<compile_context>
chip_gen: v7x
topology: tpu7x:2x2x1
jax: 0.10.0
libtpu: 0.0.40
codegen_flags: <defaults>
</compile_context>

<pallas_src>
import functools

import jax
import jax.numpy as jnp
from jax.experimental import pallas as pl
from jax.experimental.pallas import tpu as pltpu


# -----------------------------------------------------------------------------
# Kernel
# -----------------------------------------------------------------------------
def _fused_mlp_kernel(*refs, n_layers, quant, transposed):
    # refs = (x, b_0..b_{n-1}, qscale_i for quant layers..., w_hbm_0..w_hbm_{n-1},
    #         out, wbuf_0..wbuf_{n-1}, sems)
    n_q = sum(quant)
    x_ref = refs[0]
    b_refs = refs[1:1 + n_layers]
    s_flat = refs[1 + n_layers:1 + n_layers + n_q]
    w_hbm = refs[1 + n_layers + n_q:1 + 2 * n_layers + n_q]
    o_ref = refs[1 + 2 * n_layers + n_q]
    w_bufs = refs[2 + 2 * n_layers + n_q:2 + 3 * n_layers + n_q]
    sems = refs[2 + 3 * n_layers + n_q]

    # Map per-layer quant scales (only quantized layers have one).
    s_refs = []
    qi = 0
    for is_q in quant:
        s_refs.append(s_flat[qi] if is_q else None)
        if is_q:
            qi += 1

    # Kick off every weight DMA immediately: one continuous HBM->VMEM stream
    # that the per-layer matmuls then consume in order.
    copies = []
    for i in range(n_layers):
        cp = pltpu.make_async_copy(w_hbm[i], w_bufs[i], sems.at[i])
        cp.start()
        copies.append(cp)

    h = x_ref[...]                                 # f32 activations
    for i in range(n_layers):
        # ReLU + bf16 downcast depend only on the PREVIOUS layer's output, so
        # keep them above the wait -> VPU work overlaps the in-flight DMA.
        if i > 0:
            h = jnp.maximum(h, 0.0)                # ReLU (BN folded away)
        lhs = h.astype(jnp.bfloat16)

        copies[i].wait()                           # layer-i weights now in VMEM
        w = w_bufs[i][...]
        if quant[i]:
            # int8 -> bf16 dequant (mantissa only); the per-output-channel scale
            # factors out of the contraction and is applied to the f32 result.
            w = w.astype(jnp.bfloat16)
        if transposed[i]:
            w = w.T                                # stored (out, K) to avoid lane padding

        acc = jnp.dot(lhs, w, preferred_element_type=jnp.float32)
        if quant[i]:
            acc = acc * s_refs[i][...]
        h = acc + b_refs[i][...]

    o_ref[...] = h.astype(o_ref.dtype)


# -----------------------------------------------------------------------------
# Wrapper
# -----------------------------------------------------------------------------
def fused_mlp_forward(x, ws, bs, qscales):
    """x: (B, K0) f32.
    ws[i]: stored weight — (K_i, N_i) bf16/int8, or (N_i, K_i) bf16 (transposed).
    bs[i]: (1, N_i) f32 bias.  qscales[i]: (1, N_i) f32 per-output-channel scale
    for int8 layers, else None.  Returns (B, N_last) f32."""
    B, K0 = x.shape
    n_layers = len(ws)
    quant = tuple(s is not None for s in qscales)

    # Infer each layer's storage orientation and fan-out from the weight shapes.
    transposed, k = [], K0
    for w in ws:
        if w.shape[0] == k:
            transposed.append(False)
            k = w.shape[1]
        else:
            assert w.shape[1] == k, f"weight shape {w.shape} incompatible with fan-in {k}"
            transposed.append(True)
            k = w.shape[0]
    transposed = tuple(transposed)
    n_out = k

    scale_args = [s for s in qscales if s is not None]

    in_specs = [pl.BlockSpec((B, K0), lambda i: (0, 0))]                       # x
    in_specs += [pl.BlockSpec((1, b.shape[1]), lambda i: (0, 0)) for b in bs]  # biases
    in_specs += [pl.BlockSpec((1, s.shape[1]), lambda i: (0, 0)) for s in scale_args]
    in_specs += [pl.BlockSpec(memory_space=pl.ANY) for _ in ws]                # HBM weights

    scratch_shapes = [pltpu.VMEM(w.shape, w.dtype) for w in ws]
    scratch_shapes += [pltpu.SemaphoreType.DMA((n_layers,))]

    # Realistic VMEM budget: resident weight scratch + headroom for the
    # transient int8->bf16 dequant buffers; never the whole physical VMEM
    # (matters on v7x's 64 MiB per TC).
    weight_bytes = sum(int(w.size) * w.dtype.itemsize for w in ws)
    vmem_limit = min(weight_bytes + (24 << 20), 48 << 20)

    kernel = functools.partial(_fused_mlp_kernel, n_layers=n_layers,
                               quant=quant, transposed=transposed)

    return pl.pallas_call(
        kernel,
        out_shape=jax.ShapeDtypeStruct((B, n_out), jnp.float32),
        grid_spec=pltpu.PrefetchScalarGridSpec(
            num_scalar_prefetch=0,
            grid=(1,),
            in_specs=in_specs,
            out_specs=pl.BlockSpec((B, n_out), lambda i: (0, 0)),
            scratch_shapes=scratch_shapes,
        ),
        compiler_params=pltpu.CompilerParams(
            dimension_semantics=("arbitrary",),
            vmem_limit_bytes=vmem_limit,
        ),
    )(x, *bs, *scale_args, *ws)


# -----------------------------------------------------------------------------
# Parameter construction (deterministic), BN folding and weight packing.
# -----------------------------------------------------------------------------
def build_params(input_dim, output_dim, key):
    """params[i] = ((gamma, beta, running_mean, running_var), W_i, b_i) where
    BN_i is applied to Linear_i's input. W stored transposed: (in, out)."""
    dims = [input_dim, 512, 1024, 2048, 1024, output_dim]
    n_layers = len(dims) - 1
    keys = jax.random.split(key, 3 * n_layers)
    params = []
    for i in range(n_layers):
        kw, kb, kbn = keys[3 * i], keys[3 * i + 1], keys[3 * i + 2]
        fan_in, fan_out = dims[i], dims[i + 1]
        bound = 1.0 / jnp.sqrt(jnp.float32(fan_in))
        w = jax.random.uniform(kw, (fan_in, fan_out), jnp.float32, -bound, bound)
        b = jax.random.uniform(kb, (fan_out,), jnp.float32, -bound, bound)
        # Non-trivial BN stats so the folding is genuinely exercised.
        k1, k2, k3, k4 = jax.random.split(kbn, 4)
        gamma = jax.random.uniform(k1, (fan_in,), jnp.float32, 0.5, 1.5)
        beta = 0.1 * jax.random.normal(k2, (fan_in,), jnp.float32)
        mean = 0.1 * jax.random.normal(k3, (fan_in,), jnp.float32)
        var = jax.random.uniform(k4, (fan_in,), jnp.float32, 0.5, 1.5)
        params.append(((gamma, beta, mean, var), w, b))
    return params


def _quantize_per_out_channel(w):
    """Symmetric int8 weight-only quantization with a per-output-channel scale."""
    amax = jnp.max(jnp.abs(w), axis=0)
    scale = jnp.maximum(amax, 1e-30) / 127.0
    q = jnp.clip(jnp.round(w / scale[None, :]), -127.0, 127.0).astype(jnp.int8)
    return q, scale.reshape(1, -1).astype(jnp.float32)


def prepare_params(params, eps=1e-5, quant_min_elems=1 << 16):
    """Fold eval-mode BN into the Linears, then pick a storage format per layer:
      * large layers -> int8 + per-output-channel f32 scale (halves HBM bytes),
      * last layer with a non-128-multiple fan-out -> transposed (out, K) bf16
        (avoids zero-padding the output dim to a lane multiple in HBM),
      * small layers -> bf16.
    Biases stay f32, reshaped to (1, N)."""
    n = len(params)
    bn_s, bn_t = [], []
    for (gamma, beta, mean, var), _, _ in params:
        s = gamma * jax.lax.rsqrt(var + eps)
        bn_s.append(s)
        bn_t.append(beta - mean * s)

    ws_f32, bs = [], []
    for i in range(n):
        _, w, b = params[i]
        w = w.astype(jnp.float32)
        b = b.astype(jnp.float32)
        if i == 0:                      # BN before Linear0 (no ReLU between)
            b = bn_t[0] @ w + b
            w = bn_s[0][:, None] * w
        if i + 1 < n:                   # BN after Linear i (before ReLU)
            w = w * bn_s[i + 1][None, :]
            b = b * bn_s[i + 1] + bn_t[i + 1]
        ws_f32.append(w)
        bs.append(b.reshape(1, -1))

    ws, qscales = [], []
    for i, w in enumerate(ws_f32):
        k, nout = w.shape
        if i + 1 == n and nout % 128 != 0:
            ws.append(jnp.asarray(w.T, dtype=jnp.bfloat16))   # (out, K), no padding
            qscales.append(None)
        elif k * nout >= quant_min_elems:
            q, s = _quantize_per_out_channel(w)
            ws.append(q)
            qscales.append(s)
        else:
            ws.append(w.astype(jnp.bfloat16))
            qscales.append(None)
    return ws, bs, qscales


# -----------------------------------------------------------------------------
# Pure-JAX references.
# -----------------------------------------------------------------------------
def reference_forward(x, params, eps=1e-5):
    """Exact eval-mode semantics of the PyTorch module, in f32."""
    h = x
    for i, ((gamma, beta, mean, var), w, b) in enumerate(params):
        h = (h - mean) * jax.lax.rsqrt(var + eps) * gamma + beta
        if i > 0:
            h = jnp.maximum(h, 0.0)
        # Dropout(0.2) is identity in eval mode.
        h = h @ w + b
    return h


def reference_forward_folded(x, ws, bs, qscales):
    """Same math as the kernel (folded BN, bf16/int8 weights, bf16 activations,
    f32 accumulation), in plain JAX."""
    h = x
    k = x.shape[1]
    for i, (w, b, s) in enumerate(zip(ws, bs, qscales)):
        if i > 0:
            h = jnp.maximum(h, 0.0)
        lhs = h.astype(jnp.bfloat16)
        rhs = w.T if w.shape[0] != k else w
        rhs = rhs.astype(jnp.bfloat16)
        acc = jnp.dot(lhs, rhs, preferred_element_type=jnp.float32)
        if s is not None:
            acc = acc * s
        h = acc + b
        k = h.shape[1]
    return h


if __name__ == "__main__":
    key = jax.random.PRNGKey(0)
    k_x, k_p = jax.random.split(key)

    batch, input_dim, output_dim = 8, 32, 16
    x = jax.random.normal(k_x, (batch, input_dim), jnp.float32)
    params = build_params(input_dim, output_dim, k_p)

    # One-time parameter preprocessing (fold BN, int8/bf16 packing, transpose).
    ws, bs, qscales = prepare_params(params)

    fwd = jax.jit(fused_mlp_forward)
    y = jax.block_until_ready(fwd(x, ws, bs, qscales))
    assert y.shape == (batch, output_dim)

    # Tight check: kernel vs plain-JAX version of the identical folded/packed math.
    y_folded = reference_forward_folded(x, ws, bs, qscales)
    err_f = float(jnp.max(jnp.abs(y - y_folded)))
    assert jnp.allclose(y, y_folded, atol=1e-3, rtol=1e-3), \
        f"kernel vs folded reference mismatch, max abs err {err_f}"

    # Loose check: kernel vs exact f32 eval-mode semantics of MyModel.
    # Differences come from the deliberate bf16 activation casts and the
    # bf16 / per-channel-int8 weight storage.
    y_ref = reference_forward(x, params)
    err_r = float(jnp.max(jnp.abs(y - y_ref)))
    assert jnp.allclose(y, y_ref, atol=5e-2, rtol=5e-2), \
        f"kernel vs f32 reference mismatch, max abs err {err_r}"

    print("KERNEL_OK")
</pallas_src>

<mosaic_0001>
module attributes {stable_mosaic.version = 11 : i64} {
  func.func @_fused_mlp_kernel(%arg0: i32, %arg1: memref<8x32xf32, #tpu.memory_space<vmem>>, %arg2: memref<1x512xf32, #tpu.memory_space<vmem>>, %arg3: memref<1x1024xf32, #tpu.memory_space<vmem>>, %arg4: memref<1x2048xf32, #tpu.memory_space<vmem>>, %arg5: memref<1x1024xf32, #tpu.memory_space<vmem>>, %arg6: memref<1x16xf32, #tpu.memory_space<vmem>>, %arg7: memref<1x1024xf32, #tpu.memory_space<vmem>>, %arg8: memref<1x2048xf32, #tpu.memory_space<vmem>>, %arg9: memref<1x1024xf32, #tpu.memory_space<vmem>>, %arg10: memref<32x512xbf16, #tpu.memory_space<any>>, %arg11: memref<512x1024xi8, #tpu.memory_space<any>>, %arg12: memref<1024x2048xi8, #tpu.memory_space<any>>, %arg13: memref<2048x1024xi8, #tpu.memory_space<any>>, %arg14: memref<16x1024xbf16, #tpu.memory_space<any>>, %arg15: memref<8x16xf32, #tpu.memory_space<vmem>>, %arg16: memref<32x512xbf16, #tpu.memory_space<vmem>>, %arg17: memref<512x1024xi8, #tpu.memory_space<vmem>>, %arg18: memref<1024x2048xi8, #tpu.memory_space<vmem>>, %arg19: memref<2048x1024xi8, #tpu.memory_space<vmem>>, %arg20: memref<16x1024xbf16, #tpu.memory_space<vmem>>, %arg21: memref<5x!tpu.dma_semaphore, #tpu.memory_space<semaphore_mem>>) attributes {dimension_semantics = [#tpu.dimension_semantics<arbitrary>], iteration_bounds = array<i64: 1>, scalar_prefetch = 0 : i64, scratch_operands = 6 : i64, tpu.core_type = #tpu.core_type<tc>, window_params = [{pipeline_mode = #tpu.pipeline_mode<synchronous>, transform_indices = @transform_0, window_bounds = array<i64: 8, 32>}, {pipeline_mode = #tpu.pipeline_mode<synchronous>, transform_indices = @transform_1, window_bounds = array<i64: 1, 512>}, {pipeline_mode = #tpu.pipeline_mode<synchronous>, transform_indices = @transform_2, window_bounds = array<i64: 1, 1024>}, {pipeline_mode = #tpu.pipeline_mode<synchronous>, transform_indices = @transform_3, window_bounds = array<i64: 1, 2048>}, {pipeline_mode = #tpu.pipeline_mode<synchronous>, transform_indices = @transform_4, window_bounds = array<i64: 1, 1024>}, {pipeline_mode = #tpu.pipeline_mode<synchronous>, transform_indices = @transform_5, window_bounds = array<i64: 1, 16>}, {pipeline_mode = #tpu.pipeline_mode<synchronous>, transform_indices = @transform_6, window_bounds = array<i64: 1, 1024>}, {pipeline_mode = #tpu.pipeline_mode<synchronous>, transform_indices = @transform_7, window_bounds = array<i64: 1, 2048>}, {pipeline_mode = #tpu.pipeline_mode<synchronous>, transform_indices = @transform_8, window_bounds = array<i64: 1, 1024>}, {}, {}, {}, {}, {}, {pipeline_mode = #tpu.pipeline_mode<synchronous>, transform_indices = @transform_14, window_bounds = array<i64: 8, 16>}]} {
    %c0_i32 = arith.constant 0 : i32
    %0 = tpu.memref_slice %arg21[%c0_i32] : memref<5x!tpu.dma_semaphore, #tpu.memory_space<semaphore_mem>> -> memref<1x!tpu.dma_semaphore, #tpu.memory_space<semaphore_mem>>
    %1 = tpu.memref_squeeze %0 : memref<1x!tpu.dma_semaphore, #tpu.memory_space<semaphore_mem>> -> memref<!tpu.dma_semaphore, #tpu.memory_space<semaphore_mem>>
    tpu.enqueue_dma source(%arg10 : memref<32x512xbf16, #tpu.memory_space<any>>) target(%arg16 : memref<32x512xbf16, #tpu.memory_space<vmem>>) target_semaphore(%1 : memref<!tpu.dma_semaphore, #tpu.memory_space<semaphore_mem>>)
    %c1_i32 = arith.constant 1 : i32
    %2 = tpu.memref_slice %arg21[%c1_i32] : memref<5x!tpu.dma_semaphore, #tpu.memory_space<semaphore_mem>> -> memref<1x!tpu.dma_semaphore, #tpu.memory_space<semaphore_mem>>
    %3 = tpu.memref_squeeze %2 : memref<1x!tpu.dma_semaphore, #tpu.memory_space<semaphore_mem>> -> memref<!tpu.dma_semaphore, #tpu.memory_space<semaphore_mem>>
    tpu.enqueue_dma source(%arg11 : memref<512x1024xi8, #tpu.memory_space<any>>) target(%arg17 : memref<512x1024xi8, #tpu.memory_space<vmem>>) target_semaphore(%3 : memref<!tpu.dma_semaphore, #tpu.memory_space<semaphore_mem>>)
    %c2_i32 = arith.constant 2 : i32
    %4 = tpu.memref_slice %arg21[%c2_i32] : memref<5x!tpu.dma_semaphore, #tpu.memory_space<semaphore_mem>> -> memref<1x!tpu.dma_semaphore, #tpu.memory_space<semaphore_mem>>
    %5 = tpu.memref_squeeze %4 : memref<1x!tpu.dma_semaphore, #tpu.memory_space<semaphore_mem>> -> memref<!tpu.dma_semaphore, #tpu.memory_space<semaphore_mem>>
    tpu.enqueue_dma source(%arg12 : memref<1024x2048xi8, #tpu.memory_space<any>>) target(%arg18 : memref<1024x2048xi8, #tpu.memory_space<vmem>>) target_semaphore(%5 : memref<!tpu.dma_semaphore, #tpu.memory_space<semaphore_mem>>)
    %c3_i32 = arith.constant 3 : i32
    %6 = tpu.memref_slice %arg21[%c3_i32] : memref<5x!tpu.dma_semaphore, #tpu.memory_space<semaphore_mem>> -> memref<1x!tpu.dma_semaphore, #tpu.memory_space<semaphore_mem>>
    %7 = tpu.memref_squeeze %6 : memref<1x!tpu.dma_semaphore, #tpu.memory_space<semaphore_mem>> -> memref<!tpu.dma_semaphore, #tpu.memory_space<semaphore_mem>>
    tpu.enqueue_dma source(%arg13 : memref<2048x1024xi8, #tpu.memory_space<any>>) target(%arg19 : memref<2048x1024xi8, #tpu.memory_space<vmem>>) target_semaphore(%7 : memref<!tpu.dma_semaphore, #tpu.memory_space<semaphore_mem>>)
    %c4_i32 = arith.constant 4 : i32
    %8 = tpu.memref_slice %arg21[%c4_i32] : memref<5x!tpu.dma_semaphore, #tpu.memory_space<semaphore_mem>> -> memref<1x!tpu.dma_semaphore, #tpu.memory_space<semaphore_mem>>
    %9 = tpu.memref_squeeze %8 : memref<1x!tpu.dma_semaphore, #tpu.memory_space<semaphore_mem>> -> memref<!tpu.dma_semaphore, #tpu.memory_space<semaphore_mem>>
    tpu.enqueue_dma source(%arg14 : memref<16x1024xbf16, #tpu.memory_space<any>>) target(%arg20 : memref<16x1024xbf16, #tpu.memory_space<vmem>>) target_semaphore(%9 : memref<!tpu.dma_semaphore, #tpu.memory_space<semaphore_mem>>)
    %c0 = arith.constant 0 : index
    %c0_0 = arith.constant 0 : index
    %10 = vector.load %arg1[%c0, %c0_0] : memref<8x32xf32, #tpu.memory_space<vmem>>, vector<8x32xf32>
    %11 = arith.truncf %10 : vector<8x32xf32> to vector<8x32xbf16>
    %c0_i32_1 = arith.constant 0 : i32
    %12 = tpu.memref_slice %arg21[%c0_i32_1] : memref<5x!tpu.dma_semaphore, #tpu.memory_space<semaphore_mem>> -> memref<1x!tpu.dma_semaphore, #tpu.memory_space<semaphore_mem>>
    %13 = tpu.memref_squeeze %12 : memref<1x!tpu.dma_semaphore, #tpu.memory_space<semaphore_mem>> -> memref<!tpu.dma_semaphore, #tpu.memory_space<semaphore_mem>>
    tpu.wait_dma2 semaphore(%13 : memref<!tpu.dma_semaphore, #tpu.memory_space<semaphore_mem>>) src(%arg10 : memref<32x512xbf16, #tpu.memory_space<any>>) dst(%arg16 : memref<32x512xbf16, #tpu.memory_space<vmem>>)
    %c0_2 = arith.constant 0 : index
    %c0_3 = arith.constant 0 : index
    %14 = vector.load %arg16[%c0_2, %c0_3] : memref<32x512xbf16, #tpu.memory_space<vmem>>, vector<32x512xbf16>
    %cst = arith.constant dense<0.000000e+00> : vector<8x512xf32>
    %15 = tpu.matmul %11, %14, %cst {dimension_numbers = #tpu.dot_dimension_numbers<[1], [0], [0], [1], [0, 0, 1, 1], [], []>} : vector<8x32xbf16>, vector<32x512xbf16>, vector<8x512xf32> -> vector<8x512xf32>
    %c0_4 = arith.constant 0 : index
    %c0_5 = arith.constant 0 : index
    %16 = vector.load %arg2[%c0_4, %c0_5] : memref<1x512xf32, #tpu.memory_space<vmem>>, vector<1x512xf32>
    %17 = vector.broadcast %16 : vector<1x512xf32> to vector<8x512xf32>
    %18 = arith.addf %15, %17 : vector<8x512xf32>
    %cst_6 = arith.constant 0.000000e+00 : f32
    %19 = vector.broadcast %cst_6 : f32 to vector<8x512xf32>
    %20 = arith.maximumf %18, %19 : vector<8x512xf32>
    %21 = arith.truncf %20 : vector<8x512xf32> to vector<8x512xbf16>
    %c1_i32_7 = arith.constant 1 : i32
    %22 = tpu.memref_slice %arg21[%c1_i32_7] : memref<5x!tpu.dma_semaphore, #tpu.memory_space<semaphore_mem>> -> memref<1x!tpu.dma_semaphore, #tpu.memory_space<semaphore_mem>>
    %23 = tpu.memref_squeeze %22 : memref<1x!tpu.dma_semaphore, #tpu.memory_space<semaphore_mem>> -> memref<!tpu.dma_semaphore, #tpu.memory_space<semaphore_mem>>
    tpu.wait_dma2 semaphore(%23 : memref<!tpu.dma_semaphore, #tpu.memory_space<semaphore_mem>>) src(%arg11 : memref<512x1024xi8, #tpu.memory_space<any>>) dst(%arg17 : memref<512x1024xi8, #tpu.memory_space<vmem>>)
    %c0_8 = arith.constant 0 : index
    %c0_9 = arith.constant 0 : index
    %24 = vector.load %arg17[%c0_8, %c0_9] : memref<512x1024xi8, #tpu.memory_space<vmem>>, vector<512x1024xi8>
    %25 = arith.sitofp %24 : vector<512x1024xi8> to vector<512x1024xbf16>
    %cst_10 = arith.constant dense<0.000000e+00> : vector<8x1024xf32>
    %26 = tpu.matmul %21, %25, %cst_10 {dimension_numbers = #tpu.dot_dimension_numbers<[1], [0], [0], [1], [0, 0, 1, 1], [], []>} : vector<8x512xbf16>, vector<512x1024xbf16>, vector<8x1024xf32> -> vector<8x1024xf32>
    %c0_11 = arith.constant 0 : index
    %c0_12 = arith.constant 0 : index
    %27 = vector.load %arg7[%c0_11, %c0_12] : memref<1x1024xf32, #tpu.memory_space<vmem>>, vector<1x1024xf32>
    %28 = vector.broadcast %27 : vector<1x1024xf32> to vector<8x1024xf32>
    %29 = arith.mulf %26, %28 : vector<8x1024xf32>
    %c0_13 = arith.constant 0 : index
    %c0_14 = arith.constant 0 : index
    %30 = vector.load %arg3[%c0_13, %c0_14] : memref<1x1024xf32, #tpu.memory_space<vmem>>, vector<1x1024xf32>
    %31 = vector.broadcast %30 : vector<1x1024xf32> to vector<8x1024xf32>
    %32 = arith.addf %29, %31 : vector<8x1024xf32>
    %cst_15 = arith.constant 0.000000e+00 : f32
    %33 = vector.broadcast %cst_15 : f32 to vector<8x1024xf32>
    %34 = arith.maximumf %32, %33 : vector<8x1024xf32>
    %35 = arith.truncf %34 : vector<8x1024xf32> to vector<8x1024xbf16>
    %c2_i32_16 = arith.constant 2 : i32
    %36 = tpu.memref_slice %arg21[%c2_i32_16] : memref<5x!tpu.dma_semaphore, #tpu.memory_space<semaphore_mem>> -> memref<1x!tpu.dma_semaphore, #tpu.memory_space<semaphore_mem>>
    %37 = tpu.memref_squeeze %36 : memref<1x!tpu.dma_semaphore, #tpu.memory_space<semaphore_mem>> -> memref<!tpu.dma_semaphore, #tpu.memory_space<semaphore_mem>>
    tpu.wait_dma2 semaphore(%37 : memref<!tpu.dma_semaphore, #tpu.memory_space<semaphore_mem>>) src(%arg12 : memref<1024x2048xi8, #tpu.memory_space<any>>) dst(%arg18 : memref<1024x2048xi8, #tpu.memory_space<vmem>>)
    %c0_17 = arith.constant 0 : index
    %c0_18 = arith.constant 0 : index
    %38 = vector.load %arg18[%c0_17, %c0_18] : memref<1024x2048xi8, #tpu.memory_space<vmem>>, vector<1024x2048xi8>
    %39 = arith.sitofp %38 : vector<1024x2048xi8> to vector<1024x2048xbf16>
    %cst_19 = arith.constant dense<0.000000e+00> : vector<8x2048xf32>
    %40 = tpu.matmul %35, %39, %cst_19 {dimension_numbers = #tpu.dot_dimension_numbers<[1], [0], [0], [1], [0, 0, 1, 1], [], []>} : vector<8x1024xbf16>, vector<1024x2048xbf16>, vector<8x2048xf32> -> vector<8x2048xf32>
    %c0_20 = arith.constant 0 : index
    %c0_21 = arith.constant 0 : index
    %41 = vector.load %arg8[%c0_20, %c0_21] : memref<1x2048xf32, #tpu.memory_space<vmem>>, vector<1x2048xf32>
    %42 = vector.broadcast %41 : vector<1x2048xf32> to vector<8x2048xf32>
    %43 = arith.mulf %40, %42 : vector<8x2048xf32>
    %c0_22 = arith.constant 0 : index
    %c0_23 = arith.constant 0 : index
    %44 = vector.load %arg4[%c0_22, %c0_23] : memref<1x2048xf32, #tpu.memory_space<vmem>>, vector<1x2048xf32>
    %45 = vector.broadcast %44 : vector<1x2048xf32> to vector<8x2048xf32>
    %46 = arith.addf %43, %45 : vector<8x2048xf32>
    %cst_24 = arith.constant 0.000000e+00 : f32
    %47 = vector.broadcast %cst_24 : f32 to vector<8x2048xf32>
    %48 = arith.maximumf %46, %47 : vector<8x2048xf32>
    %49 = arith.truncf %48 : vector<8x2048xf32> to vector<8x2048xbf16>
    %c3_i32_25 = arith.constant 3 : i32
    %50 = tpu.memref_slice %arg21[%c3_i32_25] : memref<5x!tpu.dma_semaphore, #tpu.memory_space<semaphore_mem>> -> memref<1x!tpu.dma_semaphore, #tpu.memory_space<semaphore_mem>>
    %51 = tpu.memref_squeeze %50 : memref<1x!tpu.dma_semaphore, #tpu.memory_space<semaphore_mem>> -> memref<!tpu.dma_semaphore, #tpu.memory_space<semaphore_mem>>
    tpu.wait_dma2 semaphore(%51 : memref<!tpu.dma_semaphore, #tpu.memory_space<semaphore_mem>>) src(%arg13 : memref<2048x1024xi8, #tpu.memory_space<any>>) dst(%arg19 : memref<2048x1024xi8, #tpu.memory_space<vmem>>)
    %c0_26 = arith.constant 0 : index
    %c0_27 = arith.constant 0 : index
    %52 = vector.load %arg19[%c0_26, %c0_27] : memref<2048x1024xi8, #tpu.memory_space<vmem>>, vector<2048x1024xi8>
    %53 = arith.sitofp %52 : vector<2048x1024xi8> to vector<2048x1024xbf16>
    %cst_28 = arith.constant dense<0.000000e+00> : vector<8x1024xf32>
    %54 = tpu.matmul %49, %53, %cst_28 {dimension_numbers = #tpu.dot_dimension_numbers<[1], [0], [0], [1], [0, 0, 1, 1], [], []>} : vector<8x2048xbf16>, vector<2048x1024xbf16>, vector<8x1024xf32> -> vector<8x1024xf32>
    %c0_29 = arith.constant 0 : index
    %c0_30 = arith.constant 0 : index
    %55 = vector.load %arg9[%c0_29, %c0_30] : memref<1x1024xf32, #tpu.memory_space<vmem>>, vector<1x1024xf32>
    %56 = vector.broadcast %55 : vector<1x1024xf32> to vector<8x1024xf32>
    %57 = arith.mulf %54, %56 : vector<8x1024xf32>
    %c0_31 = arith.constant 0 : index
    %c0_32 = arith.constant 0 : index
    %58 = vector.load %arg5[%c0_31, %c0_32] : memref<1x1024xf32, #tpu.memory_space<vmem>>, vector<1x1024xf32>
    %59 = vector.broadcast %58 : vector<1x1024xf32> to vector<8x1024xf32>
    %60 = arith.addf %57, %59 : vector<8x1024xf32>
    %cst_33 = arith.constant 0.000000e+00 : f32
    %61 = vector.broadcast %cst_33 : f32 to vector<8x1024xf32>
    %62 = arith.maximumf %60, %61 : vector<8x1024xf32>
    %63 = arith.truncf %62 : vector<8x1024xf32> to vector<8x1024xbf16>
    %c4_i32_34 = arith.constant 4 : i32
    %64 = tpu.memref_slice %arg21[%c4_i32_34] : memref<5x!tpu.dma_semaphore, #tpu.memory_space<semaphore_mem>> -> memref<1x!tpu.dma_semaphore, #tpu.memory_space<semaphore_mem>>
    %65 = tpu.memref_squeeze %64 : memref<1x!tpu.dma_semaphore, #tpu.memory_space<semaphore_mem>> -> memref<!tpu.dma_semaphore, #tpu.memory_space<semaphore_mem>>
    tpu.wait_dma2 semaphore(%65 : memref<!tpu.dma_semaphore, #tpu.memory_space<semaphore_mem>>) src(%arg14 : memref<16x1024xbf16, #tpu.memory_space<any>>) dst(%arg20 : memref<16x1024xbf16, #tpu.memory_space<vmem>>)
    %c0_35 = arith.constant 0 : index
    %c0_36 = arith.constant 0 : index
    %66 = vector.load %arg20[%c0_35, %c0_36] : memref<16x1024xbf16, #tpu.memory_space<vmem>>, vector<16x1024xbf16>
    %67 = tpu.transpose %66, [1, 0] : vector<16x1024xbf16> -> vector<1024x16xbf16>
    %cst_37 = arith.constant dense<0.000000e+00> : vector<8x16xf32>
    %68 = tpu.matmul %63, %67, %cst_37 {dimension_numbers = #tpu.dot_dimension_numbers<[1], [0], [0], [1], [0, 0, 1, 1], [], []>} : vector<8x1024xbf16>, vector<1024x16xbf16>, vector<8x16xf32> -> vector<8x16xf32>
    %c0_38 = arith.constant 0 : index
    %c0_39 = arith.constant 0 : index
    %69 = vector.load %arg6[%c0_38, %c0_39] : memref<1x16xf32, #tpu.memory_space<vmem>>, vector<1x16xf32>
    %70 = vector.broadcast %69 : vector<1x16xf32> to vector<8x16xf32>
    %71 = arith.addf %68, %70 : vector<8x16xf32>
    %c0_40 = arith.constant 0 : index
    %c0_41 = arith.constant 0 : index
    %72 = vector.load %arg15[%c0_40, %c0_41] : memref<8x16xf32, #tpu.memory_space<vmem>>, vector<8x16xf32>
    tpu.vector_store %arg15[%c0_40, %c0_41], %71 {strides = array<i32>} : memref<8x16xf32, #tpu.memory_space<vmem>>, vector<8x16xf32>,
    return
  }
  func.func @transform_0(%arg0: i32) -> (i32, i32) {
    %c0_i32 = arith.constant 0 : i32
    %c0_i32_0 = arith.constant 0 : i32
    %c0_i32_1 = arith.constant 0 : i32
    return %c0_i32, %c0_i32_0 : i32, i32
  }
  func.func @transform_1(%arg0: i32) -> (i32, i32) {
    %c0_i32 = arith.constant 0 : i32
    %c0_i32_0 = arith.constant 0 : i32
    %c0_i32_1 = arith.constant 0 : i32
    return %c0_i32, %c0_i32_0 : i32, i32
  }
  func.func @transform_2(%arg0: i32) -> (i32, i32) {
    %c0_i32 = arith.constant 0 : i32
    %c0_i32_0 = arith.constant 0 : i32
    %c0_i32_1 = arith.constant 0 : i32
    return %c0_i32, %c0_i32_0 : i32, i32
  }
  func.func @transform_3(%arg0: i32) -> (i32, i32) {
    %c0_i32 = arith.constant 0 : i32
    %c0_i32_0 = arith.constant 0 : i32
    %c0_i32_1 = arith.constant 0 : i32
    return %c0_i32, %c0_i32_0 : i32, i32
  }
  func.func @transform_4(%arg0: i32) -> (i32, i32) {
    %c0_i32 = arith.constant 0 : i32
    %c0_i32_0 = arith.constant 0 : i32
    %c0_i32_1 = arith.constant 0 : i32
    return %c0_i32, %c0_i32_0 : i32, i32
  }
  func.func @transform_5(%arg0: i32) -> (i32, i32) {
    %c0_i32 = arith.constant 0 : i32
    %c0_i32_0 = arith.constant 0 : i32
    %c0_i32_1 = arith.constant 0 : i32
    return %c0_i32, %c0_i32_0 : i32, i32
  }
  func.func @transform_6(%arg0: i32) -> (i32, i32) {
    %c0_i32 = arith.constant 0 : i32
    %c0_i32_0 = arith.constant 0 : i32
    %c0_i32_1 = arith.constant 0 : i32
    return %c0_i32, %c0_i32_0 : i32, i32
  }
  func.func @transform_7(%arg0: i32) -> (i32, i32) {
    %c0_i32 = arith.constant 0 : i32
    %c0_i32_0 = arith.constant 0 : i32
    %c0_i32_1 = arith.constant 0 : i32
    return %c0_i32, %c0_i32_0 : i32, i32
  }
  func.func @transform_8(%arg0: i32) -> (i32, i32) {
    %c0_i32 = arith.constant 0 : i32
    %c0_i32_0 = arith.constant 0 : i32
    %c0_i32_1 = arith.constant 0 : i32
    return %c0_i32, %c0_i32_0 : i32, i32
  }
  func.func @transform_14(%arg0: i32) -> (i32, i32) {
    %c0_i32 = arith.constant 0 : i32
    %c0_i32_0 = arith.constant 0 : i32
    %c0_i32_1 = arith.constant 0 : i32
    return %c0_i32, %c0_i32_0 : i32, i32
  }
}

</mosaic_0001>

<llo_original>
// kernel: fused_mlp_forward.1
$region0: #{fused_mlp_forward.1}
  #allocation0 [shape = 'u32[]', space=smem, size = 0x4, offset = 0x4, fixed_abs, tag = 'smem constant byte address 0x4 - core index']
  #allocation1 [shape = 'u32[144,128]{1,0:T(1,128)}', space=vmem, size = 0x12000, scoped, tag = 'internal scratch']
  #allocation2 [shape = 'bf16[32,512]{1,0:T(16,128)(2,1)}', space=vmem, size = 0x8000, scoped, tag = 'scratch operand']
  #allocation3 [shape = 's8[512,1024]{1,0:T(32,128)(4,1)}', space=vmem, size = 0x80000, scoped, tag = 'scratch operand']
  #allocation4 [shape = 's8[1024,2048]{1,0:T(32,128)(4,1)}', space=vmem, size = 0x200000, scoped, tag = 'scratch operand']
  #allocation5 [shape = 's8[2048,1024]{1,0:T(32,128)(4,1)}', space=vmem, size = 0x200000, scoped, tag = 'scratch operand']
  #allocation6 [shape = 'bf16[16,1024]{1,0:T(16,128)(2,1)}', space=vmem, size = 0x8000, scoped, tag = 'scratch operand']
  #allocation7 [shape = 's32[5]{0}', space=sflag, size = 0x14, scoped, tag = 'scratch operand']
  #allocation24 [shape = 's32[]', space=sflag, size = 0x4, offset = 0, fixed_abs, tag = 'sflag constant byte address 0x0 - dummy sync flag']
  #allocation26 [shape = 's32[]', space=sflag, size = 0x4, offset = 0, fixed_abs, tag = 'sflag constant byte address 0x0 - dummy sync flag']
  #allocation27 [shape = 's32[]', space=sflag, size = 0x4, offset = 0, fixed_abs, tag = 'sflag constant byte address 0x0 - dummy sync flag']
  #allocation28 [shape = 'u32[]', space=smem, size = 0x4, offset = 0x44, fixed_abs, tag = 'smem constant byte address 0x44 - assertion arg 0']
  #allocation29 [shape = 'u32[]', space=smem, size = 0x4, offset = 0x48, fixed_abs, tag = 'smem constant byte address 0x48 - assertion arg 1']
  #allocation30 [shape = 's32[]', space=sflag, size = 0x4, offset = 0, fixed_abs, tag = 'sflag constant byte address 0x0 - dummy sync flag']
  #allocation31 [shape = 's32[]', space=sflag, size = 0x4, offset = 0, fixed_abs, tag = 'sflag constant byte address 0x0 - dummy sync flag']
  #allocation32 [shape = 's32[]', space=sflag, size = 0x4, offset = 0, fixed_abs, tag = 'sflag constant byte address 0x0 - dummy sync flag']
  #allocation33 [shape = 's32[]', space=sflag, size = 0x4, offset = 0, fixed_abs, tag = 'sflag constant byte address 0x0 - dummy sync flag']
  #allocation34 [shape = 's32[]', space=sflag, size = 0x4, offset = 0, fixed_abs, tag = 'sflag constant byte address 0x0 - dummy sync flag']
  %s0 = inlined_call_operand.hbm [shape: f32[8,32], index: 0, kind: input, shape index: {}]
  %s1 = inlined_call_operand.hbm [shape: f32[1,512], index: 1, kind: input, shape index: {}]
  %s2 = inlined_call_operand.hbm [shape: f32[1,1024], index: 2, kind: input, shape index: {}]
  %s3 = inlined_call_operand.hbm [shape: f32[1,2048], index: 3, kind: input, shape index: {}]
  %s4 = inlined_call_operand.hbm [shape: f32[1,1024], index: 4, kind: input, shape index: {}]
  %s5 = inlined_call_operand.hbm [shape: f32[1,16], index: 5, kind: input, shape index: {}]
  %s6 = inlined_call_operand.hbm [shape: f32[1,1024], index: 6, kind: input, shape index: {}]
  %s7 = inlined_call_operand.hbm [shape: f32[1,2048], index: 7, kind: input, shape index: {}]
  %s8 = inlined_call_operand.hbm [shape: f32[1,1024], index: 8, kind: input, shape index: {}]
  %s9 = inlined_call_operand.hbm [shape: bf16[32,512], index: 9, kind: input, shape index: {}]
  %s10 = inlined_call_operand.hbm [shape: s8[512,1024], index: 10, kind: input, shape index: {}]
  %s11 = inlined_call_operand.hbm [shape: s8[1024,2048], index: 11, kind: input, shape index: {}]
  %s12 = inlined_call_operand.hbm [shape: s8[2048,1024], index: 12, kind: input, shape index: {}]
  %s13 = inlined_call_operand.hbm [shape: bf16[16,1024], index: 13, kind: input, shape index: {}]
  %s14 = inlined_call_operand.hbm [shape: f32[8,16], index: 14, kind: output, shape index: {}]
  %s15 = sld [smem:[#allocation0]]
  $region94: #{fused_mlp_forward.1} parent=0
    _
  %s17 = ssub.s32 1, %s15
  %s18 = scalar_select 0, %s17, %s15
  $region1: #{fused_mlp_forward.1} parent=0
    #allocation8 [shape = 'u8[4096]{0}', space=vmem, size = 0x1000, scoped, tag = 'input window, operand 0, single buffered']
    #allocation9 [shape = 's32[1]{0}', space=sflag, size = 0x4, scoped, tag = 'scoped memory for fused_mlp_forward.1']
    #allocation10 [shape = 's32[1]{0}', space=sflag, size = 0x4, scoped, tag = 'scoped memory for fused_mlp_forward.1']
    #allocation11 [shape = 'u8[2048]{0}', space=vmem, size = 0x800, scoped, tag = 'input window, operand 1, single buffered']
    #allocation12 [shape = 's32[1]{0}', space=sflag, size = 0x4, scoped, tag = 'scoped memory for fused_mlp_forward.1']
    #allocation13 [shape = 'u8[4096]{0}', space=vmem, size = 0x1000, scoped, tag = 'input window, operand 2, single buffered']
    #allocation14 [shape = 'u8[8192]{0}', space=vmem, size = 0x2000, scoped, tag = 'input window, operand 3, single buffered']
    #allocation15 [shape = 's32[1]{0}', space=sflag, size = 0x4, scoped, tag = 'scoped memory for fused_mlp_forward.1']
    #allocation16 [shape = 'u8[4096]{0}', space=vmem, size = 0x1000, scoped, tag = 'input window, operand 4, single buffered']
    #allocation17 [shape = 'u8[512]{0}', space=vmem, size = 0x400, scoped, tag = 'input window, operand 5, single buffered']
    #allocation18 [shape = 's32[1]{0}', space=sflag, size = 0x4, scoped, tag = 'scoped memory for fused_mlp_forward.1']
    #allocation19 [shape = 'u8[4096]{0}', space=vmem, size = 0x1000, scoped, tag = 'input window, operand 6, single buffered']
    #allocation20 [shape = 'u8[8192]{0}', space=vmem, size = 0x2000, scoped, tag = 'input window, operand 7, single buffered']
    #allocation21 [shape = 's32[1]{0}', space=sflag, size = 0x4, scoped, tag = 'scoped memory for fused_mlp_forward.1']
    #allocation22 [shape = 'u8[4096]{0}', space=vmem, size = 0x1000, scoped, tag = 'input window, operand 8, single buffered']
    #allocation23 [shape = 'u8[4096]{0}', space=vmem, size = 0x1000, scoped, tag = 'output window, operand 0, single buffered']
    #allocation25 [shape = 'u32[9]{0}', space=smem, size = 0x24, scoped, tag = 'DMA stride descriptor']
    #allocation35 [shape = 'u32[6]{0}', space=smem, size = 0x18, scoped, tag = 'DMA stride descriptor']
    %19 = vsyncpa [#allocation9], 0
    %20 = vsyncpa [#allocation12], 0
    %21 = vsyncpa [#allocation15], 0
    %22 = vsyncpa [#allocation18], 0
    %23 = vsyncpa [#allocation21], 0
    %24 = vsyncpa [#allocation10], 0
    // Predicated region
    $region2: #{fused_mlp_forward.1} parent=1 // pred_check
      _
    $region3: #{fused_mlp_forward.1} parent=1 // pred_check_branch
      %26 = sbr.rel (0) target = $region5
    $region4: #{fused_mlp_forward.1} parent=1 // pred_region
      %s28 = ssub.s32 128, 128
      %29 = vsyncadd [#allocation9], %s28
      %s31 = sshll.u32 [#allocation8], 4
      %s32 = int_to_ptr.vmem [resolvable:$true] %s31
      %34 = dma.hbm_to_vmem [thread:$0]  %s0, 128, %s32, [#allocation9]
    $region5: #{fused_mlp_forward.1} parent=1 // pred_fallthru
      _
    // Predicated region
    $region6: #{fused_mlp_forward.1} parent=1 // pred_check
      _
    $region7: #{fused_mlp_forward.1} parent=1 // pred_check_branch
      %36 = sbr.rel (0) target = $region9
    $region8: #{fused_mlp_forward.1} parent=1 // pred_region
      %s38 = ssub.s32 64, 64
      %39 = vsyncadd [#allocation12], %s38
      %s41 = sshll.u32 [#allocation11], 4
      %s42 = int_to_ptr.vmem [resolvable:$true] %s41
      %44 = dma.hbm_to_vmem [thread:$0]  %s1, 64, %s42, [#allocation12]
    $region9: #{fused_mlp_forward.1} parent=1 // pred_fallthru
      _
    // Predicated region
    $region10: #{fused_mlp_forward.1} parent=1 // pred_check
      _
    $region11: #{fused_mlp_forward.1} parent=1 // pred_check_branch
      %46 = sbr.rel (0) target = $region13
    $region12: #{fused_mlp_forward.1} parent=1 // pred_region
      %s48 = ssub.s32 128, 128
      %49 = vsyncadd [#allocation12], %s48
      %s51 = sshll.u32 [#allocation13], 4
      %s52 = int_to_ptr.vmem [resolvable:$true] %s51
      %54 = dma.hbm_to_vmem [thread:$0]  %s2, 128, %s52, [#allocation12]
    $region13: #{fused_mlp_forward.1} parent=1 // pred_fallthru
      _
    // Predicated region
    $region14: #{fused_mlp_forward.1} parent=1 // pred_check
      _
    $region15: #{fused_mlp_forward.1} parent=1 // pred_check_branch
      %56 = sbr.rel (0) target = $region17
    $region16: #{fused_mlp_forward.1} parent=1 // pred_region
      %s58 = ssub.s32 256, 256
      %59 = vsyncadd [#allocation15], %s58
      %s61 = sshll.u32 [#allocation14], 4
      %s62 = int_to_ptr.vmem [resolvable:$true] %s61
      %64 = dma.hbm_to_vmem [thread:$0]  %s3, 256, %s62, [#allocation15]
    $region17: #{fused_mlp_forward.1} parent=1 // pred_fallthru
      _
    // Predicated region
    $region18: #{fused_mlp_forward.1} parent=1 // pred_check
      _
    $region19: #{fused_mlp_forward.1} parent=1 // pred_check_branch
      %66 = sbr.rel (0) target = $region21
    $region20: #{fused_mlp_forward.1} parent=1 // pred_region
      %s68 = ssub.s32 128, 128
      %69 = vsyncadd [#allocation15], %s68
      %s71 = sshll.u32 [#allocation16], 4
      %s72 = int_to_ptr.vmem [resolvable:$true] %s71
      %74 = dma.hbm_to_vmem [thread:$0]  %s4, 128, %s72, [#allocation15]
    $region21: #{fused_mlp_forward.1} parent=1 // pred_fallthru
      _
    // Predicated region
    $region22: #{fused_mlp_forward.1} parent=1 // pred_check
      _
    $region23: #{fused_mlp_forward.1} parent=1 // pred_check_branch
      %76 = sbr.rel (0) target = $region25
    $region24: #{fused_mlp_forward.1} parent=1 // pred_region
      %s78 = ssub.s32 16, 16
      %79 = vsyncadd [#allocation18], %s78
      %s81 = sshll.u32 [#allocation17], 4
      %s82 = int_to_ptr.vmem [resolvable:$true] %s81
      %84 = dma.hbm_to_vmem [thread:$0]  %s5, 16, %s82, [#allocation18]
    $region25: #{fused_mlp_forward.1} parent=1 // pred_fallthru
      _
    // Predicated region
    $region26: #{fused_mlp_forward.1} parent=1 // pred_check
      _
    $region27: #{fused_mlp_forward.1} parent=1 // pred_check_branch
      %86 = sbr.rel (0) target = $region29
    $region28: #{fused_mlp_forward.1} parent=1 // pred_region
      %s88 = ssub.s32 128, 128
      %89 = vsyncadd [#allocation18], %s88
      %s91 = sshll.u32 [#allocation19], 4
      %s92 = int_to_ptr.vmem [resolvable:$true] %s91
      %94 = dma.hbm_to_vmem [thread:$0]  %s6, 128, %s92, [#allocation18]
    $region29: #{fused_mlp_forward.1} parent=1 // pred_fallthru
      _
    // Predicated region
    $region30: #{fused_mlp_forward.1} parent=1 // pred_check
      _
    $region31: #{fused_mlp_forward.1} parent=1 // pred_check_branch
      %96 = sbr.rel (0) target = $region33
    $region32: #{fused_mlp_forward.1} parent=1 // pred_region
      %s98 = ssub.s32 256, 256
      %99 = vsyncadd [#allocation21], %s98
      %s101 = sshll.u32 [#allocation20], 4
      %s102 = int_to_ptr.vmem [resolvable:$true] %s101
      %104 = dma.hbm_to_vmem [thread:$0]  %s7, 256, %s102, [#allocation21]
    $region33: #{fused_mlp_forward.1} parent=1 // pred_fallthru
      _
    // Predicated region
    $region34: #{fused_mlp_forward.1} parent=1 // pred_check
      _
    $region35: #{fused_mlp_forward.1} parent=1 // pred_check_branch
      %106 = sbr.rel (0) target = $region37
    $region36: #{fused_mlp_forward.1} parent=1 // pred_region
      %s108 = ssub.s32 128, 128
      %109 = vsyncadd [#allocation21], %s108
      %s111 = sshll.u32 [#allocation22], 4
      %s112 = int_to_ptr.vmem [resolvable:$true] %s111
      %114 = dma.hbm_to_vmem [thread:$0]  %s8, 128, %s112, [#allocation21]
    $region37: #{fused_mlp_forward.1} parent=1 // pred_fallthru
      _
    // Predicated region
    $region38: #{fused_mlp_forward.1} parent=1 // pred_check
      _
    $region39: #{fused_mlp_forward.1} parent=1 // pred_check_branch
      %116 = sbr.rel (0) target = $region41
    $region40: #{fused_mlp_forward.1} parent=1 // pred_region
      %117 = dma.done [#allocation9], 128
    $region41: #{fused_mlp_forward.1} parent=1 // pred_fallthru
      _
    // Predicated region
    $region42: #{fused_mlp_forward.1} parent=1 // pred_check
      _
    $region43: #{fused_mlp_forward.1} parent=1 // pred_check_branch
      %119 = sbr.rel (0) target = $region45
    $region44: #{fused_mlp_forward.1} parent=1 // pred_region
      %120 = dma.done [#allocation12], 64
    $region45: #{fused_mlp_forward.1} parent=1 // pred_fallthru
      _
    // Predicated region
    $region46: #{fused_mlp_forward.1} parent=1 // pred_check
      _
    $region47: #{fused_mlp_forward.1} parent=1 // pred_check_branch
      %122 = sbr.rel (0) target = $region49
    $region48: #{fused_mlp_forward.1} parent=1 // pred_region
      %123 = dma.done [#allocation12], 128
    $region49: #{fused_mlp_forward.1} parent=1 // pred_fallthru
      _
    // Predicated region
    $region50: #{fused_mlp_forward.1} parent=1 // pred_check
      _
    $region51: #{fused_mlp_forward.1} parent=1 // pred_check_branch
      %125 = sbr.rel (0) target = $region53
    $region52: #{fused_mlp_forward.1} parent=1 // pred_region
      %126 = dma.done [#allocation15], 256
    $region53: #{fused_mlp_forward.1} parent=1 // pred_fallthru
      _
    // Predicated region
    $region54: #{fused_mlp_forward.1} parent=1 // pred_check
      _
    $region55: #{fused_mlp_forward.1} parent=1 // pred_check_branch
      %128 = sbr.rel (0) target = $region57
    $region56: #{fused_mlp_forward.1} parent=1 // pred_region
      %129 = dma.done [#allocation15], 128
    $region57: #{fused_mlp_forward.1} parent=1 // pred_fallthru
      _
    // Predicated region
    $region58: #{fused_mlp_forward.1} parent=1 // pred_check
      _
    $region59: #{fused_mlp_forward.1} parent=1 // pred_check_branch
      %131 = sbr.rel (0) target = $region61
    $region60: #{fused_mlp_forward.1} parent=1 // pred_region
      %132 = dma.done [#allocation18], 16
    $region61: #{fused_mlp_forward.1} parent=1 // pred_fallthru
      _
    // Predicated region
    $region62: #{fused_mlp_forward.1} parent=1 // pred_check
      _
    $region63: #{fused_mlp_forward.1} parent=1 // pred_check_branch
      %134 = sbr.rel (0) target = $region65
    $region64: #{fused_mlp_forward.1} parent=1 // pred_region
      %135 = dma.done [#allocation18], 128
    $region65: #{fused_mlp_forward.1} parent=1 // pred_fallthru
      _
    // Predicated region
    $region66: #{fused_mlp_forward.1} parent=1 // pred_check
      _
    $region67: #{fused_mlp_forward.1} parent=1 // pred_check_branch
      %137 = sbr.rel (0) target = $region69
    $region68: #{fused_mlp_forward.1} parent=1 // pred_region
      %138 = dma.done [#allocation21], 256
    $region69: #{fused_mlp_forward.1} parent=1 // pred_fallthru
      _
    // Predicated region
    $region70: #{fused_mlp_forward.1} parent=1 // pred_check
      _
    $region71: #{fused_mlp_forward.1} parent=1 // pred_check_branch
      %140 = sbr.rel (0) target = $region73
    $region72: #{fused_mlp_forward.1} parent=1 // pred_region
      %141 = dma.done [#allocation21], 128
    $region73: #{fused_mlp_forward.1} parent=1 // pred_fallthru
      _
    %s144 = sshll.u32 1, 14
    %s145 = sxor.u32 4294967295, %s144
    %s147 = sld [smem:[#allocation0]]
    %s148 = sadd.s32 2, %s147
    %s150 = sshll.u32 7, 26
    %s151 = sxor.u32 4294967295, %s150
    %s152 = sand.u32 0, %s151
    %s153 = sshll.u32 %s148, 26
    %s154 = sor.u32 %s152, %s153
    %s155 = sshll.u32 [#allocation2], 4
    %s156 = int_to_ptr.vmem [resolvable:$true] %s155
    %159 = sst [smem:[#allocation25]] 512
    %s160 = scalar_lea.smem [#allocation25], 1
    %161 = sst [smem:[%s160]] 512
    %s162 = scalar_lea.smem [#allocation25], 2
    %163 = sst [smem:[%s162]] 4
    %s164 = scalar_lea.smem [#allocation25], 3
    %165 = sst [smem:[%s164]] 64
    %s166 = scalar_lea.smem [#allocation25], 4
    %167 = sst [smem:[%s166]] 128
    %s168 = scalar_lea.smem [#allocation25], 5
    %169 = sst [smem:[%s168]] 2
    %s170 = scalar_lea.smem [#allocation25], 6
    %171 = sst [smem:[%s170]] 256
    %s172 = scalar_lea.smem [#allocation25], 7
    %173 = sst [smem:[%s172]] 64
    %s174 = scalar_lea.smem [#allocation25], 8
    %175 = sst [smem:[%s174]] 4
    %177 = dma.general %s9, 1024, %s156, [#allocation7], [#allocation24], [#allocation25], %s154, 0
    %s178 = scalar_lea.sflag [#allocation7], 1
    // Predicated region
    $region74: #{fused_mlp_forward.1} parent=1 // pred_check
      _
    $region75: #{fused_mlp_forward.1} parent=1 // pred_check_branch
      %180 = sbr.rel target = $region77
    $region76: #{fused_mlp_forward.1} parent=1 // pred_region
      %181 = sst [smem:[#allocation28]] [#allocation27]
      %182 = sst [smem:[#allocation29]] [#allocation26]
    $region77: #{fused_mlp_forward.1} parent=1 // pred_fallthru
      _
    %184 = shalt.err (0)
    %s186 = sshll.u32 [#allocation3], 4
    %s187 = int_to_ptr.vmem [resolvable:$true] %s186
    %189 = dma.hbm_to_vmem [thread:$0]  %s10, 16384, %s187, %s178
    %s190 = scalar_lea.sflag [#allocation7], 2
    // Predicated region
    $region78: #{fused_mlp_forward.1} parent=1 // pred_check
      _
    $region79: #{fused_mlp_forward.1} parent=1 // pred_check_branch
      %192 = sbr.rel target = $region81
    $region80: #{fused_mlp_forward.1} parent=1 // pred_region
      %193 = sst [smem:[#allocation28]] [#allocation31]
      %194 = sst [smem:[#allocation29]] [#allocation30]
    $region81: #{fused_mlp_forward.1} parent=1 // pred_fallthru
      _
    %196 = shalt.err (0)
    %s198 = sshll.u32 [#allocation4], 4
    %s199 = int_to_ptr.vmem [resolvable:$true] %s198
    %201 = dma.hbm_to_vmem [thread:$0]  %s11, 65536, %s199, %s190
    %s202 = scalar_lea.sflag [#allocation7], 3
    // Predicated region
    $region82: #{fused_mlp_forward.1} parent=1 // pred_check
      _
    $region83: #{fused_mlp_forward.1} parent=1 // pred_check_branch
      %204 = sbr.rel target = $region85
    $region84: #{fused_mlp_forward.1} parent=1 // pred_region
      %205 = sst [smem:[#allocation28]] [#allocation33]
      %206 = sst [smem:[#allocation29]] [#allocation32]
    $region85: #{fused_mlp_forward.1} parent=1 // pred_fallthru
      _
    %208 = shalt.err (0)
    %s210 = sshll.u32 [#allocation5], 4
    %s211 = int_to_ptr.vmem [resolvable:$true] %s210
    %213 = dma.hbm_to_vmem [thread:$0]  %s12, 65536, %s211, %s202
    %s214 = scalar_lea.sflag [#allocation7], 4
    %s216 = sshll.u32 1, 14
    %s217 = sxor.u32 4294967295, %s216
    %s219 = sadd.s32 2, %s147
    %s221 = sshll.u32 7, 26
    %s222 = sxor.u32 4294967295, %s221
    %s223 = sand.u32 0, %s222
    %s224 = sshll.u32 %s219, 26
    %s225 = sor.u32 %s223, %s224
    %s226 = sshll.u32 [#allocation6], 4
    %s227 = int_to_ptr.vmem [resolvable:$true] %s226
    %230 = sst [smem:[#allocation35]] 64
    %s231 = scalar_lea.smem [#allocation35], 1
    %232 = sst [smem:[%s231]] 128
    %s233 = scalar_lea.smem [#allocation35], 2
    %234 = sst [smem:[%s233]] 2
    %s235 = scalar_lea.smem [#allocation35], 3
    %236 = sst [smem:[%s235]] 512
    %s237 = scalar_lea.smem [#allocation35], 4
    %238 = sst [smem:[%s237]] 64
    %s239 = scalar_lea.smem [#allocation35], 5
    %240 = sst [smem:[%s239]] 4
    %242 = dma.general %s13, 1024, %s227, %s214, [#allocation34], [#allocation35], %s225, 0
    %v243 = vld [vmem:[#allocation8] sm:$0xff]
    %v244 = vpack.c.bf16 %v243, %v243
    %s245 = smul.u32 4, 4
    %s246 = smul.u32 %s245, 4
    %s247 = sshll.u32 %s246, 4
    %248 = dma.done [#allocation7], %s247
    %v249 = vld [vmem:[#allocation2] sm:$0xff]
    %v250 = vld [vmem:[#allocation2 + $0x8] sm:$0xff]
    %v251 = vld [vmem:[#allocation2 + $0x10] sm:$0xff]
    %v252 = vld [vmem:[#allocation2 + $0x18] sm:$0xff]
    %v253 = vld [vmem:[#allocation2 + $0x20] sm:$0xff]
    %v254 = vld [vmem:[#allocation2 + $0x28] sm:$0xff]
    %v255 = vld [vmem:[#allocation2 + $0x30] sm:$0xff]
    %v256 = vld [vmem:[#allocation2 + $0x38] sm:$0xff]
    %v257 = vld [vmem:[#allocation11] sm:$0xf]
    %v259 = vlaneseq
    %v260 = vshrl.u32 %v259, 7
    %v261 = vsub.s32 0, %v260
    %v262 = vrot.slane %v257, %v261
    %v263 = vlaneseq
    %v264 = vshrl.u32 %v263, 7
    %v265 = vsub.s32 1, %v264
    %v266 = vrot.slane %v257, %v265
    %v267 = vlaneseq
    %v268 = vshrl.u32 %v267, 7
    %v269 = vsub.s32 2, %v268
    %v270 = vrot.slane %v257, %v269
    %v271 = vlaneseq
    %v272 = vshrl.u32 %v271, 7
    %v273 = vsub.s32 3, %v272
    %v274 = vrot.slane %v257, %v273
    %vm279 = vcmask 261120
    %v281 = vsel %vm279, %v244, 0
    %283 = vmatprep.subr.bf16.mxu0 %v250
    %284 = vmatpush1.bf16.msra.mxu0 %v249
    %285 = vmatprep.subr.bf16.mxu0 %v254
    %286 = vmatpush1.bf16.msra.mxu0 %v253
    %287 = vmatprep.subr.bf16.mxu0 0
    %288 = vmatpush1.bf16.msra.mxu0 0
    %289 = vmatprep.subr.bf16.mxu0 0
    %290 = vmatpush1.bf16.msra.mxu0 0
    %291 = vmatprep.subr.bf16.mxu0 0
    %292 = vmatpush1.bf16.msra.mxu0 0
    %293 = vmatprep.subr.bf16.mxu0 0
    %294 = vmatpush1.bf16.msra.mxu0 0
    %295 = vmatprep.subr.bf16.mxu0 0
    %296 = vmatpush1.bf16.msra.mxu0 0
    %297 = vmatprep.subr.bf16.mxu0 0
    %298 = vmatpush1.bf16.msra.mxu0 0
    %299 = vmatprep.subr.bf16.mxu0 0
    %300 = vmatpush1.bf16.msra.mxu0 0
    %301 = vmatprep.subr.bf16.mxu0 0
    %302 = vmatpush1.bf16.msra.mxu0 0
    %303 = vmatprep.subr.bf16.mxu0 0
    %304 = vmatpush1.bf16.msra.mxu0 0
    %305 = vmatprep.subr.bf16.mxu0 0
    %306 = vmatpush1.bf16.msra.mxu0 0
    %307 = vmatprep.subr.bf16.mxu0 0
    %308 = vmatpush1.bf16.msra.mxu0 0
    %309 = vmatprep.subr.bf16.mxu0 0
    %310 = vmatpush1.bf16.msra.mxu0 0
    %311 = vmatprep.subr.bf16.mxu0 0
    %312 = vmatpush1.bf16.msra.mxu0 0
    %313 = vmatprep.subr.bf16.mxu0 0
    %314 = vmatpush1.bf16.msra.mxu0 0
    %315 = vmatprep.mubr.bf16.mxu0 0
    %316 = vmatmul.mubr.bf16.gmra.mrb[0].mxu0 %v281
    %v317 = vpop.f32.mrb[0].mxu0
    %v318 = vadd.f32 %v262, %v317
    %v319 = vpop.f32.mrb[0].mxu0
    %v320 = vadd.f32 %v266, %v319
    %v321 = vpop.f32.mrb[0].mxu0
    %v322 = vpop.f32.mrb[0].mxu0
    %323 = vdwg.mxu0
    %324 = vmatprep.subr.bf16.mxu0 %v252
    %325 = vmatpush1.bf16.msra.mxu0 %v251
    %326 = vmatprep.subr.bf16.mxu0 %v256
    %327 = vmatpush1.bf16.msra.mxu0 %v255
    %328 = vmatprep.subr.bf16.mxu0 0
    %329 = vmatpush1.bf16.msra.mxu0 0
    %330 = vmatprep.subr.bf16.mxu0 0
    %331 = vmatpush1.bf16.msra.mxu0 0
    %332 = vmatprep.subr.bf16.mxu0 0
    %333 = vmatpush1.bf16.msra.mxu0 0
    %334 = vmatprep.subr.bf16.mxu0 0
    %335 = vmatpush1.bf16.msra.mxu0 0
    %336 = vmatprep.subr.bf16.mxu0 0
    %337 = vmatpush1.bf16.msra.mxu0 0
    %338 = vmatprep.subr.bf16.mxu0 0
    %339 = vmatpush1.bf16.msra.mxu0 0
    %340 = vmatprep.subr.bf16.mxu0 0
    %341 = vmatpush1.bf16.msra.mxu0 0
    %342 = vmatprep.subr.bf16.mxu0 0
    %343 = vmatpush1.bf16.msra.mxu0 0
    %344 = vmatprep.subr.bf16.mxu0 0
    %345 = vmatpush1.bf16.msra.mxu0 0
    %346 = vmatprep.subr.bf16.mxu0 0
    %347 = vmatpush1.bf16.msra.mxu0 0
    %348 = vmatprep.subr.bf16.mxu0 0
    %349 = vmatpush1.bf16.msra.mxu0 0
    %350 = vmatprep.subr.bf16.mxu0 0
    %351 = vmatpush1.bf16.msra.mxu0 0
    %352 = vmatprep.subr.bf16.mxu0 0
    %353 = vmatpush1.bf16.msra.mxu0 0
    %354 = vmatprep.subr.bf16.mxu0 0
    %355 = vmatpush1.bf16.msra.mxu0 0
    %356 = vmatprep.mubr.bf16.mxu0 0
    %357 = vmatmul.mubr.bf16.gmra.mrb[0].mxu0 %v281
    %v358 = vpop.f32.mrb[0].mxu0
    %v359 = vadd.f32 %v270, %v358
    %v360 = vpop.f32.mrb[0].mxu0
    %v361 = vadd.f32 %v274, %v360
    %v362 = vpop.f32.mrb[0].mxu0
    %v363 = vpop.f32.mrb[0].mxu0
    %364 = vdwg.mxu0
    %v365 = vmax.f32 %v318, 0.0
    %v366 = vmax.f32 %v320, 0.0
    %v367 = vmax.f32 %v359, 0.0
    %v368 = vmax.f32 %v361, 0.0
    %v369 = vpack.c.bf16 %v365, %v365
    %v370 = vpack.c.bf16 %v366, %v366
    %v371 = vpack.c.bf16 %v367, %v367
    %v372 = vpack.c.bf16 %v368, %v368
    %s373 = smul.u32 2, 64
    %s374 = smul.u32 %s373, 8
    %s375 = sshll.u32 %s374, 4
    %376 = dma.done %s178, %s375
    %v377 = vld [vmem:[#allocation3] sm:$0xff]
    %v378 = vld [vmem:[#allocation3 + $0x8] sm:$0xff]
    %v379 = vld [vmem:[#allocation3 + $0x10] sm:$0xff]
    %v380 = vld [vmem:[#allocation3 + $0x18] sm:$0xff]
    %v381 = vld [vmem:[#allocation3 + $0x20] sm:$0xff]
    %v382 = vld [vmem:[#allocation3 + $0x28] sm:$0xff]
    %v383 = vld [vmem:[#allocation3 + $0x30] sm:$0xff]
    %v384 = vld [vmem:[#allocation3 + $0x38] sm:$0xff]
    %v385 = vld [vmem:[#allocation3 + $0x40] sm:$0xff]
    %v386 = vld [vmem:[#allocation3 + $0x48] sm:$0xff]
    %v387 = vld [vmem:[#allocation3 + $0x50] sm:$0xff]
    %v388 = vld [vmem:[#allocation3 + $0x58] sm:$0xff]
    %v389 = vld [vmem:[#allocation3 + $0x60] sm:$0xff]
    %v390 = vld [vmem:[#allocation3 + $0x68] sm:$0xff]
    %v391 = vld [vmem:[#allocation3 + $0x70] sm:$0xff]
    %v392 = vld [vmem:[#allocation3 + $0x78] sm:$0xff]
    %v393 = vld [vmem:[#allocation3 + $0x80] sm:$0xff]
    %v394 = vld [vmem:[#allocation3 + $0x88] sm:$0xff]
    %v395 = vld [vmem:[#allocation3 + $0x90] sm:$0xff]
    %v396 = vld [vmem:[#allocation3 + $0x98] sm:$0xff]
    %v397 = vld [vmem:[#allocation3 + $0xa0] sm:$0xff]
    %v398 = vld [vmem:[#allocation3 + $0xa8] sm:$0xff]
    %v399 = vld [vmem:[#allocation3 + $0xb0] sm:$0xff]
    %v400 = vld [vmem:[#allocation3 + $0xb8] sm:$0xff]
    %v401 = vld [vmem:[#allocation3 + $0xc0] sm:$0xff]
    %v402 = vld [vmem:[#allocation3 + $0xc8] sm:$0xff]
    %v403 = vld [vmem:[#allocation3 + $0xd0] sm:$0xff]
    %v404 = vld [vmem:[#allocation3 + $0xd8] sm:$0xff]
    %v405 = vld [vmem:[#allocation3 + $0xe0] sm:$0xff]
    %v406 = vld [vmem:[#allocation3 + $0xe8] sm:$0xff]
    %v407 = vld [vmem:[#allocation3 + $0xf0] sm:$0xff]
    %v408 = vld [vmem:[#allocation3 + $0xf8] sm:$0xff]
    %v409 = vld [vmem:[#allocation3 + $0x100] sm:$0xff]
    %v410 = vld [vmem:[#allocation3 + $0x108] sm:$0xff]
    %v411 = vld [vmem:[#allocation3 + $0x110] sm:$0xff]
    %v412 = vld [vmem:[#allocation3 + $0x118] sm:$0xff]
    %v413 = vld [vmem:[#allocation3 + $0x120] sm:$0xff]
    %v414 = vld [vmem:[#allocation3 + $0x128] sm:$0xff]
    %v415 = vld [vmem:[#allocation3 + $0x130] sm:$0xff]
    %v416 = vld [vmem:[#allocation3 + $0x138] sm:$0xff]
    %v417 = vld [vmem:[#allocation3 + $0x140] sm:$0xff]
    %v418 = vld [vmem:[#allocation3 + $0x148] sm:$0xff]
    %v419 = vld [vmem:[#allocation3 + $0x150] sm:$0xff]
    %v420 = vld [vmem:[#allocation3 + $0x158] sm:$0xff]
    %v421 = vld [vmem:[#allocation3 + $0x160] sm:$0xff]
    %v422 = vld [vmem:[#allocation3 + $0x168] sm:$0xff]
    %v423 = vld [vmem:[#allocation3 + $0x170] sm:$0xff]
    %v424 = vld [vmem:[#allocation3 + $0x178] sm:$0xff]
    %v425 = vld [vmem:[#allocation3 + $0x180] sm:$0xff]
    %v426 = vld [vmem:[#allocation3 + $0x188] sm:$0xff]
    %v427 = vld [vmem:[#allocation3 + $0x190] sm:$0xff]
    %v428 = vld [vmem:[#allocation3 + $0x198] sm:$0xff]
    %v429 = vld [vmem:[#allocation3 + $0x1a0] sm:$0xff]
    %v430 = vld [vmem:[#allocation3 + $0x1a8] sm:$0xff]
    %v431 = vld [vmem:[#allocation3 + $0x1b0] sm:$0xff]
    %v432 = vld [vmem:[#allocation3 + $0x1b8] sm:$0xff]
    %v433 = vld [vmem:[#allocation3 + $0x1c0] sm:$0xff]
    %v434 = vld [vmem:[#allocation3 + $0x1c8] sm:$0xff]
    %v435 = vld [vmem:[#allocation3 + $0x1d0] sm:$0xff]
    %v436 = vld [vmem:[#allocation3 + $0x1d8] sm:$0xff]
    %v437 = vld [vmem:[#allocation3 + $0x1e0] sm:$0xff]
    %v438 = vld [vmem:[#allocation3 + $0x1e8] sm:$0xff]
    %v439 = vld [vmem:[#allocation3 + $0x1f0] sm:$0xff]
    %v440 = vld [vmem:[#allocation3 + $0x1f8] sm:$0xff]
    %v441 = vld [vmem:[#allocation3 + $0x200] sm:$0xff]
    %v442 = vld [vmem:[#allocation3 + $0x208] sm:$0xff]
    %v443 = vld [vmem:[#allocation3 + $0x210] sm:$0xff]
    %v444 = vld [vmem:[#allocation3 + $0x218] sm:$0xff]
    %v445 = vld [vmem:[#allocation3 + $0x220] sm:$0xff]
    %v446 = vld [vmem:[#allocation3 + $0x228] sm:$0xff]
    %v447 = vld [vmem:[#allocation3 + $0x230] sm:$0xff]
    %v448 = vld [vmem:[#allocation3 + $0x238] sm:$0xff]
    %v449 = vld [vmem:[#allocation3 + $0x240] sm:$0xff]
    %v450 = vld [vmem:[#allocation3 + $0x248] sm:$0xff]
    %v451 = vld [vmem:[#allocation3 + $0x250] sm:$0xff]
    %v452 = vld [vmem:[#allocation3 + $0x258] sm:$0xff]
    %v453 = vld [vmem:[#allocation3 + $0x260] sm:$0xff]
    %v454 = vld [vmem:[#allocation3 + $0x268] sm:$0xff]
    %v455 = vld [vmem:[#allocation3 + $0x270] sm:$0xff]
    %v456 = vld [vmem:[#allocation3 + $0x278] sm:$0xff]
    %v457 = vld [vmem:[#allocation3 + $0x280] sm:$0xff]
    %v458 = vld [vmem:[#allocation3 + $0x288] sm:$0xff]
    %v459 = vld [vmem:[#allocation3 + $0x290] sm:$0xff]
    %v460 = vld [vmem:[#allocation3 + $0x298] sm:$0xff]
    %v461 = vld [vmem:[#allocation3 + $0x2a0] sm:$0xff]
    %v462 = vld [vmem:[#allocation3 + $0x2a8] sm:$0xff]
    %v463 = vld [vmem:[#allocation3 + $0x2b0] sm:$0xff]
    %v464 = vld [vmem:[#allocation3 + $0x2b8] sm:$0xff]
    %v465 = vld [vmem:[#allocation3 + $0x2c0] sm:$0xff]
    %v466 = vld [vmem:[#allocation3 + $0x2c8] sm:$0xff]
    %v467 = vld [vmem:[#allocation3 + $0x2d0] sm:$0xff]
    %v468 = vld [vmem:[#allocation3 + $0x2d8] sm:$0xff]
    %v469 = vld [vmem:[#allocation3 + $0x2e0] sm:$0xff]
    %v470 = vld [vmem:[#allocation3 + $0x2e8] sm:$0xff]
    %v471 = vld [vmem:[#allocation3 + $0x2f0] sm:$0xff]
    %v472 = vld [vmem:[#allocation3 + $0x2f8] sm:$0xff]
    %v473 = vld [vmem:[#allocation3 + $0x300] sm:$0xff]
    %v474 = vld [vmem:[#allocation3 + $0x308] sm:$0xff]
    %v475 = vld [vmem:[#allocation3 + $0x310] sm:$0xff]
    %v476 = vld [vmem:[#allocation3 + $0x318] sm:$0xff]
    %v477 = vld [vmem:[#allocation3 + $0x320] sm:$0xff]
    %v478 = vld [vmem:[#allocation3 + $0x328] sm:$0xff]
    %v479 = vld [vmem:[#allocation3 + $0x330] sm:$0xff]
    %v480 = vld [vmem:[#allocation3 + $0x338] sm:$0xff]
    %v481 = vld [vmem:[#allocation3 + $0x340] sm:$0xff]
    %v482 = vld [vmem:[#allocation3 + $0x348] sm:$0xff]
    %v483 = vld [vmem:[#allocation3 + $0x350] sm:$0xff]
    %v484 = vld [vmem:[#allocation3 + $0x358] sm:$0xff]
    %v485 = vld [vmem:[#allocation3 + $0x360] sm:$0xff]
    %v486 = vld [vmem:[#allocation3 + $0x368] sm:$0xff]
    %v487 = vld [vmem:[#allocation3 + $0x370] sm:$0xff]
    %v488 = vld [vmem:[#allocation3 + $0x378] sm:$0xff]
    %v489 = vld [vmem:[#allocation3 + $0x380] sm:$0xff]
    %v490 = vld [vmem:[#allocation3 + $0x388] sm:$0xff]
    %v491 = vld [vmem:[#allocation3 + $0x390] sm:$0xff]
    %v492 = vld [vmem:[#allocation3 + $0x398] sm:$0xff]
    %v493 = vld [vmem:[#allocation3 + $0x3a0] sm:$0xff]
    %v494 = vld [vmem:[#allocation3 + $0x3a8] sm:$0xff]
    %v495 = vld [vmem:[#allocation3 + $0x3b0] sm:$0xff]
    %v496 = vld [vmem:[#allocation3 + $0x3b8] sm:$0xff]
    %v497 = vld [vmem:[#allocation3 + $0x3c0] sm:$0xff]
    %v498 = vld [vmem:[#allocation3 + $0x3c8] sm:$0xff]
    %v499 = vld [vmem:[#allocation3 + $0x3d0] sm:$0xff]
    %v500 = vld [vmem:[#allocation3 + $0x3d8] sm:$0xff]
    %v501 = vld [vmem:[#allocation3 + $0x3e0] sm:$0xff]
    %v502 = vld [vmem:[#allocation3 + $0x3e8] sm:$0xff]
    %v503 = vld [vmem:[#allocation3 + $0x3f0] sm:$0xff]
    %v504 = vld [vmem:[#allocation3 + $0x3f8] sm:$0xff]
    %v505 = vunpack.c.l.s8.bf16 %v377
    %v506 = vunpack.c.l.s8.bf16 %v378
    %v507 = vunpack.c.l.s8.bf16 %v379
    %v508 = vunpack.c.l.s8.bf16 %v380
    %v509 = vunpack.c.l.s8.bf16 %v381
    %v510 = vunpack.c.l.s8.bf16 %v382
    %v511 = vunpack.c.l.s8.bf16 %v383
    %v512 = vunpack.c.l.s8.bf16 %v384
    %v513 = vunpack.c.h.s8.bf16 %v377
    %v514 = vunpack.c.h.s8.bf16 %v378
    %v515 = vunpack.c.h.s8.bf16 %v379
    %v516 = vunpack.c.h.s8.bf16 %v380
    %v517 = vunpack.c.h.s8.bf16 %v381
    %v518 = vunpack.c.h.s8.bf16 %v382
    %v519 = vunpack.c.h.s8.bf16 %v383
    %v520 = vunpack.c.h.s8.bf16 %v384
    %v521 = vunpack.c.l.s8.bf16 %v385
    %v522 = vunpack.c.l.s8.bf16 %v386
    %v523 = vunpack.c.l.s8.bf16 %v387
    %v524 = vunpack.c.l.s8.bf16 %v388
    %v525 = vunpack.c.l.s8.bf16 %v389
    %v526 = vunpack.c.l.s8.bf16 %v390
    %v527 = vunpack.c.l.s8.bf16 %v391
    %v528 = vunpack.c.l.s8.bf16 %v392
    %v529 = vunpack.c.h.s8.bf16 %v385
    %v530 = vunpack.c.h.s8.bf16 %v386
    %v531 = vunpack.c.h.s8.bf16 %v387
    %v532 = vunpack.c.h.s8.bf16 %v388
    %v533 = vunpack.c.h.s8.bf16 %v389
    %v534 = vunpack.c.h.s8.bf16 %v390
    %v535 = vunpack.c.h.s8.bf16 %v391
    %v536 = vunpack.c.h.s8.bf16 %v392
    %v537 = vunpack.c.l.s8.bf16 %v393
    %v538 = vunpack.c.l.s8.bf16 %v394
    %v539 = vunpack.c.l.s8.bf16 %v395
    %v540 = vunpack.c.l.s8.bf16 %v396
    %v541 = vunpack.c.l.s8.bf16 %v397
    %v542 = vunpack.c.l.s8.bf16 %v398
    %v543 = vunpack.c.l.s8.bf16 %v399
    %v544 = vunpack.c.l.s8.bf16 %v400
    %v545 = vunpack.c.h.s8.bf16 %v393
    %v546 = vunpack.c.h.s8.bf16 %v394
    %v547 = vunpack.c.h.s8.bf16 %v395
    %v548 = vunpack.c.h.s8.bf16 %v396
    %v549 = vunpack.c.h.s8.bf16 %v397
    %v550 = vunpack.c.h.s8.bf16 %v398
    %v551 = vunpack.c.h.s8.bf16 %v399
    %v552 = vunpack.c.h.s8.bf16 %v400
    %v553 = vunpack.c.l.s8.bf16 %v401
    %v554 = vunpack.c.l.s8.bf16 %v402
    %v555 = vunpack.c.l.s8.bf16 %v403
    %v556 = vunpack.c.l.s8.bf16 %v404
    %v557 = vunpack.c.l.s8.bf16 %v405
    %v558 = vunpack.c.l.s8.bf16 %v406
    %v559 = vunpack.c.l.s8.bf16 %v407
    %v560 = vunpack.c.l.s8.bf16 %v408
    %v561 = vunpack.c.h.s8.bf16 %v401
    %v562 = vunpack.c.h.s8.bf16 %v402
    %v563 = vunpack.c.h.s8.bf16 %v403
    %v564 = vunpack.c.h.s8.bf16 %v404
    %v565 = vunpack.c.h.s8.bf16 %v405
    %v566 = vunpack.c.h.s8.bf16 %v406
    %v567 = vunpack.c.h.s8.bf16 %v407
    %v568 = vunpack.c.h.s8.bf16 %v408
    %v569 = vunpack.c.l.s8.bf16 %v409
    %v570 = vunpack.c.l.s8.bf16 %v410
    %v571 = vunpack.c.l.s8.bf16 %v411
    %v572 = vunpack.c.l.s8.bf16 %v412
    %v573 = vunpack.c.l.s8.bf16 %v413
    %v574 = vunpack.c.l.s8.bf16 %v414
    %v575 = vunpack.c.l.s8.bf16 %v415
    %v576 = vunpack.c.l.s8.bf16 %v416
    %v577 = vunpack.c.h.s8.bf16 %v409
    %v578 = vunpack.c.h.s8.bf16 %v410
    %v579 = vunpack.c.h.s8.bf16 %v411
    %v580 = vunpack.c.h.s8.bf16 %v412
    %v581 = vunpack.c.h.s8.bf16 %v413
    %v582 = vunpack.c.h.s8.bf16 %v414
    %v583 = vunpack.c.h.s8.bf16 %v415
    %v584 = vunpack.c.h.s8.bf16 %v416
    %v585 = vunpack.c.l.s8.bf16 %v417
    %v586 = vunpack.c.l.s8.bf16 %v418
    %v587 = vunpack.c.l.s8.bf16 %v419
    %v588 = vunpack.c.l.s8.bf16 %v420
    %v589 = vunpack.c.l.s8.bf16 %v421
    %v590 = vunpack.c.l.s8.bf16 %v422
    %v591 = vunpack.c.l.s8.bf16 %v423
    %v592 = vunpack.c.l.s8.bf16 %v424
    %v593 = vunpack.c.h.s8.bf16 %v417
    %v594 = vunpack.c.h.s8.bf16 %v418
    %v595 = vunpack.c.h.s8.bf16 %v419
    %v596 = vunpack.c.h.s8.bf16 %v420
    %v597 = vunpack.c.h.s8.bf16 %v421
    %v598 = vunpack.c.h.s8.bf16 %v422
    %v599 = vunpack.c.h.s8.bf16 %v423
    %v600 = vunpack.c.h.s8.bf16 %v424
    %v601 = vunpack.c.l.s8.bf16 %v425
    %v602 = vunpack.c.l.s8.bf16 %v426
    %v603 = vunpack.c.l.s8.bf16 %v427
    %v604 = vunpack.c.l.s8.bf16 %v428
    %v605 = vunpack.c.l.s8.bf16 %v429
    %v606 = vunpack.c.l.s8.bf16 %v430
    %v607 = vunpack.c.l.s8.bf16 %v431
    %v608 = vunpack.c.l.s8.bf16 %v432
    %v609 = vunpack.c.h.s8.bf16 %v425
    %v610 = vunpack.c.h.s8.bf16 %v426
    %v611 = vunpack.c.h.s8.bf16 %v427
    %v612 = vunpack.c.h.s8.bf16 %v428
    %v613 = vunpack.c.h.s8.bf16 %v429
    %v614 = vunpack.c.h.s8.bf16 %v430
    %v615 = vunpack.c.h.s8.bf16 %v431
    %v616 = vunpack.c.h.s8.bf16 %v432
    %v617 = vunpack.c.l.s8.bf16 %v433
    %v618 = vunpack.c.l.s8.bf16 %v434
    %v619 = vunpack.c.l.s8.bf16 %v435
    %v620 = vunpack.c.l.s8.bf16 %v436
    %v621 = vunpack.c.l.s8.bf16 %v437
    %v622 = vunpack.c.l.s8.bf16 %v438
    %v623 = vunpack.c.l.s8.bf16 %v439
    %v624 = vunpack.c.l.s8.bf16 %v440
    %v625 = vunpack.c.h.s8.bf16 %v433
    %v626 = vunpack.c.h.s8.bf16 %v434
    %v627 = vunpack.c.h.s8.bf16 %v435
    %v628 = vunpack.c.h.s8.bf16 %v436
    %v629 = vunpack.c.h.s8.bf16 %v437
    %v630 = vunpack.c.h.s8.bf16 %v438
    %v631 = vunpack.c.h.s8.bf16 %v439
    %v632 = vunpack.c.h.s8.bf16 %v440
    %v633 = vunpack.c.l.s8.bf16 %v441
    %v634 = vunpack.c.l.s8.bf16 %v442
    %v635 = vunpack.c.l.s8.bf16 %v443
    %v636 = vunpack.c.l.s8.bf16 %v444
    %v637 = vunpack.c.l.s8.bf16 %v445
    %v638 = vunpack.c.l.s8.bf16 %v446
    %v639 = vunpack.c.l.s8.bf16 %v447
    %v640 = vunpack.c.l.s8.bf16 %v448
    %v641 = vunpack.c.h.s8.bf16 %v441
    %v642 = vunpack.c.h.s8.bf16 %v442
    %v643 = vunpack.c.h.s8.bf16 %v443
    %v644 = vunpack.c.h.s8.bf16 %v444
    %v645 = vunpack.c.h.s8.bf16 %v445
    %v646 = vunpack.c.h.s8.bf16 %v446
    %v647 = vunpack.c.h.s8.bf16 %v447
    %v648 = vunpack.c.h.s8.bf16 %v448
    %v649 = vunpack.c.l.s8.bf16 %v449
    %v650 = vunpack.c.l.s8.bf16 %v450
    %v651 = vunpack.c.l.s8.bf16 %v451
    %v652 = vunpack.c.l.s8.bf16 %v452
    %v653 = vunpack.c.l.s8.bf16 %v453
    %v654 = vunpack.c.l.s8.bf16 %v454
    %v655 = vunpack.c.l.s8.bf16 %v455
    %v656 = vunpack.c.l.s8.bf16 %v456
    %v657 = vunpack.c.h.s8.bf16 %v449
    %v658 = vunpack.c.h.s8.bf16 %v450
    %v659 = vunpack.c.h.s8.bf16 %v451
    %v660 = vunpack.c.h.s8.bf16 %v452
    %v661 = vunpack.c.h.s8.bf16 %v453
    %v662 = vunpack.c.h.s8.bf16 %v454
    %v663 = vunpack.c.h.s8.bf16 %v455
    %v664 = vunpack.c.h.s8.bf16 %v456
    %v665 = vunpack.c.l.s8.bf16 %v457
    %v666 = vunpack.c.l.s8.bf16 %v458
    %v667 = vunpack.c.l.s8.bf16 %v459
    %v668 = vunpack.c.l.s8.bf16 %v460
    %v669 = vunpack.c.l.s8.bf16 %v461
    %v670 = vunpack.c.l.s8.bf16 %v462
    %v671 = vunpack.c.l.s8.bf16 %v463
    %v672 = vunpack.c.l.s8.bf16 %v464
    %v673 = vunpack.c.h.s8.bf16 %v457
    %v674 = vunpack.c.h.s8.bf16 %v458
    %v675 = vunpack.c.h.s8.bf16 %v459
    %v676 = vunpack.c.h.s8.bf16 %v460
    %v677 = vunpack.c.h.s8.bf16 %v461
    %v678 = vunpack.c.h.s8.bf16 %v462
    %v679 = vunpack.c.h.s8.bf16 %v463
    %v680 = vunpack.c.h.s8.bf16 %v464
    %v681 = vunpack.c.l.s8.bf16 %v465
    %v682 = vunpack.c.l.s8.bf16 %v466
    %v683 = vunpack.c.l.s8.bf16 %v467
    %v684 = vunpack.c.l.s8.bf16 %v468
    %v685 = vunpack.c.l.s8.bf16 %v469
    %v686 = vunpack.c.l.s8.bf16 %v470
    %v687 = vunpack.c.l.s8.bf16 %v471
    %v688 = vunpack.c.l.s8.bf16 %v472
    %v689 = vunpack.c.h.s8.bf16 %v465
    %v690 = vunpack.c.h.s8.bf16 %v466
    %v691 = vunpack.c.h.s8.bf16 %v467
    %v692 = vunpack.c.h.s8.bf16 %v468
    %v693 = vunpack.c.h.s8.bf16 %v469
    %v694 = vunpack.c.h.s8.bf16 %v470
    %v695 = vunpack.c.h.s8.bf16 %v471
    %v696 = vunpack.c.h.s8.bf16 %v472
    %v697 = vunpack.c.l.s8.bf16 %v473
    %v698 = vunpack.c.l.s8.bf16 %v474
    %v699 = vunpack.c.l.s8.bf16 %v475
    %v700 = vunpack.c.l.s8.bf16 %v476
    %v701 = vunpack.c.l.s8.bf16 %v477
    %v702 = vunpack.c.l.s8.bf16 %v478
    %v703 = vunpack.c.l.s8.bf16 %v479
    %v704 = vunpack.c.l.s8.bf16 %v480
    %v705 = vunpack.c.h.s8.bf16 %v473
    %v706 = vunpack.c.h.s8.bf16 %v474
    %v707 = vunpack.c.h.s8.bf16 %v475
    %v708 = vunpack.c.h.s8.bf16 %v476
    %v709 = vunpack.c.h.s8.bf16 %v477
    %v710 = vunpack.c.h.s8.bf16 %v478
    %v711 = vunpack.c.h.s8.bf16 %v479
    %v712 = vunpack.c.h.s8.bf16 %v480
    %v713 = vunpack.c.l.s8.bf16 %v481
    %v714 = vunpack.c.l.s8.bf16 %v482
    %v715 = vunpack.c.l.s8.bf16 %v483
    %v716 = vunpack.c.l.s8.bf16 %v484
    %v717 = vunpack.c.l.s8.bf16 %v485
    %v718 = vunpack.c.l.s8.bf16 %v486
    %v719 = vunpack.c.l.s8.bf16 %v487
    %v720 = vunpack.c.l.s8.bf16 %v488
    %v721 = vunpack.c.h.s8.bf16 %v481
    %v722 = vunpack.c.h.s8.bf16 %v482
    %v723 = vunpack.c.h.s8.bf16 %v483
    %v724 = vunpack.c.h.s8.bf16 %v484
    %v725 = vunpack.c.h.s8.bf16 %v485
    %v726 = vunpack.c.h.s8.bf16 %v486
    %v727 = vunpack.c.h.s8.bf16 %v487
    %v728 = vunpack.c.h.s8.bf16 %v488
    %v729 = vunpack.c.l.s8.bf16 %v489
    %v730 = vunpack.c.l.s8.bf16 %v490
    %v731 = vunpack.c.l.s8.bf16 %v491
    %v732 = vunpack.c.l.s8.bf16 %v492
    %v733 = vunpack.c.l.s8.bf16 %v493
    %v734 = vunpack.c.l.s8.bf16 %v494
    %v735 = vunpack.c.l.s8.bf16 %v495
    %v736 = vunpack.c.l.s8.bf16 %v496
    %v737 = vunpack.c.h.s8.bf16 %v489
    %v738 = vunpack.c.h.s8.bf16 %v490
    %v739 = vunpack.c.h.s8.bf16 %v491
    %v740 = vunpack.c.h.s8.bf16 %v492
    %v741 = vunpack.c.h.s8.bf16 %v493
    %v742 = vunpack.c.h.s8.bf16 %v494
    %v743 = vunpack.c.h.s8.bf16 %v495
    %v744 = vunpack.c.h.s8.bf16 %v496
    %v745 = vunpack.c.l.s8.bf16 %v497
    %v746 = vunpack.c.l.s8.bf16 %v498
    %v747 = vunpack.c.l.s8.bf16 %v499
    %v748 = vunpack.c.l.s8.bf16 %v500
    %v749 = vunpack.c.l.s8.bf16 %v501
    %v750 = vunpack.c.l.s8.bf16 %v502
    %v751 = vunpack.c.l.s8.bf16 %v503
    %v752 = vunpack.c.l.s8.bf16 %v504
    %v753 = vunpack.c.h.s8.bf16 %v497
    %v754 = vunpack.c.h.s8.bf16 %v498
    %v755 = vunpack.c.h.s8.bf16 %v499
    %v756 = vunpack.c.h.s8.bf16 %v500
    %v757 = vunpack.c.h.s8.bf16 %v501
    %v758 = vunpack.c.h.s8.bf16 %v502
    %v759 = vunpack.c.h.s8.bf16 %v503
    %v760 = vunpack.c.h.s8.bf16 %v504
    %761 = vmatprep.subr.bf16.mxu0 %v506
    %762 = vmatpush1.bf16.msra.mxu0 %v505
    %763 = vmatprep.subr.bf16.mxu0 %v514
    %764 = vmatpush1.bf16.msra.mxu0 %v513
    %765 = vmatprep.subr.bf16.mxu0 %v522
    %766 = vmatpush1.bf16.msra.mxu0 %v521
    %767 = vmatprep.subr.bf16.mxu0 %v530
    %768 = vmatpush1.bf16.msra.mxu0 %v529
    %769 = vmatprep.subr.bf16.mxu0 %v538
    %770 = vmatpush1.bf16.msra.mxu0 %v537
    %771 = vmatprep.subr.bf16.mxu0 %v546
    %772 = vmatpush1.bf16.msra.mxu0 %v545
    %773 = vmatprep.subr.bf16.mxu0 %v554
    %774 = vmatpush1.bf16.msra.mxu0 %v553
    %775 = vmatprep.subr.bf16.mxu0 %v562
    %776 = vmatpush1.bf16.msra.mxu0 %v561
    %777 = vmatprep.subr.bf16.mxu0 %v570
    %778 = vmatpush1.bf16.msra.mxu0 %v569
    %779 = vmatprep.subr.bf16.mxu0 %v578
    %780 = vmatpush1.bf16.msra.mxu0 %v577
    %781 = vmatprep.subr.bf16.mxu0 %v586
    %782 = vmatpush1.bf16.msra.mxu0 %v585
    %783 = vmatprep.subr.bf16.mxu0 %v594
    %784 = vmatpush1.bf16.msra.mxu0 %v593
    %785 = vmatprep.subr.bf16.mxu0 %v602
    %786 = vmatpush1.bf16.msra.mxu0 %v601
    %787 = vmatprep.subr.bf16.mxu0 %v610
    %788 = vmatpush1.bf16.msra.mxu0 %v609
    %789 = vmatprep.subr.bf16.mxu0 %v618
    %790 = vmatpush1.bf16.msra.mxu0 %v617
    %791 = vmatprep.subr.bf16.mxu0 %v626
    %792 = vmatpush1.bf16.msra.mxu0 %v625
    %793 = vmatprep.mubr.bf16.mxu0 %v370
    %794 = vmatmul.mubr.bf16.gmra.mrb[0].mxu0 %v369
    %v795 = vpop.f32.mrb[0].mxu0
    %v796 = vadd.f32 0.0, %v795
    %v797 = vpop.f32.mrb[0].mxu0
    %v798 = vadd.f32 0.0, %v797
    %v799 = vpop.f32.mrb[0].mxu0
    %v800 = vpop.f32.mrb[0].mxu0
    %801 = vdwg.mxu0
    %802 = vmatprep.subr.bf16.mxu0 %v634
    %803 = vmatpush1.bf16.msra.mxu0 %v633
    %804 = vmatprep.subr.bf16.mxu0 %v642
    %805 = vmatpush1.bf16.msra.mxu0 %v641
    %806 = vmatprep.subr.bf16.mxu0 %v650
    %807 = vmatpush1.bf16.msra.mxu0 %v649
    %808 = vmatprep.subr.bf16.mxu0 %v658
    %809 = vmatpush1.bf16.msra.mxu0 %v657
    %810 = vmatprep.subr.bf16.mxu0 %v666
    %811 = vmatpush1.bf16.msra.mxu0 %v665
    %812 = vmatprep.subr.bf16.mxu0 %v674
    %813 = vmatpush1.bf16.msra.mxu0 %v673
    %814 = vmatprep.subr.bf16.mxu0 %v682
    %815 = vmatpush1.bf16.msra.mxu0 %v681
    %816 = vmatprep.subr.bf16.mxu0 %v690
    %817 = vmatpush1.bf16.msra.mxu0 %v689
    %818 = vmatprep.subr.bf16.mxu0 %v698
    %819 = vmatpush1.bf16.msra.mxu0 %v697
    %820 = vmatprep.subr.bf16.mxu0 %v706
    %821 = vmatpush1.bf16.msra.mxu0 %v705
    %822 = vmatprep.subr.bf16.mxu0 %v714
    %823 = vmatpush1.bf16.msra.mxu0 %v713
    %824 = vmatprep.subr.bf16.mxu0 %v722
    %825 = vmatpush1.bf16.msra.mxu0 %v721
    %826 = vmatprep.subr.bf16.mxu0 %v730
    %827 = vmatpush1.bf16.msra.mxu0 %v729
    %828 = vmatprep.subr.bf16.mxu0 %v738
    %829 = vmatpush1.bf16.msra.mxu0 %v737
    %830 = vmatprep.subr.bf16.mxu0 %v746
    %831 = vmatpush1.bf16.msra.mxu0 %v745
    %832 = vmatprep.subr.bf16.mxu0 %v754
    %833 = vmatpush1.bf16.msra.mxu0 %v753
    %834 = vmatprep.mubr.bf16.mxu0 %v372
    %835 = vmatmul.mubr.bf16.gmra.mrb[0].mxu0 %v371
    %v836 = vpop.f32.mrb[0].mxu0
    %v837 = vadd.f32 %v796, %v836
    %v838 = vpop.f32.mrb[0].mxu0
    %v839 = vadd.f32 %v798, %v838
    %v840 = vpop.f32.mrb[0].mxu0
    %v841 = vpop.f32.mrb[0].mxu0
    %842 = vdwg.mxu0
    %843 = vmatprep.subr.bf16.mxu0 %v508
    %844 = vmatpush1.bf16.msra.mxu0 %v507
    %845 = vmatprep.subr.bf16.mxu0 %v516
    %846 = vmatpush1.bf16.msra.mxu0 %v515
    %847 = vmatprep.subr.bf16.mxu0 %v524
    %848 = vmatpush1.bf16.msra.mxu0 %v523
    %849 = vmatprep.subr.bf16.mxu0 %v532
    %850 = vmatpush1.bf16.msra.mxu0 %v531
    %851 = vmatprep.subr.bf16.mxu0 %v540
    %852 = vmatpush1.bf16.msra.mxu0 %v539
    %853 = vmatprep.subr.bf16.mxu0 %v548
    %854 = vmatpush1.bf16.msra.mxu0 %v547
    %855 = vmatprep.subr.bf16.mxu0 %v556
    %856 = vmatpush1.bf16.msra.mxu0 %v555
    %857 = vmatprep.subr.bf16.mxu0 %v564
    %858 = vmatpush1.bf16.msra.mxu0 %v563
    %859 = vmatprep.subr.bf16.mxu0 %v572
    %860 = vmatpush1.bf16.msra.mxu0 %v571
    %861 = vmatprep.subr.bf16.mxu0 %v580
    %862 = vmatpush1.bf16.msra.mxu0 %v579
    %863 = vmatprep.subr.bf16.mxu0 %v588
    %864 = vmatpush1.bf16.msra.mxu0 %v587
    %865 = vmatprep.subr.bf16.mxu0 %v596
    %866 = vmatpush1.bf16.msra.mxu0 %v595
    %867 = vmatprep.subr.bf16.mxu0 %v604
    %868 = vmatpush1.bf16.msra.mxu0 %v603
    %869 = vmatprep.subr.bf16.mxu0 %v612
    %870 = vmatpush1.bf16.msra.mxu0 %v611
    %871 = vmatprep.subr.bf16.mxu0 %v620
    %872 = vmatpush1.bf16.msra.mxu0 %v619
    %873 = vmatprep.subr.bf16.mxu0 %v628
    %874 = vmatpush1.bf16.msra.mxu0 %v627
    %875 = vmatprep.mubr.bf16.mxu0 %v370
    %876 = vmatmul.mubr.bf16.gmra.mrb[0].mxu0 %v369
    %v877 = vpop.f32.mrb[0].mxu0
    %v878 = vadd.f32 0.0, %v877
    %v879 = vpop.f32.mrb[0].mxu0
    %v880 = vadd.f32 0.0, %v879
    %v881 = vpop.f32.mrb[0].mxu0
    %v882 = vpop.f32.mrb[0].mxu0
    %883 = vdwg.mxu0
    %884 = vmatprep.subr.bf16.mxu0 %v636
    %885 = vmatpush1.bf16.msra.mxu0 %v635
    %886 = vmatprep.subr.bf16.mxu0 %v644
    %887 = vmatpush1.bf16.msra.mxu0 %v643
    %888 = vmatprep.subr.bf16.mxu0 %v652
    %889 = vmatpush1.bf16.msra.mxu0 %v651
    %890 = vmatprep.subr.bf16.mxu0 %v660
    %891 = vmatpush1.bf16.msra.mxu0 %v659
    %892 = vmatprep.subr.bf16.mxu0 %v668
    %893 = vmatpush1.bf16.msra.mxu0 %v667
    %894 = vmatprep.subr.bf16.mxu0 %v676
    %895 = vmatpush1.bf16.msra.mxu0 %v675
    %896 = vmatprep.subr.bf16.mxu0 %v684
    %897 = vmatpush1.bf16.msra.mxu0 %v683
    %898 = vmatprep.subr.bf16.mxu0 %v692
    %899 = vmatpush1.bf16.msra.mxu0 %v691
    %900 = vmatprep.subr.bf16.mxu0 %v700
    %901 = vmatpush1.bf16.msra.mxu0 %v699
    %902 = vmatprep.subr.bf16.mxu0 %v708
    %903 = vmatpush1.bf16.msra.mxu0 %v707
    %904 = vmatprep.subr.bf16.mxu0 %v716
    %905 = vmatpush1.bf16.msra.mxu0 %v715
    %906 = vmatprep.subr.bf16.mxu0 %v724
    %907 = vmatpush1.bf16.msra.mxu0 %v723
    %908 = vmatprep.subr.bf16.mxu0 %v732
    %909 = vmatpush1.bf16.msra.mxu0 %v731
    %910 = vmatprep.subr.bf16.mxu0 %v740
    %911 = vmatpush1.bf16.msra.mxu0 %v739
    %912 = vmatprep.subr.bf16.mxu0 %v748
    %913 = vmatpush1.bf16.msra.mxu0 %v747
    %914 = vmatprep.subr.bf16.mxu0 %v756
    %915 = vmatpush1.bf16.msra.mxu0 %v755
    %916 = vmatprep.mubr.bf16.mxu0 %v372
    %917 = vmatmul.mubr.bf16.gmra.mrb[0].mxu0 %v371
    %v918 = vpop.f32.mrb[0].mxu0
    %v919 = vadd.f32 %v878, %v918
    %v920 = vpop.f32.mrb[0].mxu0
    %v921 = vadd.f32 %v880, %v920
    %v922 = vpop.f32.mrb[0].mxu0
    %v923 = vpop.f32.mrb[0].mxu0
    %924 = vdwg.mxu0
    %925 = vmatprep.subr.bf16.mxu0 %v510
    %926 = vmatpush1.bf16.msra.mxu0 %v509
    %927 = vmatprep.subr.bf16.mxu0 %v518
    %928 = vmatpush1.bf16.msra.mxu0 %v517
    %929 = vmatprep.subr.bf16.mxu0 %v526
    %930 = vmatpush1.bf16.msra.mxu0 %v525
    %931 = vmatprep.subr.bf16.mxu0 %v534
    %932 = vmatpush1.bf16.msra.mxu0 %v533
    %933 = vmatprep.subr.bf16.mxu0 %v542
    %934 = vmatpush1.bf16.msra.mxu0 %v541
    %935 = vmatprep.subr.bf16.mxu0 %v550
    %936 = vmatpush1.bf16.msra.mxu0 %v549
    %937 = vmatprep.subr.bf16.mxu0 %v558
    %938 = vmatpush1.bf16.msra.mxu0 %v557
    %939 = vmatprep.subr.bf16.mxu0 %v566
    %940 = vmatpush1.bf16.msra.mxu0 %v565
    %941 = vmatprep.subr.bf16.mxu0 %v574
    %942 = vmatpush1.bf16.msra.mxu0 %v573
    %943 = vmatprep.subr.bf16.mxu0 %v582
    %944 = vmatpush1.bf16.msra.mxu0 %v581
    %945 = vmatprep.subr.bf16.mxu0 %v590
    %946 = vmatpush1.bf16.msra.mxu0 %v589
    %947 = vmatprep.subr.bf16.mxu0 %v598
    %948 = vmatpush1.bf16.msra.mxu0 %v597
    %949 = vmatprep.subr.bf16.mxu0 %v606
    %950 = vmatpush1.bf16.msra.mxu0 %v605
    %951 = vmatprep.subr.bf16.mxu0 %v614
    %952 = vmatpush1.bf16.msra.mxu0 %v613
    %953 = vmatprep.subr.bf16.mxu0 %v622
    %954 = vmatpush1.bf16.msra.mxu0 %v621
    %955 = vmatprep.subr.bf16.mxu0 %v630
    %956 = vmatpush1.bf16.msra.mxu0 %v629
    %957 = vmatprep.mubr.bf16.mxu0 %v370
    %958 = vmatmul.mubr.bf16.gmra.mrb[0].mxu0 %v369
    %v959 = vpop.f32.mrb[0].mxu0
    %v960 = vadd.f32 0.0, %v959
    %v961 = vpop.f32.mrb[0].mxu0
    %v962 = vadd.f32 0.0, %v961
    %v963 = vpop.f32.mrb[0].mxu0
    %v964 = vpop.f32.mrb[0].mxu0
    %965 = vdwg.mxu0
    %966 = vmatprep.subr.bf16.mxu0 %v638
    %967 = vmatpush1.bf16.msra.mxu0 %v637
    %968 = vmatprep.subr.bf16.mxu0 %v646
    %969 = vmatpush1.bf16.msra.mxu0 %v645
    %970 = vmatprep.subr.bf16.mxu0 %v654
    %971 = vmatpush1.bf16.msra.mxu0 %v653
    %972 = vmatprep.subr.bf16.mxu0 %v662
    %973 = vmatpush1.bf16.msra.mxu0 %v661
    %974 = vmatprep.subr.bf16.mxu0 %v670
    %975 = vmatpush1.bf16.msra.mxu0 %v669
    %976 = vmatprep.subr.bf16.mxu0 %v678
    %977 = vmatpush1.bf16.msra.mxu0 %v677
    %978 = vmatprep.subr.bf16.mxu0 %v686
    %979 = vmatpush1.bf16.msra.mxu0 %v685
    %980 = vmatprep.subr.bf16.mxu0 %v694
    %981 = vmatpush1.bf16.msra.mxu0 %v693
    %982 = vmatprep.subr.bf16.mxu0 %v702
    %983 = vmatpush1.bf16.msra.mxu0 %v701
    %984 = vmatprep.subr.bf16.mxu0 %v710
    %985 = vmatpush1.bf16.msra.mxu0 %v709
    %986 = vmatprep.subr.bf16.mxu0 %v718
    %987 = vmatpush1.bf16.msra.mxu0 %v717
    %988 = vmatprep.subr.bf16.mxu0 %v726
    %989 = vmatpush1.bf16.msra.mxu0 %v725
    %990 = vmatprep.subr.bf16.mxu0 %v734
    %991 = vmatpush1.bf16.msra.mxu0 %v733
    %992 = vmatprep.subr.bf16.mxu0 %v742
    %993 = vmatpush1.bf16.msra.mxu0 %v741
    %994 = vmatprep.subr.bf16.mxu0 %v750
    %995 = vmatpush1.bf16.msra.mxu0 %v749
    %996 = vmatprep.subr.bf16.mxu0 %v758
    %997 = vmatpush1.bf16.msra.mxu0 %v757
    %998 = vmatprep.mubr.bf16.mxu0 %v372
    %999 = vmatmul.mubr.bf16.gmra.mrb[0].mxu0 %v371
    %v1000 = vpop.f32.mrb[0].mxu0
    %v1001 = vadd.f32 %v960, %v1000
    %v1002 = vpop.f32.mrb[0].mxu0
    %v1003 = vadd.f32 %v962, %v1002
    %v1004 = vpop.f32.mrb[0].mxu0
    %v1005 = vpop.f32.mrb[0].mxu0
    %1006 = vdwg.mxu0
    %1007 = vmatprep.subr.bf16.mxu0 %v512
    %1008 = vmatpush1.bf16.msra.mxu0 %v511
    %1009 = vmatprep.subr.bf16.mxu0 %v520
    %1010 = vmatpush1.bf16.msra.mxu0 %v519
    %1011 = vmatprep.subr.bf16.mxu0 %v528
    %1012 = vmatpush1.bf16.msra.mxu0 %v527
    %1013 = vmatprep.subr.bf16.mxu0 %v536
    %1014 = vmatpush1.bf16.msra.mxu0 %v535
    %1015 = vmatprep.subr.bf16.mxu0 %v544
    %1016 = vmatpush1.bf16.msra.mxu0 %v543
    %1017 = vmatprep.subr.bf16.mxu0 %v552
    %1018 = vmatpush1.bf16.msra.mxu0 %v551
    %1019 = vmatprep.subr.bf16.mxu0 %v560
    %1020 = vmatpush1.bf16.msra.mxu0 %v559
    %1021 = vmatprep.subr.bf16.mxu0 %v568
    %1022 = vmatpush1.bf16.msra.mxu0 %v567
    %1023 = vmatprep.subr.bf16.mxu0 %v576
    %1024 = vmatpush1.bf16.msra.mxu0 %v575
    %1025 = vmatprep.subr.bf16.mxu0 %v584
    %1026 = vmatpush1.bf16.msra.mxu0 %v583
    %1027 = vmatprep.subr.bf16.mxu0 %v592
    %1028 = vmatpush1.bf16.msra.mxu0 %v591
    %1029 = vmatprep.subr.bf16.mxu0 %v600
    %1030 = vmatpush1.bf16.msra.mxu0 %v599
    %1031 = vmatprep.subr.bf16.mxu0 %v608
    %1032 = vmatpush1.bf16.msra.mxu0 %v607
    %1033 = vmatprep.subr.bf16.mxu0 %v616
    %1034 = vmatpush1.bf16.msra.mxu0 %v615
    %1035 = vmatprep.subr.bf16.mxu0 %v624
    %1036 = vmatpush1.bf16.msra.mxu0 %v623
    %1037 = vmatprep.subr.bf16.mxu0 %v632
    %1038 = vmatpush1.bf16.msra.mxu0 %v631
    %1039 = vmatprep.mubr.bf16.mxu0 %v370
    %1040 = vmatmul.mubr.bf16.gmra.mrb[0].mxu0 %v369
    %v1041 = vpop.f32.mrb[0].mxu0
    %v1042 = vadd.f32 0.0, %v1041
    %v1043 = vpop.f32.mrb[0].mxu0
    %v1044 = vadd.f32 0.0, %v1043
    %v1045 = vpop.f32.mrb[0].mxu0
    %v1046 = vpop.f32.mrb[0].mxu0
    %1047 = vdwg.mxu0
    %1048 = vmatprep.subr.bf16.mxu0 %v640
    %1049 = vmatpush1.bf16.msra.mxu0 %v639
    %1050 = vmatprep.subr.bf16.mxu0 %v648
    %1051 = vmatpush1.bf16.msra.mxu0 %v647
    %1052 = vmatprep.subr.bf16.mxu0 %v656
    %1053 = vmatpush1.bf16.msra.mxu0 %v655
    %1054 = vmatprep.subr.bf16.mxu0 %v664
    %1055 = vmatpush1.bf16.msra.mxu0 %v663
    %1056 = vmatprep.subr.bf16.mxu0 %v672
    %1057 = vmatpush1.bf16.msra.mxu0 %v671
    %1058 = vmatprep.subr.bf16.mxu0 %v680
    %1059 = vmatpush1.bf16.msra.mxu0 %v679
    %1060 = vmatprep.subr.bf16.mxu0 %v688
    %1061 = vmatpush1.bf16.msra.mxu0 %v687
    %1062 = vmatprep.subr.bf16.mxu0 %v696
    %1063 = vmatpush1.bf16.msra.mxu0 %v695
    %1064 = vmatprep.subr.bf16.mxu0 %v704
    %1065 = vmatpush1.bf16.msra.mxu0 %v703
    %1066 = vmatprep.subr.bf16.mxu0 %v712
    %1067 = vmatpush1.bf16.msra.mxu0 %v711
    %1068 = vmatprep.subr.bf16.mxu0 %v720
    %1069 = vmatpush1.bf16.msra.mxu0 %v719
    %1070 = vmatprep.subr.bf16.mxu0 %v728
    %1071 = vmatpush1.bf16.msra.mxu0 %v727
    %1072 = vmatprep.subr.bf16.mxu0 %v736
    %1073 = vmatpush1.bf16.msra.mxu0 %v735
    %1074 = vmatprep.subr.bf16.mxu0 %v744
    %1075 = vmatpush1.bf16.msra.mxu0 %v743
    %1076 = vmatprep.subr.bf16.mxu0 %v752
    %1077 = vmatpush1.bf16.msra.mxu0 %v751
    %1078 = vmatprep.subr.bf16.mxu0 %v760
    %1079 = vmatpush1.bf16.msra.mxu0 %v759
    %1080 = vmatprep.mubr.bf16.mxu0 %v372
    %1081 = vmatmul.mubr.bf16.gmra.mrb[0].mxu0 %v371
    %v1082 = vpop.f32.mrb[0].mxu0
    %v1083 = vadd.f32 %v1042, %v1082
    %v1084 = vpop.f32.mrb[0].mxu0
    %v1085 = vadd.f32 %v1044, %v1084
    %v1086 = vpop.f32.mrb[0].mxu0
    %v1087 = vpop.f32.mrb[0].mxu0
    %1088 = vdwg.mxu0
    %v1089 = vld [vmem:[#allocation19] sm:$0xff]
    %v1091 = vlaneseq
    %v1092 = vshrl.u32 %v1091, 7
    %v1093 = vsub.s32 0, %v1092
    %v1094 = vrot.slane %v1089, %v1093
    %v1095 = vlaneseq
    %v1096 = vshrl.u32 %v1095, 7
    %v1097 = vsub.s32 1, %v1096
    %v1098 = vrot.slane %v1089, %v1097
    %v1099 = vlaneseq
    %v1100 = vshrl.u32 %v1099, 7
    %v1101 = vsub.s32 2, %v1100
    %v1102 = vrot.slane %v1089, %v1101
    %v1103 = vlaneseq
    %v1104 = vshrl.u32 %v1103, 7
    %v1105 = vsub.s32 3, %v1104
    %v1106 = vrot.slane %v1089, %v1105
    %v1107 = vlaneseq
    %v1108 = vshrl.u32 %v1107, 7
    %v1109 = vsub.s32 4, %v1108
    %v1110 = vrot.slane %v1089, %v1109
    %v1111 = vlaneseq
    %v1112 = vshrl.u32 %v1111, 7
    %v1113 = vsub.s32 5, %v1112
    %v1114 = vrot.slane %v1089, %v1113
    %v1115 = vlaneseq
    %v1116 = vshrl.u32 %v1115, 7
    %v1117 = vsub.s32 6, %v1116
    %v1118 = vrot.slane %v1089, %v1117
    %v1119 = vlaneseq
    %v1120 = vshrl.u32 %v1119, 7
    %v1121 = vsub.s32 7, %v1120
    %v1122 = vrot.slane %v1089, %v1121
    %v1131 = vmul.f32 %v837, %v1094
    %v1132 = vmul.f32 %v839, %v1098
    %v1133 = vmul.f32 %v919, %v1102
    %v1134 = vmul.f32 %v921, %v1106
    %v1135 = vmul.f32 %v1001, %v1110
    %v1136 = vmul.f32 %v1003, %v1114
    %v1137 = vmul.f32 %v1083, %v1118
    %v1138 = vmul.f32 %v1085, %v1122
    %v1139 = vld [vmem:[#allocation13] sm:$0xff]
    %v1141 = vlaneseq
    %v1142 = vshrl.u32 %v1141, 7
    %v1143 = vsub.s32 0, %v1142
    %v1144 = vrot.slane %v1139, %v1143
    %v1145 = vlaneseq
    %v1146 = vshrl.u32 %v1145, 7
    %v1147 = vsub.s32 1, %v1146
    %v1148 = vrot.slane %v1139, %v1147
    %v1149 = vlaneseq
    %v1150 = vshrl.u32 %v1149, 7
    %v1151 = vsub.s32 2, %v1150
    %v1152 = vrot.slane %v1139, %v1151
    %v1153 = vlaneseq
    %v1154 = vshrl.u32 %v1153, 7
    %v1155 = vsub.s32 3, %v1154
    %v1156 = vrot.slane %v1139, %v1155
    %v1157 = vlaneseq
    %v1158 = vshrl.u32 %v1157, 7
    %v1159 = vsub.s32 4, %v1158
    %v1160 = vrot.slane %v1139, %v1159
    %v1161 = vlaneseq
    %v1162 = vshrl.u32 %v1161, 7
    %v1163 = vsub.s32 5, %v1162
    %v1164 = vrot.slane %v1139, %v1163
    %v1165 = vlaneseq
    %v1166 = vshrl.u32 %v1165, 7
    %v1167 = vsub.s32 6, %v1166
    %v1168 = vrot.slane %v1139, %v1167
    %v1169 = vlaneseq
    %v1170 = vshrl.u32 %v1169, 7
    %v1171 = vsub.s32 7, %v1170
    %v1172 = vrot.slane %v1139, %v1171
    %v1181 = vadd.f32 %v1131, %v1144
    %v1182 = vadd.f32 %v1132, %v1148
    %v1183 = vadd.f32 %v1133, %v1152
    %v1184 = vadd.f32 %v1134, %v1156
    %v1185 = vadd.f32 %v1135, %v1160
    %v1186 = vadd.f32 %v1136, %v1164
    %v1187 = vadd.f32 %v1137, %v1168
    %v1188 = vadd.f32 %v1138, %v1172
    %v1189 = vmax.f32 %v1181, 0.0
    %v1190 = vmax.f32 %v1182, 0.0
    %v1191 = vmax.f32 %v1183, 0.0
    %v1192 = vmax.f32 %v1184, 0.0
    %v1193 = vmax.f32 %v1185, 0.0
    %v1194 = vmax.f32 %v1186, 0.0
    %v1195 = vmax.f32 %v1187, 0.0
    %v1196 = vmax.f32 %v1188, 0.0
    %v1197 = vpack.c.bf16 %v1189, %v1189
    %v1198 = vpack.c.bf16 %v1190, %v1190
    %v1199 = vpack.c.bf16 %v1191, %v1191
    %v1200 = vpack.c.bf16 %v1192, %v1192
    %v1201 = vpack.c.bf16 %v1193, %v1193
    %v1202 = vpack.c.bf16 %v1194, %v1194
    %v1203 = vpack.c.bf16 %v1195, %v1195
    %v1204 = vpack.c.bf16 %v1196, %v1196
    %s1205 = smul.u32 2, 128
    %s1206 = smul.u32 %s1205, 16
    %s1207 = sshll.u32 %s1206, 4
    %1208 = dma.done %s190, %s1207
    %v1209 = vld [vmem:[#allocation4] sm:$0xff]
    %v1210 = vld [vmem:[#allocation4 + $0x8] sm:$0xff]
    %v1211 = vld [vmem:[#allocation4 + $0x10] sm:$0xff]
    %v1212 = vld [vmem:[#allocation4 + $0x18] sm:$0xff]
    %v1213 = vld [vmem:[#allocation4 + $0x20] sm:$0xff]
    %v1214 = vld [vmem:[#allocation4 + $0x28] sm:$0xff]
    %v1215 = vld [vmem:[#allocation4 + $0x30] sm:$0xff]
    %v1216 = vld [vmem:[#allocation4 + $0x38] sm:$0xff]
    %v1217 = vld [vmem:[#allocation4 + $0x40] sm:$0xff]
    %v1218 = vld [vmem:[#allocation4 + $0x48] sm:$0xff]
    %v1219 = vld [vmem:[#allocation4 + $0x50] sm:$0xff]
    %v1220 = vld [vmem:[#allocation4 + $0x58] sm:$0xff]
    %v1221 = vld [vmem:[#allocation4 + $0x60] sm:$0xff]
    %v1222 = vld [vmem:[#allocation4 + $0x68] sm:$0xff]
    %v1223 = vld [vmem:[#allocation4 + $0x70] sm:$0xff]
    %v1224 = vld [vmem:[#allocation4 + $0x78] sm:$0xff]
    %v1225 = vld [vmem:[#allocation4 + $0x80] sm:$0xff]
    %v1226 = vld [vmem:[#allocation4 + $0x88] sm:$0xff]
    %v1227 = vld [vmem:[#allocation4 + $0x90] sm:$0xff]
    %v1228 = vld [vmem:[#allocation4 + $0x98] sm:$0xff]
    %v1229 = vld [vmem:[#allocation4 + $0xa0] sm:$0xff]
    %v1230 = vld [vmem:[#allocation4 + $0xa8] sm:$0xff]
    %v1231 = vld [vmem:[#allocation4 + $0xb0] sm:$0xff]
    %v1232 = vld [vmem:[#allocation4 + $0xb8] sm:$0xff]
    %v1233 = vld [vmem:[#allocation4 + $0xc0] sm:$0xff]
    %v1234 = vld [vmem:[#allocation4 + $0xc8] sm:$0xff]
    %v1235 = vld [vmem:[#allocation4 + $0xd0] sm:$0xff]
    %v1236 = vld [vmem:[#allocation4 + $0xd8] sm:$0xff]
    %v1237 = vld [vmem:[#allocation4 + $0xe0] sm:$0xff]
    %v1238 = vld [vmem:[#allocation4 + $0xe8] sm:$0xff]
    %v1239 = vld [vmem:[#allocation4 + $0xf0] sm:$0xff]
    %v1240 = vld [vmem:[#allocation4 + $0xf8] sm:$0xff]
    %v1241 = vld [vmem:[#allocation4 + $0x100] sm:$0xff]
    %v1242 = vld [vmem:[#allocation4 + $0x108] sm:$0xff]
    %v1243 = vld [vmem:[#allocation4 + $0x110] sm:$0xff]
    %v1244 = vld [vmem:[#allocation4 + $0x118] sm:$0xff]
    %v1245 = vld [vmem:[#allocation4 + $0x120] sm:$0xff]
    %v1246 = vld [vmem:[#allocation4 + $0x128] sm:$0xff]
    %v1247 = vld [vmem:[#allocation4 + $0x130] sm:$0xff]
    %v1248 = vld [vmem:[#allocation4 + $0x138] sm:$0xff]
    %v1249 = vld [vmem:[#allocation4 + $0x140] sm:$0xff]
    %v1250 = vld [vmem:[#allocation4 + $0x148] sm:$0xff]
    %v1251 = vld [vmem:[#allocation4 + $0x150] sm:$0xff]
    %v1252 = vld [vmem:[#allocation4 + $0x158] sm:$0xff]
    %v1253 = vld [vmem:[#allocation4 + $0x160] sm:$0xff]
    %v1254 = vld [vmem:[#allocation4 + $0x168] sm:$0xff]
    %v1255 = vld [vmem:[#allocation4 + $0x170] sm:$0xff]
    %v1256 = vld [vmem:[#allocation4 + $0x178] sm:$0xff]
    %v1257 = vld [vmem:[#allocation4 + $0x180] sm:$0xff]
    %v1258 = vld [vmem:[#allocation4 + $0x188] sm:$0xff]
    %v1259 = vld [vmem:[#allocation4 + $0x190] sm:$0xff]
    %v1260 = vld [vmem:[#allocation4 + $0x198] sm:$0xff]
    %v1261 = vld [vmem:[#allocation4 + $0x1a0] sm:$0xff]
    %v1262 = vld [vmem:[#allocation4 + $0x1a8] sm:$0xff]
    %v1263 = vld [vmem:[#allocation4 + $0x1b0] sm:$0xff]
    %v1264 = vld [vmem:[#allocation4 + $0x1b8] sm:$0xff]
    %v1265 = vld [vmem:[#allocation4 + $0x1c0] sm:$0xff]
    %v1266 = vld [vmem:[#allocation4 + $0x1c8] sm:$0xff]
    %v1267 = vld [vmem:[#allocation4 + $0x1d0] sm:$0xff]
    %v1268 = vld [vmem:[#allocation4 + $0x1d8] sm:$0xff]
    %v1269 = vld [vmem:[#allocation4 + $0x1e0] sm:$0xff]
    %v1270 = vld [vmem:[#allocation4 + $0x1e8] sm:$0xff]
    %v1271 = vld [vmem:[#allocation4 + $0x1f0] sm:$0xff]
    %v1272 = vld [vmem:[#allocation4 + $0x1f8] sm:$0xff]
    %v1273 = vld [vmem:[#allocation4 + $0x200] sm:$0xff]
    %v1274 = vld [vmem:[#allocation4 + $0x208] sm:$0xff]
    %v1275 = vld [vmem:[#allocation4 + $0x210] sm:$0xff]
    %v1276 = vld [vmem:[#allocation4 + $0x218] sm:$0xff]
    %v1277 = vld [vmem:[#allocation4 + $0x220] sm:$0xff]
    %v1278 = vld [vmem:[#allocation4 + $0x228] sm:$0xff]
    %v1279 = vld [vmem:[#allocation4 + $0x230] sm:$0xff]
    %v1280 = vld [vmem:[#allocation4 + $0x238] sm:$0xff]
    %v1281 = vld [vmem:[#allocation4 + $0x240] sm:$0xff]
    %v1282 = vld [vmem:[#allocation4 + $0x248] sm:$0xff]
    %v1283 = vld [vmem:[#allocation4 + $0x250] sm:$0xff]
    %v1284 = vld [vmem:[#allocation4 + $0x258] sm:$0xff]
    %v1285 = vld [vmem:[#allocation4 + $0x260] sm:$0xff]
    %v1286 = vld [vmem:[#allocation4 + $0x268] sm:$0xff]
    %v1287 = vld [vmem:[#allocation4 + $0x270] sm:$0xff]
    %v1288 = vld [vmem:[#allocation4 + $0x278] sm:$0xff]
    %v1289 = vld [vmem:[#allocation4 + $0x280] sm:$0xff]
    %v1290 = vld [vmem:[#allocation4 + $0x288] sm:$0xff]
    %v1291 = vld [vmem:[#allocation4 + $0x290] sm:$0xff]
    %v1292 = vld [vmem:[#allocation4 + $0x298] sm:$0xff]
    %v1293 = vld [vmem:[#allocation4 + $0x2a0] sm:$0xff]
    %v1294 = vld [vmem:[#allocation4 + $0x2a8] sm:$0xff]
    %v1295 = vld [vmem:[#allocation4 + $0x2b0] sm:$0xff]
    %v1296 = vld [vmem:[#allocation4 + $0x2b8] sm:$0xff]
    %v1297 = vld [vmem:[#allocation4 + $0x2c0] sm:$0xff]
    %v1298 = vld [vmem:[#allocation4 + $0x2c8] sm:$0xff]
    %v1299 = vld [vmem:[#allocation4 + $0x2d0] sm:$0xff]
    %v1300 = vld [vmem:[#allocation4 + $0x2d8] sm:$0xff]
    %v1301 = vld [vmem:[#allocation4 + $0x2e0] sm:$0xff]
    %v1302 = vld [vmem:[#allocation4 + $0x2e8] sm:$0xff]
    %v1303 = vld [vmem:[#allocation4 + $0x2f0] sm:$0xff]
    %v1304 = vld [vmem:[#allocation4 + $0x2f8] sm:$0xff]
    %v1305 = vld [vmem:[#allocation4 + $0x300] sm:$0xff]
    %v1306 = vld [vmem:[#allocation4 + $0x308] sm:$0xff]
    %v1307 = vld [vmem:[#allocation4 + $0x310] sm:$0xff]
    %v1308 = vld [vmem:[#allocation4 + $0x318] sm:$0xff]
    %v1309 = vld [vmem:[#allocation4 + $0x320] sm:$0xff]
    %v1310 = vld [vmem:[#allocation4 + $0x328] sm:$0xff]
    %v1311 = vld [vmem:[#allocation4 + $0x330] sm:$0xff]
    %v1312 = vld [vmem:[#allocation4 + $0x338] sm:$0xff]
    %v1313 = vld [vmem:[#allocation4 + $0x340] sm:$0xff]
    %v1314 = vld [vmem:[#allocation4 + $0x348] sm:$0xff]
    %v1315 = vld [vmem:[#allocation4 + $0x350] sm:$0xff]
    %v1316 = vld [vmem:[#allocation4 + $0x358] sm:$0xff]
    %v1317 = vld [vmem:[#allocation4 + $0x360] sm:$0xff]
    %v1318 = vld [vmem:[#allocation4 + $0x368] sm:$0xff]
    %v1319 = vld [vmem:[#allocation4 + $0x370] sm:$0xff]
    %v1320 = vld [vmem:[#allocation4 + $0x378] sm:$0xff]
    %v1321 = vld [vmem:[#allocation4 + $0x380] sm:$0xff]
    %v1322 = vld [vmem:[#allocation4 + $0x388] sm:$0xff]
    %v1323 = vld [vmem:[#allocation4 + $0x390] sm:$0xff]
    %v1324 = vld [vmem:[#allocation4 + $0x398] sm:$0xff]
    %v1325 = vld [vmem:[#allocation4 + $0x3a0] sm:$0xff]
    %v1326 = vld [vmem:[#allocation4 + $0x3a8] sm:$0xff]
    %v1327 = vld [vmem:[#allocation4 + $0x3b0] sm:$0xff]
    %v1328 = vld [vmem:[#allocation4 + $0x3b8] sm:$0xff]
    %v1329 = vld [vmem:[#allocation4 + $0x3c0] sm:$0xff]
    %v1330 = vld [vmem:[#allocation4 + $0x3c8] sm:$0xff]
    %v1331 = vld [vmem:[#allocation4 + $0x3d0] sm:$0xff]
    %v1332 = vld [vmem:[#allocation4 + $0x3d8] sm:$0xff]
    %v1333 = vld [vmem:[#allocation4 + $0x3e0] sm:$0xff]
    %v1334 = vld [vmem:[#allocation4 + $0x3e8] sm:$0xff]
    %v1335 = vld [vmem:[#allocation4 + $0x3f0] sm:$0xff]
    %v1336 = vld [vmem:[#allocation4 + $0x3f8] sm:$0xff]
    %v1337 = vld [vmem:[#allocation4 + $0x400] sm:$0xff]
    %v1338 = vld [vmem:[#allocation4 + $0x408] sm:$0xff]
    %v1339 = vld [vmem:[#allocation4 + $0x410] sm:$0xff]
    %v1340 = vld [vmem:[#allocation4 + $0x418] sm:$0xff]
    %v1341 = vld [vmem:[#allocation4 + $0x420] sm:$0xff]
    %v1342 = vld [vmem:[#allocation4 + $0x428] sm:$0xff]
    %v1343 = vld [vmem:[#allocation4 + $0x430] sm:$0xff]
    %v1344 = vld [vmem:[#allocation4 + $0x438] sm:$0xff]
    %v1345 = vld [vmem:[#allocation4 + $0x440] sm:$0xff]
    %v1346 = vld [vmem:[#allocation4 + $0x448] sm:$0xff]
    %v1347 = vld [vmem:[#allocation4 + $0x450] sm:$0xff]
    %v1348 = vld [vmem:[#allocation4 + $0x458] sm:$0xff]
    %v1349 = vld [vmem:[#allocation4 + $0x460] sm:$0xff]
    %v1350 = vld [vmem:[#allocation4 + $0x468] sm:$0xff]
    %v1351 = vld [vmem:[#allocation4 + $0x470] sm:$0xff]
    %v1352 = vld [vmem:[#allocation4 + $0x478] sm:$0xff]
    %v1353 = vld [vmem:[#allocation4 + $0x480] sm:$0xff]
    %v1354 = vld [vmem:[#allocation4 + $0x488] sm:$0xff]
    %v1355 = vld [vmem:[#allocation4 + $0x490] sm:$0xff]
    %v1356 = vld [vmem:[#allocation4 + $0x498] sm:$0xff]
    %v1357 = vld [vmem:[#allocation4 + $0x4a0] sm:$0xff]
    %v1358 = vld [vmem:[#allocation4 + $0x4a8] sm:$0xff]
    %v1359 = vld [vmem:[#allocation4 + $0x4b0] sm:$0xff]
    %v1360 = vld [vmem:[#allocation4 + $0x4b8] sm:$0xff]
    %v1361 = vld [vmem:[#allocation4 + $0x4c0] sm:$0xff]
    %v1362 = vld [vmem:[#allocation4 + $0x4c8] sm:$0xff]
    %v1363 = vld [vmem:[#allocation4 + $0x4d0] sm:$0xff]
    %v1364 = vld [vmem:[#allocation4 + $0x4d8] sm:$0xff]
    %v1365 = vld [vmem:[#allocation4 + $0x4e0] sm:$0xff]
    %v1366 = vld [vmem:[#allocation4 + $0x4e8] sm:$0xff]
    %v1367 = vld [vmem:[#allocation4 + $0x4f0] sm:$0xff]
    %v1368 = vld [vmem:[#allocation4 + $0x4f8] sm:$0xff]
    %v1369 = vld [vmem:[#allocation4 + $0x500] sm:$0xff]
    %v1370 = vld [vmem:[#allocation4 + $0x508] sm:$0xff]
    %v1371 = vld [vmem:[#allocation4 + $0x510] sm:$0xff]
    %v1372 = vld [vmem:[#allocation4 + $0x518] sm:$0xff]
    %v1373 = vld [vmem:[#allocation4 + $0x520] sm:$0xff]
    %v1374 = vld [vmem:[#allocation4 + $0x528] sm:$0xff]
    %v1375 = vld [vmem:[#allocation4 + $0x530] sm:$0xff]
    %v1376 = vld [vmem:[#allocation4 + $0x538] sm:$0xff]
    %v1377 = vld [vmem:[#allocation4 + $0x540] sm:$0xff]
    %v1378 = vld [vmem:[#allocation4 + $0x548] sm:$0xff]
    %v1379 = vld [vmem:[#allocation4 + $0x550] sm:$0xff]
    %v1380 = vld [vmem:[#allocation4 + $0x558] sm:$0xff]
    %v1381 = vld [vmem:[#allocation4 + $0x560] sm:$0xff]
    %v1382 = vld [vmem:[#allocation4 + $0x568] sm:$0xff]
    %v1383 = vld [vmem:[#allocation4 + $0x570] sm:$0xff]
    %v1384 = vld [vmem:[#allocation4 + $0x578] sm:$0xff]
    %v1385 = vld [vmem:[#allocation4 + $0x580] sm:$0xff]
    %v1386 = vld [vmem:[#allocation4 + $0x588] sm:$0xff]
    %v1387 = vld [vmem:[#allocation4 + $0x590] sm:$0xff]
    %v1388 = vld [vmem:[#allocation4 + $0x598] sm:$0xff]
    %v1389 = vld [vmem:[#allocation4 + $0x5a0] sm:$0xff]
    %v1390 = vld [vmem:[#allocation4 + $0x5a8] sm:$0xff]
    %v1391 = vld [vmem:[#allocation4 + $0x5b0] sm:$0xff]
    %v1392 = vld [vmem:[#allocation4 + $0x5b8] sm:$0xff]
    %v1393 = vld [vmem:[#allocation4 + $0x5c0] sm:$0xff]
    %v1394 = vld [vmem:[#allocation4 + $0x5c8] sm:$0xff]
    %v1395 = vld [vmem:[#allocation4 + $0x5d0] sm:$0xff]
    %v1396 = vld [vmem:[#allocation4 + $0x5d8] sm:$0xff]
    %v1397 = vld [vmem:[#allocation4 + $0x5e0] sm:$0xff]
    %v1398 = vld [vmem:[#allocation4 + $0x5e8] sm:$0xff]
    %v1399 = vld [vmem:[#allocation4 + $0x5f0] sm:$0xff]
    %v1400 = vld [vmem:[#allocation4 + $0x5f8] sm:$0xff]
    %v1401 = vld [vmem:[#allocation4 + $0x600] sm:$0xff]
    %v1402 = vld [vmem:[#allocation4 + $0x608] sm:$0xff]
    %v1403 = vld [vmem:[#allocation4 + $0x610] sm:$0xff]
    %v1404 = vld [vmem:[#allocation4 + $0x618] sm:$0xff]
    %v1405 = vld [vmem:[#allocation4 + $0x620] sm:$0xff]
    %v1406 = vld [vmem:[#allocation4 + $0x628] sm:$0xff]
    %v1407 = vld [vmem:[#allocation4 + $0x630] sm:$0xff]
    %v1408 = vld [vmem:[#allocation4 + $0x638] sm:$0xff]
    %v1409 = vld [vmem:[#allocation4 + $0x640] sm:$0xff]
    %v1410 = vld [vmem:[#allocation4 + $0x648] sm:$0xff]
    %v1411 = vld [vmem:[#allocation4 + $0x650] sm:$0xff]
    %v1412 = vld [vmem:[#allocation4 + $0x658] sm:$0xff]
    %v1413 = vld [vmem:[#allocation4 + $0x660] sm:$0xff]
    %v1414 = vld [vmem:[#allocation4 + $0x668] sm:$0xff]
    %v1415 = vld [vmem:[#allocation4 + $0x670] sm:$0xff]
    %v1416 = vld [vmem:[#allocation4 + $0x678] sm:$0xff]
    %v1417 = vld [vmem:[#allocation4 + $0x680] sm:$0xff]
    %v1418 = vld [vmem:[#allocation4 + $0x688] sm:$0xff]
    %v1419 = vld [vmem:[#allocation4 + $0x690] sm:$0xff]
    %v1420 = vld [vmem:[#allocation4 + $0x698] sm:$0xff]
    %v1421 = vld [vmem:[#allocation4 + $0x6a0] sm:$0xff]
    %v1422 = vld [vmem:[#allocation4 + $0x6a8] sm:$0xff]
    %v1423 = vld [vmem:[#allocation4 + $0x6b0] sm:$0xff]
    %v1424 = vld [vmem:[#allocation4 + $0x6b8] sm:$0xff]
    %v1425 = vld [vmem:[#allocation4 + $0x6c0] sm:$0xff]
    %v1426 = vld [vmem:[#allocation4 + $0x6c8] sm:$0xff]
    %v1427 = vld [vmem:[#allocation4 + $0x6d0] sm:$0xff]
    %v1428 = vld [vmem:[#allocation4 + $0x6d8] sm:$0xff]
    %v1429 = vld [vmem:[#allocation4 + $0x6e0] sm:$0xff]
    %v1430 = vld [vmem:[#allocation4 + $0x6e8] sm:$0xff]
    %v1431 = vld [vmem:[#allocation4 + $0x6f0] sm:$0xff]
    %v1432 = vld [vmem:[#allocation4 + $0x6f8] sm:$0xff]
    %v1433 = vld [vmem:[#allocation4 + $0x700] sm:$0xff]
    %v1434 = vld [vmem:[#allocation4 + $0x708] sm:$0xff]
    %v1435 = vld [vmem:[#allocation4 + $0x710] sm:$0xff]
    %v1436 = vld [vmem:[#allocation4 + $0x718] sm:$0xff]
    %v1437 = vld [vmem:[#allocation4 + $0x720] sm:$0xff]
    %v1438 = vld [vmem:[#allocation4 + $0x728] sm:$0xff]
    %v1439 = vld [vmem:[#allocation4 + $0x730] sm:$0xff]
    %v1440 = vld [vmem:[#allocation4 + $0x738] sm:$0xff]
    %v1441 = vld [vmem:[#allocation4 + $0x740] sm:$0xff]
    %v1442 = vld [vmem:[#allocation4 + $0x748] sm:$0xff]
    %v1443 = vld [vmem:[#allocation4 + $0x750] sm:$0xff]
    %v1444 = vld [vmem:[#allocation4 + $0x758] sm:$0xff]
    %v1445 = vld [vmem:[#allocation4 + $0x760] sm:$0xff]
    %v1446 = vld [vmem:[#allocation4 + $0x768] sm:$0xff]
    %v1447 = vld [vmem:[#allocation4 + $0x770] sm:$0xff]
    %v1448 = vld [vmem:[#allocation4 + $0x778] sm:$0xff]
    %v1449 = vld [vmem:[#allocation4 + $0x780] sm:$0xff]
    %v1450 = vld [vmem:[#allocation4 + $0x788] sm:$0xff]
    %v1451 = vld [vmem:[#allocation4 + $0x790] sm:$0xff]
    %v1452 = vld [vmem:[#allocation4 + $0x798] sm:$0xff]
    %v1453 = vld [vmem:[#allocation4 + $0x7a0] sm:$0xff]
    %v1454 = vld [vmem:[#allocation4 + $0x7a8] sm:$0xff]
    %v1455 = vld [vmem:[#allocation4 + $0x7b0] sm:$0xff]
    %v1456 = vld [vmem:[#allocation4 + $0x7b8] sm:$0xff]
    %v1457 = vld [vmem:[#allocation4 + $0x7c0] sm:$0xff]
    %v1458 = vld [vmem:[#allocation4 + $0x7c8] sm:$0xff]
    %v1459 = vld [vmem:[#allocation4 + $0x7d0] sm:$0xff]
    %v1460 = vld [vmem:[#allocation4 + $0x7d8] sm:$0xff]
    %v1461 = vld [vmem:[#allocation4 + $0x7e0] sm:$0xff]
    %v1462 = vld [vmem:[#allocation4 + $0x7e8] sm:$0xff]
    %v1463 = vld [vmem:[#allocation4 + $0x7f0] sm:$0xff]
    %v1464 = vld [vmem:[#allocation4 + $0x7f8] sm:$0xff]
    %v1465 = vld [vmem:[#allocation4 + $0x800] sm:$0xff]
    %v1466 = vld [vmem:[#allocation4 + $0x808] sm:$0xff]
    %v1467 = vld [vmem:[#allocation4 + $0x810] sm:$0xff]
    %v1468 = vld [vmem:[#allocation4 + $0x818] sm:$0xff]
    %v1469 = vld [vmem:[#allocation4 + $0x820] sm:$0xff]
    %v1470 = vld [vmem:[#allocation4 + $0x828] sm:$0xff]
    %v1471 = vld [vmem:[#allocation4 + $0x830] sm:$0xff]
    %v1472 = vld [vmem:[#allocation4 + $0x838] sm:$0xff]
    %v1473 = vld [vmem:[#allocation4 + $0x840] sm:$0xff]
    %v1474 = vld [vmem:[#allocation4 + $0x848] sm:$0xff]
    %v1475 = vld [vmem:[#allocation4 + $0x850] sm:$0xff]
    %v1476 = vld [vmem:[#allocation4 + $0x858] sm:$0xff]
    %v1477 = vld [vmem:[#allocation4 + $0x860] sm:$0xff]
    %v1478 = vld [vmem:[#allocation4 + $0x868] sm:$0xff]
    %v1479 = vld [vmem:[#allocation4 + $0x870] sm:$0xff]
    %v1480 = vld [vmem:[#allocation4 + $0x878] sm:$0xff]
    %v1481 = vld [vmem:[#allocation4 + $0x880] sm:$0xff]
    %v1482 = vld [vmem:[#allocation4 + $0x888] sm:$0xff]
    %v1483 = vld [vmem:[#allocation4 + $0x890] sm:$0xff]
    %v1484 = vld [vmem:[#allocation4 + $0x898] sm:$0xff]
    %v1485 = vld [vmem:[#allocation4 + $0x8a0] sm:$0xff]
    %v1486 = vld [vmem:[#allocation4 + $0x8a8] sm:$0xff]
    %v1487 = vld [vmem:[#allocation4 + $0x8b0] sm:$0xff]
    %v1488 = vld [vmem:[#allocation4 + $0x8b8] sm:$0xff]
    %v1489 = vld [vmem:[#allocation4 + $0x8c0] sm:$0xff]
    %v1490 = vld [vmem:[#allocation4 + $0x8c8] sm:$0xff]
    %v1491 = vld [vmem:[#allocation4 + $0x8d0] sm:$0xff]
    %v1492 = vld [vmem:[#allocation4 + $0x8d8] sm:$0xff]
    %v1493 = vld [vmem:[#allocation4 + $0x8e0] sm:$0xff]
    %v1494 = vld [vmem:[#allocation4 + $0x8e8] sm:$0xff]
    %v1495 = vld [vmem:[#allocation4 + $0x8f0] sm:$0xff]
    %v1496 = vld [vmem:[#allocation4 + $0x8f8] sm:$0xff]
    %v1497 = vld [vmem:[#allocation4 + $0x900] sm:$0xff]
    %v1498 = vld [vmem:[#allocation4 + $0x908] sm:$0xff]
    %v1499 = vld [vmem:[#allocation4 + $0x910] sm:$0xff]
    %v1500 = vld [vmem:[#allocation4 + $0x918] sm:$0xff]
    %v1501 = vld [vmem:[#allocation4 + $0x920] sm:$0xff]
    %v1502 = vld [vmem:[#allocation4 + $0x928] sm:$0xff]
    %v1503 = vld [vmem:[#allocation4 + $0x930] sm:$0xff]
    %v1504 = vld [vmem:[#allocation4 + $0x938] sm:$0xff]
    %v1505 = vld [vmem:[#allocation4 + $0x940] sm:$0xff]
    %v1506 = vld [vmem:[#allocation4 + $0x948] sm:$0xff]
    %v1507 = vld [vmem:[#allocation4 + $0x950] sm:$0xff]
    %v1508 = vld [vmem:[#allocation4 + $0x958] sm:$0xff]
    %v1509 = vld [vmem:[#allocation4 + $0x960] sm:$0xff]
    %v1510 = vld [vmem:[#allocation4 + $0x968] sm:$0xff]
    %v1511 = vld [vmem:[#allocation4 + $0x970] sm:$0xff]
    %v1512 = vld [vmem:[#allocation4 + $0x978] sm:$0xff]
    %v1513 = vld [vmem:[#allocation4 + $0x980] sm:$0xff]
    %v1514 = vld [vmem:[#allocation4 + $0x988] sm:$0xff]
    %v1515 = vld [vmem:[#allocation4 + $0x990] sm:$0xff]
    %v1516 = vld [vmem:[#allocation4 + $0x998] sm:$0xff]
    %v1517 = vld [vmem:[#allocation4 + $0x9a0] sm:$0xff]
    %v1518 = vld [vmem:[#allocation4 + $0x9a8] sm:$0xff]
    %v1519 = vld [vmem:[#allocation4 + $0x9b0] sm:$0xff]
    %v1520 = vld [vmem:[#allocation4 + $0x9b8] sm:$0xff]
    %v1521 = vld [vmem:[#allocation4 + $0x9c0] sm:$0xff]
    %v1522 = vld [vmem:[#allocation4 + $0x9c8] sm:$0xff]
    %v1523 = vld [vmem:[#allocation4 + $0x9d0] sm:$0xff]
    %v1524 = vld [vmem:[#allocation4 + $0x9d8] sm:$0xff]
    %v1525 = vld [vmem:[#allocation4 + $0x9e0] sm:$0xff]
    %v1526 = vld [vmem:[#allocation4 + $0x9e8] sm:$0xff]
    %v1527 = vld [vmem:[#allocation4 + $0x9f0] sm:$0xff]
    %v1528 = vld [vmem:[#allocation4 + $0x9f8] sm:$0xff]
    %v1529 = vld [vmem:[#allocation4 + $0xa00] sm:$0xff]
    %v1530 = vld [vmem:[#allocation4 + $0xa08] sm:$0xff]
    %v1531 = vld [vmem:[#allocation4 + $0xa10] sm:$0xff]
    %v1532 = vld [vmem:[#allocation4 + $0xa18] sm:$0xff]
    %v1533 = vld [vmem:[#allocation4 + $0xa20] sm:$0xff]
    %v1534 = vld [vmem:[#allocation4 + $0xa28] sm:$0xff]
    %v1535 = vld [vmem:[#allocation4 + $0xa30] sm:$0xff]
    %v1536 = vld [vmem:[#allocation4 + $0xa38] sm:$0xff]
    %v1537 = vld [vmem:[#allocation4 + $0xa40] sm:$0xff]
    %v1538 = vld [vmem:[#allocation4 + $0xa48] sm:$0xff]
    %v1539 = vld [vmem:[#allocation4 + $0xa50] sm:$0xff]
    %v1540 = vld [vmem:[#allocation4 + $0xa58] sm:$0xff]
    %v1541 = vld [vmem:[#allocation4 + $0xa60] sm:$0xff]
    %v1542 = vld [vmem:[#allocation4 + $0xa68] sm:$0xff]
    %v1543 = vld [vmem:[#allocation4 + $0xa70] sm:$0xff]
    %v1544 = vld [vmem:[#allocation4 + $0xa78] sm:$0xff]
    %v1545 = vld [vmem:[#allocation4 + $0xa80] sm:$0xff]
    %v1546 = vld [vmem:[#allocation4 + $0xa88] sm:$0xff]
    %v1547 = vld [vmem:[#allocation4 + $0xa90] sm:$0xff]
    %v1548 = vld [vmem:[#allocation4 + $0xa98] sm:$0xff]
    %v1549 = vld [vmem:[#allocation4 + $0xaa0] sm:$0xff]
    %v1550 = vld [vmem:[#allocation4 + $0xaa8] sm:$0xff]
    %v1551 = vld [vmem:[#allocation4 + $0xab0] sm:$0xff]
    %v1552 = vld [vmem:[#allocation4 + $0xab8] sm:$0xff]
    %v1553 = vld [vmem:[#allocation4 + $0xac0] sm:$0xff]
    %v1554 = vld [vmem:[#allocation4 + $0xac8] sm:$0xff]
    %v1555 = vld [vmem:[#allocation4 + $0xad0] sm:$0xff]
    %v1556 = vld [vmem:[#allocation4 + $0xad8] sm:$0xff]
    %v1557 = vld [vmem:[#allocation4 + $0xae0] sm:$0xff]
    %v1558 = vld [vmem:[#allocation4 + $0xae8] sm:$0xff]
    %v1559 = vld [vmem:[#allocation4 + $0xaf0] sm:$0xff]
    %v1560 = vld [vmem:[#allocation4 + $0xaf8] sm:$0xff]
    %v1561 = vld [vmem:[#allocation4 + $0xb00] sm:$0xff]
    %v1562 = vld [vmem:[#allocation4 + $0xb08] sm:$0xff]
    %v1563 = vld [vmem:[#allocation4 + $0xb10] sm:$0xff]
    %v1564 = vld [vmem:[#allocation4 + $0xb18] sm:$0xff]
    %v1565 = vld [vmem:[#allocation4 + $0xb20] sm:$0xff]
    %v1566 = vld [vmem:[#allocation4 + $0xb28] sm:$0xff]
    %v1567 = vld [vmem:[#allocation4 + $0xb30] sm:$0xff]
    %v1568 = vld [vmem:[#allocation4 + $0xb38] sm:$0xff]
    %v1569 = vld [vmem:[#allocation4 + $0xb40] sm:$0xff]
    %v1570 = vld [vmem:[#allocation4 + $0xb48] sm:$0xff]
    %v1571 = vld [vmem:[#allocation4 + $0xb50] sm:$0xff]
    %v1572 = vld [vmem:[#allocation4 + $0xb58] sm:$0xff]
    %v1573 = vld [vmem:[#allocation4 + $0xb60] sm:$0xff]
    %v1574 = vld [vmem:[#allocation4 + $0xb68] sm:$0xff]
    %v1575 = vld [vmem:[#allocation4 + $0xb70] sm:$0xff]
    %v1576 = vld [vmem:[#allocation4 + $0xb78] sm:$0xff]
    %v1577 = vld [vmem:[#allocation4 + $0xb80] sm:$0xff]
    %v1578 = vld [vmem:[#allocation4 + $0xb88] sm:$0xff]
    %v1579 = vld [vmem:[#allocation4 + $0xb90] sm:$0xff]
    %v1580 = vld [vmem:[#allocation4 + $0xb98] sm:$0xff]
    %v1581 = vld [vmem:[#allocation4 + $0xba0] sm:$0xff]
    %v1582 = vld [vmem:[#allocation4 + $0xba8] sm:$0xff]
    %v1583 = vld [vmem:[#allocation4 + $0xbb0] sm:$0xff]
    %v1584 = vld [vmem:[#allocation4 + $0xbb8] sm:$0xff]
    %v1585 = vld [vmem:[#allocation4 + $0xbc0] sm:$0xff]
    %v1586 = vld [vmem:[#allocation4 + $0xbc8] sm:$0xff]
    %v1587 = vld [vmem:[#allocation4 + $0xbd0] sm:$0xff]
    %v1588 = vld [vmem:[#allocation4 + $0xbd8] sm:$0xff]
    %v1589 = vld [vmem:[#allocation4 + $0xbe0] sm:$0xff]
    %v1590 = vld [vmem:[#allocation4 + $0xbe8] sm:$0xff]
    %v1591 = vld [vmem:[#allocation4 + $0xbf0] sm:$0xff]
    %v1592 = vld [vmem:[#allocation4 + $0xbf8] sm:$0xff]
    %v1593 = vld [vmem:[#allocation4 + $0xc00] sm:$0xff]
    %v1594 = vld [vmem:[#allocation4 + $0xc08] sm:$0xff]
    %v1595 = vld [vmem:[#allocation4 + $0xc10] sm:$0xff]
    %v1596 = vld [vmem:[#allocation4 + $0xc18] sm:$0xff]
    %v1597 = vld [vmem:[#allocation4 + $0xc20] sm:$0xff]
    %v1598 = vld [vmem:[#allocation4 + $0xc28] sm:$0xff]
    %v1599 = vld [vmem:[#allocation4 + $0xc30] sm:$0xff]
    %v1600 = vld [vmem:[#allocation4 + $0xc38] sm:$0xff]
    %v1601 = vld [vmem:[#allocation4 + $0xc40] sm:$0xff]
    %v1602 = vld [vmem:[#allocation4 + $0xc48] sm:$0xff]
    %v1603 = vld [vmem:[#allocation4 + $0xc50] sm:$0xff]
    %v1604 = vld [vmem:[#allocation4 + $0xc58] sm:$0xff]
    %v1605 = vld [vmem:[#allocation4 + $0xc60] sm:$0xff]
    %v1606 = vld [vmem:[#allocation4 + $0xc68] sm:$0xff]
    %v1607 = vld [vmem:[#allocation4 + $0xc70] sm:$0xff]
    %v1608 = vld [vmem:[#allocation4 + $0xc78] sm:$0xff]
    %v1609 = vld [vmem:[#allocation4 + $0xc80] sm:$0xff]
    %v1610 = vld [vmem:[#allocation4 + $0xc88] sm:$0xff]
    %v1611 = vld [vmem:[#allocation4 + $0xc90] sm:$0xff]
    %v1612 = vld [vmem:[#allocation4 + $0xc98] sm:$0xff]
    %v1613 = vld [vmem:[#allocation4 + $0xca0] sm:$0xff]
    %v1614 = vld [vmem:[#allocation4 + $0xca8] sm:$0xff]
    %v1615 = vld [vmem:[#allocation4 + $0xcb0] sm:$0xff]
    %v1616 = vld [vmem:[#allocation4 + $0xcb8] sm:$0xff]
    %v1617 = vld [vmem:[#allocation4 + $0xcc0] sm:$0xff]
    %v1618 = vld [vmem:[#allocation4 + $0xcc8] sm:$0xff]
    %v1619 = vld [vmem:[#allocation4 + $0xcd0] sm:$0xff]
    %v1620 = vld [vmem:[#allocation4 + $0xcd8] sm:$0xff]
    %v1621 = vld [vmem:[#allocation4 + $0xce0] sm:$0xff]
    %v1622 = vld [vmem:[#allocation4 + $0xce8] sm:$0xff]
    %v1623 = vld [vmem:[#allocation4 + $0xcf0] sm:$0xff]
    %v1624 = vld [vmem:[#allocation4 + $0xcf8] sm:$0xff]
    %v1625 = vld [vmem:[#allocation4 + $0xd00] sm:$0xff]
    %v1626 = vld [vmem:[#allocation4 + $0xd08] sm:$0xff]
    %v1627 = vld [vmem:[#allocation4 + $0xd10] sm:$0xff]
    %v1628 = vld [vmem:[#allocation4 + $0xd18] sm:$0xff]
    %v1629 = vld [vmem:[#allocation4 + $0xd20] sm:$0xff]
    %v1630 = vld [vmem:[#allocation4 + $0xd28] sm:$0xff]
    %v1631 = vld [vmem:[#allocation4 + $0xd30] sm:$0xff]
    %v1632 = vld [vmem:[#allocation4 + $0xd38] sm:$0xff]
    %v1633 = vld [vmem:[#allocation4 + $0xd40] sm:$0xff]
    %v1634 = vld [vmem:[#allocation4 + $0xd48] sm:$0xff]
    %v1635 = vld [vmem:[#allocation4 + $0xd50] sm:$0xff]
    %v1636 = vld [vmem:[#allocation4 + $0xd58] sm:$0xff]
    %v1637 = vld [vmem:[#allocation4 + $0xd60] sm:$0xff]
    %v1638 = vld [vmem:[#allocation4 + $0xd68] sm:$0xff]
    %v1639 = vld [vmem:[#allocation4 + $0xd70] sm:$0xff]
    %v1640 = vld [vmem:[#allocation4 + $0xd78] sm:$0xff]
    %v1641 = vld [vmem:[#allocation4 + $0xd80] sm:$0xff]
    %v1642 = vld [vmem:[#allocation4 + $0xd88] sm:$0xff]
    %v1643 = vld [vmem:[#allocation4 + $0xd90] sm:$0xff]
    %v1644 = vld [vmem:[#allocation4 + $0xd98] sm:$0xff]
    %v1645 = vld [vmem:[#allocation4 + $0xda0] sm:$0xff]
    %v1646 = vld [vmem:[#allocation4 + $0xda8] sm:$0xff]
    %v1647 = vld [vmem:[#allocation4 + $0xdb0] sm:$0xff]
    %v1648 = vld [vmem:[#allocation4 + $0xdb8] sm:$0xff]
    %v1649 = vld [vmem:[#allocation4 + $0xdc0] sm:$0xff]
    %v1650 = vld [vmem:[#allocation4 + $0xdc8] sm:$0xff]
    %v1651 = vld [vmem:[#allocation4 + $0xdd0] sm:$0xff]
    %v1652 = vld [vmem:[#allocation4 + $0xdd8] sm:$0xff]
    %v1653 = vld [vmem:[#allocation4 + $0xde0] sm:$0xff]
    %v1654 = vld [vmem:[#allocation4 + $0xde8] sm:$0xff]
    %v1655 = vld [vmem:[#allocation4 + $0xdf0] sm:$0xff]
    %v1656 = vld [vmem:[#allocation4 + $0xdf8] sm:$0xff]
    %v1657 = vld [vmem:[#allocation4 + $0xe00] sm:$0xff]
    %v1658 = vld [vmem:[#allocation4 + $0xe08] sm:$0xff]
    %v1659 = vld [vmem:[#allocation4 + $0xe10] sm:$0xff]
    %v1660 = vld [vmem:[#allocation4 + $0xe18] sm:$0xff]
    %v1661 = vld [vmem:[#allocation4 + $0xe20] sm:$0xff]
    %v1662 = vld [vmem:[#allocation4 + $0xe28] sm:$0xff]
    %v1663 = vld [vmem:[#allocation4 + $0xe30] sm:$0xff]
    %v1664 = vld [vmem:[#allocation4 + $0xe38] sm:$0xff]
    %v1665 = vld [vmem:[#allocation4 + $0xe40] sm:$0xff]
    %v1666 = vld [vmem:[#allocation4 + $0xe48] sm:$0xff]
    %v1667 = vld [vmem:[#allocation4 + $0xe50] sm:$0xff]
    %v1668 = vld [vmem:[#allocation4 + $0xe58] sm:$0xff]
    %v1669 = vld [vmem:[#allocation4 + $0xe60] sm:$0xff]
    %v1670 = vld [vmem:[#allocation4 + $0xe68] sm:$0xff]
    %v1671 = vld [vmem:[#allocation4 + $0xe70] sm:$0xff]
    %v1672 = vld [vmem:[#allocation4 + $0xe78] sm:$0xff]
    %v1673 = vld [vmem:[#allocation4 + $0xe80] sm:$0xff]
    %v1674 = vld [vmem:[#allocation4 + $0xe88] sm:$0xff]
    %v1675 = vld [vmem:[#allocation4 + $0xe90] sm:$0xff]
    %v1676 = vld [vmem:[#allocation4 + $0xe98] sm:$0xff]
    %v1677 = vld [vmem:[#allocation4 + $0xea0] sm:$0xff]
    %v1678 = vld [vmem:[#allocation4 + $0xea8] sm:$0xff]
    %v1679 = vld [vmem:[#allocation4 + $0xeb0] sm:$0xff]
    %v1680 = vld [vmem:[#allocation4 + $0xeb8] sm:$0xff]
    %v1681 = vld [vmem:[#allocation4 + $0xec0] sm:$0xff]
    %v1682 = vld [vmem:[#allocation4 + $0xec8] sm:$0xff]
    %v1683 = vld [vmem:[#allocation4 + $0xed0] sm:$0xff]
    %v1684 = vld [vmem:[#allocation4 + $0xed8] sm:$0xff]
    %v1685 = vld [vmem:[#allocation4 + $0xee0] sm:$0xff]
    %v1686 = vld [vmem:[#allocation4 + $0xee8] sm:$0xff]
    %v1687 = vld [vmem:[#allocation4 + $0xef0] sm:$0xff]
    %v1688 = vld [vmem:[#allocation4 + $0xef8] sm:$0xff]
    %v1689 = vld [vmem:[#allocation4 + $0xf00] sm:$0xff]
    %v1690 = vld [vmem:[#allocation4 + $0xf08] sm:$0xff]
    %v1691 = vld [vmem:[#allocation4 + $0xf10] sm:$0xff]
    %v1692 = vld [vmem:[#allocation4 + $0xf18] sm:$0xff]
    %v1693 = vld [vmem:[#allocation4 + $0xf20] sm:$0xff]
    %v1694 = vld [vmem:[#allocation4 + $0xf28] sm:$0xff]
    %v1695 = vld [vmem:[#allocation4 + $0xf30] sm:$0xff]
    %v1696 = vld [vmem:[#allocation4 + $0xf38] sm:$0xff]
    %v1697 = vld [vmem:[#allocation4 + $0xf40] sm:$0xff]
    %v1698 = vld [vmem:[#allocation4 + $0xf48] sm:$0xff]
    %v1699 = vld [vmem:[#allocation4 + $0xf50] sm:$0xff]
    %v1700 = vld [vmem:[#allocation4 + $0xf58] sm:$0xff]
    %v1701 = vld [vmem:[#allocation4 + $0xf60] sm:$0xff]
    %v1702 = vld [vmem:[#allocation4 + $0xf68] sm:$0xff]
    %v1703 = vld [vmem:[#allocation4 + $0xf70] sm:$0xff]
    %v1704 = vld [vmem:[#allocation4 + $0xf78] sm:$0xff]
    %v1705 = vld [vmem:[#allocation4 + $0xf80] sm:$0xff]
    %v1706 = vld [vmem:[#allocation4 + $0xf88] sm:$0xff]
    %v1707 = vld [vmem:[#allocation4 + $0xf90] sm:$0xff]
    %v1708 = vld [vmem:[#allocation4 + $0xf98] sm:$0xff]
    %v1709 = vld [vmem:[#allocation4 + $0xfa0] sm:$0xff]
    %v1710 = vld [vmem:[#allocation4 + $0xfa8] sm:$0xff]
    %v1711 = vld [vmem:[#allocation4 + $0xfb0] sm:$0xff]
    %v1712 = vld [vmem:[#allocation4 + $0xfb8] sm:$0xff]
    %v1713 = vld [vmem:[#allocation4 + $0xfc0] sm:$0xff]
    %v1714 = vld [vmem:[#allocation4 + $0xfc8] sm:$0xff]
    %v1715 = vld [vmem:[#allocation4 + $0xfd0] sm:$0xff]
    %v1716 = vld [vmem:[#allocation4 + $0xfd8] sm:$0xff]
    %v1717 = vld [vmem:[#allocation4 + $0xfe0] sm:$0xff]
    %v1718 = vld [vmem:[#allocation4 + $0xfe8] sm:$0xff]
    %v1719 = vld [vmem:[#allocation4 + $0xff0] sm:$0xff]
    %v1720 = vld [vmem:[#allocation4 + $0xff8] sm:$0xff]
    %v1721 = vunpack.c.l.s8.bf16 %v1209
    %v1722 = vunpack.c.l.s8.bf16 %v1210
    %v1723 = vunpack.c.l.s8.bf16 %v1211
    %v1724 = vunpack.c.l.s8.bf16 %v1212
    %v1725 = vunpack.c.l.s8.bf16 %v1213
    %v1726 = vunpack.c.l.s8.bf16 %v1214
    %v1727 = vunpack.c.l.s8.bf16 %v1215
    %v1728 = vunpack.c.l.s8.bf16 %v1216
    %v1729 = vunpack.c.l.s8.bf16 %v1217
    %v1730 = vunpack.c.l.s8.bf16 %v1218
    %v1731 = vunpack.c.l.s8.bf16 %v1219
    %v1732 = vunpack.c.l.s8.bf16 %v1220
    %v1733 = vunpack.c.l.s8.bf16 %v1221
    %v1734 = vunpack.c.l.s8.bf16 %v1222
    %v1735 = vunpack.c.l.s8.bf16 %v1223
    %v1736 = vunpack.c.l.s8.bf16 %v1224
    %v1737 = vunpack.c.h.s8.bf16 %v1209
    %v1738 = vunpack.c.h.s8.bf16 %v1210
    %v1739 = vunpack.c.h.s8.bf16 %v1211
    %v1740 = vunpack.c.h.s8.bf16 %v1212
    %v1741 = vunpack.c.h.s8.bf16 %v1213
    %v1742 = vunpack.c.h.s8.bf16 %v1214
    %v1743 = vunpack.c.h.s8.bf16 %v1215
    %v1744 = vunpack.c.h.s8.bf16 %v1216
    %v1745 = vunpack.c.h.s8.bf16 %v1217
    %v1746 = vunpack.c.h.s8.bf16 %v1218
    %v1747 = vunpack.c.h.s8.bf16 %v1219
    %v1748 = vunpack.c.h.s8.bf16 %v1220
    %v1749 = vunpack.c.h.s8.bf16 %v1221
    %v1750 = vunpack.c.h.s8.bf16 %v1222
    %v1751 = vunpack.c.h.s8.bf16 %v1223
    %v1752 = vunpack.c.h.s8.bf16 %v1224
    %v1753 = vunpack.c.l.s8.bf16 %v1225
    %v1754 = vunpack.c.l.s8.bf16 %v1226
    %v1755 = vunpack.c.l.s8.bf16 %v1227
    %v1756 = vunpack.c.l.s8.bf16 %v1228
    %v1757 = vunpack.c.l.s8.bf16 %v1229
    %v1758 = vunpack.c.l.s8.bf16 %v1230
    %v1759 = vunpack.c.l.s8.bf16 %v1231
    %v1760 = vunpack.c.l.s8.bf16 %v1232
    %v1761 = vunpack.c.l.s8.bf16 %v1233
    %v1762 = vunpack.c.l.s8.bf16 %v1234
    %v1763 = vunpack.c.l.s8.bf16 %v1235
    %v1764 = vunpack.c.l.s8.bf16 %v1236
    %v1765 = vunpack.c.l.s8.bf16 %v1237
    %v1766 = vunpack.c.l.s8.bf16 %v1238
    %v1767 = vunpack.c.l.s8.bf16 %v1239
    %v1768 = vunpack.c.l.s8.bf16 %v1240
    %v1769 = vunpack.c.h.s8.bf16 %v1225
    %v1770 = vunpack.c.h.s8.bf16 %v1226
    %v1771 = vunpack.c.h.s8.bf16 %v1227
    %v1772 = vunpack.c.h.s8.bf16 %v1228
    %v1773 = vunpack.c.h.s8.bf16 %v1229
    %v1774 = vunpack.c.h.s8.bf16 %v1230
    %v1775 = vunpack.c.h.s8.bf16 %v1231
    %v1776 = vunpack.c.h.s8.bf16 %v1232
    %v1777 = vunpack.c.h.s8.bf16 %v1233
    %v1778 = vunpack.c.h.s8.bf16 %v1234
    %v1779 = vunpack.c.h.s8.bf16 %v1235
    %v1780 = vunpack.c.h.s8.bf16 %v1236
    %v1781 = vunpack.c.h.s8.bf16 %v1237
    %v1782 = vunpack.c.h.s8.bf16 %v1238
    %v1783 = vunpack.c.h.s8.bf16 %v1239
    %v1784 = vunpack.c.h.s8.bf16 %v1240
    %v1785 = vunpack.c.l.s8.bf16 %v1241
    %v1786 = vunpack.c.l.s8.bf16 %v1242
    %v1787 = vunpack.c.l.s8.bf16 %v1243
    %v1788 = vunpack.c.l.s8.bf16 %v1244
    %v1789 = vunpack.c.l.s8.bf16 %v1245
    %v1790 = vunpack.c.l.s8.bf16 %v1246
    %v1791 = vunpack.c.l.s8.bf16 %v1247
    %v1792 = vunpack.c.l.s8.bf16 %v1248
    %v1793 = vunpack.c.l.s8.bf16 %v1249
    %v1794 = vunpack.c.l.s8.bf16 %v1250
    %v1795 = vunpack.c.l.s8.bf16 %v1251
    %v1796 = vunpack.c.l.s8.bf16 %v1252
    %v1797 = vunpack.c.l.s8.bf16 %v1253
    %v1798 = vunpack.c.l.s8.bf16 %v1254
    %v1799 = vunpack.c.l.s8.bf16 %v1255
    %v1800 = vunpack.c.l.s8.bf16 %v1256
    %v1801 = vunpack.c.h.s8.bf16 %v1241
    %v1802 = vunpack.c.h.s8.bf16 %v1242
    %v1803 = vunpack.c.h.s8.bf16 %v1243
    %v1804 = vunpack.c.h.s8.bf16 %v1244
    %v1805 = vunpack.c.h.s8.bf16 %v1245
    %v1806 = vunpack.c.h.s8.bf16 %v1246
    %v1807 = vunpack.c.h.s8.bf16 %v1247
    %v1808 = vunpack.c.h.s8.bf16 %v1248
    %v1809 = vunpack.c.h.s8.bf16 %v1249
    %v1810 = vunpack.c.h.s8.bf16 %v1250
    %v1811 = vunpack.c.h.s8.bf16 %v1251
    %v1812 = vunpack.c.h.s8.bf16 %v1252
    %v1813 = vunpack.c.h.s8.bf16 %v1253
    %v1814 = vunpack.c.h.s8.bf16 %v1254
    %v1815 = vunpack.c.h.s8.bf16 %v1255
    %v1816 = vunpack.c.h.s8.bf16 %v1256
    %v1817 = vunpack.c.l.s8.bf16 %v1257
    %v1818 = vunpack.c.l.s8.bf16 %v1258
    %v1819 = vunpack.c.l.s8.bf16 %v1259
    %v1820 = vunpack.c.l.s8.bf16 %v1260
    %v1821 = vunpack.c.l.s8.bf16 %v1261
    %v1822 = vunpack.c.l.s8.bf16 %v1262
    %v1823 = vunpack.c.l.s8.bf16 %v1263
    %v1824 = vunpack.c.l.s8.bf16 %v1264
    %v1825 = vunpack.c.l.s8.bf16 %v1265
    %v1826 = vunpack.c.l.s8.bf16 %v1266
    %v1827 = vunpack.c.l.s8.bf16 %v1267
    %v1828 = vunpack.c.l.s8.bf16 %v1268
    %v1829 = vunpack.c.l.s8.bf16 %v1269
    %v1830 = vunpack.c.l.s8.bf16 %v1270
    %v1831 = vunpack.c.l.s8.bf16 %v1271
    %v1832 = vunpack.c.l.s8.bf16 %v1272
    %v1833 = vunpack.c.h.s8.bf16 %v1257
    %v1834 = vunpack.c.h.s8.bf16 %v1258
    %v1835 = vunpack.c.h.s8.bf16 %v1259
    %v1836 = vunpack.c.h.s8.bf16 %v1260
    %v1837 = vunpack.c.h.s8.bf16 %v1261
    %v1838 = vunpack.c.h.s8.bf16 %v1262
    %v1839 = vunpack.c.h.s8.bf16 %v1263
    %v1840 = vunpack.c.h.s8.bf16 %v1264
    %v1841 = vunpack.c.h.s8.bf16 %v1265
    %v1842 = vunpack.c.h.s8.bf16 %v1266
    %v1843 = vunpack.c.h.s8.bf16 %v1267
    %v1844 = vunpack.c.h.s8.bf16 %v1268
    %v1845 = vunpack.c.h.s8.bf16 %v1269
    %v1846 = vunpack.c.h.s8.bf16 %v1270
    %v1847 = vunpack.c.h.s8.bf16 %v1271
    %v1848 = vunpack.c.h.s8.bf16 %v1272
    %v1849 = vunpack.c.l.s8.bf16 %v1273
    %v1850 = vunpack.c.l.s8.bf16 %v1274
    %v1851 = vunpack.c.l.s8.bf16 %v1275
    %v1852 = vunpack.c.l.s8.bf16 %v1276
    %v1853 = vunpack.c.l.s8.bf16 %v1277
    %v1854 = vunpack.c.l.s8.bf16 %v1278
    %v1855 = vunpack.c.l.s8.bf16 %v1279
    %v1856 = vunpack.c.l.s8.bf16 %v1280
    %v1857 = vunpack.c.l.s8.bf16 %v1281
    %v1858 = vunpack.c.l.s8.bf16 %v1282
    %v1859 = vunpack.c.l.s8.bf16 %v1283
    %v1860 = vunpack.c.l.s8.bf16 %v1284
    %v1861 = vunpack.c.l.s8.bf16 %v1285
    %v1862 = vunpack.c.l.s8.bf16 %v1286
    %v1863 = vunpack.c.l.s8.bf16 %v1287
    %v1864 = vunpack.c.l.s8.bf16 %v1288
    %v1865 = vunpack.c.h.s8.bf16 %v1273
    %v1866 = vunpack.c.h.s8.bf16 %v1274
    %v1867 = vunpack.c.h.s8.bf16 %v1275
    %v1868 = vunpack.c.h.s8.bf16 %v1276
    %v1869 = vunpack.c.h.s8.bf16 %v1277
    %v1870 = vunpack.c.h.s8.bf16 %v1278
    %v1871 = vunpack.c.h.s8.bf16 %v1279
    %v1872 = vunpack.c.h.s8.bf16 %v1280
    %v1873 = vunpack.c.h.s8.bf16 %v1281
    %v1874 = vunpack.c.h.s8.bf16 %v1282
    %v1875 = vunpack.c.h.s8.bf16 %v1283
    %v1876 = vunpack.c.h.s8.bf16 %v1284
    %v1877 = vunpack.c.h.s8.bf16 %v1285
    %v1878 = vunpack.c.h.s8.bf16 %v1286
    %v1879 = vunpack.c.h.s8.bf16 %v1287
    %v1880 = vunpack.c.h.s8.bf16 %v1288
    %v1881 = vunpack.c.l.s8.bf16 %v1289
    %v1882 = vunpack.c.l.s8.bf16 %v1290
    %v1883 = vunpack.c.l.s8.bf16 %v1291
    %v1884 = vunpack.c.l.s8.bf16 %v1292
    %v1885 = vunpack.c.l.s8.bf16 %v1293
    %v1886 = vunpack.c.l.s8.bf16 %v1294
    %v1887 = vunpack.c.l.s8.bf16 %v1295
    %v1888 = vunpack.c.l.s8.bf16 %v1296
    %v1889 = vunpack.c.l.s8.bf16 %v1297
    %v1890 = vunpack.c.l.s8.bf16 %v1298
    %v1891 = vunpack.c.l.s8.bf16 %v1299
    %v1892 = vunpack.c.l.s8.bf16 %v1300
    %v1893 = vunpack.c.l.s8.bf16 %v1301
    %v1894 = vunpack.c.l.s8.bf16 %v1302
    %v1895 = vunpack.c.l.s8.bf16 %v1303
    %v1896 = vunpack.c.l.s8.bf16 %v1304
    %v1897 = vunpack.c.h.s8.bf16 %v1289
    %v1898 = vunpack.c.h.s8.bf16 %v1290
    %v1899 = vunpack.c.h.s8.bf16 %v1291
    %v1900 = vunpack.c.h.s8.bf16 %v1292
    %v1901 = vunpack.c.h.s8.bf16 %v1293
    %v1902 = vunpack.c.h.s8.bf16 %v1294
    %v1903 = vunpack.c.h.s8.bf16 %v1295
    %v1904 = vunpack.c.h.s8.bf16 %v1296
    %v1905 = vunpack.c.h.s8.bf16 %v1297
    %v1906 = vunpack.c.h.s8.bf16 %v1298
    %v1907 = vunpack.c.h.s8.bf16 %v1299
    %v1908 = vunpack.c.h.s8.bf16 %v1300
    %v1909 = vunpack.c.h.s8.bf16 %v1301
    %v1910 = vunpack.c.h.s8.bf16 %v1302
    %v1911 = vunpack.c.h.s8.bf16 %v1303
    %v1912 = vunpack.c.h.s8.bf16 %v1304
    %v1913 = vunpack.c.l.s8.bf16 %v1305
    %v1914 = vunpack.c.l.s8.bf16 %v1306
    %v1915 = vunpack.c.l.s8.bf16 %v1307
    %v1916 = vunpack.c.l.s8.bf16 %v1308
    %v1917 = vunpack.c.l.s8.bf16 %v1309
    %v1918 = vunpack.c.l.s8.bf16 %v1310
    %v1919 = vunpack.c.l.s8.bf16 %v1311
    %v1920 = vunpack.c.l.s8.bf16 %v1312
    %v1921 = vunpack.c.l.s8.bf16 %v1313
    %v1922 = vunpack.c.l.s8.bf16 %v1314
    %v1923 = vunpack.c.l.s8.bf16 %v1315
    %v1924 = vunpack.c.l.s8.bf16 %v1316
    %v1925 = vunpack.c.l.s8.bf16 %v1317
    %v1926 = vunpack.c.l.s8.bf16 %v1318
    %v1927 = vunpack.c.l.s8.bf16 %v1319
    %v1928 = vunpack.c.l.s8.bf16 %v1320
    %v1929 = vunpack.c.h.s8.bf16 %v1305
    %v1930 = vunpack.c.h.s8.bf16 %v1306
    %v1931 = vunpack.c.h.s8.bf16 %v1307
    %v1932 = vunpack.c.h.s8.bf16 %v1308
    %v1933 = vunpack.c.h.s8.bf16 %v1309
    %v1934 = vunpack.c.h.s8.bf16 %v1310
    %v1935 = vunpack.c.h.s8.bf16 %v1311
    %v1936 = vunpack.c.h.s8.bf16 %v1312
    %v1937 = vunpack.c.h.s8.bf16 %v1313
    %v1938 = vunpack.c.h.s8.bf16 %v1314
    %v1939 = vunpack.c.h.s8.bf16 %v1315
    %v1940 = vunpack.c.h.s8.bf16 %v1316
    %v1941 = vunpack.c.h.s8.bf16 %v1317
    %v1942 = vunpack.c.h.s8.bf16 %v1318
    %v1943 = vunpack.c.h.s8.bf16 %v1319
    %v1944 = vunpack.c.h.s8.bf16 %v1320
    %v1945 = vunpack.c.l.s8.bf16 %v1321
    %v1946 = vunpack.c.l.s8.bf16 %v1322
    %v1947 = vunpack.c.l.s8.bf16 %v1323
    %v1948 = vunpack.c.l.s8.bf16 %v1324
    %v1949 = vunpack.c.l.s8.bf16 %v1325
    %v1950 = vunpack.c.l.s8.bf16 %v1326
    %v1951 = vunpack.c.l.s8.bf16 %v1327
    %v1952 = vunpack.c.l.s8.bf16 %v1328
    %v1953 = vunpack.c.l.s8.bf16 %v1329
    %v1954 = vunpack.c.l.s8.bf16 %v1330
    %v1955 = vunpack.c.l.s8.bf16 %v1331
    %v1956 = vunpack.c.l.s8.bf16 %v1332
    %v1957 = vunpack.c.l.s8.bf16 %v1333
    %v1958 = vunpack.c.l.s8.bf16 %v1334
    %v1959 = vunpack.c.l.s8.bf16 %v1335
    %v1960 = vunpack.c.l.s8.bf16 %v1336
    %v1961 = vunpack.c.h.s8.bf16 %v1321
    %v1962 = vunpack.c.h.s8.bf16 %v1322
    %v1963 = vunpack.c.h.s8.bf16 %v1323
    %v1964 = vunpack.c.h.s8.bf16 %v1324
    %v1965 = vunpack.c.h.s8.bf16 %v1325
    %v1966 = vunpack.c.h.s8.bf16 %v1326
    %v1967 = vunpack.c.h.s8.bf16 %v1327
    %v1968 = vunpack.c.h.s8.bf16 %v1328
    %v1969 = vunpack.c.h.s8.bf16 %v1329
    %v1970 = vunpack.c.h.s8.bf16 %v1330
    %v1971 = vunpack.c.h.s8.bf16 %v1331
    %v1972 = vunpack.c.h.s8.bf16 %v1332
    %v1973 = vunpack.c.h.s8.bf16 %v1333
    %v1974 = vunpack.c.h.s8.bf16 %v1334
    %v1975 = vunpack.c.h.s8.bf16 %v1335
    %v1976 = vunpack.c.h.s8.bf16 %v1336
    %v1977 = vunpack.c.l.s8.bf16 %v1337
    %v1978 = vunpack.c.l.s8.bf16 %v1338
    %v1979 = vunpack.c.l.s8.bf16 %v1339
    %v1980 = vunpack.c.l.s8.bf16 %v1340
    %v1981 = vunpack.c.l.s8.bf16 %v1341
    %v1982 = vunpack.c.l.s8.bf16 %v1342
    %v1983 = vunpack.c.l.s8.bf16 %v1343
    %v1984 = vunpack.c.l.s8.bf16 %v1344
    %v1985 = vunpack.c.l.s8.bf16 %v1345
    %v1986 = vunpack.c.l.s8.bf16 %v1346
    %v1987 = vunpack.c.l.s8.bf16 %v1347
    %v1988 = vunpack.c.l.s8.bf16 %v1348
    %v1989 = vunpack.c.l.s8.bf16 %v1349
    %v1990 = vunpack.c.l.s8.bf16 %v1350
    %v1991 = vunpack.c.l.s8.bf16 %v1351
    %v1992 = vunpack.c.l.s8.bf16 %v1352
    %v1993 = vunpack.c.h.s8.bf16 %v1337
    %v1994 = vunpack.c.h.s8.bf16 %v1338
    %v1995 = vunpack.c.h.s8.bf16 %v1339
    %v1996 = vunpack.c.h.s8.bf16 %v1340
    %v1997 = vunpack.c.h.s8.bf16 %v1341
    %v1998 = vunpack.c.h.s8.bf16 %v1342
    %v1999 = vunpack.c.h.s8.bf16 %v1343
    %v2000 = vunpack.c.h.s8.bf16 %v1344
    %v2001 = vunpack.c.h.s8.bf16 %v1345
    %v2002 = vunpack.c.h.s8.bf16 %v1346
    %v2003 = vunpack.c.h.s8.bf16 %v1347
    %v2004 = vunpack.c.h.s8.bf16 %v1348
    %v2005 = vunpack.c.h.s8.bf16 %v1349
    %v2006 = vunpack.c.h.s8.bf16 %v1350
    %v2007 = vunpack.c.h.s8.bf16 %v1351
    %v2008 = vunpack.c.h.s8.bf16 %v1352
    %v2009 = vunpack.c.l.s8.bf16 %v1353
    %v2010 = vunpack.c.l.s8.bf16 %v1354
    %v2011 = vunpack.c.l.s8.bf16 %v1355
    %v2012 = vunpack.c.l.s8.bf16 %v1356
    %v2013 = vunpack.c.l.s8.bf16 %v1357
    %v2014 = vunpack.c.l.s8.bf16 %v1358
    %v2015 = vunpack.c.l.s8.bf16 %v1359
    %v2016 = vunpack.c.l.s8.bf16 %v1360
    %v2017 = vunpack.c.l.s8.bf16 %v1361
    %v2018 = vunpack.c.l.s8.bf16 %v1362
    %v2019 = vunpack.c.l.s8.bf16 %v1363
    %v2020 = vunpack.c.l.s8.bf16 %v1364
    %v2021 = vunpack.c.l.s8.bf16 %v1365
    %v2022 = vunpack.c.l.s8.bf16 %v1366
    %v2023 = vunpack.c.l.s8.bf16 %v1367
    %v2024 = vunpack.c.l.s8.bf16 %v1368
    %v2025 = vunpack.c.h.s8.bf16 %v1353
    %v2026 = vunpack.c.h.s8.bf16 %v1354
    %v2027 = vunpack.c.h.s8.bf16 %v1355
    %v2028 = vunpack.c.h.s8.bf16 %v1356
    %v2029 = vunpack.c.h.s8.bf16 %v1357
    %v2030 = vunpack.c.h.s8.bf16 %v1358
    %v2031 = vunpack.c.h.s8.bf16 %v1359
    %v2032 = vunpack.c.h.s8.bf16 %v1360
    %v2033 = vunpack.c.h.s8.bf16 %v1361
    %v2034 = vunpack.c.h.s8.bf16 %v1362
    %v2035 = vunpack.c.h.s8.bf16 %v1363
    %v2036 = vunpack.c.h.s8.bf16 %v1364
    %v2037 = vunpack.c.h.s8.bf16 %v1365
    %v2038 = vunpack.c.h.s8.bf16 %v1366
    %v2039 = vunpack.c.h.s8.bf16 %v1367
    %v2040 = vunpack.c.h.s8.bf16 %v1368
    %v2041 = vunpack.c.l.s8.bf16 %v1369
    %v2042 = vunpack.c.l.s8.bf16 %v1370
    %v2043 = vunpack.c.l.s8.bf16 %v1371
    %v2044 = vunpack.c.l.s8.bf16 %v1372
    %v2045 = vunpack.c.l.s8.bf16 %v1373
    %v2046 = vunpack.c.l.s8.bf16 %v1374
    %v2047 = vunpack.c.l.s8.bf16 %v1375
    %v2048 = vunpack.c.l.s8.bf16 %v1376
    %v2049 = vunpack.c.l.s8.bf16 %v1377
    %v2050 = vunpack.c.l.s8.bf16 %v1378
    %v2051 = vunpack.c.l.s8.bf16 %v1379
    %v2052 = vunpack.c.l.s8.bf16 %v1380
    %v2053 = vunpack.c.l.s8.bf16 %v1381
    %v2054 = vunpack.c.l.s8.bf16 %v1382
    %v2055 = vunpack.c.l.s8.bf16 %v1383
    %v2056 = vunpack.c.l.s8.bf16 %v1384
    %v2057 = vunpack.c.h.s8.bf16 %v1369
    %v2058 = vunpack.c.h.s8.bf16 %v1370
    %v2059 = vunpack.c.h.s8.bf16 %v1371
    %v2060 = vunpack.c.h.s8.bf16 %v1372
    %v2061 = vunpack.c.h.s8.bf16 %v1373
    %v2062 = vunpack.c.h.s8.bf16 %v1374
    %v2063 = vunpack.c.h.s8.bf16 %v1375
    %v2064 = vunpack.c.h.s8.bf16 %v1376
    %v2065 = vunpack.c.h.s8.bf16 %v1377
    %v2066 = vunpack.c.h.s8.bf16 %v1378
    %v2067 = vunpack.c.h.s8.bf16 %v1379
    %v2068 = vunpack.c.h.s8.bf16 %v1380
    %v2069 = vunpack.c.h.s8.bf16 %v1381
    %v2070 = vunpack.c.h.s8.bf16 %v1382
    %v2071 = vunpack.c.h.s8.bf16 %v1383
    %v2072 = vunpack.c.h.s8.bf16 %v1384
    %v2073 = vunpack.c.l.s8.bf16 %v1385
    %v2074 = vunpack.c.l.s8.bf16 %v1386
    %v2075 = vunpack.c.l.s8.bf16 %v1387
    %v2076 = vunpack.c.l.s8.bf16 %v1388
    %v2077 = vunpack.c.l.s8.bf16 %v1389
    %v2078 = vunpack.c.l.s8.bf16 %v1390
    %v2079 = vunpack.c.l.s8.bf16 %v1391
    %v2080 = vunpack.c.l.s8.bf16 %v1392
    %v2081 = vunpack.c.l.s8.bf16 %v1393
    %v2082 = vunpack.c.l.s8.bf16 %v1394
    %v2083 = vunpack.c.l.s8.bf16 %v1395
    %v2084 = vunpack.c.l.s8.bf16 %v1396
    %v2085 = vunpack.c.l.s8.bf16 %v1397
    %v2086 = vunpack.c.l.s8.bf16 %v1398
    %v2087 = vunpack.c.l.s8.bf16 %v1399
    %v2088 = vunpack.c.l.s8.bf16 %v1400
    %v2089 = vunpack.c.h.s8.bf16 %v1385
    %v2090 = vunpack.c.h.s8.bf16 %v1386
    %v2091 = vunpack.c.h.s8.bf16 %v1387
    %v2092 = vunpack.c.h.s8.bf16 %v1388
    %v2093 = vunpack.c.h.s8.bf16 %v1389
    %v2094 = vunpack.c.h.s8.bf16 %v1390
    %v2095 = vunpack.c.h.s8.bf16 %v1391
    %v2096 = vunpack.c.h.s8.bf16 %v1392
    %v2097 = vunpack.c.h.s8.bf16 %v1393
    %v2098 = vunpack.c.h.s8.bf16 %v1394
    %v2099 = vunpack.c.h.s8.bf16 %v1395
    %v2100 = vunpack.c.h.s8.bf16 %v1396
    %v2101 = vunpack.c.h.s8.bf16 %v1397
    %v2102 = vunpack.c.h.s8.bf16 %v1398
    %v2103 = vunpack.c.h.s8.bf16 %v1399
    %v2104 = vunpack.c.h.s8.bf16 %v1400
    %v2105 = vunpack.c.l.s8.bf16 %v1401
    %v2106 = vunpack.c.l.s8.bf16 %v1402
    %v2107 = vunpack.c.l.s8.bf16 %v1403
    %v2108 = vunpack.c.l.s8.bf16 %v1404
    %v2109 = vunpack.c.l.s8.bf16 %v1405
    %v2110 = vunpack.c.l.s8.bf16 %v1406
    %v2111 = vunpack.c.l.s8.bf16 %v1407
    %v2112 = vunpack.c.l.s8.bf16 %v1408
    %v2113 = vunpack.c.l.s8.bf16 %v1409
    %v2114 = vunpack.c.l.s8.bf16 %v1410
    %v2115 = vunpack.c.l.s8.bf16 %v1411
    %v2116 = vunpack.c.l.s8.bf16 %v1412
    %v2117 = vunpack.c.l.s8.bf16 %v1413
    %v2118 = vunpack.c.l.s8.bf16 %v1414
    %v2119 = vunpack.c.l.s8.bf16 %v1415
    %v2120 = vunpack.c.l.s8.bf16 %v1416
    %v2121 = vunpack.c.h.s8.bf16 %v1401
    %v2122 = vunpack.c.h.s8.bf16 %v1402
    %v2123 = vunpack.c.h.s8.bf16 %v1403
    %v2124 = vunpack.c.h.s8.bf16 %v1404
    %v2125 = vunpack.c.h.s8.bf16 %v1405
    %v2126 = vunpack.c.h.s8.bf16 %v1406
    %v2127 = vunpack.c.h.s8.bf16 %v1407
    %v2128 = vunpack.c.h.s8.bf16 %v1408
    %v2129 = vunpack.c.h.s8.bf16 %v1409
    %v2130 = vunpack.c.h.s8.bf16 %v1410
    %v2131 = vunpack.c.h.s8.bf16 %v1411
    %v2132 = vunpack.c.h.s8.bf16 %v1412
    %v2133 = vunpack.c.h.s8.bf16 %v1413
    %v2134 = vunpack.c.h.s8.bf16 %v1414
    %v2135 = vunpack.c.h.s8.bf16 %v1415
    %v2136 = vunpack.c.h.s8.bf16 %v1416
    %v2137 = vunpack.c.l.s8.bf16 %v1417
    %v2138 = vunpack.c.l.s8.bf16 %v1418
    %v2139 = vunpack.c.l.s8.bf16 %v1419
    %v2140 = vunpack.c.l.s8.bf16 %v1420
    %v2141 = vunpack.c.l.s8.bf16 %v1421
    %v2142 = vunpack.c.l.s8.bf16 %v1422
    %v2143 = vunpack.c.l.s8.bf16 %v1423
    %v2144 = vunpack.c.l.s8.bf16 %v1424
    %v2145 = vunpack.c.l.s8.bf16 %v1425
    %v2146 = vunpack.c.l.s8.bf16 %v1426
    %v2147 = vunpack.c.l.s8.bf16 %v1427
    %v2148 = vunpack.c.l.s8.bf16 %v1428
    %v2149 = vunpack.c.l.s8.bf16 %v1429
    %v2150 = vunpack.c.l.s8.bf16 %v1430
    %v2151 = vunpack.c.l.s8.bf16 %v1431
    %v2152 = vunpack.c.l.s8.bf16 %v1432
    %v2153 = vunpack.c.h.s8.bf16 %v1417
    %v2154 = vunpack.c.h.s8.bf16 %v1418
    %v2155 = vunpack.c.h.s8.bf16 %v1419
    %v2156 = vunpack.c.h.s8.bf16 %v1420
    %v2157 = vunpack.c.h.s8.bf16 %v1421
    %v2158 = vunpack.c.h.s8.bf16 %v1422
    %v2159 = vunpack.c.h.s8.bf16 %v1423
    %v2160 = vunpack.c.h.s8.bf16 %v1424
    %v2161 = vunpack.c.h.s8.bf16 %v1425
    %v2162 = vunpack.c.h.s8.bf16 %v1426
    %v2163 = vunpack.c.h.s8.bf16 %v1427
    %v2164 = vunpack.c.h.s8.bf16 %v1428
    %v2165 = vunpack.c.h.s8.bf16 %v1429
    %v2166 = vunpack.c.h.s8.bf16 %v1430
    %v2167 = vunpack.c.h.s8.bf16 %v1431
    %v2168 = vunpack.c.h.s8.bf16 %v1432
    %v2169 = vunpack.c.l.s8.bf16 %v1433
    %v2170 = vunpack.c.l.s8.bf16 %v1434
    %v2171 = vunpack.c.l.s8.bf16 %v1435
    %v2172 = vunpack.c.l.s8.bf16 %v1436
    %v2173 = vunpack.c.l.s8.bf16 %v1437
    %v2174 = vunpack.c.l.s8.bf16 %v1438
    %v2175 = vunpack.c.l.s8.bf16 %v1439
    %v2176 = vunpack.c.l.s8.bf16 %v1440
    %v2177 = vunpack.c.l.s8.bf16 %v1441
    %v2178 = vunpack.c.l.s8.bf16 %v1442
    %v2179 = vunpack.c.l.s8.bf16 %v1443
    %v2180 = vunpack.c.l.s8.bf16 %v1444
    %v2181 = vunpack.c.l.s8.bf16 %v1445
    %v2182 = vunpack.c.l.s8.bf16 %v1446
    %v2183 = vunpack.c.l.s8.bf16 %v1447
    %v2184 = vunpack.c.l.s8.bf16 %v1448
    %v2185 = vunpack.c.h.s8.bf16 %v1433
    %v2186 = vunpack.c.h.s8.bf16 %v1434
    %v2187 = vunpack.c.h.s8.bf16 %v1435
    %v2188 = vunpack.c.h.s8.bf16 %v1436
    %v2189 = vunpack.c.h.s8.bf16 %v1437
    %v2190 = vunpack.c.h.s8.bf16 %v1438
    %v2191 = vunpack.c.h.s8.bf16 %v1439
    %v2192 = vunpack.c.h.s8.bf16 %v1440
    %v2193 = vunpack.c.h.s8.bf16 %v1441
    %v2194 = vunpack.c.h.s8.bf16 %v1442
    %v2195 = vunpack.c.h.s8.bf16 %v1443
    %v2196 = vunpack.c.h.s8.bf16 %v1444
    %v2197 = vunpack.c.h.s8.bf16 %v1445
    %v2198 = vunpack.c.h.s8.bf16 %v1446
    %v2199 = vunpack.c.h.s8.bf16 %v1447
    %v2200 = vunpack.c.h.s8.bf16 %v1448
    %v2201 = vunpack.c.l.s8.bf16 %v1449
    %v2202 = vunpack.c.l.s8.bf16 %v1450
    %v2203 = vunpack.c.l.s8.bf16 %v1451
    %v2204 = vunpack.c.l.s8.bf16 %v1452
    %v2205 = vunpack.c.l.s8.bf16 %v1453
    %v2206 = vunpack.c.l.s8.bf16 %v1454
    %v2207 = vunpack.c.l.s8.bf16 %v1455
    %v2208 = vunpack.c.l.s8.bf16 %v1456
    %v2209 = vunpack.c.l.s8.bf16 %v1457
    %v2210 = vunpack.c.l.s8.bf16 %v1458
    %v2211 = vunpack.c.l.s8.bf16 %v1459
    %v2212 = vunpack.c.l.s8.bf16 %v1460
    %v2213 = vunpack.c.l.s8.bf16 %v1461
    %v2214 = vunpack.c.l.s8.bf16 %v1462
    %v2215 = vunpack.c.l.s8.bf16 %v1463
    %v2216 = vunpack.c.l.s8.bf16 %v1464
    %v2217 = vunpack.c.h.s8.bf16 %v1449
    %v2218 = vunpack.c.h.s8.bf16 %v1450
    %v2219 = vunpack.c.h.s8.bf16 %v1451
    %v2220 = vunpack.c.h.s8.bf16 %v1452
    %v2221 = vunpack.c.h.s8.bf16 %v1453
    %v2222 = vunpack.c.h.s8.bf16 %v1454
    %v2223 = vunpack.c.h.s8.bf16 %v1455
    %v2224 = vunpack.c.h.s8.bf16 %v1456
    %v2225 = vunpack.c.h.s8.bf16 %v1457
    %v2226 = vunpack.c.h.s8.bf16 %v1458
    %v2227 = vunpack.c.h.s8.bf16 %v1459
    %v2228 = vunpack.c.h.s8.bf16 %v1460
    %v2229 = vunpack.c.h.s8.bf16 %v1461
    %v2230 = vunpack.c.h.s8.bf16 %v1462
    %v2231 = vunpack.c.h.s8.bf16 %v1463
    %v2232 = vunpack.c.h.s8.bf16 %v1464
    %v2233 = vunpack.c.l.s8.bf16 %v1465
    %v2234 = vunpack.c.l.s8.bf16 %v1466
    %v2235 = vunpack.c.l.s8.bf16 %v1467
    %v2236 = vunpack.c.l.s8.bf16 %v1468
    %v2237 = vunpack.c.l.s8.bf16 %v1469
    %v2238 = vunpack.c.l.s8.bf16 %v1470
    %v2239 = vunpack.c.l.s8.bf16 %v1471
    %v2240 = vunpack.c.l.s8.bf16 %v1472
    %v2241 = vunpack.c.l.s8.bf16 %v1473
    %v2242 = vunpack.c.l.s8.bf16 %v1474
    %v2243 = vunpack.c.l.s8.bf16 %v1475
    %v2244 = vunpack.c.l.s8.bf16 %v1476
    %v2245 = vunpack.c.l.s8.bf16 %v1477
    %v2246 = vunpack.c.l.s8.bf16 %v1478
    %v2247 = vunpack.c.l.s8.bf16 %v1479
    %v2248 = vunpack.c.l.s8.bf16 %v1480
    %v2249 = vunpack.c.h.s8.bf16 %v1465
    %v2250 = vunpack.c.h.s8.bf16 %v1466
    %v2251 = vunpack.c.h.s8.bf16 %v1467
    %v2252 = vunpack.c.h.s8.bf16 %v1468
    %v2253 = vunpack.c.h.s8.bf16 %v1469
    %v2254 = vunpack.c.h.s8.bf16 %v1470
    %v2255 = vunpack.c.h.s8.bf16 %v1471
    %v2256 = vunpack.c.h.s8.bf16 %v1472
    %v2257 = vunpack.c.h.s8.bf16 %v1473
    %v2258 = vunpack.c.h.s8.bf16 %v1474
    %v2259 = vunpack.c.h.s8.bf16 %v1475
    %v2260 = vunpack.c.h.s8.bf16 %v1476
    %v2261 = vunpack.c.h.s8.bf16 %v1477
    %v2262 = vunpack.c.h.s8.bf16 %v1478
    %v2263 = vunpack.c.h.s8.bf16 %v1479
    %v2264 = vunpack.c.h.s8.bf16 %v1480
    %v2265 = vunpack.c.l.s8.bf16 %v1481
    %v2266 = vunpack.c.l.s8.bf16 %v1482
    %v2267 = vunpack.c.l.s8.bf16 %v1483
    %v2268 = vunpack.c.l.s8.bf16 %v1484
    %v2269 = vunpack.c.l.s8.bf16 %v1485
    %v2270 = vunpack.c.l.s8.bf16 %v1486
    %v2271 = vunpack.c.l.s8.bf16 %v1487
    %v2272 = vunpack.c.l.s8.bf16 %v1488
    %v2273 = vunpack.c.l.s8.bf16 %v1489
    %v2274 = vunpack.c.l.s8.bf16 %v1490
    %v2275 = vunpack.c.l.s8.bf16 %v1491
    %v2276 = vunpack.c.l.s8.bf16 %v1492
    %v2277 = vunpack.c.l.s8.bf16 %v1493
    %v2278 = vunpack.c.l.s8.bf16 %v1494
    %v2279 = vunpack.c.l.s8.bf16 %v1495
    %v2280 = vunpack.c.l.s8.bf16 %v1496
    %v2281 = vunpack.c.h.s8.bf16 %v1481
    %v2282 = vunpack.c.h.s8.bf16 %v1482
    %v2283 = vunpack.c.h.s8.bf16 %v1483
    %v2284 = vunpack.c.h.s8.bf16 %v1484
    %v2285 = vunpack.c.h.s8.bf16 %v1485
    %v2286 = vunpack.c.h.s8.bf16 %v1486
    %v2287 = vunpack.c.h.s8.bf16 %v1487
    %v2288 = vunpack.c.h.s8.bf16 %v1488
    %v2289 = vunpack.c.h.s8.bf16 %v1489
    %v2290 = vunpack.c.h.s8.bf16 %v1490
    %v2291 = vunpack.c.h.s8.bf16 %v1491
    %v2292 = vunpack.c.h.s8.bf16 %v1492
    %v2293 = vunpack.c.h.s8.bf16 %v1493
    %v2294 = vunpack.c.h.s8.bf16 %v1494
    %v2295 = vunpack.c.h.s8.bf16 %v1495
    %v2296 = vunpack.c.h.s8.bf16 %v1496
    %v2297 = vunpack.c.l.s8.bf16 %v1497
    %v2298 = vunpack.c.l.s8.bf16 %v1498
    %v2299 = vunpack.c.l.s8.bf16 %v1499
    %v2300 = vunpack.c.l.s8.bf16 %v1500
    %v2301 = vunpack.c.l.s8.bf16 %v1501
    %v2302 = vunpack.c.l.s8.bf16 %v1502
    %v2303 = vunpack.c.l.s8.bf16 %v1503
    %v2304 = vunpack.c.l.s8.bf16 %v1504
    %v2305 = vunpack.c.l.s8.bf16 %v1505
    %v2306 = vunpack.c.l.s8.bf16 %v1506
    %v2307 = vunpack.c.l.s8.bf16 %v1507
    %v2308 = vunpack.c.l.s8.bf16 %v1508
    %v2309 = vunpack.c.l.s8.bf16 %v1509
    %v2310 = vunpack.c.l.s8.bf16 %v1510
    %v2311 = vunpack.c.l.s8.bf16 %v1511
    %v2312 = vunpack.c.l.s8.bf16 %v1512
    %v2313 = vunpack.c.h.s8.bf16 %v1497
    %v2314 = vunpack.c.h.s8.bf16 %v1498
    %v2315 = vunpack.c.h.s8.bf16 %v1499
    %v2316 = vunpack.c.h.s8.bf16 %v1500
    %v2317 = vunpack.c.h.s8.bf16 %v1501
    %v2318 = vunpack.c.h.s8.bf16 %v1502
    %v2319 = vunpack.c.h.s8.bf16 %v1503
    %v2320 = vunpack.c.h.s8.bf16 %v1504
    %v2321 = vunpack.c.h.s8.bf16 %v1505
    %v2322 = vunpack.c.h.s8.bf16 %v1506
    %v2323 = vunpack.c.h.s8.bf16 %v1507
    %v2324 = vunpack.c.h.s8.bf16 %v1508
    %v2325 = vunpack.c.h.s8.bf16 %v1509
    %v2326 = vunpack.c.h.s8.bf16 %v1510
    %v2327 = vunpack.c.h.s8.bf16 %v1511
    %v2328 = vunpack.c.h.s8.bf16 %v1512
    %v2329 = vunpack.c.l.s8.bf16 %v1513
    %v2330 = vunpack.c.l.s8.bf16 %v1514
    %v2331 = vunpack.c.l.s8.bf16 %v1515
    %v2332 = vunpack.c.l.s8.bf16 %v1516
    %v2333 = vunpack.c.l.s8.bf16 %v1517
    %v2334 = vunpack.c.l.s8.bf16 %v1518
    %v2335 = vunpack.c.l.s8.bf16 %v1519
    %v2336 = vunpack.c.l.s8.bf16 %v1520
    %v2337 = vunpack.c.l.s8.bf16 %v1521
    %v2338 = vunpack.c.l.s8.bf16 %v1522
    %v2339 = vunpack.c.l.s8.bf16 %v1523
    %v2340 = vunpack.c.l.s8.bf16 %v1524
    %v2341 = vunpack.c.l.s8.bf16 %v1525
    %v2342 = vunpack.c.l.s8.bf16 %v1526
    %v2343 = vunpack.c.l.s8.bf16 %v1527
    %v2344 = vunpack.c.l.s8.bf16 %v1528
    %v2345 = vunpack.c.h.s8.bf16 %v1513
    %v2346 = vunpack.c.h.s8.bf16 %v1514
    %v2347 = vunpack.c.h.s8.bf16 %v1515
    %v2348 = vunpack.c.h.s8.bf16 %v1516
    %v2349 = vunpack.c.h.s8.bf16 %v1517
    %v2350 = vunpack.c.h.s8.bf16 %v1518
    %v2351 = vunpack.c.h.s8.bf16 %v1519
    %v2352 = vunpack.c.h.s8.bf16 %v1520
    %v2353 = vunpack.c.h.s8.bf16 %v1521
    %v2354 = vunpack.c.h.s8.bf16 %v1522
    %v2355 = vunpack.c.h.s8.bf16 %v1523
    %v2356 = vunpack.c.h.s8.bf16 %v1524
    %v2357 = vunpack.c.h.s8.bf16 %v1525
    %v2358 = vunpack.c.h.s8.bf16 %v1526
    %v2359 = vunpack.c.h.s8.bf16 %v1527
    %v2360 = vunpack.c.h.s8.bf16 %v1528
    %v2361 = vunpack.c.l.s8.bf16 %v1529
    %v2362 = vunpack.c.l.s8.bf16 %v1530
    %v2363 = vunpack.c.l.s8.bf16 %v1531
    %v2364 = vunpack.c.l.s8.bf16 %v1532
    %v2365 = vunpack.c.l.s8.bf16 %v1533
    %v2366 = vunpack.c.l.s8.bf16 %v1534
    %v2367 = vunpack.c.l.s8.bf16 %v1535
    %v2368 = vunpack.c.l.s8.bf16 %v1536
    %v2369 = vunpack.c.l.s8.bf16 %v1537
    %v2370 = vunpack.c.l.s8.bf16 %v1538
    %v2371 = vunpack.c.l.s8.bf16 %v1539
    %v2372 = vunpack.c.l.s8.bf16 %v1540
    %v2373 = vunpack.c.l.s8.bf16 %v1541
    %v2374 = vunpack.c.l.s8.bf16 %v1542
    %v2375 = vunpack.c.l.s8.bf16 %v1543
    %v2376 = vunpack.c.l.s8.bf16 %v1544
    %v2377 = vunpack.c.h.s8.bf16 %v1529
    %v2378 = vunpack.c.h.s8.bf16 %v1530
    %v2379 = vunpack.c.h.s8.bf16 %v1531
    %v2380 = vunpack.c.h.s8.bf16 %v1532
    %v2381 = vunpack.c.h.s8.bf16 %v1533
    %v2382 = vunpack.c.h.s8.bf16 %v1534
    %v2383 = vunpack.c.h.s8.bf16 %v1535
    %v2384 = vunpack.c.h.s8.bf16 %v1536
    %v2385 = vunpack.c.h.s8.bf16 %v1537
    %v2386 = vunpack.c.h.s8.bf16 %v1538
    %v2387 = vunpack.c.h.s8.bf16 %v1539
    %v2388 = vunpack.c.h.s8.bf16 %v1540
    %v2389 = vunpack.c.h.s8.bf16 %v1541
    %v2390 = vunpack.c.h.s8.bf16 %v1542
    %v2391 = vunpack.c.h.s8.bf16 %v1543
    %v2392 = vunpack.c.h.s8.bf16 %v1544
    %v2393 = vunpack.c.l.s8.bf16 %v1545
    %v2394 = vunpack.c.l.s8.bf16 %v1546
    %v2395 = vunpack.c.l.s8.bf16 %v1547
    %v2396 = vunpack.c.l.s8.bf16 %v1548
    %v2397 = vunpack.c.l.s8.bf16 %v1549
    %v2398 = vunpack.c.l.s8.bf16 %v1550
    %v2399 = vunpack.c.l.s8.bf16 %v1551
    %v2400 = vunpack.c.l.s8.bf16 %v1552
    %v2401 = vunpack.c.l.s8.bf16 %v1553
    %v2402 = vunpack.c.l.s8.bf16 %v1554
    %v2403 = vunpack.c.l.s8.bf16 %v1555
    %v2404 = vunpack.c.l.s8.bf16 %v1556
    %v2405 = vunpack.c.l.s8.bf16 %v1557
    %v2406 = vunpack.c.l.s8.bf16 %v1558
    %v2407 = vunpack.c.l.s8.bf16 %v1559
    %v2408 = vunpack.c.l.s8.bf16 %v1560
    %v2409 = vunpack.c.h.s8.bf16 %v1545
    %v2410 = vunpack.c.h.s8.bf16 %v1546
    %v2411 = vunpack.c.h.s8.bf16 %v1547
    %v2412 = vunpack.c.h.s8.bf16 %v1548
    %v2413 = vunpack.c.h.s8.bf16 %v1549
    %v2414 = vunpack.c.h.s8.bf16 %v1550
    %v2415 = vunpack.c.h.s8.bf16 %v1551
    %v2416 = vunpack.c.h.s8.bf16 %v1552
    %v2417 = vunpack.c.h.s8.bf16 %v1553
    %v2418 = vunpack.c.h.s8.bf16 %v1554
    %v2419 = vunpack.c.h.s8.bf16 %v1555
    %v2420 = vunpack.c.h.s8.bf16 %v1556
    %v2421 = vunpack.c.h.s8.bf16 %v1557
    %v2422 = vunpack.c.h.s8.bf16 %v1558
    %v2423 = vunpack.c.h.s8.bf16 %v1559
    %v2424 = vunpack.c.h.s8.bf16 %v1560
    %v2425 = vunpack.c.l.s8.bf16 %v1561
    %v2426 = vunpack.c.l.s8.bf16 %v1562
    %v2427 = vunpack.c.l.s8.bf16 %v1563
    %v2428 = vunpack.c.l.s8.bf16 %v1564
    %v2429 = vunpack.c.l.s8.bf16 %v1565
    %v2430 = vunpack.c.l.s8.bf16 %v1566
    %v2431 = vunpack.c.l.s8.bf16 %v1567
    %v2432 = vunpack.c.l.s8.bf16 %v1568
    %v2433 = vunpack.c.l.s8.bf16 %v1569
    %v2434 = vunpack.c.l.s8.bf16 %v1570
    %v2435 = vunpack.c.l.s8.bf16 %v1571
    %v2436 = vunpack.c.l.s8.bf16 %v1572
    %v2437 = vunpack.c.l.s8.bf16 %v1573
    %v2438 = vunpack.c.l.s8.bf16 %v1574
    %v2439 = vunpack.c.l.s8.bf16 %v1575
    %v2440 = vunpack.c.l.s8.bf16 %v1576
    %v2441 = vunpack.c.h.s8.bf16 %v1561
    %v2442 = vunpack.c.h.s8.bf16 %v1562
    %v2443 = vunpack.c.h.s8.bf16 %v1563
    %v2444 = vunpack.c.h.s8.bf16 %v1564
    %v2445 = vunpack.c.h.s8.bf16 %v1565
    %v2446 = vunpack.c.h.s8.bf16 %v1566
    %v2447 = vunpack.c.h.s8.bf16 %v1567
    %v2448 = vunpack.c.h.s8.bf16 %v1568
    %v2449 = vunpack.c.h.s8.bf16 %v1569
    %v2450 = vunpack.c.h.s8.bf16 %v1570
    %v2451 = vunpack.c.h.s8.bf16 %v1571
    %v2452 = vunpack.c.h.s8.bf16 %v1572
    %v2453 = vunpack.c.h.s8.bf16 %v1573
    %v2454 = vunpack.c.h.s8.bf16 %v1574
    %v2455 = vunpack.c.h.s8.bf16 %v1575
    %v2456 = vunpack.c.h.s8.bf16 %v1576
    %v2457 = vunpack.c.l.s8.bf16 %v1577
    %v2458 = vunpack.c.l.s8.bf16 %v1578
    %v2459 = vunpack.c.l.s8.bf16 %v1579
    %v2460 = vunpack.c.l.s8.bf16 %v1580
    %v2461 = vunpack.c.l.s8.bf16 %v1581
    %v2462 = vunpack.c.l.s8.bf16 %v1582
    %v2463 = vunpack.c.l.s8.bf16 %v1583
    %v2464 = vunpack.c.l.s8.bf16 %v1584
    %v2465 = vunpack.c.l.s8.bf16 %v1585
    %v2466 = vunpack.c.l.s8.bf16 %v1586
    %v2467 = vunpack.c.l.s8.bf16 %v1587
    %v2468 = vunpack.c.l.s8.bf16 %v1588
    %v2469 = vunpack.c.l.s8.bf16 %v1589
    %v2470 = vunpack.c.l.s8.bf16 %v1590
    %v2471 = vunpack.c.l.s8.bf16 %v1591
    %v2472 = vunpack.c.l.s8.bf16 %v1592
    %v2473 = vunpack.c.h.s8.bf16 %v1577
    %v2474 = vunpack.c.h.s8.bf16 %v1578
    %v2475 = vunpack.c.h.s8.bf16 %v1579
    %v2476 = vunpack.c.h.s8.bf16 %v1580
    %v2477 = vunpack.c.h.s8.bf16 %v1581
    %v2478 = vunpack.c.h.s8.bf16 %v1582
    %v2479 = vunpack.c.h.s8.bf16 %v1583
    %v2480 = vunpack.c.h.s8.bf16 %v1584
    %v2481 = vunpack.c.h.s8.bf16 %v1585
    %v2482 = vunpack.c.h.s8.bf16 %v1586
    %v2483 = vunpack.c.h.s8.bf16 %v1587
    %v2484 = vunpack.c.h.s8.bf16 %v1588
    %v2485 = vunpack.c.h.s8.bf16 %v1589
    %v2486 = vunpack.c.h.s8.bf16 %v1590
    %v2487 = vunpack.c.h.s8.bf16 %v1591
    %v2488 = vunpack.c.h.s8.bf16 %v1592
    %v2489 = vunpack.c.l.s8.bf16 %v1593
    %v2490 = vunpack.c.l.s8.bf16 %v1594
    %v2491 = vunpack.c.l.s8.bf16 %v1595
    %v2492 = vunpack.c.l.s8.bf16 %v1596
    %v2493 = vunpack.c.l.s8.bf16 %v1597
    %v2494 = vunpack.c.l.s8.bf16 %v1598
    %v2495 = vunpack.c.l.s8.bf16 %v1599
    %v2496 = vunpack.c.l.s8.bf16 %v1600
    %v2497 = vunpack.c.l.s8.bf16 %v1601
    %v2498 = vunpack.c.l.s8.bf16 %v1602
    %v2499 = vunpack.c.l.s8.bf16 %v1603
    %v2500 = vunpack.c.l.s8.bf16 %v1604
    %v2501 = vunpack.c.l.s8.bf16 %v1605
    %v2502 = vunpack.c.l.s8.bf16 %v1606
    %v2503 = vunpack.c.l.s8.bf16 %v1607
    %v2504 = vunpack.c.l.s8.bf16 %v1608
    %v2505 = vunpack.c.h.s8.bf16 %v1593
    %v2506 = vunpack.c.h.s8.bf16 %v1594
    %v2507 = vunpack.c.h.s8.bf16 %v1595
    %v2508 = vunpack.c.h.s8.bf16 %v1596
    %v2509 = vunpack.c.h.s8.bf16 %v1597
    %v2510 = vunpack.c.h.s8.bf16 %v1598
    %v2511 = vunpack.c.h.s8.bf16 %v1599
    %v2512 = vunpack.c.h.s8.bf16 %v1600
    %v2513 = vunpack.c.h.s8.bf16 %v1601
    %v2514 = vunpack.c.h.s8.bf16 %v1602
    %v2515 = vunpack.c.h.s8.bf16 %v1603
    %v2516 = vunpack.c.h.s8.bf16 %v1604
    %v2517 = vunpack.c.h.s8.bf16 %v1605
    %v2518 = vunpack.c.h.s8.bf16 %v1606
    %v2519 = vunpack.c.h.s8.bf16 %v1607
    %v2520 = vunpack.c.h.s8.bf16 %v1608
    %v2521 = vunpack.c.l.s8.bf16 %v1609
    %v2522 = vunpack.c.l.s8.bf16 %v1610
    %v2523 = vunpack.c.l.s8.bf16 %v1611
    %v2524 = vunpack.c.l.s8.bf16 %v1612
    %v2525 = vunpack.c.l.s8.bf16 %v1613
    %v2526 = vunpack.c.l.s8.bf16 %v1614
    %v2527 = vunpack.c.l.s8.bf16 %v1615
    %v2528 = vunpack.c.l.s8.bf16 %v1616
    %v2529 = vunpack.c.l.s8.bf16 %v1617
    %v2530 = vunpack.c.l.s8.bf16 %v1618
    %v2531 = vunpack.c.l.s8.bf16 %v1619
    %v2532 = vunpack.c.l.s8.bf16 %v1620
    %v2533 = vunpack.c.l.s8.bf16 %v1621
    %v2534 = vunpack.c.l.s8.bf16 %v1622
    %v2535 = vunpack.c.l.s8.bf16 %v1623
    %v2536 = vunpack.c.l.s8.bf16 %v1624
    %v2537 = vunpack.c.h.s8.bf16 %v1609
    %v2538 = vunpack.c.h.s8.bf16 %v1610
    %v2539 = vunpack.c.h.s8.bf16 %v1611
    %v2540 = vunpack.c.h.s8.bf16 %v1612
    %v2541 = vunpack.c.h.s8.bf16 %v1613
    %v2542 = vunpack.c.h.s8.bf16 %v1614
    %v2543 = vunpack.c.h.s8.bf16 %v1615
    %v2544 = vunpack.c.h.s8.bf16 %v1616
    %v2545 = vunpack.c.h.s8.bf16 %v1617
    %v2546 = vunpack.c.h.s8.bf16 %v1618
    %v2547 = vunpack.c.h.s8.bf16 %v1619
    %v2548 = vunpack.c.h.s8.bf16 %v1620
    %v2549 = vunpack.c.h.s8.bf16 %v1621
    %v2550 = vunpack.c.h.s8.bf16 %v1622
    %v2551 = vunpack.c.h.s8.bf16 %v1623
    %v2552 = vunpack.c.h.s8.bf16 %v1624
    %v2553 = vunpack.c.l.s8.bf16 %v1625
    %v2554 = vunpack.c.l.s8.bf16 %v1626
    %v2555 = vunpack.c.l.s8.bf16 %v1627
    %v2556 = vunpack.c.l.s8.bf16 %v1628
    %v2557 = vunpack.c.l.s8.bf16 %v1629
    %v2558 = vunpack.c.l.s8.bf16 %v1630
    %v2559 = vunpack.c.l.s8.bf16 %v1631
    %v2560 = vunpack.c.l.s8.bf16 %v1632
    %v2561 = vunpack.c.l.s8.bf16 %v1633
    %v2562 = vunpack.c.l.s8.bf16 %v1634
    %v2563 = vunpack.c.l.s8.bf16 %v1635
    %v2564 = vunpack.c.l.s8.bf16 %v1636
    %v2565 = vunpack.c.l.s8.bf16 %v1637
    %v2566 = vunpack.c.l.s8.bf16 %v1638
    %v2567 = vunpack.c.l.s8.bf16 %v1639
    %v2568 = vunpack.c.l.s8.bf16 %v1640
    %v2569 = vunpack.c.h.s8.bf16 %v1625
    %v2570 = vunpack.c.h.s8.bf16 %v1626
    %v2571 = vunpack.c.h.s8.bf16 %v1627
    %v2572 = vunpack.c.h.s8.bf16 %v1628
    %v2573 = vunpack.c.h.s8.bf16 %v1629
    %v2574 = vunpack.c.h.s8.bf16 %v1630
    %v2575 = vunpack.c.h.s8.bf16 %v1631
    %v2576 = vunpack.c.h.s8.bf16 %v1632
    %v2577 = vunpack.c.h.s8.bf16 %v1633
    %v2578 = vunpack.c.h.s8.bf16 %v1634
    %v2579 = vunpack.c.h.s8.bf16 %v1635
    %v2580 = vunpack.c.h.s8.bf16 %v1636
    %v2581 = vunpack.c.h.s8.bf16 %v1637
    %v2582 = vunpack.c.h.s8.bf16 %v1638
    %v2583 = vunpack.c.h.s8.bf16 %v1639
    %v2584 = vunpack.c.h.s8.bf16 %v1640
    %v2585 = vunpack.c.l.s8.bf16 %v1641
    %v2586 = vunpack.c.l.s8.bf16 %v1642
    %v2587 = vunpack.c.l.s8.bf16 %v1643
    %v2588 = vunpack.c.l.s8.bf16 %v1644
    %v2589 = vunpack.c.l.s8.bf16 %v1645
    %v2590 = vunpack.c.l.s8.bf16 %v1646
    %v2591 = vunpack.c.l.s8.bf16 %v1647
    %v2592 = vunpack.c.l.s8.bf16 %v1648
    %v2593 = vunpack.c.l.s8.bf16 %v1649
    %v2594 = vunpack.c.l.s8.bf16 %v1650
    %v2595 = vunpack.c.l.s8.bf16 %v1651
    %v2596 = vunpack.c.l.s8.bf16 %v1652
    %v2597 = vunpack.c.l.s8.bf16 %v1653
    %v2598 = vunpack.c.l.s8.bf16 %v1654
    %v2599 = vunpack.c.l.s8.bf16 %v1655
    %v2600 = vunpack.c.l.s8.bf16 %v1656
    %v2601 = vunpack.c.h.s8.bf16 %v1641
    %v2602 = vunpack.c.h.s8.bf16 %v1642
    %v2603 = vunpack.c.h.s8.bf16 %v1643
    %v2604 = vunpack.c.h.s8.bf16 %v1644
    %v2605 = vunpack.c.h.s8.bf16 %v1645
    %v2606 = vunpack.c.h.s8.bf16 %v1646
    %v2607 = vunpack.c.h.s8.bf16 %v1647
    %v2608 = vunpack.c.h.s8.bf16 %v1648
    %v2609 = vunpack.c.h.s8.bf16 %v1649
    %v2610 = vunpack.c.h.s8.bf16 %v1650
    %v2611 = vunpack.c.h.s8.bf16 %v1651
    %v2612 = vunpack.c.h.s8.bf16 %v1652
    %v2613 = vunpack.c.h.s8.bf16 %v1653
    %v2614 = vunpack.c.h.s8.bf16 %v1654
    %v2615 = vunpack.c.h.s8.bf16 %v1655
    %v2616 = vunpack.c.h.s8.bf16 %v1656
    %v2617 = vunpack.c.l.s8.bf16 %v1657
    %v2618 = vunpack.c.l.s8.bf16 %v1658
    %v2619 = vunpack.c.l.s8.bf16 %v1659
    %v2620 = vunpack.c.l.s8.bf16 %v1660
    %v2621 = vunpack.c.l.s8.bf16 %v1661
    %v2622 = vunpack.c.l.s8.bf16 %v1662
    %v2623 = vunpack.c.l.s8.bf16 %v1663
    %v2624 = vunpack.c.l.s8.bf16 %v1664
    %v2625 = vunpack.c.l.s8.bf16 %v1665
    %v2626 = vunpack.c.l.s8.bf16 %v1666
    %v2627 = vunpack.c.l.s8.bf16 %v1667
    %v2628 = vunpack.c.l.s8.bf16 %v1668
    %v2629 = vunpack.c.l.s8.bf16 %v1669
    %v2630 = vunpack.c.l.s8.bf16 %v1670
    %v2631 = vunpack.c.l.s8.bf16 %v1671
    %v2632 = vunpack.c.l.s8.bf16 %v1672
    %v2633 = vunpack.c.h.s8.bf16 %v1657
    %v2634 = vunpack.c.h.s8.bf16 %v1658
    %v2635 = vunpack.c.h.s8.bf16 %v1659
    %v2636 = vunpack.c.h.s8.bf16 %v1660
    %v2637 = vunpack.c.h.s8.bf16 %v1661
    %v2638 = vunpack.c.h.s8.bf16 %v1662
    %v2639 = vunpack.c.h.s8.bf16 %v1663
    %v2640 = vunpack.c.h.s8.bf16 %v1664
    %v2641 = vunpack.c.h.s8.bf16 %v1665
    %v2642 = vunpack.c.h.s8.bf16 %v1666
    %v2643 = vunpack.c.h.s8.bf16 %v1667
    %v2644 = vunpack.c.h.s8.bf16 %v1668
    %v2645 = vunpack.c.h.s8.bf16 %v1669
    %v2646 = vunpack.c.h.s8.bf16 %v1670
    %v2647 = vunpack.c.h.s8.bf16 %v1671
    %v2648 = vunpack.c.h.s8.bf16 %v1672
    %v2649 = vunpack.c.l.s8.bf16 %v1673
    %v2650 = vunpack.c.l.s8.bf16 %v1674
    %v2651 = vunpack.c.l.s8.bf16 %v1675
    %v2652 = vunpack.c.l.s8.bf16 %v1676
    %v2653 = vunpack.c.l.s8.bf16 %v1677
    %v2654 = vunpack.c.l.s8.bf16 %v1678
    %v2655 = vunpack.c.l.s8.bf16 %v1679
    %v2656 = vunpack.c.l.s8.bf16 %v1680
    %v2657 = vunpack.c.l.s8.bf16 %v1681
    %v2658 = vunpack.c.l.s8.bf16 %v1682
    %v2659 = vunpack.c.l.s8.bf16 %v1683
    %v2660 = vunpack.c.l.s8.bf16 %v1684
    %v2661 = vunpack.c.l.s8.bf16 %v1685
    %v2662 = vunpack.c.l.s8.bf16 %v1686
    %v2663 = vunpack.c.l.s8.bf16 %v1687
    %v2664 = vunpack.c.l.s8.bf16 %v1688
    %v2665 = vunpack.c.h.s8.bf16 %v1673
    %v2666 = vunpack.c.h.s8.bf16 %v1674
    %v2667 = vunpack.c.h.s8.bf16 %v1675
    %v2668 = vunpack.c.h.s8.bf16 %v1676
    %v2669 = vunpack.c.h.s8.bf16 %v1677
    %v2670 = vunpack.c.h.s8.bf16 %v1678
    %v2671 = vunpack.c.h.s8.bf16 %v1679
    %v2672 = vunpack.c.h.s8.bf16 %v1680
    %v2673 = vunpack.c.h.s8.bf16 %v1681
    %v2674 = vunpack.c.h.s8.bf16 %v1682
    %v2675 = vunpack.c.h.s8.bf16 %v1683
    %v2676 = vunpack.c.h.s8.bf16 %v1684
    %v2677 = vunpack.c.h.s8.bf16 %v1685
    %v2678 = vunpack.c.h.s8.bf16 %v1686
    %v2679 = vunpack.c.h.s8.bf16 %v1687
    %v2680 = vunpack.c.h.s8.bf16 %v1688
    %v2681 = vunpack.c.l.s8.bf16 %v1689
    %v2682 = vunpack.c.l.s8.bf16 %v1690
    %v2683 = vunpack.c.l.s8.bf16 %v1691
    %v2684 = vunpack.c.l.s8.bf16 %v1692
    %v2685 = vunpack.c.l.s8.bf16 %v1693
    %v2686 = vunpack.c.l.s8.bf16 %v1694
    %v2687 = vunpack.c.l.s8.bf16 %v1695
    %v2688 = vunpack.c.l.s8.bf16 %v1696
    %v2689 = vunpack.c.l.s8.bf16 %v1697
    %v2690 = vunpack.c.l.s8.bf16 %v1698
    %v2691 = vunpack.c.l.s8.bf16 %v1699
    %v2692 = vunpack.c.l.s8.bf16 %v1700
    %v2693 = vunpack.c.l.s8.bf16 %v1701
    %v2694 = vunpack.c.l.s8.bf16 %v1702
    %v2695 = vunpack.c.l.s8.bf16 %v1703
    %v2696 = vunpack.c.l.s8.bf16 %v1704
    %v2697 = vunpack.c.h.s8.bf16 %v1689
    %v2698 = vunpack.c.h.s8.bf16 %v1690
    %v2699 = vunpack.c.h.s8.bf16 %v1691
    %v2700 = vunpack.c.h.s8.bf16 %v1692
    %v2701 = vunpack.c.h.s8.bf16 %v1693
    %v2702 = vunpack.c.h.s8.bf16 %v1694
    %v2703 = vunpack.c.h.s8.bf16 %v1695
    %v2704 = vunpack.c.h.s8.bf16 %v1696
    %v2705 = vunpack.c.h.s8.bf16 %v1697
    %v2706 = vunpack.c.h.s8.bf16 %v1698
    %v2707 = vunpack.c.h.s8.bf16 %v1699
    %v2708 = vunpack.c.h.s8.bf16 %v1700
    %v2709 = vunpack.c.h.s8.bf16 %v1701
    %v2710 = vunpack.c.h.s8.bf16 %v1702
    %v2711 = vunpack.c.h.s8.bf16 %v1703
    %v2712 = vunpack.c.h.s8.bf16 %v1704
    %v2713 = vunpack.c.l.s8.bf16 %v1705
    %v2714 = vunpack.c.l.s8.bf16 %v1706
    %v2715 = vunpack.c.l.s8.bf16 %v1707
    %v2716 = vunpack.c.l.s8.bf16 %v1708
    %v2717 = vunpack.c.l.s8.bf16 %v1709
    %v2718 = vunpack.c.l.s8.bf16 %v1710
    %v2719 = vunpack.c.l.s8.bf16 %v1711
    %v2720 = vunpack.c.l.s8.bf16 %v1712
    %v2721 = vunpack.c.l.s8.bf16 %v1713
    %v2722 = vunpack.c.l.s8.bf16 %v1714
    %v2723 = vunpack.c.l.s8.bf16 %v1715
    %v2724 = vunpack.c.l.s8.bf16 %v1716
    %v2725 = vunpack.c.l.s8.bf16 %v1717
    %v2726 = vunpack.c.l.s8.bf16 %v1718
    %v2727 = vunpack.c.l.s8.bf16 %v1719
    %v2728 = vunpack.c.l.s8.bf16 %v1720
    %v2729 = vunpack.c.h.s8.bf16 %v1705
    %v2730 = vunpack.c.h.s8.bf16 %v1706
    %v2731 = vunpack.c.h.s8.bf16 %v1707
    %v2732 = vunpack.c.h.s8.bf16 %v1708
    %v2733 = vunpack.c.h.s8.bf16 %v1709
    %v2734 = vunpack.c.h.s8.bf16 %v1710
    %v2735 = vunpack.c.h.s8.bf16 %v1711
    %v2736 = vunpack.c.h.s8.bf16 %v1712
    %v2737 = vunpack.c.h.s8.bf16 %v1713
    %v2738 = vunpack.c.h.s8.bf16 %v1714
    %v2739 = vunpack.c.h.s8.bf16 %v1715
    %v2740 = vunpack.c.h.s8.bf16 %v1716
    %v2741 = vunpack.c.h.s8.bf16 %v1717
    %v2742 = vunpack.c.h.s8.bf16 %v1718
    %v2743 = vunpack.c.h.s8.bf16 %v1719
    %v2744 = vunpack.c.h.s8.bf16 %v1720
    %2745 = vmatprep.subr.bf16.mxu0 %v1722
    %2746 = vmatpush1.bf16.msra.mxu0 %v1721
    %2747 = vmatprep.subr.bf16.mxu0 %v1738
    %2748 = vmatpush1.bf16.msra.mxu0 %v1737
    %2749 = vmatprep.subr.bf16.mxu0 %v1754
    %2750 = vmatpush1.bf16.msra.mxu0 %v1753
    %2751 = vmatprep.subr.bf16.mxu0 %v1770
    %2752 = vmatpush1.bf16.msra.mxu0 %v1769
    %2753 = vmatprep.subr.bf16.mxu0 %v1786
    %2754 = vmatpush1.bf16.msra.mxu0 %v1785
    %2755 = vmatprep.subr.bf16.mxu0 %v1802
    %2756 = vmatpush1.bf16.msra.mxu0 %v1801
    %2757 = vmatprep.subr.bf16.mxu0 %v1818
    %2758 = vmatpush1.bf16.msra.mxu0 %v1817
    %2759 = vmatprep.subr.bf16.mxu0 %v1834
    %2760 = vmatpush1.bf16.msra.mxu0 %v1833
    %2761 = vmatprep.subr.bf16.mxu0 %v1850
    %2762 = vmatpush1.bf16.msra.mxu0 %v1849
    %2763 = vmatprep.subr.bf16.mxu0 %v1866
    %2764 = vmatpush1.bf16.msra.mxu0 %v1865
    %2765 = vmatprep.subr.bf16.mxu0 %v1882
    %2766 = vmatpush1.bf16.msra.mxu0 %v1881
    %2767 = vmatprep.subr.bf16.mxu0 %v1898
    %2768 = vmatpush1.bf16.msra.mxu0 %v1897
    %2769 = vmatprep.subr.bf16.mxu0 %v1914
    %2770 = vmatpush1.bf16.msra.mxu0 %v1913
    %2771 = vmatprep.subr.bf16.mxu0 %v1930
    %2772 = vmatpush1.bf16.msra.mxu0 %v1929
    %2773 = vmatprep.subr.bf16.mxu0 %v1946
    %2774 = vmatpush1.bf16.msra.mxu0 %v1945
    %2775 = vmatprep.subr.bf16.mxu0 %v1962
    %2776 = vmatpush1.bf16.msra.mxu0 %v1961
    %2777 = vmatprep.mubr.bf16.mxu0 %v1198
    %2778 = vmatmul.mubr.bf16.gmra.mrb[0].mxu0 %v1197
    %v2779 = vpop.f32.mrb[0].mxu0
    %v2780 = vadd.f32 0.0, %v2779
    %v2781 = vpop.f32.mrb[0].mxu0
    %v2782 = vadd.f32 0.0, %v2781
    %v2783 = vpop.f32.mrb[0].mxu0
    %v2784 = vpop.f32.mrb[0].mxu0
    %2785 = vdwg.mxu0
    %2786 = vmatprep.subr.bf16.mxu0 %v1978
    %2787 = vmatpush1.bf16.msra.mxu0 %v1977
    %2788 = vmatprep.subr.bf16.mxu0 %v1994
    %2789 = vmatpush1.bf16.msra.mxu0 %v1993
    %2790 = vmatprep.subr.bf16.mxu0 %v2010
    %2791 = vmatpush1.bf16.msra.mxu0 %v2009
    %2792 = vmatprep.subr.bf16.mxu0 %v2026
    %2793 = vmatpush1.bf16.msra.mxu0 %v2025
    %2794 = vmatprep.subr.bf16.mxu0 %v2042
    %2795 = vmatpush1.bf16.msra.mxu0 %v2041
    %2796 = vmatprep.subr.bf16.mxu0 %v2058
    %2797 = vmatpush1.bf16.msra.mxu0 %v2057
    %2798 = vmatprep.subr.bf16.mxu0 %v2074
    %2799 = vmatpush1.bf16.msra.mxu0 %v2073
    %2800 = vmatprep.subr.bf16.mxu0 %v2090
    %2801 = vmatpush1.bf16.msra.mxu0 %v2089
    %2802 = vmatprep.subr.bf16.mxu0 %v2106
    %2803 = vmatpush1.bf16.msra.mxu0 %v2105
    %2804 = vmatprep.subr.bf16.mxu0 %v2122
    %2805 = vmatpush1.bf16.msra.mxu0 %v2121
    %2806 = vmatprep.subr.bf16.mxu0 %v2138
    %2807 = vmatpush1.bf16.msra.mxu0 %v2137
    %2808 = vmatprep.subr.bf16.mxu0 %v2154
    %2809 = vmatpush1.bf16.msra.mxu0 %v2153
    %2810 = vmatprep.subr.bf16.mxu0 %v2170
    %2811 = vmatpush1.bf16.msra.mxu0 %v2169
    %2812 = vmatprep.subr.bf16.mxu0 %v2186
    %2813 = vmatpush1.bf16.msra.mxu0 %v2185
    %2814 = vmatprep.subr.bf16.mxu0 %v2202
    %2815 = vmatpush1.bf16.msra.mxu0 %v2201
    %2816 = vmatprep.subr.bf16.mxu0 %v2218
    %2817 = vmatpush1.bf16.msra.mxu0 %v2217
    %2818 = vmatprep.mubr.bf16.mxu0 %v1200
    %2819 = vmatmul.mubr.bf16.gmra.mrb[0].mxu0 %v1199
    %v2820 = vpop.f32.mrb[0].mxu0
    %v2821 = vadd.f32 %v2780, %v2820
    %v2822 = vpop.f32.mrb[0].mxu0
    %v2823 = vadd.f32 %v2782, %v2822
    %v2824 = vpop.f32.mrb[0].mxu0
    %v2825 = vpop.f32.mrb[0].mxu0
    %2826 = vdwg.mxu0
    %2827 = vmatprep.subr.bf16.mxu0 %v2234
    %2828 = vmatpush1.bf16.msra.mxu0 %v2233
    %2829 = vmatprep.subr.bf16.mxu0 %v2250
    %2830 = vmatpush1.bf16.msra.mxu0 %v2249
    %2831 = vmatprep.subr.bf16.mxu0 %v2266
    %2832 = vmatpush1.bf16.msra.mxu0 %v2265
    %2833 = vmatprep.subr.bf16.mxu0 %v2282
    %2834 = vmatpush1.bf16.msra.mxu0 %v2281
    %2835 = vmatprep.subr.bf16.mxu0 %v2298
    %2836 = vmatpush1.bf16.msra.mxu0 %v2297
    %2837 = vmatprep.subr.bf16.mxu0 %v2314
    %2838 = vmatpush1.bf16.msra.mxu0 %v2313
    %2839 = vmatprep.subr.bf16.mxu0 %v2330
    %2840 = vmatpush1.bf16.msra.mxu0 %v2329
    %2841 = vmatprep.subr.bf16.mxu0 %v2346
    %2842 = vmatpush1.bf16.msra.mxu0 %v2345
    %2843 = vmatprep.subr.bf16.mxu0 %v2362
    %2844 = vmatpush1.bf16.msra.mxu0 %v2361
    %2845 = vmatprep.subr.bf16.mxu0 %v2378
    %2846 = vmatpush1.bf16.msra.mxu0 %v2377
    %2847 = vmatprep.subr.bf16.mxu0 %v2394
    %2848 = vmatpush1.bf16.msra.mxu0 %v2393
    %2849 = vmatprep.subr.bf16.mxu0 %v2410
    %2850 = vmatpush1.bf16.msra.mxu0 %v2409
    %2851 = vmatprep.subr.bf16.mxu0 %v2426
    %2852 = vmatpush1.bf16.msra.mxu0 %v2425
    %2853 = vmatprep.subr.bf16.mxu0 %v2442
    %2854 = vmatpush1.bf16.msra.mxu0 %v2441
    %2855 = vmatprep.subr.bf16.mxu0 %v2458
    %2856 = vmatpush1.bf16.msra.mxu0 %v2457
    %2857 = vmatprep.subr.bf16.mxu0 %v2474
    %2858 = vmatpush1.bf16.msra.mxu0 %v2473
    %2859 = vmatprep.mubr.bf16.mxu0 %v1202
    %2860 = vmatmul.mubr.bf16.gmra.mrb[0].mxu0 %v1201
    %v2861 = vpop.f32.mrb[0].mxu0
    %v2862 = vadd.f32 %v2821, %v2861
    %v2863 = vpop.f32.mrb[0].mxu0
    %v2864 = vadd.f32 %v2823, %v2863
    %v2865 = vpop.f32.mrb[0].mxu0
    %v2866 = vpop.f32.mrb[0].mxu0
    %2867 = vdwg.mxu0
    %2868 = vmatprep.subr.bf16.mxu0 %v2490
    %2869 = vmatpush1.bf16.msra.mxu0 %v2489
    %2870 = vmatprep.subr.bf16.mxu0 %v2506
    %2871 = vmatpush1.bf16.msra.mxu0 %v2505
    %2872 = vmatprep.subr.bf16.mxu0 %v2522
    %2873 = vmatpush1.bf16.msra.mxu0 %v2521
    %2874 = vmatprep.subr.bf16.mxu0 %v2538
    %2875 = vmatpush1.bf16.msra.mxu0 %v2537
    %2876 = vmatprep.subr.bf16.mxu0 %v2554
    %2877 = vmatpush1.bf16.msra.mxu0 %v2553
    %2878 = vmatprep.subr.bf16.mxu0 %v2570
    %2879 = vmatpush1.bf16.msra.mxu0 %v2569
    %2880 = vmatprep.subr.bf16.mxu0 %v2586
    %2881 = vmatpush1.bf16.msra.mxu0 %v2585
    %2882 = vmatprep.subr.bf16.mxu0 %v2602
    %2883 = vmatpush1.bf16.msra.mxu0 %v2601
    %2884 = vmatprep.subr.bf16.mxu0 %v2618
    %2885 = vmatpush1.bf16.msra.mxu0 %v2617
    %2886 = vmatprep.subr.bf16.mxu0 %v2634
    %2887 = vmatpush1.bf16.msra.mxu0 %v2633
    %2888 = vmatprep.subr.bf16.mxu0 %v2650
    %2889 = vmatpush1.bf16.msra.mxu0 %v2649
    %2890 = vmatprep.subr.bf16.mxu0 %v2666
    %2891 = vmatpush1.bf16.msra.mxu0 %v2665
    %2892 = vmatprep.subr.bf16.mxu0 %v2682
    %2893 = vmatpush1.bf16.msra.mxu0 %v2681
    %2894 = vmatprep.subr.bf16.mxu0 %v2698
    %2895 = vmatpush1.bf16.msra.mxu0 %v2697
    %2896 = vmatprep.subr.bf16.mxu0 %v2714
    %2897 = vmatpush1.bf16.msra.mxu0 %v2713
    %2898 = vmatprep.subr.bf16.mxu0 %v2730
    %2899 = vmatpush1.bf16.msra.mxu0 %v2729
    %2900 = vmatprep.mubr.bf16.mxu0 %v1204
    %2901 = vmatmul.mubr.bf16.gmra.mrb[0].mxu0 %v1203
    %v2902 = vpop.f32.mrb[0].mxu0
    %v2903 = vadd.f32 %v2862, %v2902
    %v2904 = vpop.f32.mrb[0].mxu0
    %v2905 = vadd.f32 %v2864, %v2904
    %v2906 = vpop.f32.mrb[0].mxu0
    %v2907 = vpop.f32.mrb[0].mxu0
    %2908 = vdwg.mxu0
    %2909 = vmatprep.subr.bf16.mxu0 %v1724
    %2910 = vmatpush1.bf16.msra.mxu0 %v1723
    %2911 = vmatprep.subr.bf16.mxu0 %v1740
    %2912 = vmatpush1.bf16.msra.mxu0 %v1739
    %2913 = vmatprep.subr.bf16.mxu0 %v1756
    %2914 = vmatpush1.bf16.msra.mxu0 %v1755
    %2915 = vmatprep.subr.bf16.mxu0 %v1772
    %2916 = vmatpush1.bf16.msra.mxu0 %v1771
    %2917 = vmatprep.subr.bf16.mxu0 %v1788
    %2918 = vmatpush1.bf16.msra.mxu0 %v1787
    %2919 = vmatprep.subr.bf16.mxu0 %v1804
    %2920 = vmatpush1.bf16.msra.mxu0 %v1803
    %2921 = vmatprep.subr.bf16.mxu0 %v1820
    %2922 = vmatpush1.bf16.msra.mxu0 %v1819
    %2923 = vmatprep.subr.bf16.mxu0 %v1836
    %2924 = vmatpush1.bf16.msra.mxu0 %v1835
    %2925 = vmatprep.subr.bf16.mxu0 %v1852
    %2926 = vmatpush1.bf16.msra.mxu0 %v1851
    %2927 = vmatprep.subr.bf16.mxu0 %v1868
    %2928 = vmatpush1.bf16.msra.mxu0 %v1867
    %2929 = vmatprep.subr.bf16.mxu0 %v1884
    %2930 = vmatpush1.bf16.msra.mxu0 %v1883
    %2931 = vmatprep.subr.bf16.mxu0 %v1900
    %2932 = vmatpush1.bf16.msra.mxu0 %v1899
    %2933 = vmatprep.subr.bf16.mxu0 %v1916
    %2934 = vmatpush1.bf16.msra.mxu0 %v1915
    %2935 = vmatprep.subr.bf16.mxu0 %v1932
    %2936 = vmatpush1.bf16.msra.mxu0 %v1931
    %2937 = vmatprep.subr.bf16.mxu0 %v1948
    %2938 = vmatpush1.bf16.msra.mxu0 %v1947
    %2939 = vmatprep.subr.bf16.mxu0 %v1964
    %2940 = vmatpush1.bf16.msra.mxu0 %v1963
    %2941 = vmatprep.mubr.bf16.mxu0 %v1198
    %2942 = vmatmul.mubr.bf16.gmra.mrb[0].mxu0 %v1197
    %v2943 = vpop.f32.mrb[0].mxu0
    %v2944 = vadd.f32 0.0, %v2943
    %v2945 = vpop.f32.mrb[0].mxu0
    %v2946 = vadd.f32 0.0, %v2945
    %v2947 = vpop.f32.mrb[0].mxu0
    %v2948 = vpop.f32.mrb[0].mxu0
    %2949 = vdwg.mxu0
    %2950 = vmatprep.subr.bf16.mxu0 %v1980
    %2951 = vmatpush1.bf16.msra.mxu0 %v1979
    %2952 = vmatprep.subr.bf16.mxu0 %v1996
    %2953 = vmatpush1.bf16.msra.mxu0 %v1995
    %2954 = vmatprep.subr.bf16.mxu0 %v2012
    %2955 = vmatpush1.bf16.msra.mxu0 %v2011
    %2956 = vmatprep.subr.bf16.mxu0 %v2028
    %2957 = vmatpush1.bf16.msra.mxu0 %v2027
    %2958 = vmatprep.subr.bf16.mxu0 %v2044
    %2959 = vmatpush1.bf16.msra.mxu0 %v2043
    %2960 = vmatprep.subr.bf16.mxu0 %v2060
    %2961 = vmatpush1.bf16.msra.mxu0 %v2059
    %2962 = vmatprep.subr.bf16.mxu0 %v2076
    %2963 = vmatpush1.bf16.msra.mxu0 %v2075
    %2964 = vmatprep.subr.bf16.mxu0 %v2092
    %2965 = vmatpush1.bf16.msra.mxu0 %v2091
    %2966 = vmatprep.subr.bf16.mxu0 %v2108
    %2967 = vmatpush1.bf16.msra.mxu0 %v2107
    %2968 = vmatprep.subr.bf16.mxu0 %v2124
    %2969 = vmatpush1.bf16.msra.mxu0 %v2123
    %2970 = vmatprep.subr.bf16.mxu0 %v2140
    %2971 = vmatpush1.bf16.msra.mxu0 %v2139
    %2972 = vmatprep.subr.bf16.mxu0 %v2156
    %2973 = vmatpush1.bf16.msra.mxu0 %v2155
    %2974 = vmatprep.subr.bf16.mxu0 %v2172
    %2975 = vmatpush1.bf16.msra.mxu0 %v2171
    %2976 = vmatprep.subr.bf16.mxu0 %v2188
    %2977 = vmatpush1.bf16.msra.mxu0 %v2187
    %2978 = vmatprep.subr.bf16.mxu0 %v2204
    %2979 = vmatpush1.bf16.msra.mxu0 %v2203
    %2980 = vmatprep.subr.bf16.mxu0 %v2220
    %2981 = vmatpush1.bf16.msra.mxu0 %v2219
    %2982 = vmatprep.mubr.bf16.mxu0 %v1200
    %2983 = vmatmul.mubr.bf16.gmra.mrb[0].mxu0 %v1199
    %v2984 = vpop.f32.mrb[0].mxu0
    %v2985 = vadd.f32 %v2944, %v2984
    %v2986 = vpop.f32.mrb[0].mxu0
    %v2987 = vadd.f32 %v2946, %v2986
    %v2988 = vpop.f32.mrb[0].mxu0
    %v2989 = vpop.f32.mrb[0].mxu0
    %2990 = vdwg.mxu0
    %2991 = vmatprep.subr.bf16.mxu0 %v2236
    %2992 = vmatpush1.bf16.msra.mxu0 %v2235
    %2993 = vmatprep.subr.bf16.mxu0 %v2252
    %2994 = vmatpush1.bf16.msra.mxu0 %v2251
    %2995 = vmatprep.subr.bf16.mxu0 %v2268
    %2996 = vmatpush1.bf16.msra.mxu0 %v2267
    %2997 = vmatprep.subr.bf16.mxu0 %v2284
    %2998 = vmatpush1.bf16.msra.mxu0 %v2283
    %2999 = vmatprep.subr.bf16.mxu0 %v2300
    %3000 = vmatpush1.bf16.msra.mxu0 %v2299
    %3001 = vmatprep.subr.bf16.mxu0 %v2316
    %3002 = vmatpush1.bf16.msra.mxu0 %v2315
    %3003 = vmatprep.subr.bf16.mxu0 %v2332
    %3004 = vmatpush1.bf16.msra.mxu0 %v2331
    %3005 = vmatprep.subr.bf16.mxu0 %v2348
    %3006 = vmatpush1.bf16.msra.mxu0 %v2347
    %3007 = vmatprep.subr.bf16.mxu0 %v2364
    %3008 = vmatpush1.bf16.msra.mxu0 %v2363
    %3009 = vmatprep.subr.bf16.mxu0 %v2380
    %3010 = vmatpush1.bf16.msra.mxu0 %v2379
    %3011 = vmatprep.subr.bf16.mxu0 %v2396
    %3012 = vmatpush1.bf16.msra.mxu0 %v2395
    %3013 = vmatprep.subr.bf16.mxu0 %v2412
    %3014 = vmatpush1.bf16.msra.mxu0 %v2411
    %3015 = vmatprep.subr.bf16.mxu0 %v2428
    %3016 = vmatpush1.bf16.msra.mxu0 %v2427
    %3017 = vmatprep.subr.bf16.mxu0 %v2444
    %3018 = vmatpush1.bf16.msra.mxu0 %v2443
    %3019 = vmatprep.subr.bf16.mxu0 %v2460
    %3020 = vmatpush1.bf16.msra.mxu0 %v2459
    %3021 = vmatprep.subr.bf16.mxu0 %v2476
    %3022 = vmatpush1.bf16.msra.mxu0 %v2475
    %3023 = vmatprep.mubr.bf16.mxu0 %v1202
    %3024 = vmatmul.mubr.bf16.gmra.mrb[0].mxu0 %v1201
    %v3025 = vpop.f32.mrb[0].mxu0
    %v3026 = vadd.f32 %v2985, %v3025
    %v3027 = vpop.f32.mrb[0].mxu0
    %v3028 = vadd.f32 %v2987, %v3027
    %v3029 = vpop.f32.mrb[0].mxu0
    %v3030 = vpop.f32.mrb[0].mxu0
    %3031 = vdwg.mxu0
    %3032 = vmatprep.subr.bf16.mxu0 %v2492
    %3033 = vmatpush1.bf16.msra.mxu0 %v2491
    %3034 = vmatprep.subr.bf16.mxu0 %v2508
    %3035 = vmatpush1.bf16.msra.mxu0 %v2507
    %3036 = vmatprep.subr.bf16.mxu0 %v2524
    %3037 = vmatpush1.bf16.msra.mxu0 %v2523
    %3038 = vmatprep.subr.bf16.mxu0 %v2540
    %3039 = vmatpush1.bf16.msra.mxu0 %v2539
    %3040 = vmatprep.subr.bf16.mxu0 %v2556
    %3041 = vmatpush1.bf16.msra.mxu0 %v2555
    %3042 = vmatprep.subr.bf16.mxu0 %v2572
    %3043 = vmatpush1.bf16.msra.mxu0 %v2571
    %3044 = vmatprep.subr.bf16.mxu0 %v2588
    %3045 = vmatpush1.bf16.msra.mxu0 %v2587
    %3046 = vmatprep.subr.bf16.mxu0 %v2604
    %3047 = vmatpush1.bf16.msra.mxu0 %v2603
    %3048 = vmatprep.subr.bf16.mxu0 %v2620
    %3049 = vmatpush1.bf16.msra.mxu0 %v2619
    %3050 = vmatprep.subr.bf16.mxu0 %v2636
    %3051 = vmatpush1.bf16.msra.mxu0 %v2635
    %3052 = vmatprep.subr.bf16.mxu0 %v2652
    %3053 = vmatpush1.bf16.msra.mxu0 %v2651
    %3054 = vmatprep.subr.bf16.mxu0 %v2668
    %3055 = vmatpush1.bf16.msra.mxu0 %v2667
    %3056 = vmatprep.subr.bf16.mxu0 %v2684
    %3057 = vmatpush1.bf16.msra.mxu0 %v2683
    %3058 = vmatprep.subr.bf16.mxu0 %v2700
    %3059 = vmatpush1.bf16.msra.mxu0 %v2699
    %3060 = vmatprep.subr.bf16.mxu0 %v2716
    %3061 = vmatpush1.bf16.msra.mxu0 %v2715
    %3062 = vmatprep.subr.bf16.mxu0 %v2732
    %3063 = vmatpush1.bf16.msra.mxu0 %v2731
    %3064 = vmatprep.mubr.bf16.mxu0 %v1204
    %3065 = vmatmul.mubr.bf16.gmra.mrb[0].mxu0 %v1203
    %v3066 = vpop.f32.mrb[0].mxu0
    %v3067 = vadd.f32 %v3026, %v3066
    %v3068 = vpop.f32.mrb[0].mxu0
    %v3069 = vadd.f32 %v3028, %v3068
    %v3070 = vpop.f32.mrb[0].mxu0
    %v3071 = vpop.f32.mrb[0].mxu0
    %3072 = vdwg.mxu0
    %3073 = vmatprep.subr.bf16.mxu0 %v1726
    %3074 = vmatpush1.bf16.msra.mxu0 %v1725
    %3075 = vmatprep.subr.bf16.mxu0 %v1742
    %3076 = vmatpush1.bf16.msra.mxu0 %v1741
    %3077 = vmatprep.subr.bf16.mxu0 %v1758
    %3078 = vmatpush1.bf16.msra.mxu0 %v1757
    %3079 = vmatprep.subr.bf16.mxu0 %v1774
    %3080 = vmatpush1.bf16.msra.mxu0 %v1773
    %3081 = vmatprep.subr.bf16.mxu0 %v1790
    %3082 = vmatpush1.bf16.msra.mxu0 %v1789
    %3083 = vmatprep.subr.bf16.mxu0 %v1806
    %3084 = vmatpush1.bf16.msra.mxu0 %v1805
    %3085 = vmatprep.subr.bf16.mxu0 %v1822
    %3086 = vmatpush1.bf16.msra.mxu0 %v1821
    %3087 = vmatprep.subr.bf16.mxu0 %v1838
    %3088 = vmatpush1.bf16.msra.mxu0 %v1837
    %3089 = vmatprep.subr.bf16.mxu0 %v1854
    %3090 = vmatpush1.bf16.msra.mxu0 %v1853
    %3091 = vmatprep.subr.bf16.mxu0 %v1870
    %3092 = vmatpush1.bf16.msra.mxu0 %v1869
    %3093 = vmatprep.subr.bf16.mxu0 %v1886
    %3094 = vmatpush1.bf16.msra.mxu0 %v1885
    %3095 = vmatprep.subr.bf16.mxu0 %v1902
    %3096 = vmatpush1.bf16.msra.mxu0 %v1901
    %3097 = vmatprep.subr.bf16.mxu0 %v1918
    %3098 = vmatpush1.bf16.msra.mxu0 %v1917
    %3099 = vmatprep.subr.bf16.mxu0 %v1934
    %3100 = vmatpush1.bf16.msra.mxu0 %v1933
    %3101 = vmatprep.subr.bf16.mxu0 %v1950
    %3102 = vmatpush1.bf16.msra.mxu0 %v1949
    %3103 = vmatprep.subr.bf16.mxu0 %v1966
    %3104 = vmatpush1.bf16.msra.mxu0 %v1965
    %3105 = vmatprep.mubr.bf16.mxu0 %v1198
    %3106 = vmatmul.mubr.bf16.gmra.mrb[0].mxu0 %v1197
    %v3107 = vpop.f32.mrb[0].mxu0
    %v3108 = vadd.f32 0.0, %v3107
    %v3109 = vpop.f32.mrb[0].mxu0
    %v3110 = vadd.f32 0.0, %v3109
    %v3111 = vpop.f32.mrb[0].mxu0
    %v3112 = vpop.f32.mrb[0].mxu0
    %3113 = vdwg.mxu0
    %3114 = vmatprep.subr.bf16.mxu0 %v1982
    %3115 = vmatpush1.bf16.msra.mxu0 %v1981
    %3116 = vmatprep.subr.bf16.mxu0 %v1998
    %3117 = vmatpush1.bf16.msra.mxu0 %v1997
    %3118 = vmatprep.subr.bf16.mxu0 %v2014
    %3119 = vmatpush1.bf16.msra.mxu0 %v2013
    %3120 = vmatprep.subr.bf16.mxu0 %v2030
    %3121 = vmatpush1.bf16.msra.mxu0 %v2029
    %3122 = vmatprep.subr.bf16.mxu0 %v2046
    %3123 = vmatpush1.bf16.msra.mxu0 %v2045
    %3124 = vmatprep.subr.bf16.mxu0 %v2062
    %3125 = vmatpush1.bf16.msra.mxu0 %v2061
    %3126 = vmatprep.subr.bf16.mxu0 %v2078
    %3127 = vmatpush1.bf16.msra.mxu0 %v2077
    %3128 = vmatprep.subr.bf16.mxu0 %v2094
    %3129 = vmatpush1.bf16.msra.mxu0 %v2093
    %3130 = vmatprep.subr.bf16.mxu0 %v2110
    %3131 = vmatpush1.bf16.msra.mxu0 %v2109
    %3132 = vmatprep.subr.bf16.mxu0 %v2126
    %3133 = vmatpush1.bf16.msra.mxu0 %v2125
    %3134 = vmatprep.subr.bf16.mxu0 %v2142
    %3135 = vmatpush1.bf16.msra.mxu0 %v2141
    %3136 = vmatprep.subr.bf16.mxu0 %v2158
    %3137 = vmatpush1.bf16.msra.mxu0 %v2157
    %3138 = vmatprep.subr.bf16.mxu0 %v2174
    %3139 = vmatpush1.bf16.msra.mxu0 %v2173
    %3140 = vmatprep.subr.bf16.mxu0 %v2190
    %3141 = vmatpush1.bf16.msra.mxu0 %v2189
    %3142 = vmatprep.subr.bf16.mxu0 %v2206
    %3143 = vmatpush1.bf16.msra.mxu0 %v2205
    %3144 = vmatprep.subr.bf16.mxu0 %v2222
    %3145 = vmatpush1.bf16.msra.mxu0 %v2221
    %3146 = vmatprep.mubr.bf16.mxu0 %v1200
    %3147 = vmatmul.mubr.bf16.gmra.mrb[0].mxu0 %v1199
    %v3148 = vpop.f32.mrb[0].mxu0
    %v3149 = vadd.f32 %v3108, %v3148
    %v3150 = vpop.f32.mrb[0].mxu0
    %v3151 = vadd.f32 %v3110, %v3150
    %v3152 = vpop.f32.mrb[0].mxu0
    %v3153 = vpop.f32.mrb[0].mxu0
    %3154 = vdwg.mxu0
    %3155 = vmatprep.subr.bf16.mxu0 %v2238
    %3156 = vmatpush1.bf16.msra.mxu0 %v2237
    %3157 = vmatprep.subr.bf16.mxu0 %v2254
    %3158 = vmatpush1.bf16.msra.mxu0 %v2253
    %3159 = vmatprep.subr.bf16.mxu0 %v2270
    %3160 = vmatpush1.bf16.msra.mxu0 %v2269
    %3161 = vmatprep.subr.bf16.mxu0 %v2286
    %3162 = vmatpush1.bf16.msra.mxu0 %v2285
    %3163 = vmatprep.subr.bf16.mxu0 %v2302
    %3164 = vmatpush1.bf16.msra.mxu0 %v2301
    %3165 = vmatprep.subr.bf16.mxu0 %v2318
    %3166 = vmatpush1.bf16.msra.mxu0 %v2317
    %3167 = vmatprep.subr.bf16.mxu0 %v2334
    %3168 = vmatpush1.bf16.msra.mxu0 %v2333
    %3169 = vmatprep.subr.bf16.mxu0 %v2350
    %3170 = vmatpush1.bf16.msra.mxu0 %v2349
    %3171 = vmatprep.subr.bf16.mxu0 %v2366
    %3172 = vmatpush1.bf16.msra.mxu0 %v2365
    %3173 = vmatprep.subr.bf16.mxu0 %v2382
    %3174 = vmatpush1.bf16.msra.mxu0 %v2381
    %3175 = vmatprep.subr.bf16.mxu0 %v2398
    %3176 = vmatpush1.bf16.msra.mxu0 %v2397
    %3177 = vmatprep.subr.bf16.mxu0 %v2414
    %3178 = vmatpush1.bf16.msra.mxu0 %v2413
    %3179 = vmatprep.subr.bf16.mxu0 %v2430
    %3180 = vmatpush1.bf16.msra.mxu0 %v2429
    %3181 = vmatprep.subr.bf16.mxu0 %v2446
    %3182 = vmatpush1.bf16.msra.mxu0 %v2445
    %3183 = vmatprep.subr.bf16.mxu0 %v2462
    %3184 = vmatpush1.bf16.msra.mxu0 %v2461
    %3185 = vmatprep.subr.bf16.mxu0 %v2478
    %3186 = vmatpush1.bf16.msra.mxu0 %v2477
    %3187 = vmatprep.mubr.bf16.mxu0 %v1202
    %3188 = vmatmul.mubr.bf16.gmra.mrb[0].mxu0 %v1201
    %v3189 = vpop.f32.mrb[0].mxu0
    %v3190 = vadd.f32 %v3149, %v3189
    %v3191 = vpop.f32.mrb[0].mxu0
    %v3192 = vadd.f32 %v3151, %v3191
    %v3193 = vpop.f32.mrb[0].mxu0
    %v3194 = vpop.f32.mrb[0].mxu0
    %3195 = vdwg.mxu0
    %3196 = vmatprep.subr.bf16.mxu0 %v2494
    %3197 = vmatpush1.bf16.msra.mxu0 %v2493
    %3198 = vmatprep.subr.bf16.mxu0 %v2510
    %3199 = vmatpush1.bf16.msra.mxu0 %v2509
    %3200 = vmatprep.subr.bf16.mxu0 %v2526
    %3201 = vmatpush1.bf16.msra.mxu0 %v2525
    %3202 = vmatprep.subr.bf16.mxu0 %v2542
    %3203 = vmatpush1.bf16.msra.mxu0 %v2541
    %3204 = vmatprep.subr.bf16.mxu0 %v2558
    %3205 = vmatpush1.bf16.msra.mxu0 %v2557
    %3206 = vmatprep.subr.bf16.mxu0 %v2574
    %3207 = vmatpush1.bf16.msra.mxu0 %v2573
    %3208 = vmatprep.subr.bf16.mxu0 %v2590
    %3209 = vmatpush1.bf16.msra.mxu0 %v2589
    %3210 = vmatprep.subr.bf16.mxu0 %v2606
    %3211 = vmatpush1.bf16.msra.mxu0 %v2605
    %3212 = vmatprep.subr.bf16.mxu0 %v2622
    %3213 = vmatpush1.bf16.msra.mxu0 %v2621
    %3214 = vmatprep.subr.bf16.mxu0 %v2638
    %3215 = vmatpush1.bf16.msra.mxu0 %v2637
    %3216 = vmatprep.subr.bf16.mxu0 %v2654
    %3217 = vmatpush1.bf16.msra.mxu0 %v2653
    %3218 = vmatprep.subr.bf16.mxu0 %v2670
    %3219 = vmatpush1.bf16.msra.mxu0 %v2669
    %3220 = vmatprep.subr.bf16.mxu0 %v2686
    %3221 = vmatpush1.bf16.msra.mxu0 %v2685
    %3222 = vmatprep.subr.bf16.mxu0 %v2702
    %3223 = vmatpush1.bf16.msra.mxu0 %v2701
    %3224 = vmatprep.subr.bf16.mxu0 %v2718
    %3225 = vmatpush1.bf16.msra.mxu0 %v2717
    %3226 = vmatprep.subr.bf16.mxu0 %v2734
    %3227 = vmatpush1.bf16.msra.mxu0 %v2733
    %3228 = vmatprep.mubr.bf16.mxu0 %v1204
    %3229 = vmatmul.mubr.bf16.gmra.mrb[0].mxu0 %v1203
    %v3230 = vpop.f32.mrb[0].mxu0
    %v3231 = vadd.f32 %v3190, %v3230
    %v3232 = vpop.f32.mrb[0].mxu0
    %v3233 = vadd.f32 %v3192, %v3232
    %v3234 = vpop.f32.mrb[0].mxu0
    %v3235 = vpop.f32.mrb[0].mxu0
    %3236 = vdwg.mxu0
    %3237 = vmatprep.subr.bf16.mxu0 %v1728
    %3238 = vmatpush1.bf16.msra.mxu0 %v1727
    %3239 = vmatprep.subr.bf16.mxu0 %v1744
    %3240 = vmatpush1.bf16.msra.mxu0 %v1743
    %3241 = vmatprep.subr.bf16.mxu0 %v1760
    %3242 = vmatpush1.bf16.msra.mxu0 %v1759
    %3243 = vmatprep.subr.bf16.mxu0 %v1776
    %3244 = vmatpush1.bf16.msra.mxu0 %v1775
    %3245 = vmatprep.subr.bf16.mxu0 %v1792
    %3246 = vmatpush1.bf16.msra.mxu0 %v1791
    %3247 = vmatprep.subr.bf16.mxu0 %v1808
    %3248 = vmatpush1.bf16.msra.mxu0 %v1807
    %3249 = vmatprep.subr.bf16.mxu0 %v1824
    %3250 = vmatpush1.bf16.msra.mxu0 %v1823
    %3251 = vmatprep.subr.bf16.mxu0 %v1840
    %3252 = vmatpush1.bf16.msra.mxu0 %v1839
    %3253 = vmatprep.subr.bf16.mxu0 %v1856
    %3254 = vmatpush1.bf16.msra.mxu0 %v1855
    %3255 = vmatprep.subr.bf16.mxu0 %v1872
    %3256 = vmatpush1.bf16.msra.mxu0 %v1871
    %3257 = vmatprep.subr.bf16.mxu0 %v1888
    %3258 = vmatpush1.bf16.msra.mxu0 %v1887
    %3259 = vmatprep.subr.bf16.mxu0 %v1904
    %3260 = vmatpush1.bf16.msra.mxu0 %v1903
    %3261 = vmatprep.subr.bf16.mxu0 %v1920
    %3262 = vmatpush1.bf16.msra.mxu0 %v1919
    %3263 = vmatprep.subr.bf16.mxu0 %v1936
    %3264 = vmatpush1.bf16.msra.mxu0 %v1935
    %3265 = vmatprep.subr.bf16.mxu0 %v1952
    %3266 = vmatpush1.bf16.msra.mxu0 %v1951
    %3267 = vmatprep.subr.bf16.mxu0 %v1968
    %3268 = vmatpush1.bf16.msra.mxu0 %v1967
    %3269 = vmatprep.mubr.bf16.mxu0 %v1198
    %3270 = vmatmul.mubr.bf16.gmra.mrb[0].mxu0 %v1197
    %v3271 = vpop.f32.mrb[0].mxu0
    %v3272 = vadd.f32 0.0, %v3271
    %v3273 = vpop.f32.mrb[0].mxu0
    %v3274 = vadd.f32 0.0, %v3273
    %v3275 = vpop.f32.mrb[0].mxu0
    %v3276 = vpop.f32.mrb[0].mxu0
    %3277 = vdwg.mxu0
    %3278 = vmatprep.subr.bf16.mxu0 %v1984
    %3279 = vmatpush1.bf16.msra.mxu0 %v1983
    %3280 = vmatprep.subr.bf16.mxu0 %v2000
    %3281 = vmatpush1.bf16.msra.mxu0 %v1999
    %3282 = vmatprep.subr.bf16.mxu0 %v2016
    %3283 = vmatpush1.bf16.msra.mxu0 %v2015
    %3284 = vmatprep.subr.bf16.mxu0 %v2032
    %3285 = vmatpush1.bf16.msra.mxu0 %v2031
    %3286 = vmatprep.subr.bf16.mxu0 %v2048
    %3287 = vmatpush1.bf16.msra.mxu0 %v2047
    %3288 = vmatprep.subr.bf16.mxu0 %v2064
    %3289 = vmatpush1.bf16.msra.mxu0 %v2063
    %3290 = vmatprep.subr.bf16.mxu0 %v2080
    %3291 = vmatpush1.bf16.msra.mxu0 %v2079
    %3292 = vmatprep.subr.bf16.mxu0 %v2096
    %3293 = vmatpush1.bf16.msra.mxu0 %v2095
    %3294 = vmatprep.subr.bf16.mxu0 %v2112
    %3295 = vmatpush1.bf16.msra.mxu0 %v2111
    %3296 = vmatprep.subr.bf16.mxu0 %v2128
    %3297 = vmatpush1.bf16.msra.mxu0 %v2127
    %3298 = vmatprep.subr.bf16.mxu0 %v2144
    %3299 = vmatpush1.bf16.msra.mxu0 %v2143
    %3300 = vmatprep.subr.bf16.mxu0 %v2160
    %3301 = vmatpush1.bf16.msra.mxu0 %v2159
    %3302 = vmatprep.subr.bf16.mxu0 %v2176
    %3303 = vmatpush1.bf16.msra.mxu0 %v2175
    %3304 = vmatprep.subr.bf16.mxu0 %v2192
    %3305 = vmatpush1.bf16.msra.mxu0 %v2191
    %3306 = vmatprep.subr.bf16.mxu0 %v2208
    %3307 = vmatpush1.bf16.msra.mxu0 %v2207
    %3308 = vmatprep.subr.bf16.mxu0 %v2224
    %3309 = vmatpush1.bf16.msra.mxu0 %v2223
    %3310 = vmatprep.mubr.bf16.mxu0 %v1200
    %3311 = vmatmul.mubr.bf16.gmra.mrb[0].mxu0 %v1199
    %v3312 = vpop.f32.mrb[0].mxu0
    %v3313 = vadd.f32 %v3272, %v3312
    %v3314 = vpop.f32.mrb[0].mxu0
    %v3315 = vadd.f32 %v3274, %v3314
    %v3316 = vpop.f32.mrb[0].mxu0
    %v3317 = vpop.f32.mrb[0].mxu0
    %3318 = vdwg.mxu0
    %3319 = vmatprep.subr.bf16.mxu0 %v2240
    %3320 = vmatpush1.bf16.msra.mxu0 %v2239
    %3321 = vmatprep.subr.bf16.mxu0 %v2256
    %3322 = vmatpush1.bf16.msra.mxu0 %v2255
    %3323 = vmatprep.subr.bf16.mxu0 %v2272
    %3324 = vmatpush1.bf16.msra.mxu0 %v2271
    %3325 = vmatprep.subr.bf16.mxu0 %v2288
    %3326 = vmatpush1.bf16.msra.mxu0 %v2287
    %3327 = vmatprep.subr.bf16.mxu0 %v2304
    %3328 = vmatpush1.bf16.msra.mxu0 %v2303
    %3329 = vmatprep.subr.bf16.mxu0 %v2320
    %3330 = vmatpush1.bf16.msra.mxu0 %v2319
    %3331 = vmatprep.subr.bf16.mxu0 %v2336
    %3332 = vmatpush1.bf16.msra.mxu0 %v2335
    %3333 = vmatprep.subr.bf16.mxu0 %v2352
    %3334 = vmatpush1.bf16.msra.mxu0 %v2351
    %3335 = vmatprep.subr.bf16.mxu0 %v2368
    %3336 = vmatpush1.bf16.msra.mxu0 %v2367
    %3337 = vmatprep.subr.bf16.mxu0 %v2384
    %3338 = vmatpush1.bf16.msra.mxu0 %v2383
    %3339 = vmatprep.subr.bf16.mxu0 %v2400
    %3340 = vmatpush1.bf16.msra.mxu0 %v2399
    %3341 = vmatprep.subr.bf16.mxu0 %v2416
    %3342 = vmatpush1.bf16.msra.mxu0 %v2415
    %3343 = vmatprep.subr.bf16.mxu0 %v2432
    %3344 = vmatpush1.bf16.msra.mxu0 %v2431
    %3345 = vmatprep.subr.bf16.mxu0 %v2448
    %3346 = vmatpush1.bf16.msra.mxu0 %v2447
    %3347 = vmatprep.subr.bf16.mxu0 %v2464
    %3348 = vmatpush1.bf16.msra.mxu0 %v2463
    %3349 = vmatprep.subr.bf16.mxu0 %v2480
    %3350 = vmatpush1.bf16.msra.mxu0 %v2479
    %3351 = vmatprep.mubr.bf16.mxu0 %v1202
    %3352 = vmatmul.mubr.bf16.gmra.mrb[0].mxu0 %v1201
    %v3353 = vpop.f32.mrb[0].mxu0
    %v3354 = vadd.f32 %v3313, %v3353
    %v3355 = vpop.f32.mrb[0].mxu0
    %v3356 = vadd.f32 %v3315, %v3355
    %v3357 = vpop.f32.mrb[0].mxu0
    %v3358 = vpop.f32.mrb[0].mxu0
    %3359 = vdwg.mxu0
    %3360 = vmatprep.subr.bf16.mxu0 %v2496
    %3361 = vmatpush1.bf16.msra.mxu0 %v2495
    %3362 = vmatprep.subr.bf16.mxu0 %v2512
    %3363 = vmatpush1.bf16.msra.mxu0 %v2511
    %3364 = vmatprep.subr.bf16.mxu0 %v2528
    %3365 = vmatpush1.bf16.msra.mxu0 %v2527
    %3366 = vmatprep.subr.bf16.mxu0 %v2544
    %3367 = vmatpush1.bf16.msra.mxu0 %v2543
    %3368 = vmatprep.subr.bf16.mxu0 %v2560
    %3369 = vmatpush1.bf16.msra.mxu0 %v2559
    %3370 = vmatprep.subr.bf16.mxu0 %v2576
    %3371 = vmatpush1.bf16.msra.mxu0 %v2575
    %3372 = vmatprep.subr.bf16.mxu0 %v2592
    %3373 = vmatpush1.bf16.msra.mxu0 %v2591
    %3374 = vmatprep.subr.bf16.mxu0 %v2608
    %3375 = vmatpush1.bf16.msra.mxu0 %v2607
    %3376 = vmatprep.subr.bf16.mxu0 %v2624
    %3377 = vmatpush1.bf16.msra.mxu0 %v2623
    %3378 = vmatprep.subr.bf16.mxu0 %v2640
    %3379 = vmatpush1.bf16.msra.mxu0 %v2639
    %3380 = vmatprep.subr.bf16.mxu0 %v2656
    %3381 = vmatpush1.bf16.msra.mxu0 %v2655
    %3382 = vmatprep.subr.bf16.mxu0 %v2672
    %3383 = vmatpush1.bf16.msra.mxu0 %v2671
    %3384 = vmatprep.subr.bf16.mxu0 %v2688
    %3385 = vmatpush1.bf16.msra.mxu0 %v2687
    %3386 = vmatprep.subr.bf16.mxu0 %v2704
    %3387 = vmatpush1.bf16.msra.mxu0 %v2703
    %3388 = vmatprep.subr.bf16.mxu0 %v2720
    %3389 = vmatpush1.bf16.msra.mxu0 %v2719
    %3390 = vmatprep.subr.bf16.mxu0 %v2736
    %3391 = vmatpush1.bf16.msra.mxu0 %v2735
    %3392 = vmatprep.mubr.bf16.mxu0 %v1204
    %3393 = vmatmul.mubr.bf16.gmra.mrb[0].mxu0 %v1203
    %v3394 = vpop.f32.mrb[0].mxu0
    %v3395 = vadd.f32 %v3354, %v3394
    %v3396 = vpop.f32.mrb[0].mxu0
    %v3397 = vadd.f32 %v3356, %v3396
    %v3398 = vpop.f32.mrb[0].mxu0
    %v3399 = vpop.f32.mrb[0].mxu0
    %3400 = vdwg.mxu0
    %3401 = vmatprep.subr.bf16.mxu0 %v1730
    %3402 = vmatpush1.bf16.msra.mxu0 %v1729
    %3403 = vmatprep.subr.bf16.mxu0 %v1746
    %3404 = vmatpush1.bf16.msra.mxu0 %v1745
    %3405 = vmatprep.subr.bf16.mxu0 %v1762
    %3406 = vmatpush1.bf16.msra.mxu0 %v1761
    %3407 = vmatprep.subr.bf16.mxu0 %v1778
    %3408 = vmatpush1.bf16.msra.mxu0 %v1777
    %3409 = vmatprep.subr.bf16.mxu0 %v1794
    %3410 = vmatpush1.bf16.msra.mxu0 %v1793
    %3411 = vmatprep.subr.bf16.mxu0 %v1810
    %3412 = vmatpush1.bf16.msra.mxu0 %v1809
    %3413 = vmatprep.subr.bf16.mxu0 %v1826
    %3414 = vmatpush1.bf16.msra.mxu0 %v1825
    %3415 = vmatprep.subr.bf16.mxu0 %v1842
    %3416 = vmatpush1.bf16.msra.mxu0 %v1841
    %3417 = vmatprep.subr.bf16.mxu0 %v1858
    %3418 = vmatpush1.bf16.msra.mxu0 %v1857
    %3419 = vmatprep.subr.bf16.mxu0 %v1874
    %3420 = vmatpush1.bf16.msra.mxu0 %v1873
    %3421 = vmatprep.subr.bf16.mxu0 %v1890
    %3422 = vmatpush1.bf16.msra.mxu0 %v1889
    %3423 = vmatprep.subr.bf16.mxu0 %v1906
    %3424 = vmatpush1.bf16.msra.mxu0 %v1905
    %3425 = vmatprep.subr.bf16.mxu0 %v1922
    %3426 = vmatpush1.bf16.msra.mxu0 %v1921
    %3427 = vmatprep.subr.bf16.mxu0 %v1938
    %3428 = vmatpush1.bf16.msra.mxu0 %v1937
    %3429 = vmatprep.subr.bf16.mxu0 %v1954
    %3430 = vmatpush1.bf16.msra.mxu0 %v1953
    %3431 = vmatprep.subr.bf16.mxu0 %v1970
    %3432 = vmatpush1.bf16.msra.mxu0 %v1969
    %3433 = vmatprep.mubr.bf16.mxu0 %v1198
    %3434 = vmatmul.mubr.bf16.gmra.mrb[0].mxu0 %v1197
    %v3435 = vpop.f32.mrb[0].mxu0
    %v3436 = vadd.f32 0.0, %v3435
    %v3437 = vpop.f32.mrb[0].mxu0
    %v3438 = vadd.f32 0.0, %v3437
    %v3439 = vpop.f32.mrb[0].mxu0
    %v3440 = vpop.f32.mrb[0].mxu0
    %3441 = vdwg.mxu0
    %3442 = vmatprep.subr.bf16.mxu0 %v1986
    %3443 = vmatpush1.bf16.msra.mxu0 %v1985
    %3444 = vmatprep.subr.bf16.mxu0 %v2002
    %3445 = vmatpush1.bf16.msra.mxu0 %v2001
    %3446 = vmatprep.subr.bf16.mxu0 %v2018
    %3447 = vmatpush1.bf16.msra.mxu0 %v2017
    %3448 = vmatprep.subr.bf16.mxu0 %v2034
    %3449 = vmatpush1.bf16.msra.mxu0 %v2033
    %3450 = vmatprep.subr.bf16.mxu0 %v2050
    %3451 = vmatpush1.bf16.msra.mxu0 %v2049
    %3452 = vmatprep.subr.bf16.mxu0 %v2066
    %3453 = vmatpush1.bf16.msra.mxu0 %v2065
    %3454 = vmatprep.subr.bf16.mxu0 %v2082
    %3455 = vmatpush1.bf16.msra.mxu0 %v2081
    %3456 = vmatprep.subr.bf16.mxu0 %v2098
    %3457 = vmatpush1.bf16.msra.mxu0 %v2097
    %3458 = vmatprep.subr.bf16.mxu0 %v2114
    %3459 = vmatpush1.bf16.msra.mxu0 %v2113
    %3460 = vmatprep.subr.bf16.mxu0 %v2130
    %3461 = vmatpush1.bf16.msra.mxu0 %v2129
    %3462 = vmatprep.subr.bf16.mxu0 %v2146
    %3463 = vmatpush1.bf16.msra.mxu0 %v2145
    %3464 = vmatprep.subr.bf16.mxu0 %v2162
    %3465 = vmatpush1.bf16.msra.mxu0 %v2161
    %3466 = vmatprep.subr.bf16.mxu0 %v2178
    %3467 = vmatpush1.bf16.msra.mxu0 %v2177
    %3468 = vmatprep.subr.bf16.mxu0 %v2194
    %3469 = vmatpush1.bf16.msra.mxu0 %v2193
    %3470 = vmatprep.subr.bf16.mxu0 %v2210
    %3471 = vmatpush1.bf16.msra.mxu0 %v2209
    %3472 = vmatprep.subr.bf16.mxu0 %v2226
    %3473 = vmatpush1.bf16.msra.mxu0 %v2225
    %3474 = vmatprep.mubr.bf16.mxu0 %v1200
    %3475 = vmatmul.mubr.bf16.gmra.mrb[0].mxu0 %v1199
    %v3476 = vpop.f32.mrb[0].mxu0
    %v3477 = vadd.f32 %v3436, %v3476
    %v3478 = vpop.f32.mrb[0].mxu0
    %v3479 = vadd.f32 %v3438, %v3478
    %v3480 = vpop.f32.mrb[0].mxu0
    %v3481 = vpop.f32.mrb[0].mxu0
    %3482 = vdwg.mxu0
    %3483 = vmatprep.subr.bf16.mxu0 %v2242
    %3484 = vmatpush1.bf16.msra.mxu0 %v2241
    %3485 = vmatprep.subr.bf16.mxu0 %v2258
    %3486 = vmatpush1.bf16.msra.mxu0 %v2257
    %3487 = vmatprep.subr.bf16.mxu0 %v2274
    %3488 = vmatpush1.bf16.msra.mxu0 %v2273
    %3489 = vmatprep.subr.bf16.mxu0 %v2290
    %3490 = vmatpush1.bf16.msra.mxu0 %v2289
    %3491 = vmatprep.subr.bf16.mxu0 %v2306
    %3492 = vmatpush1.bf16.msra.mxu0 %v2305
    %3493 = vmatprep.subr.bf16.mxu0 %v2322
    %3494 = vmatpush1.bf16.msra.mxu0 %v2321
    %3495 = vmatprep.subr.bf16.mxu0 %v2338
    %3496 = vmatpush1.bf16.msra.mxu0 %v2337
    %3497 = vmatprep.subr.bf16.mxu0 %v2354
    %3498 = vmatpush1.bf16.msra.mxu0 %v2353
    %3499 = vmatprep.subr.bf16.mxu0 %v2370
    %3500 = vmatpush1.bf16.msra.mxu0 %v2369
    %3501 = vmatprep.subr.bf16.mxu0 %v2386
    %3502 = vmatpush1.bf16.msra.mxu0 %v2385
    %3503 = vmatprep.subr.bf16.mxu0 %v2402
    %3504 = vmatpush1.bf16.msra.mxu0 %v2401
    %3505 = vmatprep.subr.bf16.mxu0 %v2418
    %3506 = vmatpush1.bf16.msra.mxu0 %v2417
    %3507 = vmatprep.subr.bf16.mxu0 %v2434
    %3508 = vmatpush1.bf16.msra.mxu0 %v2433
    %3509 = vmatprep.subr.bf16.mxu0 %v2450
    %3510 = vmatpush1.bf16.msra.mxu0 %v2449
    %3511 = vmatprep.subr.bf16.mxu0 %v2466
    %3512 = vmatpush1.bf16.msra.mxu0 %v2465
    %3513 = vmatprep.subr.bf16.mxu0 %v2482
    %3514 = vmatpush1.bf16.msra.mxu0 %v2481
    %3515 = vmatprep.mubr.bf16.mxu0 %v1202
    %3516 = vmatmul.mubr.bf16.gmra.mrb[0].mxu0 %v1201
    %v3517 = vpop.f32.mrb[0].mxu0
    %v3518 = vadd.f32 %v3477, %v3517
    %v3519 = vpop.f32.mrb[0].mxu0
    %v3520 = vadd.f32 %v3479, %v3519
    %v3521 = vpop.f32.mrb[0].mxu0
    %v3522 = vpop.f32.mrb[0].mxu0
    %3523 = vdwg.mxu0
    %3524 = vmatprep.subr.bf16.mxu0 %v2498
    %3525 = vmatpush1.bf16.msra.mxu0 %v2497
    %3526 = vmatprep.subr.bf16.mxu0 %v2514
    %3527 = vmatpush1.bf16.msra.mxu0 %v2513
    %3528 = vmatprep.subr.bf16.mxu0 %v2530
    %3529 = vmatpush1.bf16.msra.mxu0 %v2529
    %3530 = vmatprep.subr.bf16.mxu0 %v2546
    %3531 = vmatpush1.bf16.msra.mxu0 %v2545
    %3532 = vmatprep.subr.bf16.mxu0 %v2562
    %3533 = vmatpush1.bf16.msra.mxu0 %v2561
    %3534 = vmatprep.subr.bf16.mxu0 %v2578
    %3535 = vmatpush1.bf16.msra.mxu0 %v2577
    %3536 = vmatprep.subr.bf16.mxu0 %v2594
    %3537 = vmatpush1.bf16.msra.mxu0 %v2593
    %3538 = vmatprep.subr.bf16.mxu0 %v2610
    %3539 = vmatpush1.bf16.msra.mxu0 %v2609
    %3540 = vmatprep.subr.bf16.mxu0 %v2626
    %3541 = vmatpush1.bf16.msra.mxu0 %v2625
    %3542 = vmatprep.subr.bf16.mxu0 %v2642
    %3543 = vmatpush1.bf16.msra.mxu0 %v2641
    %3544 = vmatprep.subr.bf16.mxu0 %v2658
    %3545 = vmatpush1.bf16.msra.mxu0 %v2657
    %3546 = vmatprep.subr.bf16.mxu0 %v2674
    %3547 = vmatpush1.bf16.msra.mxu0 %v2673
    %3548 = vmatprep.subr.bf16.mxu0 %v2690
    %3549 = vmatpush1.bf16.msra.mxu0 %v2689
    %3550 = vmatprep.subr.bf16.mxu0 %v2706
    %3551 = vmatpush1.bf16.msra.mxu0 %v2705
    %3552 = vmatprep.subr.bf16.mxu0 %v2722
    %3553 = vmatpush1.bf16.msra.mxu0 %v2721
    %3554 = vmatprep.subr.bf16.mxu0 %v2738
    %3555 = vmatpush1.bf16.msra.mxu0 %v2737
    %3556 = vmatprep.mubr.bf16.mxu0 %v1204
    %3557 = vmatmul.mubr.bf16.gmra.mrb[0].mxu0 %v1203
    %v3558 = vpop.f32.mrb[0].mxu0
    %v3559 = vadd.f32 %v3518, %v3558
    %v3560 = vpop.f32.mrb[0].mxu0
    %v3561 = vadd.f32 %v3520, %v3560
    %v3562 = vpop.f32.mrb[0].mxu0
    %v3563 = vpop.f32.mrb[0].mxu0
    %3564 = vdwg.mxu0
    %3565 = vmatprep.subr.bf16.mxu0 %v1732
    %3566 = vmatpush1.bf16.msra.mxu0 %v1731
    %3567 = vmatprep.subr.bf16.mxu0 %v1748
    %3568 = vmatpush1.bf16.msra.mxu0 %v1747
    %3569 = vmatprep.subr.bf16.mxu0 %v1764
    %3570 = vmatpush1.bf16.msra.mxu0 %v1763
    %3571 = vmatprep.subr.bf16.mxu0 %v1780
    %3572 = vmatpush1.bf16.msra.mxu0 %v1779
    %3573 = vmatprep.subr.bf16.mxu0 %v1796
    %3574 = vmatpush1.bf16.msra.mxu0 %v1795
    %3575 = vmatprep.subr.bf16.mxu0 %v1812
    %3576 = vmatpush1.bf16.msra.mxu0 %v1811
    %3577 = vmatprep.subr.bf16.mxu0 %v1828
    %3578 = vmatpush1.bf16.msra.mxu0 %v1827
    %3579 = vmatprep.subr.bf16.mxu0 %v1844
    %3580 = vmatpush1.bf16.msra.mxu0 %v1843
    %3581 = vmatprep.subr.bf16.mxu0 %v1860
    %3582 = vmatpush1.bf16.msra.mxu0 %v1859
    %3583 = vmatprep.subr.bf16.mxu0 %v1876
    %3584 = vmatpush1.bf16.msra.mxu0 %v1875
    %3585 = vmatprep.subr.bf16.mxu0 %v1892
    %3586 = vmatpush1.bf16.msra.mxu0 %v1891
    %3587 = vmatprep.subr.bf16.mxu0 %v1908
    %3588 = vmatpush1.bf16.msra.mxu0 %v1907
    %3589 = vmatprep.subr.bf16.mxu0 %v1924
    %3590 = vmatpush1.bf16.msra.mxu0 %v1923
    %3591 = vmatprep.subr.bf16.mxu0 %v1940
    %3592 = vmatpush1.bf16.msra.mxu0 %v1939
    %3593 = vmatprep.subr.bf16.mxu0 %v1956
    %3594 = vmatpush1.bf16.msra.mxu0 %v1955
    %3595 = vmatprep.subr.bf16.mxu0 %v1972
    %3596 = vmatpush1.bf16.msra.mxu0 %v1971
    %3597 = vmatprep.mubr.bf16.mxu0 %v1198
    %3598 = vmatmul.mubr.bf16.gmra.mrb[0].mxu0 %v1197
    %v3599 = vpop.f32.mrb[0].mxu0
    %v3600 = vadd.f32 0.0, %v3599
    %v3601 = vpop.f32.mrb[0].mxu0
    %v3602 = vadd.f32 0.0, %v3601
    %v3603 = vpop.f32.mrb[0].mxu0
    %v3604 = vpop.f32.mrb[0].mxu0
    %3605 = vdwg.mxu0
    %3606 = vmatprep.subr.bf16.mxu0 %v1988
    %3607 = vmatpush1.bf16.msra.mxu0 %v1987
    %3608 = vmatprep.subr.bf16.mxu0 %v2004
    %3609 = vmatpush1.bf16.msra.mxu0 %v2003
    %3610 = vmatprep.subr.bf16.mxu0 %v2020
    %3611 = vmatpush1.bf16.msra.mxu0 %v2019
    %3612 = vmatprep.subr.bf16.mxu0 %v2036
    %3613 = vmatpush1.bf16.msra.mxu0 %v2035
    %3614 = vmatprep.subr.bf16.mxu0 %v2052
    %3615 = vmatpush1.bf16.msra.mxu0 %v2051
    %3616 = vmatprep.subr.bf16.mxu0 %v2068
    %3617 = vmatpush1.bf16.msra.mxu0 %v2067
    %3618 = vmatprep.subr.bf16.mxu0 %v2084
    %3619 = vmatpush1.bf16.msra.mxu0 %v2083
    %3620 = vmatprep.subr.bf16.mxu0 %v2100
    %3621 = vmatpush1.bf16.msra.mxu0 %v2099
    %3622 = vmatprep.subr.bf16.mxu0 %v2116
    %3623 = vmatpush1.bf16.msra.mxu0 %v2115
    %3624 = vmatprep.subr.bf16.mxu0 %v2132
    %3625 = vmatpush1.bf16.msra.mxu0 %v2131
    %3626 = vmatprep.subr.bf16.mxu0 %v2148
    %3627 = vmatpush1.bf16.msra.mxu0 %v2147
    %3628 = vmatprep.subr.bf16.mxu0 %v2164
    %3629 = vmatpush1.bf16.msra.mxu0 %v2163
    %3630 = vmatprep.subr.bf16.mxu0 %v2180
    %3631 = vmatpush1.bf16.msra.mxu0 %v2179
    %3632 = vmatprep.subr.bf16.mxu0 %v2196
    %3633 = vmatpush1.bf16.msra.mxu0 %v2195
    %3634 = vmatprep.subr.bf16.mxu0 %v2212
    %3635 = vmatpush1.bf16.msra.mxu0 %v2211
    %3636 = vmatprep.subr.bf16.mxu0 %v2228
    %3637 = vmatpush1.bf16.msra.mxu0 %v2227
    %3638 = vmatprep.mubr.bf16.mxu0 %v1200
    %3639 = vmatmul.mubr.bf16.gmra.mrb[0].mxu0 %v1199
    %v3640 = vpop.f32.mrb[0].mxu0
    %v3641 = vadd.f32 %v3600, %v3640
    %v3642 = vpop.f32.mrb[0].mxu0
    %v3643 = vadd.f32 %v3602, %v3642
    %v3644 = vpop.f32.mrb[0].mxu0
    %v3645 = vpop.f32.mrb[0].mxu0
    %3646 = vdwg.mxu0
    %3647 = vmatprep.subr.bf16.mxu0 %v2244
    %3648 = vmatpush1.bf16.msra.mxu0 %v2243
    %3649 = vmatprep.subr.bf16.mxu0 %v2260
    %3650 = vmatpush1.bf16.msra.mxu0 %v2259
    %3651 = vmatprep.subr.bf16.mxu0 %v2276
    %3652 = vmatpush1.bf16.msra.mxu0 %v2275
    %3653 = vmatprep.subr.bf16.mxu0 %v2292
    %3654 = vmatpush1.bf16.msra.mxu0 %v2291
    %3655 = vmatprep.subr.bf16.mxu0 %v2308
    %3656 = vmatpush1.bf16.msra.mxu0 %v2307
    %3657 = vmatprep.subr.bf16.mxu0 %v2324
    %3658 = vmatpush1.bf16.msra.mxu0 %v2323
    %3659 = vmatprep.subr.bf16.mxu0 %v2340
    %3660 = vmatpush1.bf16.msra.mxu0 %v2339
    %3661 = vmatprep.subr.bf16.mxu0 %v2356
    %3662 = vmatpush1.bf16.msra.mxu0 %v2355
    %3663 = vmatprep.subr.bf16.mxu0 %v2372
    %3664 = vmatpush1.bf16.msra.mxu0 %v2371
    %3665 = vmatprep.subr.bf16.mxu0 %v2388
    %3666 = vmatpush1.bf16.msra.mxu0 %v2387
    %3667 = vmatprep.subr.bf16.mxu0 %v2404
    %3668 = vmatpush1.bf16.msra.mxu0 %v2403
    %3669 = vmatprep.subr.bf16.mxu0 %v2420
    %3670 = vmatpush1.bf16.msra.mxu0 %v2419
    %3671 = vmatprep.subr.bf16.mxu0 %v2436
    %3672 = vmatpush1.bf16.msra.mxu0 %v2435
    %3673 = vmatprep.subr.bf16.mxu0 %v2452
    %3674 = vmatpush1.bf16.msra.mxu0 %v2451
    %3675 = vmatprep.subr.bf16.mxu0 %v2468
    %3676 = vmatpush1.bf16.msra.mxu0 %v2467
    %3677 = vmatprep.subr.bf16.mxu0 %v2484
    %3678 = vmatpush1.bf16.msra.mxu0 %v2483
    %3679 = vmatprep.mubr.bf16.mxu0 %v1202
    %3680 = vmatmul.mubr.bf16.gmra.mrb[0].mxu0 %v1201
    %v3681 = vpop.f32.mrb[0].mxu0
    %v3682 = vadd.f32 %v3641, %v3681
    %v3683 = vpop.f32.mrb[0].mxu0
    %v3684 = vadd.f32 %v3643, %v3683
    %v3685 = vpop.f32.mrb[0].mxu0
    %v3686 = vpop.f32.mrb[0].mxu0
    %3687 = vdwg.mxu0
    %3688 = vmatprep.subr.bf16.mxu0 %v2500
    %3689 = vmatpush1.bf16.msra.mxu0 %v2499
    %3690 = vmatprep.subr.bf16.mxu0 %v2516
    %3691 = vmatpush1.bf16.msra.mxu0 %v2515
    %3692 = vmatprep.subr.bf16.mxu0 %v2532
    %3693 = vmatpush1.bf16.msra.mxu0 %v2531
    %3694 = vmatprep.subr.bf16.mxu0 %v2548
    %3695 = vmatpush1.bf16.msra.mxu0 %v2547
    %3696 = vmatprep.subr.bf16.mxu0 %v2564
    %3697 = vmatpush1.bf16.msra.mxu0 %v2563
    %3698 = vmatprep.subr.bf16.mxu0 %v2580
    %3699 = vmatpush1.bf16.msra.mxu0 %v2579
    %3700 = vmatprep.subr.bf16.mxu0 %v2596
    %3701 = vmatpush1.bf16.msra.mxu0 %v2595
    %3702 = vmatprep.subr.bf16.mxu0 %v2612
    %3703 = vmatpush1.bf16.msra.mxu0 %v2611
    %3704 = vmatprep.subr.bf16.mxu0 %v2628
    %3705 = vmatpush1.bf16.msra.mxu0 %v2627
    %3706 = vmatprep.subr.bf16.mxu0 %v2644
    %3707 = vmatpush1.bf16.msra.mxu0 %v2643
    %3708 = vmatprep.subr.bf16.mxu0 %v2660
    %3709 = vmatpush1.bf16.msra.mxu0 %v2659
    %3710 = vmatprep.subr.bf16.mxu0 %v2676
    %3711 = vmatpush1.bf16.msra.mxu0 %v2675
    %3712 = vmatprep.subr.bf16.mxu0 %v2692
    %3713 = vmatpush1.bf16.msra.mxu0 %v2691
    %3714 = vmatprep.subr.bf16.mxu0 %v2708
    %3715 = vmatpush1.bf16.msra.mxu0 %v2707
    %3716 = vmatprep.subr.bf16.mxu0 %v2724
    %3717 = vmatpush1.bf16.msra.mxu0 %v2723
    %3718 = vmatprep.subr.bf16.mxu0 %v2740
    %3719 = vmatpush1.bf16.msra.mxu0 %v2739
    %3720 = vmatprep.mubr.bf16.mxu0 %v1204
    %3721 = vmatmul.mubr.bf16.gmra.mrb[0].mxu0 %v1203
    %v3722 = vpop.f32.mrb[0].mxu0
    %v3723 = vadd.f32 %v3682, %v3722
    %v3724 = vpop.f32.mrb[0].mxu0
    %v3725 = vadd.f32 %v3684, %v3724
    %v3726 = vpop.f32.mrb[0].mxu0
    %v3727 = vpop.f32.mrb[0].mxu0
    %3728 = vdwg.mxu0
    %3729 = vmatprep.subr.bf16.mxu0 %v1734
    %3730 = vmatpush1.bf16.msra.mxu0 %v1733
    %3731 = vmatprep.subr.bf16.mxu0 %v1750
    %3732 = vmatpush1.bf16.msra.mxu0 %v1749
    %3733 = vmatprep.subr.bf16.mxu0 %v1766
    %3734 = vmatpush1.bf16.msra.mxu0 %v1765
    %3735 = vmatprep.subr.bf16.mxu0 %v1782
    %3736 = vmatpush1.bf16.msra.mxu0 %v1781
    %3737 = vmatprep.subr.bf16.mxu0 %v1798
    %3738 = vmatpush1.bf16.msra.mxu0 %v1797
    %3739 = vmatprep.subr.bf16.mxu0 %v1814
    %3740 = vmatpush1.bf16.msra.mxu0 %v1813
    %3741 = vmatprep.subr.bf16.mxu0 %v1830
    %3742 = vmatpush1.bf16.msra.mxu0 %v1829
    %3743 = vmatprep.subr.bf16.mxu0 %v1846
    %3744 = vmatpush1.bf16.msra.mxu0 %v1845
    %3745 = vmatprep.subr.bf16.mxu0 %v1862
    %3746 = vmatpush1.bf16.msra.mxu0 %v1861
    %3747 = vmatprep.subr.bf16.mxu0 %v1878
    %3748 = vmatpush1.bf16.msra.mxu0 %v1877
    %3749 = vmatprep.subr.bf16.mxu0 %v1894
    %3750 = vmatpush1.bf16.msra.mxu0 %v1893
    %3751 = vmatprep.subr.bf16.mxu0 %v1910
    %3752 = vmatpush1.bf16.msra.mxu0 %v1909
    %3753 = vmatprep.subr.bf16.mxu0 %v1926
    %3754 = vmatpush1.bf16.msra.mxu0 %v1925
    %3755 = vmatprep.subr.bf16.mxu0 %v1942
    %3756 = vmatpush1.bf16.msra.mxu0 %v1941
    %3757 = vmatprep.subr.bf16.mxu0 %v1958
    %3758 = vmatpush1.bf16.msra.mxu0 %v1957
    %3759 = vmatprep.subr.bf16.mxu0 %v1974
    %3760 = vmatpush1.bf16.msra.mxu0 %v1973
    %3761 = vmatprep.mubr.bf16.mxu0 %v1198
    %3762 = vmatmul.mubr.bf16.gmra.mrb[0].mxu0 %v1197
    %v3763 = vpop.f32.mrb[0].mxu0
    %v3764 = vadd.f32 0.0, %v3763
    %v3765 = vpop.f32.mrb[0].mxu0
    %v3766 = vadd.f32 0.0, %v3765
    %v3767 = vpop.f32.mrb[0].mxu0
    %v3768 = vpop.f32.mrb[0].mxu0
    %3769 = vdwg.mxu0
    %3770 = vmatprep.subr.bf16.mxu0 %v1990
    %3771 = vmatpush1.bf16.msra.mxu0 %v1989
    %3772 = vmatprep.subr.bf16.mxu0 %v2006
    %3773 = vmatpush1.bf16.msra.mxu0 %v2005
    %3774 = vmatprep.subr.bf16.mxu0 %v2022
    %3775 = vmatpush1.bf16.msra.mxu0 %v2021
    %3776 = vmatprep.subr.bf16.mxu0 %v2038
    %3777 = vmatpush1.bf16.msra.mxu0 %v2037
    %3778 = vmatprep.subr.bf16.mxu0 %v2054
    %3779 = vmatpush1.bf16.msra.mxu0 %v2053
    %3780 = vmatprep.subr.bf16.mxu0 %v2070
    %3781 = vmatpush1.bf16.msra.mxu0 %v2069
    %3782 = vmatprep.subr.bf16.mxu0 %v2086
    %3783 = vmatpush1.bf16.msra.mxu0 %v2085
    %3784 = vmatprep.subr.bf16.mxu0 %v2102
    %3785 = vmatpush1.bf16.msra.mxu0 %v2101
    %3786 = vmatprep.subr.bf16.mxu0 %v2118
    %3787 = vmatpush1.bf16.msra.mxu0 %v2117
    %3788 = vmatprep.subr.bf16.mxu0 %v2134
    %3789 = vmatpush1.bf16.msra.mxu0 %v2133
    %3790 = vmatprep.subr.bf16.mxu0 %v2150
    %3791 = vmatpush1.bf16.msra.mxu0 %v2149
    %3792 = vmatprep.subr.bf16.mxu0 %v2166
    %3793 = vmatpush1.bf16.msra.mxu0 %v2165
    %3794 = vmatprep.subr.bf16.mxu0 %v2182
    %3795 = vmatpush1.bf16.msra.mxu0 %v2181
    %3796 = vmatprep.subr.bf16.mxu0 %v2198
    %3797 = vmatpush1.bf16.msra.mxu0 %v2197
    %3798 = vmatprep.subr.bf16.mxu0 %v2214
    %3799 = vmatpush1.bf16.msra.mxu0 %v2213
    %3800 = vmatprep.subr.bf16.mxu0 %v2230
    %3801 = vmatpush1.bf16.msra.mxu0 %v2229
    %3802 = vmatprep.mubr.bf16.mxu0 %v1200
    %3803 = vmatmul.mubr.bf16.gmra.mrb[0].mxu0 %v1199
    %v3804 = vpop.f32.mrb[0].mxu0
    %v3805 = vadd.f32 %v3764, %v3804
    %v3806 = vpop.f32.mrb[0].mxu0
    %v3807 = vadd.f32 %v3766, %v3806
    %v3808 = vpop.f32.mrb[0].mxu0
    %v3809 = vpop.f32.mrb[0].mxu0
    %3810 = vdwg.mxu0
    %3811 = vmatprep.subr.bf16.mxu0 %v2246
    %3812 = vmatpush1.bf16.msra.mxu0 %v2245
    %3813 = vmatprep.subr.bf16.mxu0 %v2262
    %3814 = vmatpush1.bf16.msra.mxu0 %v2261
    %3815 = vmatprep.subr.bf16.mxu0 %v2278
    %3816 = vmatpush1.bf16.msra.mxu0 %v2277
    %3817 = vmatprep.subr.bf16.mxu0 %v2294
    %3818 = vmatpush1.bf16.msra.mxu0 %v2293
    %3819 = vmatprep.subr.bf16.mxu0 %v2310
    %3820 = vmatpush1.bf16.msra.mxu0 %v2309
    %3821 = vmatprep.subr.bf16.mxu0 %v2326
    %3822 = vmatpush1.bf16.msra.mxu0 %v2325
    %3823 = vmatprep.subr.bf16.mxu0 %v2342
    %3824 = vmatpush1.bf16.msra.mxu0 %v2341
    %3825 = vmatprep.subr.bf16.mxu0 %v2358
    %3826 = vmatpush1.bf16.msra.mxu0 %v2357
    %3827 = vmatprep.subr.bf16.mxu0 %v2374
    %3828 = vmatpush1.bf16.msra.mxu0 %v2373
    %3829 = vmatprep.subr.bf16.mxu0 %v2390
    %3830 = vmatpush1.bf16.msra.mxu0 %v2389
    %3831 = vmatprep.subr.bf16.mxu0 %v2406
    %3832 = vmatpush1.bf16.msra.mxu0 %v2405
    %3833 = vmatprep.subr.bf16.mxu0 %v2422
    %3834 = vmatpush1.bf16.msra.mxu0 %v2421
    %3835 = vmatprep.subr.bf16.mxu0 %v2438
    %3836 = vmatpush1.bf16.msra.mxu0 %v2437
    %3837 = vmatprep.subr.bf16.mxu0 %v2454
    %3838 = vmatpush1.bf16.msra.mxu0 %v2453
    %3839 = vmatprep.subr.bf16.mxu0 %v2470
    %3840 = vmatpush1.bf16.msra.mxu0 %v2469
    %3841 = vmatprep.subr.bf16.mxu0 %v2486
    %3842 = vmatpush1.bf16.msra.mxu0 %v2485
    %3843 = vmatprep.mubr.bf16.mxu0 %v1202
    %3844 = vmatmul.mubr.bf16.gmra.mrb[0].mxu0 %v1201
    %v3845 = vpop.f32.mrb[0].mxu0
    %v3846 = vadd.f32 %v3805, %v3845
    %v3847 = vpop.f32.mrb[0].mxu0
    %v3848 = vadd.f32 %v3807, %v3847
    %v3849 = vpop.f32.mrb[0].mxu0
    %v3850 = vpop.f32.mrb[0].mxu0
    %3851 = vdwg.mxu0
    %3852 = vmatprep.subr.bf16.mxu0 %v2502
    %3853 = vmatpush1.bf16.msra.mxu0 %v2501
    %3854 = vmatprep.subr.bf16.mxu0 %v2518
    %3855 = vmatpush1.bf16.msra.mxu0 %v2517
    %3856 = vmatprep.subr.bf16.mxu0 %v2534
    %3857 = vmatpush1.bf16.msra.mxu0 %v2533
    %3858 = vmatprep.subr.bf16.mxu0 %v2550
    %3859 = vmatpush1.bf16.msra.mxu0 %v2549
    %3860 = vmatprep.subr.bf16.mxu0 %v2566
    %3861 = vmatpush1.bf16.msra.mxu0 %v2565
    %3862 = vmatprep.subr.bf16.mxu0 %v2582
    %3863 = vmatpush1.bf16.msra.mxu0 %v2581
    %3864 = vmatprep.subr.bf16.mxu0 %v2598
    %3865 = vmatpush1.bf16.msra.mxu0 %v2597
    %3866 = vmatprep.subr.bf16.mxu0 %v2614
    %3867 = vmatpush1.bf16.msra.mxu0 %v2613
    %3868 = vmatprep.subr.bf16.mxu0 %v2630
    %3869 = vmatpush1.bf16.msra.mxu0 %v2629
    %3870 = vmatprep.subr.bf16.mxu0 %v2646
    %3871 = vmatpush1.bf16.msra.mxu0 %v2645
    %3872 = vmatprep.subr.bf16.mxu0 %v2662
    %3873 = vmatpush1.bf16.msra.mxu0 %v2661
    %3874 = vmatprep.subr.bf16.mxu0 %v2678
    %3875 = vmatpush1.bf16.msra.mxu0 %v2677
    %3876 = vmatprep.subr.bf16.mxu0 %v2694
    %3877 = vmatpush1.bf16.msra.mxu0 %v2693
    %3878 = vmatprep.subr.bf16.mxu0 %v2710
    %3879 = vmatpush1.bf16.msra.mxu0 %v2709
    %3880 = vmatprep.subr.bf16.mxu0 %v2726
    %3881 = vmatpush1.bf16.msra.mxu0 %v2725
    %3882 = vmatprep.subr.bf16.mxu0 %v2742
    %3883 = vmatpush1.bf16.msra.mxu0 %v2741
    %3884 = vmatprep.mubr.bf16.mxu0 %v1204
    %3885 = vmatmul.mubr.bf16.gmra.mrb[0].mxu0 %v1203
    %v3886 = vpop.f32.mrb[0].mxu0
    %v3887 = vadd.f32 %v3846, %v3886
    %v3888 = vpop.f32.mrb[0].mxu0
    %v3889 = vadd.f32 %v3848, %v3888
    %v3890 = vpop.f32.mrb[0].mxu0
    %v3891 = vpop.f32.mrb[0].mxu0
    %3892 = vdwg.mxu0
    %3893 = vmatprep.subr.bf16.mxu0 %v1736
    %3894 = vmatpush1.bf16.msra.mxu0 %v1735
    %3895 = vmatprep.subr.bf16.mxu0 %v1752
    %3896 = vmatpush1.bf16.msra.mxu0 %v1751
    %3897 = vmatprep.subr.bf16.mxu0 %v1768
    %3898 = vmatpush1.bf16.msra.mxu0 %v1767
    %3899 = vmatprep.subr.bf16.mxu0 %v1784
    %3900 = vmatpush1.bf16.msra.mxu0 %v1783
    %3901 = vmatprep.subr.bf16.mxu0 %v1800
    %3902 = vmatpush1.bf16.msra.mxu0 %v1799
    %3903 = vmatprep.subr.bf16.mxu0 %v1816
    %3904 = vmatpush1.bf16.msra.mxu0 %v1815
    %3905 = vmatprep.subr.bf16.mxu0 %v1832
    %3906 = vmatpush1.bf16.msra.mxu0 %v1831
    %3907 = vmatprep.subr.bf16.mxu0 %v1848
    %3908 = vmatpush1.bf16.msra.mxu0 %v1847
    %3909 = vmatprep.subr.bf16.mxu0 %v1864
    %3910 = vmatpush1.bf16.msra.mxu0 %v1863
    %3911 = vmatprep.subr.bf16.mxu0 %v1880
    %3912 = vmatpush1.bf16.msra.mxu0 %v1879
    %3913 = vmatprep.subr.bf16.mxu0 %v1896
    %3914 = vmatpush1.bf16.msra.mxu0 %v1895
    %3915 = vmatprep.subr.bf16.mxu0 %v1912
    %3916 = vmatpush1.bf16.msra.mxu0 %v1911
    %3917 = vmatprep.subr.bf16.mxu0 %v1928
    %3918 = vmatpush1.bf16.msra.mxu0 %v1927
    %3919 = vmatprep.subr.bf16.mxu0 %v1944
    %3920 = vmatpush1.bf16.msra.mxu0 %v1943
    %3921 = vmatprep.subr.bf16.mxu0 %v1960
    %3922 = vmatpush1.bf16.msra.mxu0 %v1959
    %3923 = vmatprep.subr.bf16.mxu0 %v1976
    %3924 = vmatpush1.bf16.msra.mxu0 %v1975
    %3925 = vmatprep.mubr.bf16.mxu0 %v1198
    %3926 = vmatmul.mubr.bf16.gmra.mrb[0].mxu0 %v1197
    %v3927 = vpop.f32.mrb[0].mxu0
    %v3928 = vadd.f32 0.0, %v3927
    %v3929 = vpop.f32.mrb[0].mxu0
    %v3930 = vadd.f32 0.0, %v3929
    %v3931 = vpop.f32.mrb[0].mxu0
    %v3932 = vpop.f32.mrb[0].mxu0
    %3933 = vdwg.mxu0
    %3934 = vmatprep.subr.bf16.mxu0 %v1992
    %3935 = vmatpush1.bf16.msra.mxu0 %v1991
    %3936 = vmatprep.subr.bf16.mxu0 %v2008
    %3937 = vmatpush1.bf16.msra.mxu0 %v2007
    %3938 = vmatprep.subr.bf16.mxu0 %v2024
    %3939 = vmatpush1.bf16.msra.mxu0 %v2023
    %3940 = vmatprep.subr.bf16.mxu0 %v2040
    %3941 = vmatpush1.bf16.msra.mxu0 %v2039
    %3942 = vmatprep.subr.bf16.mxu0 %v2056
    %3943 = vmatpush1.bf16.msra.mxu0 %v2055
    %3944 = vmatprep.subr.bf16.mxu0 %v2072
    %3945 = vmatpush1.bf16.msra.mxu0 %v2071
    %3946 = vmatprep.subr.bf16.mxu0 %v2088
    %3947 = vmatpush1.bf16.msra.mxu0 %v2087
    %3948 = vmatprep.subr.bf16.mxu0 %v2104
    %3949 = vmatpush1.bf16.msra.mxu0 %v2103
    %3950 = vmatprep.subr.bf16.mxu0 %v2120
    %3951 = vmatpush1.bf16.msra.mxu0 %v2119
    %3952 = vmatprep.subr.bf16.mxu0 %v2136
    %3953 = vmatpush1.bf16.msra.mxu0 %v2135
    %3954 = vmatprep.subr.bf16.mxu0 %v2152
    %3955 = vmatpush1.bf16.msra.mxu0 %v2151
    %3956 = vmatprep.subr.bf16.mxu0 %v2168
    %3957 = vmatpush1.bf16.msra.mxu0 %v2167
    %3958 = vmatprep.subr.bf16.mxu0 %v2184
    %3959 = vmatpush1.bf16.msra.mxu0 %v2183
    %3960 = vmatprep.subr.bf16.mxu0 %v2200
    %3961 = vmatpush1.bf16.msra.mxu0 %v2199
    %3962 = vmatprep.subr.bf16.mxu0 %v2216
    %3963 = vmatpush1.bf16.msra.mxu0 %v2215
    %3964 = vmatprep.subr.bf16.mxu0 %v2232
    %3965 = vmatpush1.bf16.msra.mxu0 %v2231
    %3966 = vmatprep.mubr.bf16.mxu0 %v1200
    %3967 = vmatmul.mubr.bf16.gmra.mrb[0].mxu0 %v1199
    %v3968 = vpop.f32.mrb[0].mxu0
    %v3969 = vadd.f32 %v3928, %v3968
    %v3970 = vpop.f32.mrb[0].mxu0
    %v3971 = vadd.f32 %v3930, %v3970
    %v3972 = vpop.f32.mrb[0].mxu0
    %v3973 = vpop.f32.mrb[0].mxu0
    %3974 = vdwg.mxu0
    %3975 = vmatprep.subr.bf16.mxu0 %v2248
    %3976 = vmatpush1.bf16.msra.mxu0 %v2247
    %3977 = vmatprep.subr.bf16.mxu0 %v2264
    %3978 = vmatpush1.bf16.msra.mxu0 %v2263
    %3979 = vmatprep.subr.bf16.mxu0 %v2280
    %3980 = vmatpush1.bf16.msra.mxu0 %v2279
    %3981 = vmatprep.subr.bf16.mxu0 %v2296
    %3982 = vmatpush1.bf16.msra.mxu0 %v2295
    %3983 = vmatprep.subr.bf16.mxu0 %v2312
    %3984 = vmatpush1.bf16.msra.mxu0 %v2311
    %3985 = vmatprep.subr.bf16.mxu0 %v2328
    %3986 = vmatpush1.bf16.msra.mxu0 %v2327
    %3987 = vmatprep.subr.bf16.mxu0 %v2344
    %3988 = vmatpush1.bf16.msra.mxu0 %v2343
    %3989 = vmatprep.subr.bf16.mxu0 %v2360
    %3990 = vmatpush1.bf16.msra.mxu0 %v2359
    %3991 = vmatprep.subr.bf16.mxu0 %v2376
    %3992 = vmatpush1.bf16.msra.mxu0 %v2375
    %3993 = vmatprep.subr.bf16.mxu0 %v2392
    %3994 = vmatpush1.bf16.msra.mxu0 %v2391
    %3995 = vmatprep.subr.bf16.mxu0 %v2408
    %3996 = vmatpush1.bf16.msra.mxu0 %v2407
    %3997 = vmatprep.subr.bf16.mxu0 %v2424
    %3998 = vmatpush1.bf16.msra.mxu0 %v2423
    %3999 = vmatprep.subr.bf16.mxu0 %v2440
    %4000 = vmatpush1.bf16.msra.mxu0 %v2439
    %4001 = vmatprep.subr.bf16.mxu0 %v2456
    %4002 = vmatpush1.bf16.msra.mxu0 %v2455
    %4003 = vmatprep.subr.bf16.mxu0 %v2472
    %4004 = vmatpush1.bf16.msra.mxu0 %v2471
    %4005 = vmatprep.subr.bf16.mxu0 %v2488
    %4006 = vmatpush1.bf16.msra.mxu0 %v2487
    %4007 = vmatprep.mubr.bf16.mxu0 %v1202
    %4008 = vmatmul.mubr.bf16.gmra.mrb[0].mxu0 %v1201
    %v4009 = vpop.f32.mrb[0].mxu0
    %v4010 = vadd.f32 %v3969, %v4009
    %v4011 = vpop.f32.mrb[0].mxu0
    %v4012 = vadd.f32 %v3971, %v4011
    %v4013 = vpop.f32.mrb[0].mxu0
    %v4014 = vpop.f32.mrb[0].mxu0
    %4015 = vdwg.mxu0
    %4016 = vmatprep.subr.bf16.mxu0 %v2504
    %4017 = vmatpush1.bf16.msra.mxu0 %v2503
    %4018 = vmatprep.subr.bf16.mxu0 %v2520
    %4019 = vmatpush1.bf16.msra.mxu0 %v2519
    %4020 = vmatprep.subr.bf16.mxu0 %v2536
    %4021 = vmatpush1.bf16.msra.mxu0 %v2535
    %4022 = vmatprep.subr.bf16.mxu0 %v2552
    %4023 = vmatpush1.bf16.msra.mxu0 %v2551
    %4024 = vmatprep.subr.bf16.mxu0 %v2568
    %4025 = vmatpush1.bf16.msra.mxu0 %v2567
    %4026 = vmatprep.subr.bf16.mxu0 %v2584
    %4027 = vmatpush1.bf16.msra.mxu0 %v2583
    %4028 = vmatprep.subr.bf16.mxu0 %v2600
    %4029 = vmatpush1.bf16.msra.mxu0 %v2599
    %4030 = vmatprep.subr.bf16.mxu0 %v2616
    %4031 = vmatpush1.bf16.msra.mxu0 %v2615
    %4032 = vmatprep.subr.bf16.mxu0 %v2632
    %4033 = vmatpush1.bf16.msra.mxu0 %v2631
    %4034 = vmatprep.subr.bf16.mxu0 %v2648
    %4035 = vmatpush1.bf16.msra.mxu0 %v2647
    %4036 = vmatprep.subr.bf16.mxu0 %v2664
    %4037 = vmatpush1.bf16.msra.mxu0 %v2663
    %4038 = vmatprep.subr.bf16.mxu0 %v2680
    %4039 = vmatpush1.bf16.msra.mxu0 %v2679
    %4040 = vmatprep.subr.bf16.mxu0 %v2696
    %4041 = vmatpush1.bf16.msra.mxu0 %v2695
    %4042 = vmatprep.subr.bf16.mxu0 %v2712
    %4043 = vmatpush1.bf16.msra.mxu0 %v2711
    %4044 = vmatprep.subr.bf16.mxu0 %v2728
    %4045 = vmatpush1.bf16.msra.mxu0 %v2727
    %4046 = vmatprep.subr.bf16.mxu0 %v2744
    %4047 = vmatpush1.bf16.msra.mxu0 %v2743
    %4048 = vmatprep.mubr.bf16.mxu0 %v1204
    %4049 = vmatmul.mubr.bf16.gmra.mrb[0].mxu0 %v1203
    %v4050 = vpop.f32.mrb[0].mxu0
    %v4051 = vadd.f32 %v4010, %v4050
    %v4052 = vpop.f32.mrb[0].mxu0
    %v4053 = vadd.f32 %v4012, %v4052
    %v4054 = vpop.f32.mrb[0].mxu0
    %v4055 = vpop.f32.mrb[0].mxu0
    %4056 = vdwg.mxu0
    %v4057 = vld [vmem:[#allocation20] sm:$0xff]
    %v4058 = vld [vmem:[#allocation20 + $0x8] sm:$0xff]
    %v4061 = vlaneseq
    %v4062 = vshrl.u32 %v4061, 7
    %v4063 = vsub.s32 0, %v4062
    %v4064 = vrot.slane %v4057, %v4063
    %v4065 = vlaneseq
    %v4066 = vshrl.u32 %v4065, 7
    %v4067 = vsub.s32 1, %v4066
    %v4068 = vrot.slane %v4057, %v4067
    %v4069 = vlaneseq
    %v4070 = vshrl.u32 %v4069, 7
    %v4071 = vsub.s32 2, %v4070
    %v4072 = vrot.slane %v4057, %v4071
    %v4073 = vlaneseq
    %v4074 = vshrl.u32 %v4073, 7
    %v4075 = vsub.s32 3, %v4074
    %v4076 = vrot.slane %v4057, %v4075
    %v4077 = vlaneseq
    %v4078 = vshrl.u32 %v4077, 7
    %v4079 = vsub.s32 4, %v4078
    %v4080 = vrot.slane %v4057, %v4079
    %v4081 = vlaneseq
    %v4082 = vshrl.u32 %v4081, 7
    %v4083 = vsub.s32 5, %v4082
    %v4084 = vrot.slane %v4057, %v4083
    %v4085 = vlaneseq
    %v4086 = vshrl.u32 %v4085, 7
    %v4087 = vsub.s32 6, %v4086
    %v4088 = vrot.slane %v4057, %v4087
    %v4089 = vlaneseq
    %v4090 = vshrl.u32 %v4089, 7
    %v4091 = vsub.s32 7, %v4090
    %v4092 = vrot.slane %v4057, %v4091
    %v4093 = vlaneseq
    %v4094 = vshrl.u32 %v4093, 7
    %v4095 = vsub.s32 0, %v4094
    %v4096 = vrot.slane %v4058, %v4095
    %v4097 = vlaneseq
    %v4098 = vshrl.u32 %v4097, 7
    %v4099 = vsub.s32 1, %v4098
    %v4100 = vrot.slane %v4058, %v4099
    %v4101 = vlaneseq
    %v4102 = vshrl.u32 %v4101, 7
    %v4103 = vsub.s32 2, %v4102
    %v4104 = vrot.slane %v4058, %v4103
    %v4105 = vlaneseq
    %v4106 = vshrl.u32 %v4105, 7
    %v4107 = vsub.s32 3, %v4106
    %v4108 = vrot.slane %v4058, %v4107
    %v4109 = vlaneseq
    %v4110 = vshrl.u32 %v4109, 7
    %v4111 = vsub.s32 4, %v4110
    %v4112 = vrot.slane %v4058, %v4111
    %v4113 = vlaneseq
    %v4114 = vshrl.u32 %v4113, 7
    %v4115 = vsub.s32 5, %v4114
    %v4116 = vrot.slane %v4058, %v4115
    %v4117 = vlaneseq
    %v4118 = vshrl.u32 %v4117, 7
    %v4119 = vsub.s32 6, %v4118
    %v4120 = vrot.slane %v4058, %v4119
    %v4121 = vlaneseq
    %v4122 = vshrl.u32 %v4121, 7
    %v4123 = vsub.s32 7, %v4122
    %v4124 = vrot.slane %v4058, %v4123
    %v4141 = vmul.f32 %v2903, %v4064
    %v4142 = vmul.f32 %v2905, %v4068
    %v4143 = vmul.f32 %v3067, %v4072
    %v4144 = vmul.f32 %v3069, %v4076
    %v4145 = vmul.f32 %v3231, %v4080
    %v4146 = vmul.f32 %v3233, %v4084
    %v4147 = vmul.f32 %v3395, %v4088
    %v4148 = vmul.f32 %v3397, %v4092
    %v4149 = vmul.f32 %v3559, %v4096
    %v4150 = vmul.f32 %v3561, %v4100
    %v4151 = vmul.f32 %v3723, %v4104
    %v4152 = vmul.f32 %v3725, %v4108
    %v4153 = vmul.f32 %v3887, %v4112
    %v4154 = vmul.f32 %v3889, %v4116
    %v4155 = vmul.f32 %v4051, %v4120
    %v4156 = vmul.f32 %v4053, %v4124
    %v4157 = vld [vmem:[#allocation14] sm:$0xff]
    %v4158 = vld [vmem:[#allocation14 + $0x8] sm:$0xff]
    %v4161 = vlaneseq
    %v4162 = vshrl.u32 %v4161, 7
    %v4163 = vsub.s32 0, %v4162
    %v4164 = vrot.slane %v4157, %v4163
    %v4165 = vlaneseq
    %v4166 = vshrl.u32 %v4165, 7
    %v4167 = vsub.s32 1, %v4166
    %v4168 = vrot.slane %v4157, %v4167
    %v4169 = vlaneseq
    %v4170 = vshrl.u32 %v4169, 7
    %v4171 = vsub.s32 2, %v4170
    %v4172 = vrot.slane %v4157, %v4171
    %v4173 = vlaneseq
    %v4174 = vshrl.u32 %v4173, 7
    %v4175 = vsub.s32 3, %v4174
    %v4176 = vrot.slane %v4157, %v4175
    %v4177 = vlaneseq
    %v4178 = vshrl.u32 %v4177, 7
    %v4179 = vsub.s32 4, %v4178
    %v4180 = vrot.slane %v4157, %v4179
    %v4181 = vlaneseq
    %v4182 = vshrl.u32 %v4181, 7
    %v4183 = vsub.s32 5, %v4182
    %v4184 = vrot.slane %v4157, %v4183
    %v4185 = vlaneseq
    %v4186 = vshrl.u32 %v4185, 7
    %v4187 = vsub.s32 6, %v4186
    %v4188 = vrot.slane %v4157, %v4187
    %v4189 = vlaneseq
    %v4190 = vshrl.u32 %v4189, 7
    %v4191 = vsub.s32 7, %v4190
    %v4192 = vrot.slane %v4157, %v4191
    %v4193 = vlaneseq
    %v4194 = vshrl.u32 %v4193, 7
    %v4195 = vsub.s32 0, %v4194
    %v4196 = vrot.slane %v4158, %v4195
    %v4197 = vlaneseq
    %v4198 = vshrl.u32 %v4197, 7
    %v4199 = vsub.s32 1, %v4198
    %v4200 = vrot.slane %v4158, %v4199
    %v4201 = vlaneseq
    %v4202 = vshrl.u32 %v4201, 7
    %v4203 = vsub.s32 2, %v4202
    %v4204 = vrot.slane %v4158, %v4203
    %v4205 = vlaneseq
    %v4206 = vshrl.u32 %v4205, 7
    %v4207 = vsub.s32 3, %v4206
    %v4208 = vrot.slane %v4158, %v4207
    %v4209 = vlaneseq
    %v4210 = vshrl.u32 %v4209, 7
    %v4211 = vsub.s32 4, %v4210
    %v4212 = vrot.slane %v4158, %v4211
    %v4213 = vlaneseq
    %v4214 = vshrl.u32 %v4213, 7
    %v4215 = vsub.s32 5, %v4214
    %v4216 = vrot.slane %v4158, %v4215
    %v4217 = vlaneseq
    %v4218 = vshrl.u32 %v4217, 7
    %v4219 = vsub.s32 6, %v4218
    %v4220 = vrot.slane %v4158, %v4219
    %v4221 = vlaneseq
    %v4222 = vshrl.u32 %v4221, 7
    %v4223 = vsub.s32 7, %v4222
    %v4224 = vrot.slane %v4158, %v4223
    %v4241 = vadd.f32 %v4141, %v4164
    %v4242 = vadd.f32 %v4142, %v4168
    %v4243 = vadd.f32 %v4143, %v4172
    %v4244 = vadd.f32 %v4144, %v4176
    %v4245 = vadd.f32 %v4145, %v4180
    %v4246 = vadd.f32 %v4146, %v4184
    %v4247 = vadd.f32 %v4147, %v4188
    %v4248 = vadd.f32 %v4148, %v4192
    %v4249 = vadd.f32 %v4149, %v4196
    %v4250 = vadd.f32 %v4150, %v4200
    %v4251 = vadd.f32 %v4151, %v4204
    %v4252 = vadd.f32 %v4152, %v4208
    %v4253 = vadd.f32 %v4153, %v4212
    %v4254 = vadd.f32 %v4154, %v4216
    %v4255 = vadd.f32 %v4155, %v4220
    %v4256 = vadd.f32 %v4156, %v4224
    %v4257 = vmax.f32 %v4241, 0.0
    %v4258 = vmax.f32 %v4242, 0.0
    %v4259 = vmax.f32 %v4243, 0.0
    %v4260 = vmax.f32 %v4244, 0.0
    %v4261 = vmax.f32 %v4245, 0.0
    %v4262 = vmax.f32 %v4246, 0.0
    %v4263 = vmax.f32 %v4247, 0.0
    %v4264 = vmax.f32 %v4248, 0.0
    %v4265 = vmax.f32 %v4249, 0.0
    %v4266 = vmax.f32 %v4250, 0.0
    %v4267 = vmax.f32 %v4251, 0.0
    %v4268 = vmax.f32 %v4252, 0.0
    %v4269 = vmax.f32 %v4253, 0.0
    %v4270 = vmax.f32 %v4254, 0.0
    %v4271 = vmax.f32 %v4255, 0.0
    %v4272 = vmax.f32 %v4256, 0.0
    %v4273 = vpack.c.bf16 %v4257, %v4257
    %v4274 = vpack.c.bf16 %v4258, %v4258
    %v4275 = vpack.c.bf16 %v4259, %v4259
    %v4276 = vpack.c.bf16 %v4260, %v4260
    %v4277 = vpack.c.bf16 %v4261, %v4261
    %v4278 = vpack.c.bf16 %v4262, %v4262
    %v4279 = vpack.c.bf16 %v4263, %v4263
    %v4280 = vpack.c.bf16 %v4264, %v4264
    %v4281 = vpack.c.bf16 %v4265, %v4265
    %v4282 = vpack.c.bf16 %v4266, %v4266
    %v4283 = vpack.c.bf16 %v4267, %v4267
    %v4284 = vpack.c.bf16 %v4268, %v4268
    %v4285 = vpack.c.bf16 %v4269, %v4269
    %v4286 = vpack.c.bf16 %v4270, %v4270
    %v4287 = vpack.c.bf16 %v4271, %v4271
    %v4288 = vpack.c.bf16 %v4272, %v4272
    %s4289 = smul.u32 2, 256
    %s4290 = smul.u32 %s4289, 8
    %s4291 = sshll.u32 %s4290, 4
    %4292 = dma.done %s202, %s4291
    %v4293 = vld [vmem:[#allocation5] sm:$0xff]
    %v4294 = vld [vmem:[#allocation5 + $0x8] sm:$0xff]
    %v4295 = vld [vmem:[#allocation5 + $0x10] sm:$0xff]
    %v4296 = vld [vmem:[#allocation5 + $0x18] sm:$0xff]
    %v4297 = vld [vmem:[#allocation5 + $0x20] sm:$0xff]
    %v4298 = vld [vmem:[#allocation5 + $0x28] sm:$0xff]
    %v4299 = vld [vmem:[#allocation5 + $0x30] sm:$0xff]
    %v4300 = vld [vmem:[#allocation5 + $0x38] sm:$0xff]
    %v4301 = vld [vmem:[#allocation5 + $0x40] sm:$0xff]
    %v4302 = vld [vmem:[#allocation5 + $0x48] sm:$0xff]
    %v4303 = vld [vmem:[#allocation5 + $0x50] sm:$0xff]
    %v4304 = vld [vmem:[#allocation5 + $0x58] sm:$0xff]
    %v4305 = vld [vmem:[#allocation5 + $0x60] sm:$0xff]
    %v4306 = vld [vmem:[#allocation5 + $0x68] sm:$0xff]
    %v4307 = vld [vmem:[#allocation5 + $0x70] sm:$0xff]
    %v4308 = vld [vmem:[#allocation5 + $0x78] sm:$0xff]
    %v4309 = vld [vmem:[#allocation5 + $0x80] sm:$0xff]
    %v4310 = vld [vmem:[#allocation5 + $0x88] sm:$0xff]
    %v4311 = vld [vmem:[#allocation5 + $0x90] sm:$0xff]
    %v4312 = vld [vmem:[#allocation5 + $0x98] sm:$0xff]
    %v4313 = vld [vmem:[#allocation5 + $0xa0] sm:$0xff]
    %v4314 = vld [vmem:[#allocation5 + $0xa8] sm:$0xff]
    %v4315 = vld [vmem:[#allocation5 + $0xb0] sm:$0xff]
    %v4316 = vld [vmem:[#allocation5 + $0xb8] sm:$0xff]
    %v4317 = vld [vmem:[#allocation5 + $0xc0] sm:$0xff]
    %v4318 = vld [vmem:[#allocation5 + $0xc8] sm:$0xff]
    %v4319 = vld [vmem:[#allocation5 + $0xd0] sm:$0xff]
    %v4320 = vld [vmem:[#allocation5 + $0xd8] sm:$0xff]
    %v4321 = vld [vmem:[#allocation5 + $0xe0] sm:$0xff]
    %v4322 = vld [vmem:[#allocation5 + $0xe8] sm:$0xff]
    %v4323 = vld [vmem:[#allocation5 + $0xf0] sm:$0xff]
    %v4324 = vld [vmem:[#allocation5 + $0xf8] sm:$0xff]
    %v4325 = vld [vmem:[#allocation5 + $0x100] sm:$0xff]
    %v4326 = vld [vmem:[#allocation5 + $0x108] sm:$0xff]
    %v4327 = vld [vmem:[#allocation5 + $0x110] sm:$0xff]
    %v4328 = vld [vmem:[#allocation5 + $0x118] sm:$0xff]
    %v4329 = vld [vmem:[#allocation5 + $0x120] sm:$0xff]
    %v4330 = vld [vmem:[#allocation5 + $0x128] sm:$0xff]
    %v4331 = vld [vmem:[#allocation5 + $0x130] sm:$0xff]
    %v4332 = vld [vmem:[#allocation5 + $0x138] sm:$0xff]
    %v4333 = vld [vmem:[#allocation5 + $0x140] sm:$0xff]
    %v4334 = vld [vmem:[#allocation5 + $0x148] sm:$0xff]
    %v4335 = vld [vmem:[#allocation5 + $0x150] sm:$0xff]
    %v4336 = vld [vmem:[#allocation5 + $0x158] sm:$0xff]
    %v4337 = vld [vmem:[#allocation5 + $0x160] sm:$0xff]
    %v4338 = vld [vmem:[#allocation5 + $0x168] sm:$0xff]
    %v4339 = vld [vmem:[#allocation5 + $0x170] sm:$0xff]
    %v4340 = vld [vmem:[#allocation5 + $0x178] sm:$0xff]
    %v4341 = vld [vmem:[#allocation5 + $0x180] sm:$0xff]
    %v4342 = vld [vmem:[#allocation5 + $0x188] sm:$0xff]
    %v4343 = vld [vmem:[#allocation5 + $0x190] sm:$0xff]
    %v4344 = vld [vmem:[#allocation5 + $0x198] sm:$0xff]
    %v4345 = vld [vmem:[#allocation5 + $0x1a0] sm:$0xff]
    %v4346 = vld [vmem:[#allocation5 + $0x1a8] sm:$0xff]
    %v4347 = vld [vmem:[#allocation5 + $0x1b0] sm:$0xff]
    %v4348 = vld [vmem:[#allocation5 + $0x1b8] sm:$0xff]
    %v4349 = vld [vmem:[#allocation5 + $0x1c0] sm:$0xff]
    %v4350 = vld [vmem:[#allocation5 + $0x1c8] sm:$0xff]
    %v4351 = vld [vmem:[#allocation5 + $0x1d0] sm:$0xff]
    %v4352 = vld [vmem:[#allocation5 + $0x1d8] sm:$0xff]
    %v4353 = vld [vmem:[#allocation5 + $0x1e0] sm:$0xff]
    %v4354 = vld [vmem:[#allocation5 + $0x1e8] sm:$0xff]
    %v4355 = vld [vmem:[#allocation5 + $0x1f0] sm:$0xff]
    %v4356 = vld [vmem:[#allocation5 + $0x1f8] sm:$0xff]
    %v4357 = vld [vmem:[#allocation5 + $0x200] sm:$0xff]
    %v4358 = vld [vmem:[#allocation5 + $0x208] sm:$0xff]
    %v4359 = vld [vmem:[#allocation5 + $0x210] sm:$0xff]
    %v4360 = vld [vmem:[#allocation5 + $0x218] sm:$0xff]
    %v4361 = vld [vmem:[#allocation5 + $0x220] sm:$0xff]
    %v4362 = vld [vmem:[#allocation5 + $0x228] sm:$0xff]
    %v4363 = vld [vmem:[#allocation5 + $0x230] sm:$0xff]
    %v4364 = vld [vmem:[#allocation5 + $0x238] sm:$0xff]
    %v4365 = vld [vmem:[#allocation5 + $0x240] sm:$0xff]
    %v4366 = vld [vmem:[#allocation5 + $0x248] sm:$0xff]
    %v4367 = vld [vmem:[#allocation5 + $0x250] sm:$0xff]
    %v4368 = vld [vmem:[#allocation5 + $0x258] sm:$0xff]
    %v4369 = vld [vmem:[#allocation5 + $0x260] sm:$0xff]
    %v4370 = vld [vmem:[#allocation5 + $0x268] sm:$0xff]
    %v4371 = vld [vmem:[#allocation5 + $0x270] sm:$0xff]
    %v4372 = vld [vmem:[#allocation5 + $0x278] sm:$0xff]
    %v4373 = vld [vmem:[#allocation5 + $0x280] sm:$0xff]
    %v4374 = vld [vmem:[#allocation5 + $0x288] sm:$0xff]
    %v4375 = vld [vmem:[#allocation5 + $0x290] sm:$0xff]
    %v4376 = vld [vmem:[#allocation5 + $0x298] sm:$0xff]
    %v4377 = vld [vmem:[#allocation5 + $0x2a0] sm:$0xff]
    %v4378 = vld [vmem:[#allocation5 + $0x2a8] sm:$0xff]
    %v4379 = vld [vmem:[#allocation5 + $0x2b0] sm:$0xff]
    %v4380 = vld [vmem:[#allocation5 + $0x2b8] sm:$0xff]
    %v4381 = vld [vmem:[#allocation5 + $0x2c0] sm:$0xff]
    %v4382 = vld [vmem:[#allocation5 + $0x2c8] sm:$0xff]
    %v4383 = vld [vmem:[#allocation5 + $0x2d0] sm:$0xff]
    %v4384 = vld [vmem:[#allocation5 + $0x2d8] sm:$0xff]
    %v4385 = vld [vmem:[#allocation5 + $0x2e0] sm:$0xff]
    %v4386 = vld [vmem:[#allocation5 + $0x2e8] sm:$0xff]
    %v4387 = vld [vmem:[#allocation5 + $0x2f0] sm:$0xff]
    %v4388 = vld [vmem:[#allocation5 + $0x2f8] sm:$0xff]
    %v4389 = vld [vmem:[#allocation5 + $0x300] sm:$0xff]
    %v4390 = vld [vmem:[#allocation5 + $0x308] sm:$0xff]
    %v4391 = vld [vmem:[#allocation5 + $0x310] sm:$0xff]
    %v4392 = vld [vmem:[#allocation5 + $0x318] sm:$0xff]
    %v4393 = vld [vmem:[#allocation5 + $0x320] sm:$0xff]
    %v4394 = vld [vmem:[#allocation5 + $0x328] sm:$0xff]
    %v4395 = vld [vmem:[#allocation5 + $0x330] sm:$0xff]
    %v4396 = vld [vmem:[#allocation5 + $0x338] sm:$0xff]
    %v4397 = vld [vmem:[#allocation5 + $0x340] sm:$0xff]
    %v4398 = vld [vmem:[#allocation5 + $0x348] sm:$0xff]
    %v4399 = vld [vmem:[#allocation5 + $0x350] sm:$0xff]
    %v4400 = vld [vmem:[#allocation5 + $0x358] sm:$0xff]
    %v4401 = vld [vmem:[#allocation5 + $0x360] sm:$0xff]
    %v4402 = vld [vmem:[#allocation5 + $0x368] sm:$0xff]
    %v4403 = vld [vmem:[#allocation5 + $0x370] sm:$0xff]
    %v4404 = vld [vmem:[#allocation5 + $0x378] sm:$0xff]
    %v4405 = vld [vmem:[#allocation5 + $0x380] sm:$0xff]
    %v4406 = vld [vmem:[#allocation5 + $0x388] sm:$0xff]
    %v4407 = vld [vmem:[#allocation5 + $0x390] sm:$0xff]
    %v4408 = vld [vmem:[#allocation5 + $0x398] sm:$0xff]
    %v4409 = vld [vmem:[#allocation5 + $0x3a0] sm:$0xff]
    %v4410 = vld [vmem:[#allocation5 + $0x3a8] sm:$0xff]
    %v4411 = vld [vmem:[#allocation5 + $0x3b0] sm:$0xff]
    %v4412 = vld [vmem:[#allocation5 + $0x3b8] sm:$0xff]
    %v4413 = vld [vmem:[#allocation5 + $0x3c0] sm:$0xff]
    %v4414 = vld [vmem:[#allocation5 + $0x3c8] sm:$0xff]
    %v4415 = vld [vmem:[#allocation5 + $0x3d0] sm:$0xff]
    %v4416 = vld [vmem:[#allocation5 + $0x3d8] sm:$0xff]
    %v4417 = vld [vmem:[#allocation5 + $0x3e0] sm:$0xff]
    %v4418 = vld [vmem:[#allocation5 + $0x3e8] sm:$0xff]
    %v4419 = vld [vmem:[#allocation5 + $0x3f0] sm:$0xff]
    %v4420 = vld [vmem:[#allocation5 + $0x3f8] sm:$0xff]
    %v4421 = vld [vmem:[#allocation5 + $0x400] sm:$0xff]
    %v4422 = vld [vmem:[#allocation5 + $0x408] sm:$0xff]
    %v4423 = vld [vmem:[#allocation5 + $0x410] sm:$0xff]
    %v4424 = vld [vmem:[#allocation5 + $0x418] sm:$0xff]
    %v4425 = vld [vmem:[#allocation5 + $0x420] sm:$0xff]
    %v4426 = vld [vmem:[#allocation5 + $0x428] sm:$0xff]
    %v4427 = vld [vmem:[#allocation5 + $0x430] sm:$0xff]
    %v4428 = vld [vmem:[#allocation5 + $0x438] sm:$0xff]
    %v4429 = vld [vmem:[#allocation5 + $0x440] sm:$0xff]
    %v4430 = vld [vmem:[#allocation5 + $0x448] sm:$0xff]
    %v4431 = vld [vmem:[#allocation5 + $0x450] sm:$0xff]
    %v4432 = vld [vmem:[#allocation5 + $0x458] sm:$0xff]
    %v4433 = vld [vmem:[#allocation5 + $0x460] sm:$0xff]
    %v4434 = vld [vmem:[#allocation5 + $0x468] sm:$0xff]
    %v4435 = vld [vmem:[#allocation5 + $0x470] sm:$0xff]
    %v4436 = vld [vmem:[#allocation5 + $0x478] sm:$0xff]
    %v4437 = vld [vmem:[#allocation5 + $0x480] sm:$0xff]
    %v4438 = vld [vmem:[#allocation5 + $0x488] sm:$0xff]
    %v4439 = vld [vmem:[#allocation5 + $0x490] sm:$0xff]
    %v4440 = vld [vmem:[#allocation5 + $0x498] sm:$0xff]
    %v4441 = vld [vmem:[#allocation5 + $0x4a0] sm:$0xff]
    %v4442 = vld [vmem:[#allocation5 + $0x4a8] sm:$0xff]
    %v4443 = vld [vmem:[#allocation5 + $0x4b0] sm:$0xff]
    %v4444 = vld [vmem:[#allocation5 + $0x4b8] sm:$0xff]
    %v4445 = vld [vmem:[#allocation5 + $0x4c0] sm:$0xff]
    %v4446 = vld [vmem:[#allocation5 + $0x4c8] sm:$0xff]
    %v4447 = vld [vmem:[#allocation5 + $0x4d0] sm:$0xff]
    %v4448 = vld [vmem:[#allocation5 + $0x4d8] sm:$0xff]
    %v4449 = vld [vmem:[#allocation5 + $0x4e0] sm:$0xff]
    %v4450 = vld [vmem:[#allocation5 + $0x4e8] sm:$0xff]
    %v4451 = vld [vmem:[#allocation5 + $0x4f0] sm:$0xff]
    %v4452 = vld [vmem:[#allocation5 + $0x4f8] sm:$0xff]
    %v4453 = vld [vmem:[#allocation5 + $0x500] sm:$0xff]
    %v4454 = vld [vmem:[#allocation5 + $0x508] sm:$0xff]
    %v4455 = vld [vmem:[#allocation5 + $0x510] sm:$0xff]
    %v4456 = vld [vmem:[#allocation5 + $0x518] sm:$0xff]
    %v4457 = vld [vmem:[#allocation5 + $0x520] sm:$0xff]
    %v4458 = vld [vmem:[#allocation5 + $0x528] sm:$0xff]
    %v4459 = vld [vmem:[#allocation5 + $0x530] sm:$0xff]
    %v4460 = vld [vmem:[#allocation5 + $0x538] sm:$0xff]
    %v4461 = vld [vmem:[#allocation5 + $0x540] sm:$0xff]
    %v4462 = vld [vmem:[#allocation5 + $0x548] sm:$0xff]
    %v4463 = vld [vmem:[#allocation5 + $0x550] sm:$0xff]
    %v4464 = vld [vmem:[#allocation5 + $0x558] sm:$0xff]
    %v4465 = vld [vmem:[#allocation5 + $0x560] sm:$0xff]
    %v4466 = vld [vmem:[#allocation5 + $0x568] sm:$0xff]
    %v4467 = vld [vmem:[#allocation5 + $0x570] sm:$0xff]
    %v4468 = vld [vmem:[#allocation5 + $0x578] sm:$0xff]
    %v4469 = vld [vmem:[#allocation5 + $0x580] sm:$0xff]
    %v4470 = vld [vmem:[#allocation5 + $0x588] sm:$0xff]
    %v4471 = vld [vmem:[#allocation5 + $0x590] sm:$0xff]
    %v4472 = vld [vmem:[#allocation5 + $0x598] sm:$0xff]
    %v4473 = vld [vmem:[#allocation5 + $0x5a0] sm:$0xff]
    %v4474 = vld [vmem:[#allocation5 + $0x5a8] sm:$0xff]
    %v4475 = vld [vmem:[#allocation5 + $0x5b0] sm:$0xff]
    %v4476 = vld [vmem:[#allocation5 + $0x5b8] sm:$0xff]
    %v4477 = vld [vmem:[#allocation5 + $0x5c0] sm:$0xff]
    %v4478 = vld [vmem:[#allocation5 + $0x5c8] sm:$0xff]
    %v4479 = vld [vmem:[#allocation5 + $0x5d0] sm:$0xff]
    %v4480 = vld [vmem:[#allocation5 + $0x5d8] sm:$0xff]
    %v4481 = vld [vmem:[#allocation5 + $0x5e0] sm:$0xff]
    %v4482 = vld [vmem:[#allocation5 + $0x5e8] sm:$0xff]
    %v4483 = vld [vmem:[#allocation5 + $0x5f0] sm:$0xff]
    %v4484 = vld [vmem:[#allocation5 + $0x5f8] sm:$0xff]
    %v4485 = vld [vmem:[#allocation5 + $0x600] sm:$0xff]
    %v4486 = vld [vmem:[#allocation5 + $0x608] sm:$0xff]
    %v4487 = vld [vmem:[#allocation5 + $0x610] sm:$0xff]
    %v4488 = vld [vmem:[#allocation5 + $0x618] sm:$0xff]
    %v4489 = vld [vmem:[#allocation5 + $0x620] sm:$0xff]
    %v4490 = vld [vmem:[#allocation5 + $0x628] sm:$0xff]
    %v4491 = vld [vmem:[#allocation5 + $0x630] sm:$0xff]
    %v4492 = vld [vmem:[#allocation5 + $0x638] sm:$0xff]
    %v4493 = vld [vmem:[#allocation5 + $0x640] sm:$0xff]
    %v4494 = vld [vmem:[#allocation5 + $0x648] sm:$0xff]
    %v4495 = vld [vmem:[#allocation5 + $0x650] sm:$0xff]
    %v4496 = vld [vmem:[#allocation5 + $0x658] sm:$0xff]
    %v4497 = vld [vmem:[#allocation5 + $0x660] sm:$0xff]
    %v4498 = vld [vmem:[#allocation5 + $0x668] sm:$0xff]
    %v4499 = vld [vmem:[#allocation5 + $0x670] sm:$0xff]
    %v4500 = vld [vmem:[#allocation5 + $0x678] sm:$0xff]
    %v4501 = vld [vmem:[#allocation5 + $0x680] sm:$0xff]
    %v4502 = vld [vmem:[#allocation5 + $0x688] sm:$0xff]
    %v4503 = vld [vmem:[#allocation5 + $0x690] sm:$0xff]
    %v4504 = vld [vmem:[#allocation5 + $0x698] sm:$0xff]
    %v4505 = vld [vmem:[#allocation5 + $0x6a0] sm:$0xff]
    %v4506 = vld [vmem:[#allocation5 + $0x6a8] sm:$0xff]
    %v4507 = vld [vmem:[#allocation5 + $0x6b0] sm:$0xff]
    %v4508 = vld [vmem:[#allocation5 + $0x6b8] sm:$0xff]
    %v4509 = vld [vmem:[#allocation5 + $0x6c0] sm:$0xff]
    %v4510 = vld [vmem:[#allocation5 + $0x6c8] sm:$0xff]
    %v4511 = vld [vmem:[#allocation5 + $0x6d0] sm:$0xff]
    %v4512 = vld [vmem:[#allocation5 + $0x6d8] sm:$0xff]
    %v4513 = vld [vmem:[#allocation5 + $0x6e0] sm:$0xff]
    %v4514 = vld [vmem:[#allocation5 + $0x6e8] sm:$0xff]
    %v4515 = vld [vmem:[#allocation5 + $0x6f0] sm:$0xff]
    %v4516 = vld [vmem:[#allocation5 + $0x6f8] sm:$0xff]
    %v4517 = vld [vmem:[#allocation5 + $0x700] sm:$0xff]
    %v4518 = vld [vmem:[#allocation5 + $0x708] sm:$0xff]
    %v4519 = vld [vmem:[#allocation5 + $0x710] sm:$0xff]
    %v4520 = vld [vmem:[#allocation5 + $0x718] sm:$0xff]
    %v4521 = vld [vmem:[#allocation5 + $0x720] sm:$0xff]
    %v4522 = vld [vmem:[#allocation5 + $0x728] sm:$0xff]
    %v4523 = vld [vmem:[#allocation5 + $0x730] sm:$0xff]
    %v4524 = vld [vmem:[#allocation5 + $0x738] sm:$0xff]
    %v4525 = vld [vmem:[#allocation5 + $0x740] sm:$0xff]
    %v4526 = vld [vmem:[#allocation5 + $0x748] sm:$0xff]
    %v4527 = vld [vmem:[#allocation5 + $0x750] sm:$0xff]
    %v4528 = vld [vmem:[#allocation5 + $0x758] sm:$0xff]
    %v4529 = vld [vmem:[#allocation5 + $0x760] sm:$0xff]
    %v4530 = vld [vmem:[#allocation5 + $0x768] sm:$0xff]
    %v4531 = vld [vmem:[#allocation5 + $0x770] sm:$0xff]
    %v4532 = vld [vmem:[#allocation5 + $0x778] sm:$0xff]
    %v4533 = vld [vmem:[#allocation5 + $0x780] sm:$0xff]
    %v4534 = vld [vmem:[#allocation5 + $0x788] sm:$0xff]
    %v4535 = vld [vmem:[#allocation5 + $0x790] sm:$0xff]
    %v4536 = vld [vmem:[#allocation5 + $0x798] sm:$0xff]
    %v4537 = vld [vmem:[#allocation5 + $0x7a0] sm:$0xff]
    %v4538 = vld [vmem:[#allocation5 + $0x7a8] sm:$0xff]
    %v4539 = vld [vmem:[#allocation5 + $0x7b0] sm:$0xff]
    %v4540 = vld [vmem:[#allocation5 + $0x7b8] sm:$0xff]
    %v4541 = vld [vmem:[#allocation5 + $0x7c0] sm:$0xff]
    %v4542 = vld [vmem:[#allocation5 + $0x7c8] sm:$0xff]
    %v4543 = vld [vmem:[#allocation5 + $0x7d0] sm:$0xff]
    %v4544 = vld [vmem:[#allocation5 + $0x7d8] sm:$0xff]
    %v4545 = vld [vmem:[#allocation5 + $0x7e0] sm:$0xff]
    %v4546 = vld [vmem:[#allocation5 + $0x7e8] sm:$0xff]
    %v4547 = vld [vmem:[#allocation5 + $0x7f0] sm:$0xff]
    %v4548 = vld [vmem:[#allocation5 + $0x7f8] sm:$0xff]
    %v4549 = vld [vmem:[#allocation5 + $0x800] sm:$0xff]
    %v4550 = vld [vmem:[#allocation5 + $0x808] sm:$0xff]
    %v4551 = vld [vmem:[#allocation5 + $0x810] sm:$0xff]
    %v4552 = vld [vmem:[#allocation5 + $0x818] sm:$0xff]
    %v4553 = vld [vmem:[#allocation5 + $0x820] sm:$0xff]
    %v4554 = vld [vmem:[#allocation5 + $0x828] sm:$0xff]
    %v4555 = vld [vmem:[#allocation5 + $0x830] sm:$0xff]
    %v4556 = vld [vmem:[#allocation5 + $0x838] sm:$0xff]
    %v4557 = vld [vmem:[#allocation5 + $0x840] sm:$0xff]
    %v4558 = vld [vmem:[#allocation5 + $0x848] sm:$0xff]
    %v4559 = vld [vmem:[#allocation5 + $0x850] sm:$0xff]
    %v4560 = vld [vmem:[#allocation5 + $0x858] sm:$0xff]
    %v4561 = vld [vmem:[#allocation5 + $0x860] sm:$0xff]
    %v4562 = vld [vmem:[#allocation5 + $0x868] sm:$0xff]
    %v4563 = vld [vmem:[#allocation5 + $0x870] sm:$0xff]
    %v4564 = vld [vmem:[#allocation5 + $0x878] sm:$0xff]
    %v4565 = vld [vmem:[#allocation5 + $0x880] sm:$0xff]
    %v4566 = vld [vmem:[#allocation5 + $0x888] sm:$0xff]
    %v4567 = vld [vmem:[#allocation5 + $0x890] sm:$0xff]
    %v4568 = vld [vmem:[#allocation5 + $0x898] sm:$0xff]
    %v4569 = vld [vmem:[#allocation5 + $0x8a0] sm:$0xff]
    %v4570 = vld [vmem:[#allocation5 + $0x8a8] sm:$0xff]
    %v4571 = vld [vmem:[#allocation5 + $0x8b0] sm:$0xff]
    %v4572 = vld [vmem:[#allocation5 + $0x8b8] sm:$0xff]
    %v4573 = vld [vmem:[#allocation5 + $0x8c0] sm:$0xff]
    %v4574 = vld [vmem:[#allocation5 + $0x8c8] sm:$0xff]
    %v4575 = vld [vmem:[#allocation5 + $0x8d0] sm:$0xff]
    %v4576 = vld [vmem:[#allocation5 + $0x8d8] sm:$0xff]
    %v4577 = vld [vmem:[#allocation5 + $0x8e0] sm:$0xff]
    %v4578 = vld [vmem:[#allocation5 + $0x8e8] sm:$0xff]
    %v4579 = vld [vmem:[#allocation5 + $0x8f0] sm:$0xff]
    %v4580 = vld [vmem:[#allocation5 + $0x8f8] sm:$0xff]
    %v4581 = vld [vmem:[#allocation5 + $0x900] sm:$0xff]
    %v4582 = vld [vmem:[#allocation5 + $0x908] sm:$0xff]
    %v4583 = vld [vmem:[#allocation5 + $0x910] sm:$0xff]
    %v4584 = vld [vmem:[#allocation5 + $0x918] sm:$0xff]
    %v4585 = vld [vmem:[#allocation5 + $0x920] sm:$0xff]
    %v4586 = vld [vmem:[#allocation5 + $0x928] sm:$0xff]
    %v4587 = vld [vmem:[#allocation5 + $0x930] sm:$0xff]
    %v4588 = vld [vmem:[#allocation5 + $0x938] sm:$0xff]
    %v4589 = vld [vmem:[#allocation5 + $0x940] sm:$0xff]
    %v4590 = vld [vmem:[#allocation5 + $0x948] sm:$0xff]
    %v4591 = vld [vmem:[#allocation5 + $0x950] sm:$0xff]
    %v4592 = vld [vmem:[#allocation5 + $0x958] sm:$0xff]
    %v4593 = vld [vmem:[#allocation5 + $0x960] sm:$0xff]
    %v4594 = vld [vmem:[#allocation5 + $0x968] sm:$0xff]
    %v4595 = vld [vmem:[#allocation5 + $0x970] sm:$0xff]
    %v4596 = vld [vmem:[#allocation5 + $0x978] sm:$0xff]
    %v4597 = vld [vmem:[#allocation5 + $0x980] sm:$0xff]
    %v4598 = vld [vmem:[#allocation5 + $0x988] sm:$0xff]
    %v4599 = vld [vmem:[#allocation5 + $0x990] sm:$0xff]
    %v4600 = vld [vmem:[#allocation5 + $0x998] sm:$0xff]
    %v4601 = vld [vmem:[#allocation5 + $0x9a0] sm:$0xff]
    %v4602 = vld [vmem:[#allocation5 + $0x9a8] sm:$0xff]
    %v4603 = vld [vmem:[#allocation5 + $0x9b0] sm:$0xff]
    %v4604 = vld [vmem:[#allocation5 + $0x9b8] sm:$0xff]
    %v4605 = vld [vmem:[#allocation5 + $0x9c0] sm:$0xff]
    %v4606 = vld [vmem:[#allocation5 + $0x9c8] sm:$0xff]
    %v4607 = vld [vmem:[#allocation5 + $0x9d0] sm:$0xff]
    %v4608 = vld [vmem:[#allocation5 + $0x9d8] sm:$0xff]
    %v4609 = vld [vmem:[#allocation5 + $0x9e0] sm:$0xff]
    %v4610 = vld [vmem:[#allocation5 + $0x9e8] sm:$0xff]
    %v4611 = vld [vmem:[#allocation5 + $0x9f0] sm:$0xff]
    %v4612 = vld [vmem:[#allocation5 + $0x9f8] sm:$0xff]
    %v4613 = vld [vmem:[#allocation5 + $0xa00] sm:$0xff]
    %v4614 = vld [vmem:[#allocation5 + $0xa08] sm:$0xff]
    %v4615 = vld [vmem:[#allocation5 + $0xa10] sm:$0xff]
    %v4616 = vld [vmem:[#allocation5 + $0xa18] sm:$0xff]
    %v4617 = vld [vmem:[#allocation5 + $0xa20] sm:$0xff]
    %v4618 = vld [vmem:[#allocation5 + $0xa28] sm:$0xff]
    %v4619 = vld [vmem:[#allocation5 + $0xa30] sm:$0xff]
    %v4620 = vld [vmem:[#allocation5 + $0xa38] sm:$0xff]
    %v4621 = vld [vmem:[#allocation5 + $0xa40] sm:$0xff]
    %v4622 = vld [vmem:[#allocation5 + $0xa48] sm:$0xff]
    %v4623 = vld [vmem:[#allocation5 + $0xa50] sm:$0xff]
    %v4624 = vld [vmem:[#allocation5 + $0xa58] sm:$0xff]
    %v4625 = vld [vmem:[#allocation5 + $0xa60] sm:$0xff]
    %v4626 = vld [vmem:[#allocation5 + $0xa68] sm:$0xff]
    %v4627 = vld [vmem:[#allocation5 + $0xa70] sm:$0xff]
    %v4628 = vld [vmem:[#allocation5 + $0xa78] sm:$0xff]
    %v4629 = vld [vmem:[#allocation5 + $0xa80] sm:$0xff]
    %v4630 = vld [vmem:[#allocation5 + $0xa88] sm:$0xff]
    %v4631 = vld [vmem:[#allocation5 + $0xa90] sm:$0xff]
    %v4632 = vld [vmem:[#allocation5 + $0xa98] sm:$0xff]
    %v4633 = vld [vmem:[#allocation5 + $0xaa0] sm:$0xff]
    %v4634 = vld [vmem:[#allocation5 + $0xaa8] sm:$0xff]
    %v4635 = vld [vmem:[#allocation5 + $0xab0] sm:$0xff]
    %v4636 = vld [vmem:[#allocation5 + $0xab8] sm:$0xff]
    %v4637 = vld [vmem:[#allocation5 + $0xac0] sm:$0xff]
    %v4638 = vld [vmem:[#allocation5 + $0xac8] sm:$0xff]
    %v4639 = vld [vmem:[#allocation5 + $0xad0] sm:$0xff]
    %v4640 = vld [vmem:[#allocation5 + $0xad8] sm:$0xff]
    %v4641 = vld [vmem:[#allocation5 + $0xae0] sm:$0xff]
    %v4642 = vld [vmem:[#allocation5 + $0xae8] sm:$0xff]
    %v4643 = vld [vmem:[#allocation5 + $0xaf0] sm:$0xff]
    %v4644 = vld [vmem:[#allocation5 + $0xaf8] sm:$0xff]
    %v4645 = vld [vmem:[#allocation5 + $0xb00] sm:$0xff]
    %v4646 = vld [vmem:[#allocation5 + $0xb08] sm:$0xff]
    %v4647 = vld [vmem:[#allocation5 + $0xb10] sm:$0xff]
    %v4648 = vld [vmem:[#allocation5 + $0xb18] sm:$0xff]
    %v4649 = vld [vmem:[#allocation5 + $0xb20] sm:$0xff]
    %v4650 = vld [vmem:[#allocation5 + $0xb28] sm:$0xff]
    %v4651 = vld [vmem:[#allocation5 + $0xb30] sm:$0xff]
    %v4652 = vld [vmem:[#allocation5 + $0xb38] sm:$0xff]
    %v4653 = vld [vmem:[#allocation5 + $0xb40] sm:$0xff]
    %v4654 = vld [vmem:[#allocation5 + $0xb48] sm:$0xff]
    %v4655 = vld [vmem:[#allocation5 + $0xb50] sm:$0xff]
    %v4656 = vld [vmem:[#allocation5 + $0xb58] sm:$0xff]
    %v4657 = vld [vmem:[#allocation5 + $0xb60] sm:$0xff]
    %v4658 = vld [vmem:[#allocation5 + $0xb68] sm:$0xff]
    %v4659 = vld [vmem:[#allocation5 + $0xb70] sm:$0xff]
    %v4660 = vld [vmem:[#allocation5 + $0xb78] sm:$0xff]
    %v4661 = vld [vmem:[#allocation5 + $0xb80] sm:$0xff]
    %v4662 = vld [vmem:[#allocation5 + $0xb88] sm:$0xff]
    %v4663 = vld [vmem:[#allocation5 + $0xb90] sm:$0xff]
    %v4664 = vld [vmem:[#allocation5 + $0xb98] sm:$0xff]
    %v4665 = vld [vmem:[#allocation5 + $0xba0] sm:$0xff]
    %v4666 = vld [vmem:[#allocation5 + $0xba8] sm:$0xff]
    %v4667 = vld [vmem:[#allocation5 + $0xbb0] sm:$0xff]
    %v4668 = vld [vmem:[#allocation5 + $0xbb8] sm:$0xff]
    %v4669 = vld [vmem:[#allocation5 + $0xbc0] sm:$0xff]
    %v4670 = vld [vmem:[#allocation5 + $0xbc8] sm:$0xff]
    %v4671 = vld [vmem:[#allocation5 + $0xbd0] sm:$0xff]
    %v4672 = vld [vmem:[#allocation5 + $0xbd8] sm:$0xff]
    %v4673 = vld [vmem:[#allocation5 + $0xbe0] sm:$0xff]
    %v4674 = vld [vmem:[#allocation5 + $0xbe8] sm:$0xff]
    %v4675 = vld [vmem:[#allocation5 + $0xbf0] sm:$0xff]
    %v4676 = vld [vmem:[#allocation5 + $0xbf8] sm:$0xff]
    %v4677 = vld [vmem:[#allocation5 + $0xc00] sm:$0xff]
    %v4678 = vld [vmem:[#allocation5 + $0xc08] sm:$0xff]
    %v4679 = vld [vmem:[#allocation5 + $0xc10] sm:$0xff]
    %v4680 = vld [vmem:[#allocation5 + $0xc18] sm:$0xff]
    %v4681 = vld [vmem:[#allocation5 + $0xc20] sm:$0xff]
    %v4682 = vld [vmem:[#allocation5 + $0xc28] sm:$0xff]
    %v4683 = vld [vmem:[#allocation5 + $0xc30] sm:$0xff]
    %v4684 = vld [vmem:[#allocation5 + $0xc38] sm:$0xff]
    %v4685 = vld [vmem:[#allocation5 + $0xc40] sm:$0xff]
    %v4686 = vld [vmem:[#allocation5 + $0xc48] sm:$0xff]
    %v4687 = vld [vmem:[#allocation5 + $0xc50] sm:$0xff]
    %v4688 = vld [vmem:[#allocation5 + $0xc58] sm:$0xff]
    %v4689 = vld [vmem:[#allocation5 + $0xc60] sm:$0xff]
    %v4690 = vld [vmem:[#allocation5 + $0xc68] sm:$0xff]
    %v4691 = vld [vmem:[#allocation5 + $0xc70] sm:$0xff]
    %v4692 = vld [vmem:[#allocation5 + $0xc78] sm:$0xff]
    %v4693 = vld [vmem:[#allocation5 + $0xc80] sm:$0xff]
    %v4694 = vld [vmem:[#allocation5 + $0xc88] sm:$0xff]
    %v4695 = vld [vmem:[#allocation5 + $0xc90] sm:$0xff]
    %v4696 = vld [vmem:[#allocation5 + $0xc98] sm:$0xff]
    %v4697 = vld [vmem:[#allocation5 + $0xca0] sm:$0xff]
    %v4698 = vld [vmem:[#allocation5 + $0xca8] sm:$0xff]
    %v4699 = vld [vmem:[#allocation5 + $0xcb0] sm:$0xff]
    %v4700 = vld [vmem:[#allocation5 + $0xcb8] sm:$0xff]
    %v4701 = vld [vmem:[#allocation5 + $0xcc0] sm:$0xff]
    %v4702 = vld [vmem:[#allocation5 + $0xcc8] sm:$0xff]
    %v4703 = vld [vmem:[#allocation5 + $0xcd0] sm:$0xff]
    %v4704 = vld [vmem:[#allocation5 + $0xcd8] sm:$0xff]
    %v4705 = vld [vmem:[#allocation5 + $0xce0] sm:$0xff]
    %v4706 = vld [vmem:[#allocation5 + $0xce8] sm:$0xff]
    %v4707 = vld [vmem:[#allocation5 + $0xcf0] sm:$0xff]
    %v4708 = vld [vmem:[#allocation5 + $0xcf8] sm:$0xff]
    %v4709 = vld [vmem:[#allocation5 + $0xd00] sm:$0xff]
    %v4710 = vld [vmem:[#allocation5 + $0xd08] sm:$0xff]
    %v4711 = vld [vmem:[#allocation5 + $0xd10] sm:$0xff]
    %v4712 = vld [vmem:[#allocation5 + $0xd18] sm:$0xff]
    %v4713 = vld [vmem:[#allocation5 + $0xd20] sm:$0xff]
    %v4714 = vld [vmem:[#allocation5 + $0xd28] sm:$0xff]
    %v4715 = vld [vmem:[#allocation5 + $0xd30] sm:$0xff]
    %v4716 = vld [vmem:[#allocation5 + $0xd38] sm:$0xff]
    %v4717 = vld [vmem:[#allocation5 + $0xd40] sm:$0xff]
    %v4718 = vld [vmem:[#allocation5 + $0xd48] sm:$0xff]
    %v4719 = vld [vmem:[#allocation5 + $0xd50] sm:$0xff]
    %v4720 = vld [vmem:[#allocation5 + $0xd58] sm:$0xff]
    %v4721 = vld [vmem:[#allocation5 + $0xd60] sm:$0xff]
    %v4722 = vld [vmem:[#allocation5 + $0xd68] sm:$0xff]
    %v4723 = vld [vmem:[#allocation5 + $0xd70] sm:$0xff]
    %v4724 = vld [vmem:[#allocation5 + $0xd78] sm:$0xff]
    %v4725 = vld [vmem:[#allocation5 + $0xd80] sm:$0xff]
    %v4726 = vld [vmem:[#allocation5 + $0xd88] sm:$0xff]
    %v4727 = vld [vmem:[#allocation5 + $0xd90] sm:$0xff]
    %v4728 = vld [vmem:[#allocation5 + $0xd98] sm:$0xff]
    %v4729 = vld [vmem:[#allocation5 + $0xda0] sm:$0xff]
    %v4730 = vld [vmem:[#allocation5 + $0xda8] sm:$0xff]
    %v4731 = vld [vmem:[#allocation5 + $0xdb0] sm:$0xff]
    %v4732 = vld [vmem:[#allocation5 + $0xdb8] sm:$0xff]
    %v4733 = vld [vmem:[#allocation5 + $0xdc0] sm:$0xff]
    %v4734 = vld [vmem:[#allocation5 + $0xdc8] sm:$0xff]
    %v4735 = vld [vmem:[#allocation5 + $0xdd0] sm:$0xff]
    %v4736 = vld [vmem:[#allocation5 + $0xdd8] sm:$0xff]
    %v4737 = vld [vmem:[#allocation5 + $0xde0] sm:$0xff]
    %v4738 = vld [vmem:[#allocation5 + $0xde8] sm:$0xff]
    %v4739 = vld [vmem:[#allocation5 + $0xdf0] sm:$0xff]
    %v4740 = vld [vmem:[#allocation5 + $0xdf8] sm:$0xff]
    %v4741 = vld [vmem:[#allocation5 + $0xe00] sm:$0xff]
    %v4742 = vld [vmem:[#allocation5 + $0xe08] sm:$0xff]
    %v4743 = vld [vmem:[#allocation5 + $0xe10] sm:$0xff]
    %v4744 = vld [vmem:[#allocation5 + $0xe18] sm:$0xff]
    %v4745 = vld [vmem:[#allocation5 + $0xe20] sm:$0xff]
    %v4746 = vld [vmem:[#allocation5 + $0xe28] sm:$0xff]
    %v4747 = vld [vmem:[#allocation5 + $0xe30] sm:$0xff]
    %v4748 = vld [vmem:[#allocation5 + $0xe38] sm:$0xff]
    %v4749 = vld [vmem:[#allocation5 + $0xe40] sm:$0xff]
    %v4750 = vld [vmem:[#allocation5 + $0xe48] sm:$0xff]
    %v4751 = vld [vmem:[#allocation5 + $0xe50] sm:$0xff]
    %v4752 = vld [vmem:[#allocation5 + $0xe58] sm:$0xff]
    %v4753 = vld [vmem:[#allocation5 + $0xe60] sm:$0xff]
    %v4754 = vld [vmem:[#allocation5 + $0xe68] sm:$0xff]
    %v4755 = vld [vmem:[#allocation5 + $0xe70] sm:$0xff]
    %v4756 = vld [vmem:[#allocation5 + $0xe78] sm:$0xff]
    %v4757 = vld [vmem:[#allocation5 + $0xe80] sm:$0xff]
    %v4758 = vld [vmem:[#allocation5 + $0xe88] sm:$0xff]
    %v4759 = vld [vmem:[#allocation5 + $0xe90] sm:$0xff]
    %v4760 = vld [vmem:[#allocation5 + $0xe98] sm:$0xff]
    %v4761 = vld [vmem:[#allocation5 + $0xea0] sm:$0xff]
    %v4762 = vld [vmem:[#allocation5 + $0xea8] sm:$0xff]
    %v4763 = vld [vmem:[#allocation5 + $0xeb0] sm:$0xff]
    %v4764 = vld [vmem:[#allocation5 + $0xeb8] sm:$0xff]
    %v4765 = vld [vmem:[#allocation5 + $0xec0] sm:$0xff]
    %v4766 = vld [vmem:[#allocation5 + $0xec8] sm:$0xff]
    %v4767 = vld [vmem:[#allocation5 + $0xed0] sm:$0xff]
    %v4768 = vld [vmem:[#allocation5 + $0xed8] sm:$0xff]
    %v4769 = vld [vmem:[#allocation5 + $0xee0] sm:$0xff]
    %v4770 = vld [vmem:[#allocation5 + $0xee8] sm:$0xff]
    %v4771 = vld [vmem:[#allocation5 + $0xef0] sm:$0xff]
    %v4772 = vld [vmem:[#allocation5 + $0xef8] sm:$0xff]
    %v4773 = vld [vmem:[#allocation5 + $0xf00] sm:$0xff]
    %v4774 = vld [vmem:[#allocation5 + $0xf08] sm:$0xff]
    %v4775 = vld [vmem:[#allocation5 + $0xf10] sm:$0xff]
    %v4776 = vld [vmem:[#allocation5 + $0xf18] sm:$0xff]
    %v4777 = vld [vmem:[#allocation5 + $0xf20] sm:$0xff]
    %v4778 = vld [vmem:[#allocation5 + $0xf28] sm:$0xff]
    %v4779 = vld [vmem:[#allocation5 + $0xf30] sm:$0xff]
    %v4780 = vld [vmem:[#allocation5 + $0xf38] sm:$0xff]
    %v4781 = vld [vmem:[#allocation5 + $0xf40] sm:$0xff]
    %v4782 = vld [vmem:[#allocation5 + $0xf48] sm:$0xff]
    %v4783 = vld [vmem:[#allocation5 + $0xf50] sm:$0xff]
    %v4784 = vld [vmem:[#allocation5 + $0xf58] sm:$0xff]
    %v4785 = vld [vmem:[#allocation5 + $0xf60] sm:$0xff]
    %v4786 = vld [vmem:[#allocation5 + $0xf68] sm:$0xff]
    %v4787 = vld [vmem:[#allocation5 + $0xf70] sm:$0xff]
    %v4788 = vld [vmem:[#allocation5 + $0xf78] sm:$0xff]
    %v4789 = vld [vmem:[#allocation5 + $0xf80] sm:$0xff]
    %v4790 = vld [vmem:[#allocation5 + $0xf88] sm:$0xff]
    %v4791 = vld [vmem:[#allocation5 + $0xf90] sm:$0xff]
    %v4792 = vld [vmem:[#allocation5 + $0xf98] sm:$0xff]
    %v4793 = vld [vmem:[#allocation5 + $0xfa0] sm:$0xff]
    %v4794 = vld [vmem:[#allocation5 + $0xfa8] sm:$0xff]
    %v4795 = vld [vmem:[#allocation5 + $0xfb0] sm:$0xff]
    %v4796 = vld [vmem:[#allocation5 + $0xfb8] sm:$0xff]
    %v4797 = vld [vmem:[#allocation5 + $0xfc0] sm:$0xff]
    %v4798 = vld [vmem:[#allocation5 + $0xfc8] sm:$0xff]
    %v4799 = vld [vmem:[#allocation5 + $0xfd0] sm:$0xff]
    %v4800 = vld [vmem:[#allocation5 + $0xfd8] sm:$0xff]
    %v4801 = vld [vmem:[#allocation5 + $0xfe0] sm:$0xff]
    %v4802 = vld [vmem:[#allocation5 + $0xfe8] sm:$0xff]
    %v4803 = vld [vmem:[#allocation5 + $0xff0] sm:$0xff]
    %v4804 = vld [vmem:[#allocation5 + $0xff8] sm:$0xff]
    %v4805 = vunpack.c.l.s8.bf16 %v4293
    %v4806 = vunpack.c.l.s8.bf16 %v4294
    %v4807 = vunpack.c.l.s8.bf16 %v4295
    %v4808 = vunpack.c.l.s8.bf16 %v4296
    %v4809 = vunpack.c.l.s8.bf16 %v4297
    %v4810 = vunpack.c.l.s8.bf16 %v4298
    %v4811 = vunpack.c.l.s8.bf16 %v4299
    %v4812 = vunpack.c.l.s8.bf16 %v4300
    %v4813 = vunpack.c.h.s8.bf16 %v4293
    %v4814 = vunpack.c.h.s8.bf16 %v4294
    %v4815 = vunpack.c.h.s8.bf16 %v4295
    %v4816 = vunpack.c.h.s8.bf16 %v4296
    %v4817 = vunpack.c.h.s8.bf16 %v4297
    %v4818 = vunpack.c.h.s8.bf16 %v4298
    %v4819 = vunpack.c.h.s8.bf16 %v4299
    %v4820 = vunpack.c.h.s8.bf16 %v4300
    %v4821 = vunpack.c.l.s8.bf16 %v4301
    %v4822 = vunpack.c.l.s8.bf16 %v4302
    %v4823 = vunpack.c.l.s8.bf16 %v4303
    %v4824 = vunpack.c.l.s8.bf16 %v4304
    %v4825 = vunpack.c.l.s8.bf16 %v4305
    %v4826 = vunpack.c.l.s8.bf16 %v4306
    %v4827 = vunpack.c.l.s8.bf16 %v4307
    %v4828 = vunpack.c.l.s8.bf16 %v4308
    %v4829 = vunpack.c.h.s8.bf16 %v4301
    %v4830 = vunpack.c.h.s8.bf16 %v4302
    %v4831 = vunpack.c.h.s8.bf16 %v4303
    %v4832 = vunpack.c.h.s8.bf16 %v4304
    %v4833 = vunpack.c.h.s8.bf16 %v4305
    %v4834 = vunpack.c.h.s8.bf16 %v4306
    %v4835 = vunpack.c.h.s8.bf16 %v4307
    %v4836 = vunpack.c.h.s8.bf16 %v4308
    %v4837 = vunpack.c.l.s8.bf16 %v4309
    %v4838 = vunpack.c.l.s8.bf16 %v4310
    %v4839 = vunpack.c.l.s8.bf16 %v4311
    %v4840 = vunpack.c.l.s8.bf16 %v4312
    %v4841 = vunpack.c.l.s8.bf16 %v4313
    %v4842 = vunpack.c.l.s8.bf16 %v4314
    %v4843 = vunpack.c.l.s8.bf16 %v4315
    %v4844 = vunpack.c.l.s8.bf16 %v4316
    %v4845 = vunpack.c.h.s8.bf16 %v4309
    %v4846 = vunpack.c.h.s8.bf16 %v4310
    %v4847 = vunpack.c.h.s8.bf16 %v4311
    %v4848 = vunpack.c.h.s8.bf16 %v4312
    %v4849 = vunpack.c.h.s8.bf16 %v4313
    %v4850 = vunpack.c.h.s8.bf16 %v4314
    %v4851 = vunpack.c.h.s8.bf16 %v4315
    %v4852 = vunpack.c.h.s8.bf16 %v4316
    %v4853 = vunpack.c.l.s8.bf16 %v4317
    %v4854 = vunpack.c.l.s8.bf16 %v4318
    %v4855 = vunpack.c.l.s8.bf16 %v4319
    %v4856 = vunpack.c.l.s8.bf16 %v4320
    %v4857 = vunpack.c.l.s8.bf16 %v4321
    %v4858 = vunpack.c.l.s8.bf16 %v4322
    %v4859 = vunpack.c.l.s8.bf16 %v4323
    %v4860 = vunpack.c.l.s8.bf16 %v4324
    %v4861 = vunpack.c.h.s8.bf16 %v4317
    %v4862 = vunpack.c.h.s8.bf16 %v4318
    %v4863 = vunpack.c.h.s8.bf16 %v4319
    %v4864 = vunpack.c.h.s8.bf16 %v4320
    %v4865 = vunpack.c.h.s8.bf16 %v4321
    %v4866 = vunpack.c.h.s8.bf16 %v4322
    %v4867 = vunpack.c.h.s8.bf16 %v4323
    %v4868 = vunpack.c.h.s8.bf16 %v4324
    %v4869 = vunpack.c.l.s8.bf16 %v4325
    %v4870 = vunpack.c.l.s8.bf16 %v4326
    %v4871 = vunpack.c.l.s8.bf16 %v4327
    %v4872 = vunpack.c.l.s8.bf16 %v4328
    %v4873 = vunpack.c.l.s8.bf16 %v4329
    %v4874 = vunpack.c.l.s8.bf16 %v4330
    %v4875 = vunpack.c.l.s8.bf16 %v4331
    %v4876 = vunpack.c.l.s8.bf16 %v4332
    %v4877 = vunpack.c.h.s8.bf16 %v4325
    %v4878 = vunpack.c.h.s8.bf16 %v4326
    %v4879 = vunpack.c.h.s8.bf16 %v4327
    %v4880 = vunpack.c.h.s8.bf16 %v4328
    %v4881 = vunpack.c.h.s8.bf16 %v4329
    %v4882 = vunpack.c.h.s8.bf16 %v4330
    %v4883 = vunpack.c.h.s8.bf16 %v4331
    %v4884 = vunpack.c.h.s8.bf16 %v4332
    %v4885 = vunpack.c.l.s8.bf16 %v4333
    %v4886 = vunpack.c.l.s8.bf16 %v4334
    %v4887 = vunpack.c.l.s8.bf16 %v4335
    %v4888 = vunpack.c.l.s8.bf16 %v4336
    %v4889 = vunpack.c.l.s8.bf16 %v4337
    %v4890 = vunpack.c.l.s8.bf16 %v4338
    %v4891 = vunpack.c.l.s8.bf16 %v4339
    %v4892 = vunpack.c.l.s8.bf16 %v4340
    %v4893 = vunpack.c.h.s8.bf16 %v4333
    %v4894 = vunpack.c.h.s8.bf16 %v4334
    %v4895 = vunpack.c.h.s8.bf16 %v4335
    %v4896 = vunpack.c.h.s8.bf16 %v4336
    %v4897 = vunpack.c.h.s8.bf16 %v4337
    %v4898 = vunpack.c.h.s8.bf16 %v4338
    %v4899 = vunpack.c.h.s8.bf16 %v4339
    %v4900 = vunpack.c.h.s8.bf16 %v4340
    %v4901 = vunpack.c.l.s8.bf16 %v4341
    %v4902 = vunpack.c.l.s8.bf16 %v4342
    %v4903 = vunpack.c.l.s8.bf16 %v4343
    %v4904 = vunpack.c.l.s8.bf16 %v4344
    %v4905 = vunpack.c.l.s8.bf16 %v4345
    %v4906 = vunpack.c.l.s8.bf16 %v4346
    %v4907 = vunpack.c.l.s8.bf16 %v4347
    %v4908 = vunpack.c.l.s8.bf16 %v4348
    %v4909 = vunpack.c.h.s8.bf16 %v4341
    %v4910 = vunpack.c.h.s8.bf16 %v4342
    %v4911 = vunpack.c.h.s8.bf16 %v4343
    %v4912 = vunpack.c.h.s8.bf16 %v4344
    %v4913 = vunpack.c.h.s8.bf16 %v4345
    %v4914 = vunpack.c.h.s8.bf16 %v4346
    %v4915 = vunpack.c.h.s8.bf16 %v4347
    %v4916 = vunpack.c.h.s8.bf16 %v4348
    %v4917 = vunpack.c.l.s8.bf16 %v4349
    %v4918 = vunpack.c.l.s8.bf16 %v4350
    %v4919 = vunpack.c.l.s8.bf16 %v4351
    %v4920 = vunpack.c.l.s8.bf16 %v4352
    %v4921 = vunpack.c.l.s8.bf16 %v4353
    %v4922 = vunpack.c.l.s8.bf16 %v4354
    %v4923 = vunpack.c.l.s8.bf16 %v4355
    %v4924 = vunpack.c.l.s8.bf16 %v4356
    %v4925 = vunpack.c.h.s8.bf16 %v4349
    %v4926 = vunpack.c.h.s8.bf16 %v4350
    %v4927 = vunpack.c.h.s8.bf16 %v4351
    %v4928 = vunpack.c.h.s8.bf16 %v4352
    %v4929 = vunpack.c.h.s8.bf16 %v4353
    %v4930 = vunpack.c.h.s8.bf16 %v4354
    %v4931 = vunpack.c.h.s8.bf16 %v4355
    %v4932 = vunpack.c.h.s8.bf16 %v4356
    %v4933 = vunpack.c.l.s8.bf16 %v4357
    %v4934 = vunpack.c.l.s8.bf16 %v4358
    %v4935 = vunpack.c.l.s8.bf16 %v4359
    %v4936 = vunpack.c.l.s8.bf16 %v4360
    %v4937 = vunpack.c.l.s8.bf16 %v4361
    %v4938 = vunpack.c.l.s8.bf16 %v4362
    %v4939 = vunpack.c.l.s8.bf16 %v4363
    %v4940 = vunpack.c.l.s8.bf16 %v4364
    %v4941 = vunpack.c.h.s8.bf16 %v4357
    %v4942 = vunpack.c.h.s8.bf16 %v4358
    %v4943 = vunpack.c.h.s8.bf16 %v4359
    %v4944 = vunpack.c.h.s8.bf16 %v4360
    %v4945 = vunpack.c.h.s8.bf16 %v4361
    %v4946 = vunpack.c.h.s8.bf16 %v4362
    %v4947 = vunpack.c.h.s8.bf16 %v4363
    %v4948 = vunpack.c.h.s8.bf16 %v4364
    %v4949 = vunpack.c.l.s8.bf16 %v4365
    %v4950 = vunpack.c.l.s8.bf16 %v4366
    %v4951 = vunpack.c.l.s8.bf16 %v4367
    %v4952 = vunpack.c.l.s8.bf16 %v4368
    %v4953 = vunpack.c.l.s8.bf16 %v4369
    %v4954 = vunpack.c.l.s8.bf16 %v4370
    %v4955 = vunpack.c.l.s8.bf16 %v4371
    %v4956 = vunpack.c.l.s8.bf16 %v4372
    %v4957 = vunpack.c.h.s8.bf16 %v4365
    %v4958 = vunpack.c.h.s8.bf16 %v4366
    %v4959 = vunpack.c.h.s8.bf16 %v4367
    %v4960 = vunpack.c.h.s8.bf16 %v4368
    %v4961 = vunpack.c.h.s8.bf16 %v4369
    %v4962 = vunpack.c.h.s8.bf16 %v4370
    %v4963 = vunpack.c.h.s8.bf16 %v4371
    %v4964 = vunpack.c.h.s8.bf16 %v4372
    %v4965 = vunpack.c.l.s8.bf16 %v4373
    %v4966 = vunpack.c.l.s8.bf16 %v4374
    %v4967 = vunpack.c.l.s8.bf16 %v4375
    %v4968 = vunpack.c.l.s8.bf16 %v4376
    %v4969 = vunpack.c.l.s8.bf16 %v4377
    %v4970 = vunpack.c.l.s8.bf16 %v4378
    %v4971 = vunpack.c.l.s8.bf16 %v4379
    %v4972 = vunpack.c.l.s8.bf16 %v4380
    %v4973 = vunpack.c.h.s8.bf16 %v4373
    %v4974 = vunpack.c.h.s8.bf16 %v4374
    %v4975 = vunpack.c.h.s8.bf16 %v4375
    %v4976 = vunpack.c.h.s8.bf16 %v4376
    %v4977 = vunpack.c.h.s8.bf16 %v4377
    %v4978 = vunpack.c.h.s8.bf16 %v4378
    %v4979 = vunpack.c.h.s8.bf16 %v4379
    %v4980 = vunpack.c.h.s8.bf16 %v4380
    %v4981 = vunpack.c.l.s8.bf16 %v4381
    %v4982 = vunpack.c.l.s8.bf16 %v4382
    %v4983 = vunpack.c.l.s8.bf16 %v4383
    %v4984 = vunpack.c.l.s8.bf16 %v4384
    %v4985 = vunpack.c.l.s8.bf16 %v4385
    %v4986 = vunpack.c.l.s8.bf16 %v4386
    %v4987 = vunpack.c.l.s8.bf16 %v4387
    %v4988 = vunpack.c.l.s8.bf16 %v4388
    %v4989 = vunpack.c.h.s8.bf16 %v4381
    %v4990 = vunpack.c.h.s8.bf16 %v4382
    %v4991 = vunpack.c.h.s8.bf16 %v4383
    %v4992 = vunpack.c.h.s8.bf16 %v4384
    %v4993 = vunpack.c.h.s8.bf16 %v4385
    %v4994 = vunpack.c.h.s8.bf16 %v4386
    %v4995 = vunpack.c.h.s8.bf16 %v4387
    %v4996 = vunpack.c.h.s8.bf16 %v4388
    %v4997 = vunpack.c.l.s8.bf16 %v4389
    %v4998 = vunpack.c.l.s8.bf16 %v4390
    %v4999 = vunpack.c.l.s8.bf16 %v4391
    %v5000 = vunpack.c.l.s8.bf16 %v4392
    %v5001 = vunpack.c.l.s8.bf16 %v4393
    %v5002 = vunpack.c.l.s8.bf16 %v4394
    %v5003 = vunpack.c.l.s8.bf16 %v4395
    %v5004 = vunpack.c.l.s8.bf16 %v4396
    %v5005 = vunpack.c.h.s8.bf16 %v4389
    %v5006 = vunpack.c.h.s8.bf16 %v4390
    %v5007 = vunpack.c.h.s8.bf16 %v4391
    %v5008 = vunpack.c.h.s8.bf16 %v4392
    %v5009 = vunpack.c.h.s8.bf16 %v4393
    %v5010 = vunpack.c.h.s8.bf16 %v4394
    %v5011 = vunpack.c.h.s8.bf16 %v4395
    %v5012 = vunpack.c.h.s8.bf16 %v4396
    %v5013 = vunpack.c.l.s8.bf16 %v4397
    %v5014 = vunpack.c.l.s8.bf16 %v4398
    %v5015 = vunpack.c.l.s8.bf16 %v4399
    %v5016 = vunpack.c.l.s8.bf16 %v4400
    %v5017 = vunpack.c.l.s8.bf16 %v4401
    %v5018 = vunpack.c.l.s8.bf16 %v4402
    %v5019 = vunpack.c.l.s8.bf16 %v4403
    %v5020 = vunpack.c.l.s8.bf16 %v4404
    %v5021 = vunpack.c.h.s8.bf16 %v4397
    %v5022 = vunpack.c.h.s8.bf16 %v4398
    %v5023 = vunpack.c.h.s8.bf16 %v4399
    %v5024 = vunpack.c.h.s8.bf16 %v4400
    %v5025 = vunpack.c.h.s8.bf16 %v4401
    %v5026 = vunpack.c.h.s8.bf16 %v4402
    %v5027 = vunpack.c.h.s8.bf16 %v4403
    %v5028 = vunpack.c.h.s8.bf16 %v4404
    %v5029 = vunpack.c.l.s8.bf16 %v4405
    %v5030 = vunpack.c.l.s8.bf16 %v4406
    %v5031 = vunpack.c.l.s8.bf16 %v4407
    %v5032 = vunpack.c.l.s8.bf16 %v4408
    %v5033 = vunpack.c.l.s8.bf16 %v4409
    %v5034 = vunpack.c.l.s8.bf16 %v4410
    %v5035 = vunpack.c.l.s8.bf16 %v4411
    %v5036 = vunpack.c.l.s8.bf16 %v4412
    %v5037 = vunpack.c.h.s8.bf16 %v4405
    %v5038 = vunpack.c.h.s8.bf16 %v4406
    %v5039 = vunpack.c.h.s8.bf16 %v4407
    %v5040 = vunpack.c.h.s8.bf16 %v4408
    %v5041 = vunpack.c.h.s8.bf16 %v4409
    %v5042 = vunpack.c.h.s8.bf16 %v4410
    %v5043 = vunpack.c.h.s8.bf16 %v4411
    %v5044 = vunpack.c.h.s8.bf16 %v4412
    %v5045 = vunpack.c.l.s8.bf16 %v4413
    %v5046 = vunpack.c.l.s8.bf16 %v4414
    %v5047 = vunpack.c.l.s8.bf16 %v4415
    %v5048 = vunpack.c.l.s8.bf16 %v4416
    %v5049 = vunpack.c.l.s8.bf16 %v4417
    %v5050 = vunpack.c.l.s8.bf16 %v4418
    %v5051 = vunpack.c.l.s8.bf16 %v4419
    %v5052 = vunpack.c.l.s8.bf16 %v4420
    %v5053 = vunpack.c.h.s8.bf16 %v4413
    %v5054 = vunpack.c.h.s8.bf16 %v4414
    %v5055 = vunpack.c.h.s8.bf16 %v4415
    %v5056 = vunpack.c.h.s8.bf16 %v4416
    %v5057 = vunpack.c.h.s8.bf16 %v4417
    %v5058 = vunpack.c.h.s8.bf16 %v4418
    %v5059 = vunpack.c.h.s8.bf16 %v4419
    %v5060 = vunpack.c.h.s8.bf16 %v4420
    %v5061 = vunpack.c.l.s8.bf16 %v4421
    %v5062 = vunpack.c.l.s8.bf16 %v4422
    %v5063 = vunpack.c.l.s8.bf16 %v4423
    %v5064 = vunpack.c.l.s8.bf16 %v4424
    %v5065 = vunpack.c.l.s8.bf16 %v4425
    %v5066 = vunpack.c.l.s8.bf16 %v4426
    %v5067 = vunpack.c.l.s8.bf16 %v4427
    %v5068 = vunpack.c.l.s8.bf16 %v4428
    %v5069 = vunpack.c.h.s8.bf16 %v4421
    %v5070 = vunpack.c.h.s8.bf16 %v4422
    %v5071 = vunpack.c.h.s8.bf16 %v4423
    %v5072 = vunpack.c.h.s8.bf16 %v4424
    %v5073 = vunpack.c.h.s8.bf16 %v4425
    %v5074 = vunpack.c.h.s8.bf16 %v4426
    %v5075 = vunpack.c.h.s8.bf16 %v4427
    %v5076 = vunpack.c.h.s8.bf16 %v4428
    %v5077 = vunpack.c.l.s8.bf16 %v4429
    %v5078 = vunpack.c.l.s8.bf16 %v4430
    %v5079 = vunpack.c.l.s8.bf16 %v4431
    %v5080 = vunpack.c.l.s8.bf16 %v4432
    %v5081 = vunpack.c.l.s8.bf16 %v4433
    %v5082 = vunpack.c.l.s8.bf16 %v4434
    %v5083 = vunpack.c.l.s8.bf16 %v4435
    %v5084 = vunpack.c.l.s8.bf16 %v4436
    %v5085 = vunpack.c.h.s8.bf16 %v4429
    %v5086 = vunpack.c.h.s8.bf16 %v4430
    %v5087 = vunpack.c.h.s8.bf16 %v4431
    %v5088 = vunpack.c.h.s8.bf16 %v4432
    %v5089 = vunpack.c.h.s8.bf16 %v4433
    %v5090 = vunpack.c.h.s8.bf16 %v4434
    %v5091 = vunpack.c.h.s8.bf16 %v4435
    %v5092 = vunpack.c.h.s8.bf16 %v4436
    %v5093 = vunpack.c.l.s8.bf16 %v4437
    %v5094 = vunpack.c.l.s8.bf16 %v4438
    %v5095 = vunpack.c.l.s8.bf16 %v4439
    %v5096 = vunpack.c.l.s8.bf16 %v4440
    %v5097 = vunpack.c.l.s8.bf16 %v4441
    %v5098 = vunpack.c.l.s8.bf16 %v4442
    %v5099 = vunpack.c.l.s8.bf16 %v4443
    %v5100 = vunpack.c.l.s8.bf16 %v4444
    %v5101 = vunpack.c.h.s8.bf16 %v4437
    %v5102 = vunpack.c.h.s8.bf16 %v4438
    %v5103 = vunpack.c.h.s8.bf16 %v4439
    %v5104 = vunpack.c.h.s8.bf16 %v4440
    %v5105 = vunpack.c.h.s8.bf16 %v4441
    %v5106 = vunpack.c.h.s8.bf16 %v4442
    %v5107 = vunpack.c.h.s8.bf16 %v4443
    %v5108 = vunpack.c.h.s8.bf16 %v4444
    %v5109 = vunpack.c.l.s8.bf16 %v4445
    %v5110 = vunpack.c.l.s8.bf16 %v4446
    %v5111 = vunpack.c.l.s8.bf16 %v4447
    %v5112 = vunpack.c.l.s8.bf16 %v4448
    %v5113 = vunpack.c.l.s8.bf16 %v4449
    %v5114 = vunpack.c.l.s8.bf16 %v4450
    %v5115 = vunpack.c.l.s8.bf16 %v4451
    %v5116 = vunpack.c.l.s8.bf16 %v4452
    %v5117 = vunpack.c.h.s8.bf16 %v4445
    %v5118 = vunpack.c.h.s8.bf16 %v4446
    %v5119 = vunpack.c.h.s8.bf16 %v4447
    %v5120 = vunpack.c.h.s8.bf16 %v4448
    %v5121 = vunpack.c.h.s8.bf16 %v4449
    %v5122 = vunpack.c.h.s8.bf16 %v4450
    %v5123 = vunpack.c.h.s8.bf16 %v4451
    %v5124 = vunpack.c.h.s8.bf16 %v4452
    %v5125 = vunpack.c.l.s8.bf16 %v4453
    %v5126 = vunpack.c.l.s8.bf16 %v4454
    %v5127 = vunpack.c.l.s8.bf16 %v4455
    %v5128 = vunpack.c.l.s8.bf16 %v4456
    %v5129 = vunpack.c.l.s8.bf16 %v4457
    %v5130 = vunpack.c.l.s8.bf16 %v4458
    %v5131 = vunpack.c.l.s8.bf16 %v4459
    %v5132 = vunpack.c.l.s8.bf16 %v4460
    %v5133 = vunpack.c.h.s8.bf16 %v4453
    %v5134 = vunpack.c.h.s8.bf16 %v4454
    %v5135 = vunpack.c.h.s8.bf16 %v4455
    %v5136 = vunpack.c.h.s8.bf16 %v4456
    %v5137 = vunpack.c.h.s8.bf16 %v4457
    %v5138 = vunpack.c.h.s8.bf16 %v4458
    %v5139 = vunpack.c.h.s8.bf16 %v4459
    %v5140 = vunpack.c.h.s8.bf16 %v4460
    %v5141 = vunpack.c.l.s8.bf16 %v4461
    %v5142 = vunpack.c.l.s8.bf16 %v4462
    %v5143 = vunpack.c.l.s8.bf16 %v4463
    %v5144 = vunpack.c.l.s8.bf16 %v4464
    %v5145 = vunpack.c.l.s8.bf16 %v4465
    %v5146 = vunpack.c.l.s8.bf16 %v4466
    %v5147 = vunpack.c.l.s8.bf16 %v4467
    %v5148 = vunpack.c.l.s8.bf16 %v4468
    %v5149 = vunpack.c.h.s8.bf16 %v4461
    %v5150 = vunpack.c.h.s8.bf16 %v4462
    %v5151 = vunpack.c.h.s8.bf16 %v4463
    %v5152 = vunpack.c.h.s8.bf16 %v4464
    %v5153 = vunpack.c.h.s8.bf16 %v4465
    %v5154 = vunpack.c.h.s8.bf16 %v4466
    %v5155 = vunpack.c.h.s8.bf16 %v4467
    %v5156 = vunpack.c.h.s8.bf16 %v4468
    %v5157 = vunpack.c.l.s8.bf16 %v4469
    %v5158 = vunpack.c.l.s8.bf16 %v4470
    %v5159 = vunpack.c.l.s8.bf16 %v4471
    %v5160 = vunpack.c.l.s8.bf16 %v4472
    %v5161 = vunpack.c.l.s8.bf16 %v4473
    %v5162 = vunpack.c.l.s8.bf16 %v4474
    %v5163 = vunpack.c.l.s8.bf16 %v4475
    %v5164 = vunpack.c.l.s8.bf16 %v4476
    %v5165 = vunpack.c.h.s8.bf16 %v4469
    %v5166 = vunpack.c.h.s8.bf16 %v4470
    %v5167 = vunpack.c.h.s8.bf16 %v4471
    %v5168 = vunpack.c.h.s8.bf16 %v4472
    %v5169 = vunpack.c.h.s8.bf16 %v4473
    %v5170 = vunpack.c.h.s8.bf16 %v4474
    %v5171 = vunpack.c.h.s8.bf16 %v4475
    %v5172 = vunpack.c.h.s8.bf16 %v4476
    %v5173 = vunpack.c.l.s8.bf16 %v4477
    %v5174 = vunpack.c.l.s8.bf16 %v4478
    %v5175 = vunpack.c.l.s8.bf16 %v4479
    %v5176 = vunpack.c.l.s8.bf16 %v4480
    %v5177 = vunpack.c.l.s8.bf16 %v4481
    %v5178 = vunpack.c.l.s8.bf16 %v4482
    %v5179 = vunpack.c.l.s8.bf16 %v4483
    %v5180 = vunpack.c.l.s8.bf16 %v4484
    %v5181 = vunpack.c.h.s8.bf16 %v4477
    %v5182 = vunpack.c.h.s8.bf16 %v4478
    %v5183 = vunpack.c.h.s8.bf16 %v4479
    %v5184 = vunpack.c.h.s8.bf16 %v4480
    %v5185 = vunpack.c.h.s8.bf16 %v4481
    %v5186 = vunpack.c.h.s8.bf16 %v4482
    %v5187 = vunpack.c.h.s8.bf16 %v4483
    %v5188 = vunpack.c.h.s8.bf16 %v4484
    %v5189 = vunpack.c.l.s8.bf16 %v4485
    %v5190 = vunpack.c.l.s8.bf16 %v4486
    %v5191 = vunpack.c.l.s8.bf16 %v4487
    %v5192 = vunpack.c.l.s8.bf16 %v4488
    %v5193 = vunpack.c.l.s8.bf16 %v4489
    %v5194 = vunpack.c.l.s8.bf16 %v4490
    %v5195 = vunpack.c.l.s8.bf16 %v4491
    %v5196 = vunpack.c.l.s8.bf16 %v4492
    %v5197 = vunpack.c.h.s8.bf16 %v4485
    %v5198 = vunpack.c.h.s8.bf16 %v4486
    %v5199 = vunpack.c.h.s8.bf16 %v4487
    %v5200 = vunpack.c.h.s8.bf16 %v4488
    %v5201 = vunpack.c.h.s8.bf16 %v4489
    %v5202 = vunpack.c.h.s8.bf16 %v4490
    %v5203 = vunpack.c.h.s8.bf16 %v4491
    %v5204 = vunpack.c.h.s8.bf16 %v4492
    %v5205 = vunpack.c.l.s8.bf16 %v4493
    %v5206 = vunpack.c.l.s8.bf16 %v4494
    %v5207 = vunpack.c.l.s8.bf16 %v4495
    %v5208 = vunpack.c.l.s8.bf16 %v4496
    %v5209 = vunpack.c.l.s8.bf16 %v4497
    %v5210 = vunpack.c.l.s8.bf16 %v4498
    %v5211 = vunpack.c.l.s8.bf16 %v4499
    %v5212 = vunpack.c.l.s8.bf16 %v4500
    %v5213 = vunpack.c.h.s8.bf16 %v4493
    %v5214 = vunpack.c.h.s8.bf16 %v4494
    %v5215 = vunpack.c.h.s8.bf16 %v4495
    %v5216 = vunpack.c.h.s8.bf16 %v4496
    %v5217 = vunpack.c.h.s8.bf16 %v4497
    %v5218 = vunpack.c.h.s8.bf16 %v4498
    %v5219 = vunpack.c.h.s8.bf16 %v4499
    %v5220 = vunpack.c.h.s8.bf16 %v4500
    %v5221 = vunpack.c.l.s8.bf16 %v4501
    %v5222 = vunpack.c.l.s8.bf16 %v4502
    %v5223 = vunpack.c.l.s8.bf16 %v4503
    %v5224 = vunpack.c.l.s8.bf16 %v4504
    %v5225 = vunpack.c.l.s8.bf16 %v4505
    %v5226 = vunpack.c.l.s8.bf16 %v4506
    %v5227 = vunpack.c.l.s8.bf16 %v4507
    %v5228 = vunpack.c.l.s8.bf16 %v4508
    %v5229 = vunpack.c.h.s8.bf16 %v4501
    %v5230 = vunpack.c.h.s8.bf16 %v4502
    %v5231 = vunpack.c.h.s8.bf16 %v4503
    %v5232 = vunpack.c.h.s8.bf16 %v4504
    %v5233 = vunpack.c.h.s8.bf16 %v4505
    %v5234 = vunpack.c.h.s8.bf16 %v4506
    %v5235 = vunpack.c.h.s8.bf16 %v4507
    %v5236 = vunpack.c.h.s8.bf16 %v4508
    %v5237 = vunpack.c.l.s8.bf16 %v4509
    %v5238 = vunpack.c.l.s8.bf16 %v4510
    %v5239 = vunpack.c.l.s8.bf16 %v4511
    %v5240 = vunpack.c.l.s8.bf16 %v4512
    %v5241 = vunpack.c.l.s8.bf16 %v4513
    %v5242 = vunpack.c.l.s8.bf16 %v4514
    %v5243 = vunpack.c.l.s8.bf16 %v4515
    %v5244 = vunpack.c.l.s8.bf16 %v4516
    %v5245 = vunpack.c.h.s8.bf16 %v4509
    %v5246 = vunpack.c.h.s8.bf16 %v4510
    %v5247 = vunpack.c.h.s8.bf16 %v4511
    %v5248 = vunpack.c.h.s8.bf16 %v4512
    %v5249 = vunpack.c.h.s8.bf16 %v4513
    %v5250 = vunpack.c.h.s8.bf16 %v4514
    %v5251 = vunpack.c.h.s8.bf16 %v4515
    %v5252 = vunpack.c.h.s8.bf16 %v4516
    %v5253 = vunpack.c.l.s8.bf16 %v4517
    %v5254 = vunpack.c.l.s8.bf16 %v4518
    %v5255 = vunpack.c.l.s8.bf16 %v4519
    %v5256 = vunpack.c.l.s8.bf16 %v4520
    %v5257 = vunpack.c.l.s8.bf16 %v4521
    %v5258 = vunpack.c.l.s8.bf16 %v4522
    %v5259 = vunpack.c.l.s8.bf16 %v4523
    %v5260 = vunpack.c.l.s8.bf16 %v4524
    %v5261 = vunpack.c.h.s8.bf16 %v4517
    %v5262 = vunpack.c.h.s8.bf16 %v4518
    %v5263 = vunpack.c.h.s8.bf16 %v4519
    %v5264 = vunpack.c.h.s8.bf16 %v4520
    %v5265 = vunpack.c.h.s8.bf16 %v4521
    %v5266 = vunpack.c.h.s8.bf16 %v4522
    %v5267 = vunpack.c.h.s8.bf16 %v4523
    %v5268 = vunpack.c.h.s8.bf16 %v4524
    %v5269 = vunpack.c.l.s8.bf16 %v4525
    %v5270 = vunpack.c.l.s8.bf16 %v4526
    %v5271 = vunpack.c.l.s8.bf16 %v4527
    %v5272 = vunpack.c.l.s8.bf16 %v4528
    %v5273 = vunpack.c.l.s8.bf16 %v4529
    %v5274 = vunpack.c.l.s8.bf16 %v4530
    %v5275 = vunpack.c.l.s8.bf16 %v4531
    %v5276 = vunpack.c.l.s8.bf16 %v4532
    %v5277 = vunpack.c.h.s8.bf16 %v4525
    %v5278 = vunpack.c.h.s8.bf16 %v4526
    %v5279 = vunpack.c.h.s8.bf16 %v4527
    %v5280 = vunpack.c.h.s8.bf16 %v4528
    %v5281 = vunpack.c.h.s8.bf16 %v4529
    %v5282 = vunpack.c.h.s8.bf16 %v4530
    %v5283 = vunpack.c.h.s8.bf16 %v4531
    %v5284 = vunpack.c.h.s8.bf16 %v4532
    %v5285 = vunpack.c.l.s8.bf16 %v4533
    %v5286 = vunpack.c.l.s8.bf16 %v4534
    %v5287 = vunpack.c.l.s8.bf16 %v4535
    %v5288 = vunpack.c.l.s8.bf16 %v4536
    %v5289 = vunpack.c.l.s8.bf16 %v4537
    %v5290 = vunpack.c.l.s8.bf16 %v4538
    %v5291 = vunpack.c.l.s8.bf16 %v4539
    %v5292 = vunpack.c.l.s8.bf16 %v4540
    %v5293 = vunpack.c.h.s8.bf16 %v4533
    %v5294 = vunpack.c.h.s8.bf16 %v4534
    %v5295 = vunpack.c.h.s8.bf16 %v4535
    %v5296 = vunpack.c.h.s8.bf16 %v4536
    %v5297 = vunpack.c.h.s8.bf16 %v4537
    %v5298 = vunpack.c.h.s8.bf16 %v4538
    %v5299 = vunpack.c.h.s8.bf16 %v4539
    %v5300 = vunpack.c.h.s8.bf16 %v4540
    %v5301 = vunpack.c.l.s8.bf16 %v4541
    %v5302 = vunpack.c.l.s8.bf16 %v4542
    %v5303 = vunpack.c.l.s8.bf16 %v4543
    %v5304 = vunpack.c.l.s8.bf16 %v4544
    %v5305 = vunpack.c.l.s8.bf16 %v4545
    %v5306 = vunpack.c.l.s8.bf16 %v4546
    %v5307 = vunpack.c.l.s8.bf16 %v4547
    %v5308 = vunpack.c.l.s8.bf16 %v4548
    %v5309 = vunpack.c.h.s8.bf16 %v4541
    %v5310 = vunpack.c.h.s8.bf16 %v4542
    %v5311 = vunpack.c.h.s8.bf16 %v4543
    %v5312 = vunpack.c.h.s8.bf16 %v4544
    %v5313 = vunpack.c.h.s8.bf16 %v4545
    %v5314 = vunpack.c.h.s8.bf16 %v4546
    %v5315 = vunpack.c.h.s8.bf16 %v4547
    %v5316 = vunpack.c.h.s8.bf16 %v4548
    %v5317 = vunpack.c.l.s8.bf16 %v4549
    %v5318 = vunpack.c.l.s8.bf16 %v4550
    %v5319 = vunpack.c.l.s8.bf16 %v4551
    %v5320 = vunpack.c.l.s8.bf16 %v4552
    %v5321 = vunpack.c.l.s8.bf16 %v4553
    %v5322 = vunpack.c.l.s8.bf16 %v4554
    %v5323 = vunpack.c.l.s8.bf16 %v4555
    %v5324 = vunpack.c.l.s8.bf16 %v4556
    %v5325 = vunpack.c.h.s8.bf16 %v4549
    %v5326 = vunpack.c.h.s8.bf16 %v4550
    %v5327 = vunpack.c.h.s8.bf16 %v4551
    %v5328 = vunpack.c.h.s8.bf16 %v4552
    %v5329 = vunpack.c.h.s8.bf16 %v4553
    %v5330 = vunpack.c.h.s8.bf16 %v4554
    %v5331 = vunpack.c.h.s8.bf16 %v4555
    %v5332 = vunpack.c.h.s8.bf16 %v4556
    %v5333 = vunpack.c.l.s8.bf16 %v4557
    %v5334 = vunpack.c.l.s8.bf16 %v4558
    %v5335 = vunpack.c.l.s8.bf16 %v4559
    %v5336 = vunpack.c.l.s8.bf16 %v4560
    %v5337 = vunpack.c.l.s8.bf16 %v4561
    %v5338 = vunpack.c.l.s8.bf16 %v4562
    %v5339 = vunpack.c.l.s8.bf16 %v4563
    %v5340 = vunpack.c.l.s8.bf16 %v4564
    %v5341 = vunpack.c.h.s8.bf16 %v4557
    %v5342 = vunpack.c.h.s8.bf16 %v4558
    %v5343 = vunpack.c.h.s8.bf16 %v4559
    %v5344 = vunpack.c.h.s8.bf16 %v4560
    %v5345 = vunpack.c.h.s8.bf16 %v4561
    %v5346 = vunpack.c.h.s8.bf16 %v4562
    %v5347 = vunpack.c.h.s8.bf16 %v4563
    %v5348 = vunpack.c.h.s8.bf16 %v4564
    %v5349 = vunpack.c.l.s8.bf16 %v4565
    %v5350 = vunpack.c.l.s8.bf16 %v4566
    %v5351 = vunpack.c.l.s8.bf16 %v4567
    %v5352 = vunpack.c.l.s8.bf16 %v4568
    %v5353 = vunpack.c.l.s8.bf16 %v4569
    %v5354 = vunpack.c.l.s8.bf16 %v4570
    %v5355 = vunpack.c.l.s8.bf16 %v4571
    %v5356 = vunpack.c.l.s8.bf16 %v4572
    %v5357 = vunpack.c.h.s8.bf16 %v4565
    %v5358 = vunpack.c.h.s8.bf16 %v4566
    %v5359 = vunpack.c.h.s8.bf16 %v4567
    %v5360 = vunpack.c.h.s8.bf16 %v4568
    %v5361 = vunpack.c.h.s8.bf16 %v4569
    %v5362 = vunpack.c.h.s8.bf16 %v4570
    %v5363 = vunpack.c.h.s8.bf16 %v4571
    %v5364 = vunpack.c.h.s8.bf16 %v4572
    %v5365 = vunpack.c.l.s8.bf16 %v4573
    %v5366 = vunpack.c.l.s8.bf16 %v4574
    %v5367 = vunpack.c.l.s8.bf16 %v4575
    %v5368 = vunpack.c.l.s8.bf16 %v4576
    %v5369 = vunpack.c.l.s8.bf16 %v4577
    %v5370 = vunpack.c.l.s8.bf16 %v4578
    %v5371 = vunpack.c.l.s8.bf16 %v4579
    %v5372 = vunpack.c.l.s8.bf16 %v4580
    %v5373 = vunpack.c.h.s8.bf16 %v4573
    %v5374 = vunpack.c.h.s8.bf16 %v4574
    %v5375 = vunpack.c.h.s8.bf16 %v4575
    %v5376 = vunpack.c.h.s8.bf16 %v4576
    %v5377 = vunpack.c.h.s8.bf16 %v4577
    %v5378 = vunpack.c.h.s8.bf16 %v4578
    %v5379 = vunpack.c.h.s8.bf16 %v4579
    %v5380 = vunpack.c.h.s8.bf16 %v4580
    %v5381 = vunpack.c.l.s8.bf16 %v4581
    %v5382 = vunpack.c.l.s8.bf16 %v4582
    %v5383 = vunpack.c.l.s8.bf16 %v4583
    %v5384 = vunpack.c.l.s8.bf16 %v4584
    %v5385 = vunpack.c.l.s8.bf16 %v4585
    %v5386 = vunpack.c.l.s8.bf16 %v4586
    %v5387 = vunpack.c.l.s8.bf16 %v4587
    %v5388 = vunpack.c.l.s8.bf16 %v4588
    %v5389 = vunpack.c.h.s8.bf16 %v4581
    %v5390 = vunpack.c.h.s8.bf16 %v4582
    %v5391 = vunpack.c.h.s8.bf16 %v4583
    %v5392 = vunpack.c.h.s8.bf16 %v4584
    %v5393 = vunpack.c.h.s8.bf16 %v4585
    %v5394 = vunpack.c.h.s8.bf16 %v4586
    %v5395 = vunpack.c.h.s8.bf16 %v4587
    %v5396 = vunpack.c.h.s8.bf16 %v4588
    %v5397 = vunpack.c.l.s8.bf16 %v4589
    %v5398 = vunpack.c.l.s8.bf16 %v4590
    %v5399 = vunpack.c.l.s8.bf16 %v4591
    %v5400 = vunpack.c.l.s8.bf16 %v4592
    %v5401 = vunpack.c.l.s8.bf16 %v4593
    %v5402 = vunpack.c.l.s8.bf16 %v4594
    %v5403 = vunpack.c.l.s8.bf16 %v4595
    %v5404 = vunpack.c.l.s8.bf16 %v4596
    %v5405 = vunpack.c.h.s8.bf16 %v4589
    %v5406 = vunpack.c.h.s8.bf16 %v4590
    %v5407 = vunpack.c.h.s8.bf16 %v4591
    %v5408 = vunpack.c.h.s8.bf16 %v4592
    %v5409 = vunpack.c.h.s8.bf16 %v4593
    %v5410 = vunpack.c.h.s8.bf16 %v4594
    %v5411 = vunpack.c.h.s8.bf16 %v4595
    %v5412 = vunpack.c.h.s8.bf16 %v4596
    %v5413 = vunpack.c.l.s8.bf16 %v4597
    %v5414 = vunpack.c.l.s8.bf16 %v4598
    %v5415 = vunpack.c.l.s8.bf16 %v4599
    %v5416 = vunpack.c.l.s8.bf16 %v4600
    %v5417 = vunpack.c.l.s8.bf16 %v4601
    %v5418 = vunpack.c.l.s8.bf16 %v4602
    %v5419 = vunpack.c.l.s8.bf16 %v4603
    %v5420 = vunpack.c.l.s8.bf16 %v4604
    %v5421 = vunpack.c.h.s8.bf16 %v4597
    %v5422 = vunpack.c.h.s8.bf16 %v4598
    %v5423 = vunpack.c.h.s8.bf16 %v4599
    %v5424 = vunpack.c.h.s8.bf16 %v4600
    %v5425 = vunpack.c.h.s8.bf16 %v4601
    %v5426 = vunpack.c.h.s8.bf16 %v4602
    %v5427 = vunpack.c.h.s8.bf16 %v4603
    %v5428 = vunpack.c.h.s8.bf16 %v4604
    %v5429 = vunpack.c.l.s8.bf16 %v4605
    %v5430 = vunpack.c.l.s8.bf16 %v4606
    %v5431 = vunpack.c.l.s8.bf16 %v4607
    %v5432 = vunpack.c.l.s8.bf16 %v4608
    %v5433 = vunpack.c.l.s8.bf16 %v4609
    %v5434 = vunpack.c.l.s8.bf16 %v4610
    %v5435 = vunpack.c.l.s8.bf16 %v4611
    %v5436 = vunpack.c.l.s8.bf16 %v4612
    %v5437 = vunpack.c.h.s8.bf16 %v4605
    %v5438 = vunpack.c.h.s8.bf16 %v4606
    %v5439 = vunpack.c.h.s8.bf16 %v4607
    %v5440 = vunpack.c.h.s8.bf16 %v4608
    %v5441 = vunpack.c.h.s8.bf16 %v4609
    %v5442 = vunpack.c.h.s8.bf16 %v4610
    %v5443 = vunpack.c.h.s8.bf16 %v4611
    %v5444 = vunpack.c.h.s8.bf16 %v4612
    %v5445 = vunpack.c.l.s8.bf16 %v4613
    %v5446 = vunpack.c.l.s8.bf16 %v4614
    %v5447 = vunpack.c.l.s8.bf16 %v4615
    %v5448 = vunpack.c.l.s8.bf16 %v4616
    %v5449 = vunpack.c.l.s8.bf16 %v4617
    %v5450 = vunpack.c.l.s8.bf16 %v4618
    %v5451 = vunpack.c.l.s8.bf16 %v4619
    %v5452 = vunpack.c.l.s8.bf16 %v4620
    %v5453 = vunpack.c.h.s8.bf16 %v4613
    %v5454 = vunpack.c.h.s8.bf16 %v4614
    %v5455 = vunpack.c.h.s8.bf16 %v4615
    %v5456 = vunpack.c.h.s8.bf16 %v4616
    %v5457 = vunpack.c.h.s8.bf16 %v4617
    %v5458 = vunpack.c.h.s8.bf16 %v4618
    %v5459 = vunpack.c.h.s8.bf16 %v4619
    %v5460 = vunpack.c.h.s8.bf16 %v4620
    %v5461 = vunpack.c.l.s8.bf16 %v4621
    %v5462 = vunpack.c.l.s8.bf16 %v4622
    %v5463 = vunpack.c.l.s8.bf16 %v4623
    %v5464 = vunpack.c.l.s8.bf16 %v4624
    %v5465 = vunpack.c.l.s8.bf16 %v4625
    %v5466 = vunpack.c.l.s8.bf16 %v4626
    %v5467 = vunpack.c.l.s8.bf16 %v4627
    %v5468 = vunpack.c.l.s8.bf16 %v4628
    %v5469 = vunpack.c.h.s8.bf16 %v4621
    %v5470 = vunpack.c.h.s8.bf16 %v4622
    %v5471 = vunpack.c.h.s8.bf16 %v4623
    %v5472 = vunpack.c.h.s8.bf16 %v4624
    %v5473 = vunpack.c.h.s8.bf16 %v4625
    %v5474 = vunpack.c.h.s8.bf16 %v4626
    %v5475 = vunpack.c.h.s8.bf16 %v4627
    %v5476 = vunpack.c.h.s8.bf16 %v4628
    %v5477 = vunpack.c.l.s8.bf16 %v4629
    %v5478 = vunpack.c.l.s8.bf16 %v4630
    %v5479 = vunpack.c.l.s8.bf16 %v4631
    %v5480 = vunpack.c.l.s8.bf16 %v4632
    %v5481 = vunpack.c.l.s8.bf16 %v4633
    %v5482 = vunpack.c.l.s8.bf16 %v4634
    %v5483 = vunpack.c.l.s8.bf16 %v4635
    %v5484 = vunpack.c.l.s8.bf16 %v4636
    %v5485 = vunpack.c.h.s8.bf16 %v4629
    %v5486 = vunpack.c.h.s8.bf16 %v4630
    %v5487 = vunpack.c.h.s8.bf16 %v4631
    %v5488 = vunpack.c.h.s8.bf16 %v4632
    %v5489 = vunpack.c.h.s8.bf16 %v4633
    %v5490 = vunpack.c.h.s8.bf16 %v4634
    %v5491 = vunpack.c.h.s8.bf16 %v4635
    %v5492 = vunpack.c.h.s8.bf16 %v4636
    %v5493 = vunpack.c.l.s8.bf16 %v4637
    %v5494 = vunpack.c.l.s8.bf16 %v4638
    %v5495 = vunpack.c.l.s8.bf16 %v4639
    %v5496 = vunpack.c.l.s8.bf16 %v4640
    %v5497 = vunpack.c.l.s8.bf16 %v4641
    %v5498 = vunpack.c.l.s8.bf16 %v4642
    %v5499 = vunpack.c.l.s8.bf16 %v4643
    %v5500 = vunpack.c.l.s8.bf16 %v4644
    %v5501 = vunpack.c.h.s8.bf16 %v4637
    %v5502 = vunpack.c.h.s8.bf16 %v4638
    %v5503 = vunpack.c.h.s8.bf16 %v4639
    %v5504 = vunpack.c.h.s8.bf16 %v4640
    %v5505 = vunpack.c.h.s8.bf16 %v4641
    %v5506 = vunpack.c.h.s8.bf16 %v4642
    %v5507 = vunpack.c.h.s8.bf16 %v4643
    %v5508 = vunpack.c.h.s8.bf16 %v4644
    %v5509 = vunpack.c.l.s8.bf16 %v4645
    %v5510 = vunpack.c.l.s8.bf16 %v4646
    %v5511 = vunpack.c.l.s8.bf16 %v4647
    %v5512 = vunpack.c.l.s8.bf16 %v4648
    %v5513 = vunpack.c.l.s8.bf16 %v4649
    %v5514 = vunpack.c.l.s8.bf16 %v4650
    %v5515 = vunpack.c.l.s8.bf16 %v4651
    %v5516 = vunpack.c.l.s8.bf16 %v4652
    %v5517 = vunpack.c.h.s8.bf16 %v4645
    %v5518 = vunpack.c.h.s8.bf16 %v4646
    %v5519 = vunpack.c.h.s8.bf16 %v4647
    %v5520 = vunpack.c.h.s8.bf16 %v4648
    %v5521 = vunpack.c.h.s8.bf16 %v4649
    %v5522 = vunpack.c.h.s8.bf16 %v4650
    %v5523 = vunpack.c.h.s8.bf16 %v4651
    %v5524 = vunpack.c.h.s8.bf16 %v4652
    %v5525 = vunpack.c.l.s8.bf16 %v4653
    %v5526 = vunpack.c.l.s8.bf16 %v4654
    %v5527 = vunpack.c.l.s8.bf16 %v4655
    %v5528 = vunpack.c.l.s8.bf16 %v4656
    %v5529 = vunpack.c.l.s8.bf16 %v4657
    %v5530 = vunpack.c.l.s8.bf16 %v4658
    %v5531 = vunpack.c.l.s8.bf16 %v4659
    %v5532 = vunpack.c.l.s8.bf16 %v4660
    %v5533 = vunpack.c.h.s8.bf16 %v4653
    %v5534 = vunpack.c.h.s8.bf16 %v4654
    %v5535 = vunpack.c.h.s8.bf16 %v4655
    %v5536 = vunpack.c.h.s8.bf16 %v4656
    %v5537 = vunpack.c.h.s8.bf16 %v4657
    %v5538 = vunpack.c.h.s8.bf16 %v4658
    %v5539 = vunpack.c.h.s8.bf16 %v4659
    %v5540 = vunpack.c.h.s8.bf16 %v4660
    %v5541 = vunpack.c.l.s8.bf16 %v4661
    %v5542 = vunpack.c.l.s8.bf16 %v4662
    %v5543 = vunpack.c.l.s8.bf16 %v4663
    %v5544 = vunpack.c.l.s8.bf16 %v4664
    %v5545 = vunpack.c.l.s8.bf16 %v4665
    %v5546 = vunpack.c.l.s8.bf16 %v4666
    %v5547 = vunpack.c.l.s8.bf16 %v4667
    %v5548 = vunpack.c.l.s8.bf16 %v4668
    %v5549 = vunpack.c.h.s8.bf16 %v4661
    %v5550 = vunpack.c.h.s8.bf16 %v4662
    %v5551 = vunpack.c.h.s8.bf16 %v4663
    %v5552 = vunpack.c.h.s8.bf16 %v4664
    %v5553 = vunpack.c.h.s8.bf16 %v4665
    %v5554 = vunpack.c.h.s8.bf16 %v4666
    %v5555 = vunpack.c.h.s8.bf16 %v4667
    %v5556 = vunpack.c.h.s8.bf16 %v4668
    %v5557 = vunpack.c.l.s8.bf16 %v4669
    %v5558 = vunpack.c.l.s8.bf16 %v4670
    %v5559 = vunpack.c.l.s8.bf16 %v4671
    %v5560 = vunpack.c.l.s8.bf16 %v4672
    %v5561 = vunpack.c.l.s8.bf16 %v4673
    %v5562 = vunpack.c.l.s8.bf16 %v4674
    %v5563 = vunpack.c.l.s8.bf16 %v4675
    %v5564 = vunpack.c.l.s8.bf16 %v4676
    %v5565 = vunpack.c.h.s8.bf16 %v4669
    %v5566 = vunpack.c.h.s8.bf16 %v4670
    %v5567 = vunpack.c.h.s8.bf16 %v4671
    %v5568 = vunpack.c.h.s8.bf16 %v4672
    %v5569 = vunpack.c.h.s8.bf16 %v4673
    %v5570 = vunpack.c.h.s8.bf16 %v4674
    %v5571 = vunpack.c.h.s8.bf16 %v4675
    %v5572 = vunpack.c.h.s8.bf16 %v4676
    %v5573 = vunpack.c.l.s8.bf16 %v4677
    %v5574 = vunpack.c.l.s8.bf16 %v4678
    %v5575 = vunpack.c.l.s8.bf16 %v4679
    %v5576 = vunpack.c.l.s8.bf16 %v4680
    %v5577 = vunpack.c.l.s8.bf16 %v4681
    %v5578 = vunpack.c.l.s8.bf16 %v4682
    %v5579 = vunpack.c.l.s8.bf16 %v4683
    %v5580 = vunpack.c.l.s8.bf16 %v4684
    %v5581 = vunpack.c.h.s8.bf16 %v4677
    %v5582 = vunpack.c.h.s8.bf16 %v4678
    %v5583 = vunpack.c.h.s8.bf16 %v4679
    %v5584 = vunpack.c.h.s8.bf16 %v4680
    %v5585 = vunpack.c.h.s8.bf16 %v4681
    %v5586 = vunpack.c.h.s8.bf16 %v4682
    %v5587 = vunpack.c.h.s8.bf16 %v4683
    %v5588 = vunpack.c.h.s8.bf16 %v4684
    %v5589 = vunpack.c.l.s8.bf16 %v4685
    %v5590 = vunpack.c.l.s8.bf16 %v4686
    %v5591 = vunpack.c.l.s8.bf16 %v4687
    %v5592 = vunpack.c.l.s8.bf16 %v4688
    %v5593 = vunpack.c.l.s8.bf16 %v4689
    %v5594 = vunpack.c.l.s8.bf16 %v4690
    %v5595 = vunpack.c.l.s8.bf16 %v4691
    %v5596 = vunpack.c.l.s8.bf16 %v4692
    %v5597 = vunpack.c.h.s8.bf16 %v4685
    %v5598 = vunpack.c.h.s8.bf16 %v4686
    %v5599 = vunpack.c.h.s8.bf16 %v4687
    %v5600 = vunpack.c.h.s8.bf16 %v4688
    %v5601 = vunpack.c.h.s8.bf16 %v4689
    %v5602 = vunpack.c.h.s8.bf16 %v4690
    %v5603 = vunpack.c.h.s8.bf16 %v4691
    %v5604 = vunpack.c.h.s8.bf16 %v4692
    %v5605 = vunpack.c.l.s8.bf16 %v4693
    %v5606 = vunpack.c.l.s8.bf16 %v4694
    %v5607 = vunpack.c.l.s8.bf16 %v4695
    %v5608 = vunpack.c.l.s8.bf16 %v4696
    %v5609 = vunpack.c.l.s8.bf16 %v4697
    %v5610 = vunpack.c.l.s8.bf16 %v4698
    %v5611 = vunpack.c.l.s8.bf16 %v4699
    %v5612 = vunpack.c.l.s8.bf16 %v4700
    %v5613 = vunpack.c.h.s8.bf16 %v4693
    %v5614 = vunpack.c.h.s8.bf16 %v4694
    %v5615 = vunpack.c.h.s8.bf16 %v4695
    %v5616 = vunpack.c.h.s8.bf16 %v4696
    %v5617 = vunpack.c.h.s8.bf16 %v4697
    %v5618 = vunpack.c.h.s8.bf16 %v4698
    %v5619 = vunpack.c.h.s8.bf16 %v4699
    %v5620 = vunpack.c.h.s8.bf16 %v4700
    %v5621 = vunpack.c.l.s8.bf16 %v4701
    %v5622 = vunpack.c.l.s8.bf16 %v4702
    %v5623 = vunpack.c.l.s8.bf16 %v4703
    %v5624 = vunpack.c.l.s8.bf16 %v4704
    %v5625 = vunpack.c.l.s8.bf16 %v4705
    %v5626 = vunpack.c.l.s8.bf16 %v4706
    %v5627 = vunpack.c.l.s8.bf16 %v4707
    %v5628 = vunpack.c.l.s8.bf16 %v4708
    %v5629 = vunpack.c.h.s8.bf16 %v4701
    %v5630 = vunpack.c.h.s8.bf16 %v4702
    %v5631 = vunpack.c.h.s8.bf16 %v4703
    %v5632 = vunpack.c.h.s8.bf16 %v4704
    %v5633 = vunpack.c.h.s8.bf16 %v4705
    %v5634 = vunpack.c.h.s8.bf16 %v4706
    %v5635 = vunpack.c.h.s8.bf16 %v4707
    %v5636 = vunpack.c.h.s8.bf16 %v4708
    %v5637 = vunpack.c.l.s8.bf16 %v4709
    %v5638 = vunpack.c.l.s8.bf16 %v4710
    %v5639 = vunpack.c.l.s8.bf16 %v4711
    %v5640 = vunpack.c.l.s8.bf16 %v4712
    %v5641 = vunpack.c.l.s8.bf16 %v4713
    %v5642 = vunpack.c.l.s8.bf16 %v4714
    %v5643 = vunpack.c.l.s8.bf16 %v4715
    %v5644 = vunpack.c.l.s8.bf16 %v4716
    %v5645 = vunpack.c.h.s8.bf16 %v4709
    %v5646 = vunpack.c.h.s8.bf16 %v4710
    %v5647 = vunpack.c.h.s8.bf16 %v4711
    %v5648 = vunpack.c.h.s8.bf16 %v4712
    %v5649 = vunpack.c.h.s8.bf16 %v4713
    %v5650 = vunpack.c.h.s8.bf16 %v4714
    %v5651 = vunpack.c.h.s8.bf16 %v4715
    %v5652 = vunpack.c.h.s8.bf16 %v4716
    %v5653 = vunpack.c.l.s8.bf16 %v4717
    %v5654 = vunpack.c.l.s8.bf16 %v4718
    %v5655 = vunpack.c.l.s8.bf16 %v4719
    %v5656 = vunpack.c.l.s8.bf16 %v4720
    %v5657 = vunpack.c.l.s8.bf16 %v4721
    %v5658 = vunpack.c.l.s8.bf16 %v4722
    %v5659 = vunpack.c.l.s8.bf16 %v4723
    %v5660 = vunpack.c.l.s8.bf16 %v4724
    %v5661 = vunpack.c.h.s8.bf16 %v4717
    %v5662 = vunpack.c.h.s8.bf16 %v4718
    %v5663 = vunpack.c.h.s8.bf16 %v4719
    %v5664 = vunpack.c.h.s8.bf16 %v4720
    %v5665 = vunpack.c.h.s8.bf16 %v4721
    %v5666 = vunpack.c.h.s8.bf16 %v4722
    %v5667 = vunpack.c.h.s8.bf16 %v4723
    %v5668 = vunpack.c.h.s8.bf16 %v4724
    %v5669 = vunpack.c.l.s8.bf16 %v4725
    %v5670 = vunpack.c.l.s8.bf16 %v4726
    %v5671 = vunpack.c.l.s8.bf16 %v4727
    %v5672 = vunpack.c.l.s8.bf16 %v4728
    %v5673 = vunpack.c.l.s8.bf16 %v4729
    %v5674 = vunpack.c.l.s8.bf16 %v4730
    %v5675 = vunpack.c.l.s8.bf16 %v4731
    %v5676 = vunpack.c.l.s8.bf16 %v4732
    %v5677 = vunpack.c.h.s8.bf16 %v4725
    %v5678 = vunpack.c.h.s8.bf16 %v4726
    %v5679 = vunpack.c.h.s8.bf16 %v4727
    %v5680 = vunpack.c.h.s8.bf16 %v4728
    %v5681 = vunpack.c.h.s8.bf16 %v4729
    %v5682 = vunpack.c.h.s8.bf16 %v4730
    %v5683 = vunpack.c.h.s8.bf16 %v4731
    %v5684 = vunpack.c.h.s8.bf16 %v4732
    %v5685 = vunpack.c.l.s8.bf16 %v4733
    %v5686 = vunpack.c.l.s8.bf16 %v4734
    %v5687 = vunpack.c.l.s8.bf16 %v4735
    %v5688 = vunpack.c.l.s8.bf16 %v4736
    %v5689 = vunpack.c.l.s8.bf16 %v4737
    %v5690 = vunpack.c.l.s8.bf16 %v4738
    %v5691 = vunpack.c.l.s8.bf16 %v4739
    %v5692 = vunpack.c.l.s8.bf16 %v4740
    %v5693 = vunpack.c.h.s8.bf16 %v4733
    %v5694 = vunpack.c.h.s8.bf16 %v4734
    %v5695 = vunpack.c.h.s8.bf16 %v4735
    %v5696 = vunpack.c.h.s8.bf16 %v4736
    %v5697 = vunpack.c.h.s8.bf16 %v4737
    %v5698 = vunpack.c.h.s8.bf16 %v4738
    %v5699 = vunpack.c.h.s8.bf16 %v4739
    %v5700 = vunpack.c.h.s8.bf16 %v4740
    %v5701 = vunpack.c.l.s8.bf16 %v4741
    %v5702 = vunpack.c.l.s8.bf16 %v4742
    %v5703 = vunpack.c.l.s8.bf16 %v4743
    %v5704 = vunpack.c.l.s8.bf16 %v4744
    %v5705 = vunpack.c.l.s8.bf16 %v4745
    %v5706 = vunpack.c.l.s8.bf16 %v4746
    %v5707 = vunpack.c.l.s8.bf16 %v4747
    %v5708 = vunpack.c.l.s8.bf16 %v4748
    %v5709 = vunpack.c.h.s8.bf16 %v4741
    %v5710 = vunpack.c.h.s8.bf16 %v4742
    %v5711 = vunpack.c.h.s8.bf16 %v4743
    %v5712 = vunpack.c.h.s8.bf16 %v4744
    %v5713 = vunpack.c.h.s8.bf16 %v4745
    %v5714 = vunpack.c.h.s8.bf16 %v4746
    %v5715 = vunpack.c.h.s8.bf16 %v4747
    %v5716 = vunpack.c.h.s8.bf16 %v4748
    %v5717 = vunpack.c.l.s8.bf16 %v4749
    %v5718 = vunpack.c.l.s8.bf16 %v4750
    %v5719 = vunpack.c.l.s8.bf16 %v4751
    %v5720 = vunpack.c.l.s8.bf16 %v4752
    %v5721 = vunpack.c.l.s8.bf16 %v4753
    %v5722 = vunpack.c.l.s8.bf16 %v4754
    %v5723 = vunpack.c.l.s8.bf16 %v4755
    %v5724 = vunpack.c.l.s8.bf16 %v4756
    %v5725 = vunpack.c.h.s8.bf16 %v4749
    %v5726 = vunpack.c.h.s8.bf16 %v4750
    %v5727 = vunpack.c.h.s8.bf16 %v4751
    %v5728 = vunpack.c.h.s8.bf16 %v4752
    %v5729 = vunpack.c.h.s8.bf16 %v4753
    %v5730 = vunpack.c.h.s8.bf16 %v4754
    %v5731 = vunpack.c.h.s8.bf16 %v4755
    %v5732 = vunpack.c.h.s8.bf16 %v4756
    %v5733 = vunpack.c.l.s8.bf16 %v4757
    %v5734 = vunpack.c.l.s8.bf16 %v4758
    %v5735 = vunpack.c.l.s8.bf16 %v4759
    %v5736 = vunpack.c.l.s8.bf16 %v4760
    %v5737 = vunpack.c.l.s8.bf16 %v4761
    %v5738 = vunpack.c.l.s8.bf16 %v4762
    %v5739 = vunpack.c.l.s8.bf16 %v4763
    %v5740 = vunpack.c.l.s8.bf16 %v4764
    %v5741 = vunpack.c.h.s8.bf16 %v4757
    %v5742 = vunpack.c.h.s8.bf16 %v4758
    %v5743 = vunpack.c.h.s8.bf16 %v4759
    %v5744 = vunpack.c.h.s8.bf16 %v4760
    %v5745 = vunpack.c.h.s8.bf16 %v4761
    %v5746 = vunpack.c.h.s8.bf16 %v4762
    %v5747 = vunpack.c.h.s8.bf16 %v4763
    %v5748 = vunpack.c.h.s8.bf16 %v4764
    %v5749 = vunpack.c.l.s8.bf16 %v4765
    %v5750 = vunpack.c.l.s8.bf16 %v4766
    %v5751 = vunpack.c.l.s8.bf16 %v4767
    %v5752 = vunpack.c.l.s8.bf16 %v4768
    %v5753 = vunpack.c.l.s8.bf16 %v4769
    %v5754 = vunpack.c.l.s8.bf16 %v4770
    %v5755 = vunpack.c.l.s8.bf16 %v4771
    %v5756 = vunpack.c.l.s8.bf16 %v4772
    %v5757 = vunpack.c.h.s8.bf16 %v4765
    %v5758 = vunpack.c.h.s8.bf16 %v4766
    %v5759 = vunpack.c.h.s8.bf16 %v4767
    %v5760 = vunpack.c.h.s8.bf16 %v4768
    %v5761 = vunpack.c.h.s8.bf16 %v4769
    %v5762 = vunpack.c.h.s8.bf16 %v4770
    %v5763 = vunpack.c.h.s8.bf16 %v4771
    %v5764 = vunpack.c.h.s8.bf16 %v4772
    %v5765 = vunpack.c.l.s8.bf16 %v4773
    %v5766 = vunpack.c.l.s8.bf16 %v4774
    %v5767 = vunpack.c.l.s8.bf16 %v4775
    %v5768 = vunpack.c.l.s8.bf16 %v4776
    %v5769 = vunpack.c.l.s8.bf16 %v4777
    %v5770 = vunpack.c.l.s8.bf16 %v4778
    %v5771 = vunpack.c.l.s8.bf16 %v4779
    %v5772 = vunpack.c.l.s8.bf16 %v4780
    %v5773 = vunpack.c.h.s8.bf16 %v4773
    %v5774 = vunpack.c.h.s8.bf16 %v4774
    %v5775 = vunpack.c.h.s8.bf16 %v4775
    %v5776 = vunpack.c.h.s8.bf16 %v4776
    %v5777 = vunpack.c.h.s8.bf16 %v4777
    %v5778 = vunpack.c.h.s8.bf16 %v4778
    %v5779 = vunpack.c.h.s8.bf16 %v4779
    %v5780 = vunpack.c.h.s8.bf16 %v4780
    %v5781 = vunpack.c.l.s8.bf16 %v4781
    %v5782 = vunpack.c.l.s8.bf16 %v4782
    %v5783 = vunpack.c.l.s8.bf16 %v4783
    %v5784 = vunpack.c.l.s8.bf16 %v4784
    %v5785 = vunpack.c.l.s8.bf16 %v4785
    %v5786 = vunpack.c.l.s8.bf16 %v4786
    %v5787 = vunpack.c.l.s8.bf16 %v4787
    %v5788 = vunpack.c.l.s8.bf16 %v4788
    %v5789 = vunpack.c.h.s8.bf16 %v4781
    %v5790 = vunpack.c.h.s8.bf16 %v4782
    %v5791 = vunpack.c.h.s8.bf16 %v4783
    %v5792 = vunpack.c.h.s8.bf16 %v4784
    %v5793 = vunpack.c.h.s8.bf16 %v4785
    %v5794 = vunpack.c.h.s8.bf16 %v4786
    %v5795 = vunpack.c.h.s8.bf16 %v4787
    %v5796 = vunpack.c.h.s8.bf16 %v4788
    %v5797 = vunpack.c.l.s8.bf16 %v4789
    %v5798 = vunpack.c.l.s8.bf16 %v4790
    %v5799 = vunpack.c.l.s8.bf16 %v4791
    %v5800 = vunpack.c.l.s8.bf16 %v4792
    %v5801 = vunpack.c.l.s8.bf16 %v4793
    %v5802 = vunpack.c.l.s8.bf16 %v4794
    %v5803 = vunpack.c.l.s8.bf16 %v4795
    %v5804 = vunpack.c.l.s8.bf16 %v4796
    %v5805 = vunpack.c.h.s8.bf16 %v4789
    %v5806 = vunpack.c.h.s8.bf16 %v4790
    %v5807 = vunpack.c.h.s8.bf16 %v4791
    %v5808 = vunpack.c.h.s8.bf16 %v4792
    %v5809 = vunpack.c.h.s8.bf16 %v4793
    %v5810 = vunpack.c.h.s8.bf16 %v4794
    %v5811 = vunpack.c.h.s8.bf16 %v4795
    %v5812 = vunpack.c.h.s8.bf16 %v4796
    %v5813 = vunpack.c.l.s8.bf16 %v4797
    %v5814 = vunpack.c.l.s8.bf16 %v4798
    %v5815 = vunpack.c.l.s8.bf16 %v4799
    %v5816 = vunpack.c.l.s8.bf16 %v4800
    %v5817 = vunpack.c.l.s8.bf16 %v4801
    %v5818 = vunpack.c.l.s8.bf16 %v4802
    %v5819 = vunpack.c.l.s8.bf16 %v4803
    %v5820 = vunpack.c.l.s8.bf16 %v4804
    %v5821 = vunpack.c.h.s8.bf16 %v4797
    %v5822 = vunpack.c.h.s8.bf16 %v4798
    %v5823 = vunpack.c.h.s8.bf16 %v4799
    %v5824 = vunpack.c.h.s8.bf16 %v4800
    %v5825 = vunpack.c.h.s8.bf16 %v4801
    %v5826 = vunpack.c.h.s8.bf16 %v4802
    %v5827 = vunpack.c.h.s8.bf16 %v4803
    %v5828 = vunpack.c.h.s8.bf16 %v4804
    %5829 = vmatprep.subr.bf16.mxu0 %v4806
    %5830 = vmatpush1.bf16.msra.mxu0 %v4805
    %5831 = vmatprep.subr.bf16.mxu0 %v4814
    %5832 = vmatpush1.bf16.msra.mxu0 %v4813
    %5833 = vmatprep.subr.bf16.mxu0 %v4822
    %5834 = vmatpush1.bf16.msra.mxu0 %v4821
    %5835 = vmatprep.subr.bf16.mxu0 %v4830
    %5836 = vmatpush1.bf16.msra.mxu0 %v4829
    %5837 = vmatprep.subr.bf16.mxu0 %v4838
    %5838 = vmatpush1.bf16.msra.mxu0 %v4837
    %5839 = vmatprep.subr.bf16.mxu0 %v4846
    %5840 = vmatpush1.bf16.msra.mxu0 %v4845
    %5841 = vmatprep.subr.bf16.mxu0 %v4854
    %5842 = vmatpush1.bf16.msra.mxu0 %v4853
    %5843 = vmatprep.subr.bf16.mxu0 %v4862
    %5844 = vmatpush1.bf16.msra.mxu0 %v4861
    %5845 = vmatprep.subr.bf16.mxu0 %v4870
    %5846 = vmatpush1.bf16.msra.mxu0 %v4869
    %5847 = vmatprep.subr.bf16.mxu0 %v4878
    %5848 = vmatpush1.bf16.msra.mxu0 %v4877
    %5849 = vmatprep.subr.bf16.mxu0 %v4886
    %5850 = vmatpush1.bf16.msra.mxu0 %v4885
    %5851 = vmatprep.subr.bf16.mxu0 %v4894
    %5852 = vmatpush1.bf16.msra.mxu0 %v4893
    %5853 = vmatprep.subr.bf16.mxu0 %v4902
    %5854 = vmatpush1.bf16.msra.mxu0 %v4901
    %5855 = vmatprep.subr.bf16.mxu0 %v4910
    %5856 = vmatpush1.bf16.msra.mxu0 %v4909
    %5857 = vmatprep.subr.bf16.mxu0 %v4918
    %5858 = vmatpush1.bf16.msra.mxu0 %v4917
    %5859 = vmatprep.subr.bf16.mxu0 %v4926
    %5860 = vmatpush1.bf16.msra.mxu0 %v4925
    %5861 = vmatprep.mubr.bf16.mxu0 %v4274
    %5862 = vmatmul.mubr.bf16.gmra.mrb[0].mxu0 %v4273
    %v5863 = vpop.f32.mrb[0].mxu0
    %v5864 = vadd.f32 0.0, %v5863
    %v5865 = vpop.f32.mrb[0].mxu0
    %v5866 = vadd.f32 0.0, %v5865
    %v5867 = vpop.f32.mrb[0].mxu0
    %v5868 = vpop.f32.mrb[0].mxu0
    %5869 = vdwg.mxu0
    %5870 = vmatprep.subr.bf16.mxu0 %v4934
    %5871 = vmatpush1.bf16.msra.mxu0 %v4933
    %5872 = vmatprep.subr.bf16.mxu0 %v4942
    %5873 = vmatpush1.bf16.msra.mxu0 %v4941
    %5874 = vmatprep.subr.bf16.mxu0 %v4950
    %5875 = vmatpush1.bf16.msra.mxu0 %v4949
    %5876 = vmatprep.subr.bf16.mxu0 %v4958
    %5877 = vmatpush1.bf16.msra.mxu0 %v4957
    %5878 = vmatprep.subr.bf16.mxu0 %v4966
    %5879 = vmatpush1.bf16.msra.mxu0 %v4965
    %5880 = vmatprep.subr.bf16.mxu0 %v4974
    %5881 = vmatpush1.bf16.msra.mxu0 %v4973
    %5882 = vmatprep.subr.bf16.mxu0 %v4982
    %5883 = vmatpush1.bf16.msra.mxu0 %v4981
    %5884 = vmatprep.subr.bf16.mxu0 %v4990
    %5885 = vmatpush1.bf16.msra.mxu0 %v4989
    %5886 = vmatprep.subr.bf16.mxu0 %v4998
    %5887 = vmatpush1.bf16.msra.mxu0 %v4997
    %5888 = vmatprep.subr.bf16.mxu0 %v5006
    %5889 = vmatpush1.bf16.msra.mxu0 %v5005
    %5890 = vmatprep.subr.bf16.mxu0 %v5014
    %5891 = vmatpush1.bf16.msra.mxu0 %v5013
    %5892 = vmatprep.subr.bf16.mxu0 %v5022
    %5893 = vmatpush1.bf16.msra.mxu0 %v5021
    %5894 = vmatprep.subr.bf16.mxu0 %v5030
    %5895 = vmatpush1.bf16.msra.mxu0 %v5029
    %5896 = vmatprep.subr.bf16.mxu0 %v5038
    %5897 = vmatpush1.bf16.msra.mxu0 %v5037
    %5898 = vmatprep.subr.bf16.mxu0 %v5046
    %5899 = vmatpush1.bf16.msra.mxu0 %v5045
    %5900 = vmatprep.subr.bf16.mxu0 %v5054
    %5901 = vmatpush1.bf16.msra.mxu0 %v5053
    %5902 = vmatprep.mubr.bf16.mxu0 %v4276
    %5903 = vmatmul.mubr.bf16.gmra.mrb[0].mxu0 %v4275
    %v5904 = vpop.f32.mrb[0].mxu0
    %v5905 = vadd.f32 %v5864, %v5904
    %v5906 = vpop.f32.mrb[0].mxu0
    %v5907 = vadd.f32 %v5866, %v5906
    %v5908 = vpop.f32.mrb[0].mxu0
    %v5909 = vpop.f32.mrb[0].mxu0
    %5910 = vdwg.mxu0
    %5911 = vmatprep.subr.bf16.mxu0 %v5062
    %5912 = vmatpush1.bf16.msra.mxu0 %v5061
    %5913 = vmatprep.subr.bf16.mxu0 %v5070
    %5914 = vmatpush1.bf16.msra.mxu0 %v5069
    %5915 = vmatprep.subr.bf16.mxu0 %v5078
    %5916 = vmatpush1.bf16.msra.mxu0 %v5077
    %5917 = vmatprep.subr.bf16.mxu0 %v5086
    %5918 = vmatpush1.bf16.msra.mxu0 %v5085
    %5919 = vmatprep.subr.bf16.mxu0 %v5094
    %5920 = vmatpush1.bf16.msra.mxu0 %v5093
    %5921 = vmatprep.subr.bf16.mxu0 %v5102
    %5922 = vmatpush1.bf16.msra.mxu0 %v5101
    %5923 = vmatprep.subr.bf16.mxu0 %v5110
    %5924 = vmatpush1.bf16.msra.mxu0 %v5109
    %5925 = vmatprep.subr.bf16.mxu0 %v5118
    %5926 = vmatpush1.bf16.msra.mxu0 %v5117
    %5927 = vmatprep.subr.bf16.mxu0 %v5126
    %5928 = vmatpush1.bf16.msra.mxu0 %v5125
    %5929 = vmatprep.subr.bf16.mxu0 %v5134
    %5930 = vmatpush1.bf16.msra.mxu0 %v5133
    %5931 = vmatprep.subr.bf16.mxu0 %v5142
    %5932 = vmatpush1.bf16.msra.mxu0 %v5141
    %5933 = vmatprep.subr.bf16.mxu0 %v5150
    %5934 = vmatpush1.bf16.msra.mxu0 %v5149
    %5935 = vmatprep.subr.bf16.mxu0 %v5158
    %5936 = vmatpush1.bf16.msra.mxu0 %v5157
    %5937 = vmatprep.subr.bf16.mxu0 %v5166
    %5938 = vmatpush1.bf16.msra.mxu0 %v5165
    %5939 = vmatprep.subr.bf16.mxu0 %v5174
    %5940 = vmatpush1.bf16.msra.mxu0 %v5173
    %5941 = vmatprep.subr.bf16.mxu0 %v5182
    %5942 = vmatpush1.bf16.msra.mxu0 %v5181
    %5943 = vmatprep.mubr.bf16.mxu0 %v4278
    %5944 = vmatmul.mubr.bf16.gmra.mrb[0].mxu0 %v4277
    %v5945 = vpop.f32.mrb[0].mxu0
    %v5946 = vadd.f32 %v5905, %v5945
    %v5947 = vpop.f32.mrb[0].mxu0
    %v5948 = vadd.f32 %v5907, %v5947
    %v5949 = vpop.f32.mrb[0].mxu0
    %v5950 = vpop.f32.mrb[0].mxu0
    %5951 = vdwg.mxu0
    %5952 = vmatprep.subr.bf16.mxu0 %v5190
    %5953 = vmatpush1.bf16.msra.mxu0 %v5189
    %5954 = vmatprep.subr.bf16.mxu0 %v5198
    %5955 = vmatpush1.bf16.msra.mxu0 %v5197
    %5956 = vmatprep.subr.bf16.mxu0 %v5206
    %5957 = vmatpush1.bf16.msra.mxu0 %v5205
    %5958 = vmatprep.subr.bf16.mxu0 %v5214
    %5959 = vmatpush1.bf16.msra.mxu0 %v5213
    %5960 = vmatprep.subr.bf16.mxu0 %v5222
    %5961 = vmatpush1.bf16.msra.mxu0 %v5221
    %5962 = vmatprep.subr.bf16.mxu0 %v5230
    %5963 = vmatpush1.bf16.msra.mxu0 %v5229
    %5964 = vmatprep.subr.bf16.mxu0 %v5238
    %5965 = vmatpush1.bf16.msra.mxu0 %v5237
    %5966 = vmatprep.subr.bf16.mxu0 %v5246
    %5967 = vmatpush1.bf16.msra.mxu0 %v5245
    %5968 = vmatprep.subr.bf16.mxu0 %v5254
    %5969 = vmatpush1.bf16.msra.mxu0 %v5253
    %5970 = vmatprep.subr.bf16.mxu0 %v5262
    %5971 = vmatpush1.bf16.msra.mxu0 %v5261
    %5972 = vmatprep.subr.bf16.mxu0 %v5270
    %5973 = vmatpush1.bf16.msra.mxu0 %v5269
    %5974 = vmatprep.subr.bf16.mxu0 %v5278
    %5975 = vmatpush1.bf16.msra.mxu0 %v5277
    %5976 = vmatprep.subr.bf16.mxu0 %v5286
    %5977 = vmatpush1.bf16.msra.mxu0 %v5285
    %5978 = vmatprep.subr.bf16.mxu0 %v5294
    %5979 = vmatpush1.bf16.msra.mxu0 %v5293
    %5980 = vmatprep.subr.bf16.mxu0 %v5302
    %5981 = vmatpush1.bf16.msra.mxu0 %v5301
    %5982 = vmatprep.subr.bf16.mxu0 %v5310
    %5983 = vmatpush1.bf16.msra.mxu0 %v5309
    %5984 = vmatprep.mubr.bf16.mxu0 %v4280
    %5985 = vmatmul.mubr.bf16.gmra.mrb[0].mxu0 %v4279
    %v5986 = vpop.f32.mrb[0].mxu0
    %v5987 = vadd.f32 %v5946, %v5986
    %v5988 = vpop.f32.mrb[0].mxu0
    %v5989 = vadd.f32 %v5948, %v5988
    %v5990 = vpop.f32.mrb[0].mxu0
    %v5991 = vpop.f32.mrb[0].mxu0
    %5992 = vdwg.mxu0
    %5993 = vmatprep.subr.bf16.mxu0 %v5318
    %5994 = vmatpush1.bf16.msra.mxu0 %v5317
    %5995 = vmatprep.subr.bf16.mxu0 %v5326
    %5996 = vmatpush1.bf16.msra.mxu0 %v5325
    %5997 = vmatprep.subr.bf16.mxu0 %v5334
    %5998 = vmatpush1.bf16.msra.mxu0 %v5333
    %5999 = vmatprep.subr.bf16.mxu0 %v5342
    %6000 = vmatpush1.bf16.msra.mxu0 %v5341
    %6001 = vmatprep.subr.bf16.mxu0 %v5350
    %6002 = vmatpush1.bf16.msra.mxu0 %v5349
    %6003 = vmatprep.subr.bf16.mxu0 %v5358
    %6004 = vmatpush1.bf16.msra.mxu0 %v5357
    %6005 = vmatprep.subr.bf16.mxu0 %v5366
    %6006 = vmatpush1.bf16.msra.mxu0 %v5365
    %6007 = vmatprep.subr.bf16.mxu0 %v5374
    %6008 = vmatpush1.bf16.msra.mxu0 %v5373
    %6009 = vmatprep.subr.bf16.mxu0 %v5382
    %6010 = vmatpush1.bf16.msra.mxu0 %v5381
    %6011 = vmatprep.subr.bf16.mxu0 %v5390
    %6012 = vmatpush1.bf16.msra.mxu0 %v5389
    %6013 = vmatprep.subr.bf16.mxu0 %v5398
    %6014 = vmatpush1.bf16.msra.mxu0 %v5397
    %6015 = vmatprep.subr.bf16.mxu0 %v5406
    %6016 = vmatpush1.bf16.msra.mxu0 %v5405
    %6017 = vmatprep.subr.bf16.mxu0 %v5414
    %6018 = vmatpush1.bf16.msra.mxu0 %v5413
    %6019 = vmatprep.subr.bf16.mxu0 %v5422
    %6020 = vmatpush1.bf16.msra.mxu0 %v5421
    %6021 = vmatprep.subr.bf16.mxu0 %v5430
    %6022 = vmatpush1.bf16.msra.mxu0 %v5429
    %6023 = vmatprep.subr.bf16.mxu0 %v5438
    %6024 = vmatpush1.bf16.msra.mxu0 %v5437
    %6025 = vmatprep.mubr.bf16.mxu0 %v4282
    %6026 = vmatmul.mubr.bf16.gmra.mrb[0].mxu0 %v4281
    %v6027 = vpop.f32.mrb[0].mxu0
    %v6028 = vadd.f32 %v5987, %v6027
    %v6029 = vpop.f32.mrb[0].mxu0
    %v6030 = vadd.f32 %v5989, %v6029
    %v6031 = vpop.f32.mrb[0].mxu0
    %v6032 = vpop.f32.mrb[0].mxu0
    %6033 = vdwg.mxu0
    %6034 = vmatprep.subr.bf16.mxu0 %v5446
    %6035 = vmatpush1.bf16.msra.mxu0 %v5445
    %6036 = vmatprep.subr.bf16.mxu0 %v5454
    %6037 = vmatpush1.bf16.msra.mxu0 %v5453
    %6038 = vmatprep.subr.bf16.mxu0 %v5462
    %6039 = vmatpush1.bf16.msra.mxu0 %v5461
    %6040 = vmatprep.subr.bf16.mxu0 %v5470
    %6041 = vmatpush1.bf16.msra.mxu0 %v5469
    %6042 = vmatprep.subr.bf16.mxu0 %v5478
    %6043 = vmatpush1.bf16.msra.mxu0 %v5477
    %6044 = vmatprep.subr.bf16.mxu0 %v5486
    %6045 = vmatpush1.bf16.msra.mxu0 %v5485
    %6046 = vmatprep.subr.bf16.mxu0 %v5494
    %6047 = vmatpush1.bf16.msra.mxu0 %v5493
    %6048 = vmatprep.subr.bf16.mxu0 %v5502
    %6049 = vmatpush1.bf16.msra.mxu0 %v5501
    %6050 = vmatprep.subr.bf16.mxu0 %v5510
    %6051 = vmatpush1.bf16.msra.mxu0 %v5509
    %6052 = vmatprep.subr.bf16.mxu0 %v5518
    %6053 = vmatpush1.bf16.msra.mxu0 %v5517
    %6054 = vmatprep.subr.bf16.mxu0 %v5526
    %6055 = vmatpush1.bf16.msra.mxu0 %v5525
    %6056 = vmatprep.subr.bf16.mxu0 %v5534
    %6057 = vmatpush1.bf16.msra.mxu0 %v5533
    %6058 = vmatprep.subr.bf16.mxu0 %v5542
    %6059 = vmatpush1.bf16.msra.mxu0 %v5541
    %6060 = vmatprep.subr.bf16.mxu0 %v5550
    %6061 = vmatpush1.bf16.msra.mxu0 %v5549
    %6062 = vmatprep.subr.bf16.mxu0 %v5558
    %6063 = vmatpush1.bf16.msra.mxu0 %v5557
    %6064 = vmatprep.subr.bf16.mxu0 %v5566
    %6065 = vmatpush1.bf16.msra.mxu0 %v5565
    %6066 = vmatprep.mubr.bf16.mxu0 %v4284
    %6067 = vmatmul.mubr.bf16.gmra.mrb[0].mxu0 %v4283
    %v6068 = vpop.f32.mrb[0].mxu0
    %v6069 = vadd.f32 %v6028, %v6068
    %v6070 = vpop.f32.mrb[0].mxu0
    %v6071 = vadd.f32 %v6030, %v6070
    %v6072 = vpop.f32.mrb[0].mxu0
    %v6073 = vpop.f32.mrb[0].mxu0
    %6074 = vdwg.mxu0
    %6075 = vmatprep.subr.bf16.mxu0 %v5574
    %6076 = vmatpush1.bf16.msra.mxu0 %v5573
    %6077 = vmatprep.subr.bf16.mxu0 %v5582
    %6078 = vmatpush1.bf16.msra.mxu0 %v5581
    %6079 = vmatprep.subr.bf16.mxu0 %v5590
    %6080 = vmatpush1.bf16.msra.mxu0 %v5589
    %6081 = vmatprep.subr.bf16.mxu0 %v5598
    %6082 = vmatpush1.bf16.msra.mxu0 %v5597
    %6083 = vmatprep.subr.bf16.mxu0 %v5606
    %6084 = vmatpush1.bf16.msra.mxu0 %v5605
    %6085 = vmatprep.subr.bf16.mxu0 %v5614
    %6086 = vmatpush1.bf16.msra.mxu0 %v5613
    %6087 = vmatprep.subr.bf16.mxu0 %v5622
    %6088 = vmatpush1.bf16.msra.mxu0 %v5621
    %6089 = vmatprep.subr.bf16.mxu0 %v5630
    %6090 = vmatpush1.bf16.msra.mxu0 %v5629
    %6091 = vmatprep.subr.bf16.mxu0 %v5638
    %6092 = vmatpush1.bf16.msra.mxu0 %v5637
    %6093 = vmatprep.subr.bf16.mxu0 %v5646
    %6094 = vmatpush1.bf16.msra.mxu0 %v5645
    %6095 = vmatprep.subr.bf16.mxu0 %v5654
    %6096 = vmatpush1.bf16.msra.mxu0 %v5653
    %6097 = vmatprep.subr.bf16.mxu0 %v5662
    %6098 = vmatpush1.bf16.msra.mxu0 %v5661
    %6099 = vmatprep.subr.bf16.mxu0 %v5670
    %6100 = vmatpush1.bf16.msra.mxu0 %v5669
    %6101 = vmatprep.subr.bf16.mxu0 %v5678
    %6102 = vmatpush1.bf16.msra.mxu0 %v5677
    %6103 = vmatprep.subr.bf16.mxu0 %v5686
    %6104 = vmatpush1.bf16.msra.mxu0 %v5685
    %6105 = vmatprep.subr.bf16.mxu0 %v5694
    %6106 = vmatpush1.bf16.msra.mxu0 %v5693
    %6107 = vmatprep.mubr.bf16.mxu0 %v4286
    %6108 = vmatmul.mubr.bf16.gmra.mrb[0].mxu0 %v4285
    %v6109 = vpop.f32.mrb[0].mxu0
    %v6110 = vadd.f32 %v6069, %v6109
    %v6111 = vpop.f32.mrb[0].mxu0
    %v6112 = vadd.f32 %v6071, %v6111
    %v6113 = vpop.f32.mrb[0].mxu0
    %v6114 = vpop.f32.mrb[0].mxu0
    %6115 = vdwg.mxu0
    %6116 = vmatprep.subr.bf16.mxu0 %v5702
    %6117 = vmatpush1.bf16.msra.mxu0 %v5701
    %6118 = vmatprep.subr.bf16.mxu0 %v5710
    %6119 = vmatpush1.bf16.msra.mxu0 %v5709
    %6120 = vmatprep.subr.bf16.mxu0 %v5718
    %6121 = vmatpush1.bf16.msra.mxu0 %v5717
    %6122 = vmatprep.subr.bf16.mxu0 %v5726
    %6123 = vmatpush1.bf16.msra.mxu0 %v5725
    %6124 = vmatprep.subr.bf16.mxu0 %v5734
    %6125 = vmatpush1.bf16.msra.mxu0 %v5733
    %6126 = vmatprep.subr.bf16.mxu0 %v5742
    %6127 = vmatpush1.bf16.msra.mxu0 %v5741
    %6128 = vmatprep.subr.bf16.mxu0 %v5750
    %6129 = vmatpush1.bf16.msra.mxu0 %v5749
    %6130 = vmatprep.subr.bf16.mxu0 %v5758
    %6131 = vmatpush1.bf16.msra.mxu0 %v5757
    %6132 = vmatprep.subr.bf16.mxu0 %v5766
    %6133 = vmatpush1.bf16.msra.mxu0 %v5765
    %6134 = vmatprep.subr.bf16.mxu0 %v5774
    %6135 = vmatpush1.bf16.msra.mxu0 %v5773
    %6136 = vmatprep.subr.bf16.mxu0 %v5782
    %6137 = vmatpush1.bf16.msra.mxu0 %v5781
    %6138 = vmatprep.subr.bf16.mxu0 %v5790
    %6139 = vmatpush1.bf16.msra.mxu0 %v5789
    %6140 = vmatprep.subr.bf16.mxu0 %v5798
    %6141 = vmatpush1.bf16.msra.mxu0 %v5797
    %6142 = vmatprep.subr.bf16.mxu0 %v5806
    %6143 = vmatpush1.bf16.msra.mxu0 %v5805
    %6144 = vmatprep.subr.bf16.mxu0 %v5814
    %6145 = vmatpush1.bf16.msra.mxu0 %v5813
    %6146 = vmatprep.subr.bf16.mxu0 %v5822
    %6147 = vmatpush1.bf16.msra.mxu0 %v5821
    %6148 = vmatprep.mubr.bf16.mxu0 %v4288
    %6149 = vmatmul.mubr.bf16.gmra.mrb[0].mxu0 %v4287
    %v6150 = vpop.f32.mrb[0].mxu0
    %v6151 = vadd.f32 %v6110, %v6150
    %v6152 = vpop.f32.mrb[0].mxu0
    %v6153 = vadd.f32 %v6112, %v6152
    %v6154 = vpop.f32.mrb[0].mxu0
    %v6155 = vpop.f32.mrb[0].mxu0
    %6156 = vdwg.mxu0
    %6157 = vmatprep.subr.bf16.mxu0 %v4808
    %6158 = vmatpush1.bf16.msra.mxu0 %v4807
    %6159 = vmatprep.subr.bf16.mxu0 %v4816
    %6160 = vmatpush1.bf16.msra.mxu0 %v4815
    %6161 = vmatprep.subr.bf16.mxu0 %v4824
    %6162 = vmatpush1.bf16.msra.mxu0 %v4823
    %6163 = vmatprep.subr.bf16.mxu0 %v4832
    %6164 = vmatpush1.bf16.msra.mxu0 %v4831
    %6165 = vmatprep.subr.bf16.mxu0 %v4840
    %6166 = vmatpush1.bf16.msra.mxu0 %v4839
    %6167 = vmatprep.subr.bf16.mxu0 %v4848
    %6168 = vmatpush1.bf16.msra.mxu0 %v4847
    %6169 = vmatprep.subr.bf16.mxu0 %v4856
    %6170 = vmatpush1.bf16.msra.mxu0 %v4855
    %6171 = vmatprep.subr.bf16.mxu0 %v4864
    %6172 = vmatpush1.bf16.msra.mxu0 %v4863
    %6173 = vmatprep.subr.bf16.mxu0 %v4872
    %6174 = vmatpush1.bf16.msra.mxu0 %v4871
    %6175 = vmatprep.subr.bf16.mxu0 %v4880
    %6176 = vmatpush1.bf16.msra.mxu0 %v4879
    %6177 = vmatprep.subr.bf16.mxu0 %v4888
    %6178 = vmatpush1.bf16.msra.mxu0 %v4887
    %6179 = vmatprep.subr.bf16.mxu0 %v4896
    %6180 = vmatpush1.bf16.msra.mxu0 %v4895
    %6181 = vmatprep.subr.bf16.mxu0 %v4904
    %6182 = vmatpush1.bf16.msra.mxu0 %v4903
    %6183 = vmatprep.subr.bf16.mxu0 %v4912
    %6184 = vmatpush1.bf16.msra.mxu0 %v4911
    %6185 = vmatprep.subr.bf16.mxu0 %v4920
    %6186 = vmatpush1.bf16.msra.mxu0 %v4919
    %6187 = vmatprep.subr.bf16.mxu0 %v4928
    %6188 = vmatpush1.bf16.msra.mxu0 %v4927
    %6189 = vmatprep.mubr.bf16.mxu0 %v4274
    %6190 = vmatmul.mubr.bf16.gmra.mrb[0].mxu0 %v4273
    %v6191 = vpop.f32.mrb[0].mxu0
    %v6192 = vadd.f32 0.0, %v6191
    %v6193 = vpop.f32.mrb[0].mxu0
    %v6194 = vadd.f32 0.0, %v6193
    %v6195 = vpop.f32.mrb[0].mxu0
    %v6196 = vpop.f32.mrb[0].mxu0
    %6197 = vdwg.mxu0
    %6198 = vmatprep.subr.bf16.mxu0 %v4936
    %6199 = vmatpush1.bf16.msra.mxu0 %v4935
    %6200 = vmatprep.subr.bf16.mxu0 %v4944
    %6201 = vmatpush1.bf16.msra.mxu0 %v4943
    %6202 = vmatprep.subr.bf16.mxu0 %v4952
    %6203 = vmatpush1.bf16.msra.mxu0 %v4951
    %6204 = vmatprep.subr.bf16.mxu0 %v4960
    %6205 = vmatpush1.bf16.msra.mxu0 %v4959
    %6206 = vmatprep.subr.bf16.mxu0 %v4968
    %6207 = vmatpush1.bf16.msra.mxu0 %v4967
    %6208 = vmatprep.subr.bf16.mxu0 %v4976
    %6209 = vmatpush1.bf16.msra.mxu0 %v4975
    %6210 = vmatprep.subr.bf16.mxu0 %v4984
    %6211 = vmatpush1.bf16.msra.mxu0 %v4983
    %6212 = vmatprep.subr.bf16.mxu0 %v4992
    %6213 = vmatpush1.bf16.msra.mxu0 %v4991
    %6214 = vmatprep.subr.bf16.mxu0 %v5000
    %6215 = vmatpush1.bf16.msra.mxu0 %v4999
    %6216 = vmatprep.subr.bf16.mxu0 %v5008
    %6217 = vmatpush1.bf16.msra.mxu0 %v5007
    %6218 = vmatprep.subr.bf16.mxu0 %v5016
    %6219 = vmatpush1.bf16.msra.mxu0 %v5015
    %6220 = vmatprep.subr.bf16.mxu0 %v5024
    %6221 = vmatpush1.bf16.msra.mxu0 %v5023
    %6222 = vmatprep.subr.bf16.mxu0 %v5032
    %6223 = vmatpush1.bf16.msra.mxu0 %v5031
    %6224 = vmatprep.subr.bf16.mxu0 %v5040
    %6225 = vmatpush1.bf16.msra.mxu0 %v5039
    %6226 = vmatprep.subr.bf16.mxu0 %v5048
    %6227 = vmatpush1.bf16.msra.mxu0 %v5047
    %6228 = vmatprep.subr.bf16.mxu0 %v5056
    %6229 = vmatpush1.bf16.msra.mxu0 %v5055
    %6230 = vmatprep.mubr.bf16.mxu0 %v4276
    %6231 = vmatmul.mubr.bf16.gmra.mrb[0].mxu0 %v4275
    %v6232 = vpop.f32.mrb[0].mxu0
    %v6233 = vadd.f32 %v6192, %v6232
    %v6234 = vpop.f32.mrb[0].mxu0
    %v6235 = vadd.f32 %v6194, %v6234
    %v6236 = vpop.f32.mrb[0].mxu0
    %v6237 = vpop.f32.mrb[0].mxu0
    %6238 = vdwg.mxu0
    %6239 = vmatprep.subr.bf16.mxu0 %v5064
    %6240 = vmatpush1.bf16.msra.mxu0 %v5063
    %6241 = vmatprep.subr.bf16.mxu0 %v5072
    %6242 = vmatpush1.bf16.msra.mxu0 %v5071
    %6243 = vmatprep.subr.bf16.mxu0 %v5080
    %6244 = vmatpush1.bf16.msra.mxu0 %v5079
    %6245 = vmatprep.subr.bf16.mxu0 %v5088
    %6246 = vmatpush1.bf16.msra.mxu0 %v5087
    %6247 = vmatprep.subr.bf16.mxu0 %v5096
    %6248 = vmatpush1.bf16.msra.mxu0 %v5095
    %6249 = vmatprep.subr.bf16.mxu0 %v5104
    %6250 = vmatpush1.bf16.msra.mxu0 %v5103
    %6251 = vmatprep.subr.bf16.mxu0 %v5112
    %6252 = vmatpush1.bf16.msra.mxu0 %v5111
    %6253 = vmatprep.subr.bf16.mxu0 %v5120
    %6254 = vmatpush1.bf16.msra.mxu0 %v5119
    %6255 = vmatprep.subr.bf16.mxu0 %v5128
    %6256 = vmatpush1.bf16.msra.mxu0 %v5127
    %6257 = vmatprep.subr.bf16.mxu0 %v5136
    %6258 = vmatpush1.bf16.msra.mxu0 %v5135
    %6259 = vmatprep.subr.bf16.mxu0 %v5144
    %6260 = vmatpush1.bf16.msra.mxu0 %v5143
    %6261 = vmatprep.subr.bf16.mxu0 %v5152
    %6262 = vmatpush1.bf16.msra.mxu0 %v5151
    %6263 = vmatprep.subr.bf16.mxu0 %v5160
    %6264 = vmatpush1.bf16.msra.mxu0 %v5159
    %6265 = vmatprep.subr.bf16.mxu0 %v5168
    %6266 = vmatpush1.bf16.msra.mxu0 %v5167
    %6267 = vmatprep.subr.bf16.mxu0 %v5176
    %6268 = vmatpush1.bf16.msra.mxu0 %v5175
    %6269 = vmatprep.subr.bf16.mxu0 %v5184
    %6270 = vmatpush1.bf16.msra.mxu0 %v5183
    %6271 = vmatprep.mubr.bf16.mxu0 %v4278
    %6272 = vmatmul.mubr.bf16.gmra.mrb[0].mxu0 %v4277
    %v6273 = vpop.f32.mrb[0].mxu0
    %v6274 = vadd.f32 %v6233, %v6273
    %v6275 = vpop.f32.mrb[0].mxu0
    %v6276 = vadd.f32 %v6235, %v6275
    %v6277 = vpop.f32.mrb[0].mxu0
    %v6278 = vpop.f32.mrb[0].mxu0
    %6279 = vdwg.mxu0
    %6280 = vmatprep.subr.bf16.mxu0 %v5192
    %6281 = vmatpush1.bf16.msra.mxu0 %v5191
    %6282 = vmatprep.subr.bf16.mxu0 %v5200
    %6283 = vmatpush1.bf16.msra.mxu0 %v5199
    %6284 = vmatprep.subr.bf16.mxu0 %v5208
    %6285 = vmatpush1.bf16.msra.mxu0 %v5207
    %6286 = vmatprep.subr.bf16.mxu0 %v5216
    %6287 = vmatpush1.bf16.msra.mxu0 %v5215
    %6288 = vmatprep.subr.bf16.mxu0 %v5224
    %6289 = vmatpush1.bf16.msra.mxu0 %v5223
    %6290 = vmatprep.subr.bf16.mxu0 %v5232
    %6291 = vmatpush1.bf16.msra.mxu0 %v5231
    %6292 = vmatprep.subr.bf16.mxu0 %v5240
    %6293 = vmatpush1.bf16.msra.mxu0 %v5239
    %6294 = vmatprep.subr.bf16.mxu0 %v5248
    %6295 = vmatpush1.bf16.msra.mxu0 %v5247
    %6296 = vmatprep.subr.bf16.mxu0 %v5256
    %6297 = vmatpush1.bf16.msra.mxu0 %v5255
    %6298 = vmatprep.subr.bf16.mxu0 %v5264
    %6299 = vmatpush1.bf16.msra.mxu0 %v5263
    %6300 = vmatprep.subr.bf16.mxu0 %v5272
    %6301 = vmatpush1.bf16.msra.mxu0 %v5271
    %6302 = vmatprep.subr.bf16.mxu0 %v5280
    %6303 = vmatpush1.bf16.msra.mxu0 %v5279
    %6304 = vmatprep.subr.bf16.mxu0 %v5288
    %6305 = vmatpush1.bf16.msra.mxu0 %v5287
    %6306 = vmatprep.subr.bf16.mxu0 %v5296
    %6307 = vmatpush1.bf16.msra.mxu0 %v5295
    %6308 = vmatprep.subr.bf16.mxu0 %v5304
    %6309 = vmatpush1.bf16.msra.mxu0 %v5303
    %6310 = vmatprep.subr.bf16.mxu0 %v5312
    %6311 = vmatpush1.bf16.msra.mxu0 %v5311
    %6312 = vmatprep.mubr.bf16.mxu0 %v4280
    %6313 = vmatmul.mubr.bf16.gmra.mrb[0].mxu0 %v4279
    %v6314 = vpop.f32.mrb[0].mxu0
    %v6315 = vadd.f32 %v6274, %v6314
    %v6316 = vpop.f32.mrb[0].mxu0
    %v6317 = vadd.f32 %v6276, %v6316
    %v6318 = vpop.f32.mrb[0].mxu0
    %v6319 = vpop.f32.mrb[0].mxu0
    %6320 = vdwg.mxu0
    %6321 = vmatprep.subr.bf16.mxu0 %v5320
    %6322 = vmatpush1.bf16.msra.mxu0 %v5319
    %6323 = vmatprep.subr.bf16.mxu0 %v5328
    %6324 = vmatpush1.bf16.msra.mxu0 %v5327
    %6325 = vmatprep.subr.bf16.mxu0 %v5336
    %6326 = vmatpush1.bf16.msra.mxu0 %v5335
    %6327 = vmatprep.subr.bf16.mxu0 %v5344
    %6328 = vmatpush1.bf16.msra.mxu0 %v5343
    %6329 = vmatprep.subr.bf16.mxu0 %v5352
    %6330 = vmatpush1.bf16.msra.mxu0 %v5351
    %6331 = vmatprep.subr.bf16.mxu0 %v5360
    %6332 = vmatpush1.bf16.msra.mxu0 %v5359
    %6333 = vmatprep.subr.bf16.mxu0 %v5368
    %6334 = vmatpush1.bf16.msra.mxu0 %v5367
    %6335 = vmatprep.subr.bf16.mxu0 %v5376
    %6336 = vmatpush1.bf16.msra.mxu0 %v5375
    %6337 = vmatprep.subr.bf16.mxu0 %v5384
    %6338 = vmatpush1.bf16.msra.mxu0 %v5383
    %6339 = vmatprep.subr.bf16.mxu0 %v5392
    %6340 = vmatpush1.bf16.msra.mxu0 %v5391
    %6341 = vmatprep.subr.bf16.mxu0 %v5400
    %6342 = vmatpush1.bf16.msra.mxu0 %v5399
    %6343 = vmatprep.subr.bf16.mxu0 %v5408
    %6344 = vmatpush1.bf16.msra.mxu0 %v5407
    %6345 = vmatprep.subr.bf16.mxu0 %v5416
    %6346 = vmatpush1.bf16.msra.mxu0 %v5415
    %6347 = vmatprep.subr.bf16.mxu0 %v5424
    %6348 = vmatpush1.bf16.msra.mxu0 %v5423
    %6349 = vmatprep.subr.bf16.mxu0 %v5432
    %6350 = vmatpush1.bf16.msra.mxu0 %v5431
    %6351 = vmatprep.subr.bf16.mxu0 %v5440
    %6352 = vmatpush1.bf16.msra.mxu0 %v5439
    %6353 = vmatprep.mubr.bf16.mxu0 %v4282
    %6354 = vmatmul.mubr.bf16.gmra.mrb[0].mxu0 %v4281
    %v6355 = vpop.f32.mrb[0].mxu0
    %v6356 = vadd.f32 %v6315, %v6355
    %v6357 = vpop.f32.mrb[0].mxu0
    %v6358 = vadd.f32 %v6317, %v6357
    %v6359 = vpop.f32.mrb[0].mxu0
    %v6360 = vpop.f32.mrb[0].mxu0
    %6361 = vdwg.mxu0
    %6362 = vmatprep.subr.bf16.mxu0 %v5448
    %6363 = vmatpush1.bf16.msra.mxu0 %v5447
    %6364 = vmatprep.subr.bf16.mxu0 %v5456
    %6365 = vmatpush1.bf16.msra.mxu0 %v5455
    %6366 = vmatprep.subr.bf16.mxu0 %v5464
    %6367 = vmatpush1.bf16.msra.mxu0 %v5463
    %6368 = vmatprep.subr.bf16.mxu0 %v5472
    %6369 = vmatpush1.bf16.msra.mxu0 %v5471
    %6370 = vmatprep.subr.bf16.mxu0 %v5480
    %6371 = vmatpush1.bf16.msra.mxu0 %v5479
    %6372 = vmatprep.subr.bf16.mxu0 %v5488
    %6373 = vmatpush1.bf16.msra.mxu0 %v5487
    %6374 = vmatprep.subr.bf16.mxu0 %v5496
    %6375 = vmatpush1.bf16.msra.mxu0 %v5495
    %6376 = vmatprep.subr.bf16.mxu0 %v5504
    %6377 = vmatpush1.bf16.msra.mxu0 %v5503
    %6378 = vmatprep.subr.bf16.mxu0 %v5512
    %6379 = vmatpush1.bf16.msra.mxu0 %v5511
    %6380 = vmatprep.subr.bf16.mxu0 %v5520
    %6381 = vmatpush1.bf16.msra.mxu0 %v5519
    %6382 = vmatprep.subr.bf16.mxu0 %v5528
    %6383 = vmatpush1.bf16.msra.mxu0 %v5527
    %6384 = vmatprep.subr.bf16.mxu0 %v5536
    %6385 = vmatpush1.bf16.msra.mxu0 %v5535
    %6386 = vmatprep.subr.bf16.mxu0 %v5544
    %6387 = vmatpush1.bf16.msra.mxu0 %v5543
    %6388 = vmatprep.subr.bf16.mxu0 %v5552
    %6389 = vmatpush1.bf16.msra.mxu0 %v5551
    %6390 = vmatprep.subr.bf16.mxu0 %v5560
    %6391 = vmatpush1.bf16.msra.mxu0 %v5559
    %6392 = vmatprep.subr.bf16.mxu0 %v5568
    %6393 = vmatpush1.bf16.msra.mxu0 %v5567
    %6394 = vmatprep.mubr.bf16.mxu0 %v4284
    %6395 = vmatmul.mubr.bf16.gmra.mrb[0].mxu0 %v4283
    %v6396 = vpop.f32.mrb[0].mxu0
    %v6397 = vadd.f32 %v6356, %v6396
    %v6398 = vpop.f32.mrb[0].mxu0
    %v6399 = vadd.f32 %v6358, %v6398
    %v6400 = vpop.f32.mrb[0].mxu0
    %v6401 = vpop.f32.mrb[0].mxu0
    %6402 = vdwg.mxu0
    %6403 = vmatprep.subr.bf16.mxu0 %v5576
    %6404 = vmatpush1.bf16.msra.mxu0 %v5575
    %6405 = vmatprep.subr.bf16.mxu0 %v5584
    %6406 = vmatpush1.bf16.msra.mxu0 %v5583
    %6407 = vmatprep.subr.bf16.mxu0 %v5592
    %6408 = vmatpush1.bf16.msra.mxu0 %v5591
    %6409 = vmatprep.subr.bf16.mxu0 %v5600
    %6410 = vmatpush1.bf16.msra.mxu0 %v5599
    %6411 = vmatprep.subr.bf16.mxu0 %v5608
    %6412 = vmatpush1.bf16.msra.mxu0 %v5607
    %6413 = vmatprep.subr.bf16.mxu0 %v5616
    %6414 = vmatpush1.bf16.msra.mxu0 %v5615
    %6415 = vmatprep.subr.bf16.mxu0 %v5624
    %6416 = vmatpush1.bf16.msra.mxu0 %v5623
    %6417 = vmatprep.subr.bf16.mxu0 %v5632
    %6418 = vmatpush1.bf16.msra.mxu0 %v5631
    %6419 = vmatprep.subr.bf16.mxu0 %v5640
    %6420 = vmatpush1.bf16.msra.mxu0 %v5639
    %6421 = vmatprep.subr.bf16.mxu0 %v5648
    %6422 = vmatpush1.bf16.msra.mxu0 %v5647
    %6423 = vmatprep.subr.bf16.mxu0 %v5656
    %6424 = vmatpush1.bf16.msra.mxu0 %v5655
    %6425 = vmatprep.subr.bf16.mxu0 %v5664
    %6426 = vmatpush1.bf16.msra.mxu0 %v5663
    %6427 = vmatprep.subr.bf16.mxu0 %v5672
    %6428 = vmatpush1.bf16.msra.mxu0 %v5671
    %6429 = vmatprep.subr.bf16.mxu0 %v5680
    %6430 = vmatpush1.bf16.msra.mxu0 %v5679
    %6431 = vmatprep.subr.bf16.mxu0 %v5688
    %6432 = vmatpush1.bf16.msra.mxu0 %v5687
    %6433 = vmatprep.subr.bf16.mxu0 %v5696
    %6434 = vmatpush1.bf16.msra.mxu0 %v5695
    %6435 = vmatprep.mubr.bf16.mxu0 %v4286
    %6436 = vmatmul.mubr.bf16.gmra.mrb[0].mxu0 %v4285
    %v6437 = vpop.f32.mrb[0].mxu0
    %v6438 = vadd.f32 %v6397, %v6437
    %v6439 = vpop.f32.mrb[0].mxu0
    %v6440 = vadd.f32 %v6399, %v6439
    %v6441 = vpop.f32.mrb[0].mxu0
    %v6442 = vpop.f32.mrb[0].mxu0
    %6443 = vdwg.mxu0
    %6444 = vmatprep.subr.bf16.mxu0 %v5704
    %6445 = vmatpush1.bf16.msra.mxu0 %v5703
    %6446 = vmatprep.subr.bf16.mxu0 %v5712
    %6447 = vmatpush1.bf16.msra.mxu0 %v5711
    %6448 = vmatprep.subr.bf16.mxu0 %v5720
    %6449 = vmatpush1.bf16.msra.mxu0 %v5719
    %6450 = vmatprep.subr.bf16.mxu0 %v5728
    %6451 = vmatpush1.bf16.msra.mxu0 %v5727
    %6452 = vmatprep.subr.bf16.mxu0 %v5736
    %6453 = vmatpush1.bf16.msra.mxu0 %v5735
    %6454 = vmatprep.subr.bf16.mxu0 %v5744
    %6455 = vmatpush1.bf16.msra.mxu0 %v5743
    %6456 = vmatprep.subr.bf16.mxu0 %v5752
    %6457 = vmatpush1.bf16.msra.mxu0 %v5751
    %6458 = vmatprep.subr.bf16.mxu0 %v5760
    %6459 = vmatpush1.bf16.msra.mxu0 %v5759
    %6460 = vmatprep.subr.bf16.mxu0 %v5768
    %6461 = vmatpush1.bf16.msra.mxu0 %v5767
    %6462 = vmatprep.subr.bf16.mxu0 %v5776
    %6463 = vmatpush1.bf16.msra.mxu0 %v5775
    %6464 = vmatprep.subr.bf16.mxu0 %v5784
    %6465 = vmatpush1.bf16.msra.mxu0 %v5783
    %6466 = vmatprep.subr.bf16.mxu0 %v5792
    %6467 = vmatpush1.bf16.msra.mxu0 %v5791
    %6468 = vmatprep.subr.bf16.mxu0 %v5800
    %6469 = vmatpush1.bf16.msra.mxu0 %v5799
    %6470 = vmatprep.subr.bf16.mxu0 %v5808
    %6471 = vmatpush1.bf16.msra.mxu0 %v5807
    %6472 = vmatprep.subr.bf16.mxu0 %v5816
    %6473 = vmatpush1.bf16.msra.mxu0 %v5815
    %6474 = vmatprep.subr.bf16.mxu0 %v5824
    %6475 = vmatpush1.bf16.msra.mxu0 %v5823
    %6476 = vmatprep.mubr.bf16.mxu0 %v4288
    %6477 = vmatmul.mubr.bf16.gmra.mrb[0].mxu0 %v4287
    %v6478 = vpop.f32.mrb[0].mxu0
    %v6479 = vadd.f32 %v6438, %v6478
    %v6480 = vpop.f32.mrb[0].mxu0
    %v6481 = vadd.f32 %v6440, %v6480
    %v6482 = vpop.f32.mrb[0].mxu0
    %v6483 = vpop.f32.mrb[0].mxu0
    %6484 = vdwg.mxu0
    %6485 = vmatprep.subr.bf16.mxu0 %v4810
    %6486 = vmatpush1.bf16.msra.mxu0 %v4809
    %6487 = vmatprep.subr.bf16.mxu0 %v4818
    %6488 = vmatpush1.bf16.msra.mxu0 %v4817
    %6489 = vmatprep.subr.bf16.mxu0 %v4826
    %6490 = vmatpush1.bf16.msra.mxu0 %v4825
    %6491 = vmatprep.subr.bf16.mxu0 %v4834
    %6492 = vmatpush1.bf16.msra.mxu0 %v4833
    %6493 = vmatprep.subr.bf16.mxu0 %v4842
    %6494 = vmatpush1.bf16.msra.mxu0 %v4841
    %6495 = vmatprep.subr.bf16.mxu0 %v4850
    %6496 = vmatpush1.bf16.msra.mxu0 %v4849
    %6497 = vmatprep.subr.bf16.mxu0 %v4858
    %6498 = vmatpush1.bf16.msra.mxu0 %v4857
    %6499 = vmatprep.subr.bf16.mxu0 %v4866
    %6500 = vmatpush1.bf16.msra.mxu0 %v4865
    %6501 = vmatprep.subr.bf16.mxu0 %v4874
    %6502 = vmatpush1.bf16.msra.mxu0 %v4873
    %6503 = vmatprep.subr.bf16.mxu0 %v4882
    %6504 = vmatpush1.bf16.msra.mxu0 %v4881
    %6505 = vmatprep.subr.bf16.mxu0 %v4890
    %6506 = vmatpush1.bf16.msra.mxu0 %v4889
    %6507 = vmatprep.subr.bf16.mxu0 %v4898
    %6508 = vmatpush1.bf16.msra.mxu0 %v4897
    %6509 = vmatprep.subr.bf16.mxu0 %v4906
    %6510 = vmatpush1.bf16.msra.mxu0 %v4905
    %6511 = vmatprep.subr.bf16.mxu0 %v4914
    %6512 = vmatpush1.bf16.msra.mxu0 %v4913
    %6513 = vmatprep.subr.bf16.mxu0 %v4922
    %6514 = vmatpush1.bf16.msra.mxu0 %v4921
    %6515 = vmatprep.subr.bf16.mxu0 %v4930
    %6516 = vmatpush1.bf16.msra.mxu0 %v4929
    %6517 = vmatprep.mubr.bf16.mxu0 %v4274
    %6518 = vmatmul.mubr.bf16.gmra.mrb[0].mxu0 %v4273
    %v6519 = vpop.f32.mrb[0].mxu0
    %v6520 = vadd.f32 0.0, %v6519
    %v6521 = vpop.f32.mrb[0].mxu0
    %v6522 = vadd.f32 0.0, %v6521
    %v6523 = vpop.f32.mrb[0].mxu0
    %v6524 = vpop.f32.mrb[0].mxu0
    %6525 = vdwg.mxu0
    %6526 = vmatprep.subr.bf16.mxu0 %v4938
    %6527 = vmatpush1.bf16.msra.mxu0 %v4937
    %6528 = vmatprep.subr.bf16.mxu0 %v4946
    %6529 = vmatpush1.bf16.msra.mxu0 %v4945
    %6530 = vmatprep.subr.bf16.mxu0 %v4954
    %6531 = vmatpush1.bf16.msra.mxu0 %v4953
    %6532 = vmatprep.subr.bf16.mxu0 %v4962
    %6533 = vmatpush1.bf16.msra.mxu0 %v4961
    %6534 = vmatprep.subr.bf16.mxu0 %v4970
    %6535 = vmatpush1.bf16.msra.mxu0 %v4969
    %6536 = vmatprep.subr.bf16.mxu0 %v4978
    %6537 = vmatpush1.bf16.msra.mxu0 %v4977
    %6538 = vmatprep.subr.bf16.mxu0 %v4986
    %6539 = vmatpush1.bf16.msra.mxu0 %v4985
    %6540 = vmatprep.subr.bf16.mxu0 %v4994
    %6541 = vmatpush1.bf16.msra.mxu0 %v4993
    %6542 = vmatprep.subr.bf16.mxu0 %v5002
    %6543 = vmatpush1.bf16.msra.mxu0 %v5001
    %6544 = vmatprep.subr.bf16.mxu0 %v5010
    %6545 = vmatpush1.bf16.msra.mxu0 %v5009
    %6546 = vmatprep.subr.bf16.mxu0 %v5018
    %6547 = vmatpush1.bf16.msra.mxu0 %v5017
    %6548 = vmatprep.subr.bf16.mxu0 %v5026
    %6549 = vmatpush1.bf16.msra.mxu0 %v5025
    %6550 = vmatprep.subr.bf16.mxu0 %v5034
    %6551 = vmatpush1.bf16.msra.mxu0 %v5033
    %6552 = vmatprep.subr.bf16.mxu0 %v5042
    %6553 = vmatpush1.bf16.msra.mxu0 %v5041
    %6554 = vmatprep.subr.bf16.mxu0 %v5050
    %6555 = vmatpush1.bf16.msra.mxu0 %v5049
    %6556 = vmatprep.subr.bf16.mxu0 %v5058
    %6557 = vmatpush1.bf16.msra.mxu0 %v5057
    %6558 = vmatprep.mubr.bf16.mxu0 %v4276
    %6559 = vmatmul.mubr.bf16.gmra.mrb[0].mxu0 %v4275
    %v6560 = vpop.f32.mrb[0].mxu0
    %v6561 = vadd.f32 %v6520, %v6560
    %v6562 = vpop.f32.mrb[0].mxu0
    %v6563 = vadd.f32 %v6522, %v6562
    %v6564 = vpop.f32.mrb[0].mxu0
    %v6565 = vpop.f32.mrb[0].mxu0
    %6566 = vdwg.mxu0
    %6567 = vmatprep.subr.bf16.mxu0 %v5066
    %6568 = vmatpush1.bf16.msra.mxu0 %v5065
    %6569 = vmatprep.subr.bf16.mxu0 %v5074
    %6570 = vmatpush1.bf16.msra.mxu0 %v5073
    %6571 = vmatprep.subr.bf16.mxu0 %v5082
    %6572 = vmatpush1.bf16.msra.mxu0 %v5081
    %6573 = vmatprep.subr.bf16.mxu0 %v5090
    %6574 = vmatpush1.bf16.msra.mxu0 %v5089
    %6575 = vmatprep.subr.bf16.mxu0 %v5098
    %6576 = vmatpush1.bf16.msra.mxu0 %v5097
    %6577 = vmatprep.subr.bf16.mxu0 %v5106
    %6578 = vmatpush1.bf16.msra.mxu0 %v5105
    %6579 = vmatprep.subr.bf16.mxu0 %v5114
    %6580 = vmatpush1.bf16.msra.mxu0 %v5113
    %6581 = vmatprep.subr.bf16.mxu0 %v5122
    %6582 = vmatpush1.bf16.msra.mxu0 %v5121
    %6583 = vmatprep.subr.bf16.mxu0 %v5130
    %6584 = vmatpush1.bf16.msra.mxu0 %v5129
    %6585 = vmatprep.subr.bf16.mxu0 %v5138
    %6586 = vmatpush1.bf16.msra.mxu0 %v5137
    %6587 = vmatprep.subr.bf16.mxu0 %v5146
    %6588 = vmatpush1.bf16.msra.mxu0 %v5145
    %6589 = vmatprep.subr.bf16.mxu0 %v5154
    %6590 = vmatpush1.bf16.msra.mxu0 %v5153
    %6591 = vmatprep.subr.bf16.mxu0 %v5162
    %6592 = vmatpush1.bf16.msra.mxu0 %v5161
    %6593 = vmatprep.subr.bf16.mxu0 %v5170
    %6594 = vmatpush1.bf16.msra.mxu0 %v5169
    %6595 = vmatprep.subr.bf16.mxu0 %v5178
    %6596 = vmatpush1.bf16.msra.mxu0 %v5177
    %6597 = vmatprep.subr.bf16.mxu0 %v5186
    %6598 = vmatpush1.bf16.msra.mxu0 %v5185
    %6599 = vmatprep.mubr.bf16.mxu0 %v4278
    %6600 = vmatmul.mubr.bf16.gmra.mrb[0].mxu0 %v4277
    %v6601 = vpop.f32.mrb[0].mxu0
    %v6602 = vadd.f32 %v6561, %v6601
    %v6603 = vpop.f32.mrb[0].mxu0
    %v6604 = vadd.f32 %v6563, %v6603
    %v6605 = vpop.f32.mrb[0].mxu0
    %v6606 = vpop.f32.mrb[0].mxu0
    %6607 = vdwg.mxu0
    %6608 = vmatprep.subr.bf16.mxu0 %v5194
    %6609 = vmatpush1.bf16.msra.mxu0 %v5193
    %6610 = vmatprep.subr.bf16.mxu0 %v5202
    %6611 = vmatpush1.bf16.msra.mxu0 %v5201
    %6612 = vmatprep.subr.bf16.mxu0 %v5210
    %6613 = vmatpush1.bf16.msra.mxu0 %v5209
    %6614 = vmatprep.subr.bf16.mxu0 %v5218
    %6615 = vmatpush1.bf16.msra.mxu0 %v5217
    %6616 = vmatprep.subr.bf16.mxu0 %v5226
    %6617 = vmatpush1.bf16.msra.mxu0 %v5225
    %6618 = vmatprep.subr.bf16.mxu0 %v5234
    %6619 = vmatpush1.bf16.msra.mxu0 %v5233
    %6620 = vmatprep.subr.bf16.mxu0 %v5242
    %6621 = vmatpush1.bf16.msra.mxu0 %v5241
    %6622 = vmatprep.subr.bf16.mxu0 %v5250
    %6623 = vmatpush1.bf16.msra.mxu0 %v5249
    %6624 = vmatprep.subr.bf16.mxu0 %v5258
    %6625 = vmatpush1.bf16.msra.mxu0 %v5257
    %6626 = vmatprep.subr.bf16.mxu0 %v5266
    %6627 = vmatpush1.bf16.msra.mxu0 %v5265
    %6628 = vmatprep.subr.bf16.mxu0 %v5274
    %6629 = vmatpush1.bf16.msra.mxu0 %v5273
    %6630 = vmatprep.subr.bf16.mxu0 %v5282
    %6631 = vmatpush1.bf16.msra.mxu0 %v5281
    %6632 = vmatprep.subr.bf16.mxu0 %v5290
    %6633 = vmatpush1.bf16.msra.mxu0 %v5289
    %6634 = vmatprep.subr.bf16.mxu0 %v5298
    %6635 = vmatpush1.bf16.msra.mxu0 %v5297
    %6636 = vmatprep.subr.bf16.mxu0 %v5306
    %6637 = vmatpush1.bf16.msra.mxu0 %v5305
    %6638 = vmatprep.subr.bf16.mxu0 %v5314
    %6639 = vmatpush1.bf16.msra.mxu0 %v5313
    %6640 = vmatprep.mubr.bf16.mxu0 %v4280
    %6641 = vmatmul.mubr.bf16.gmra.mrb[0].mxu0 %v4279
    %v6642 = vpop.f32.mrb[0].mxu0
    %v6643 = vadd.f32 %v6602, %v6642
    %v6644 = vpop.f32.mrb[0].mxu0
    %v6645 = vadd.f32 %v6604, %v6644
    %v6646 = vpop.f32.mrb[0].mxu0
    %v6647 = vpop.f32.mrb[0].mxu0
    %6648 = vdwg.mxu0
    %6649 = vmatprep.subr.bf16.mxu0 %v5322
    %6650 = vmatpush1.bf16.msra.mxu0 %v5321
    %6651 = vmatprep.subr.bf16.mxu0 %v5330
    %6652 = vmatpush1.bf16.msra.mxu0 %v5329
    %6653 = vmatprep.subr.bf16.mxu0 %v5338
    %6654 = vmatpush1.bf16.msra.mxu0 %v5337
    %6655 = vmatprep.subr.bf16.mxu0 %v5346
    %6656 = vmatpush1.bf16.msra.mxu0 %v5345
    %6657 = vmatprep.subr.bf16.mxu0 %v5354
    %6658 = vmatpush1.bf16.msra.mxu0 %v5353
    %6659 = vmatprep.subr.bf16.mxu0 %v5362
    %6660 = vmatpush1.bf16.msra.mxu0 %v5361
    %6661 = vmatprep.subr.bf16.mxu0 %v5370
    %6662 = vmatpush1.bf16.msra.mxu0 %v5369
    %6663 = vmatprep.subr.bf16.mxu0 %v5378
    %6664 = vmatpush1.bf16.msra.mxu0 %v5377
    %6665 = vmatprep.subr.bf16.mxu0 %v5386
    %6666 = vmatpush1.bf16.msra.mxu0 %v5385
    %6667 = vmatprep.subr.bf16.mxu0 %v5394
    %6668 = vmatpush1.bf16.msra.mxu0 %v5393
    %6669 = vmatprep.subr.bf16.mxu0 %v5402
    %6670 = vmatpush1.bf16.msra.mxu0 %v5401
    %6671 = vmatprep.subr.bf16.mxu0 %v5410
    %6672 = vmatpush1.bf16.msra.mxu0 %v5409
    %6673 = vmatprep.subr.bf16.mxu0 %v5418
    %6674 = vmatpush1.bf16.msra.mxu0 %v5417
    %6675 = vmatprep.subr.bf16.mxu0 %v5426
    %6676 = vmatpush1.bf16.msra.mxu0 %v5425
    %6677 = vmatprep.subr.bf16.mxu0 %v5434
    %6678 = vmatpush1.bf16.msra.mxu0 %v5433
    %6679 = vmatprep.subr.bf16.mxu0 %v5442
    %6680 = vmatpush1.bf16.msra.mxu0 %v5441
    %6681 = vmatprep.mubr.bf16.mxu0 %v4282
    %6682 = vmatmul.mubr.bf16.gmra.mrb[0].mxu0 %v4281
    %v6683 = vpop.f32.mrb[0].mxu0
    %v6684 = vadd.f32 %v6643, %v6683
    %v6685 = vpop.f32.mrb[0].mxu0
    %v6686 = vadd.f32 %v6645, %v6685
    %v6687 = vpop.f32.mrb[0].mxu0
    %v6688 = vpop.f32.mrb[0].mxu0
    %6689 = vdwg.mxu0
    %6690 = vmatprep.subr.bf16.mxu0 %v5450
    %6691 = vmatpush1.bf16.msra.mxu0 %v5449
    %6692 = vmatprep.subr.bf16.mxu0 %v5458
    %6693 = vmatpush1.bf16.msra.mxu0 %v5457
    %6694 = vmatprep.subr.bf16.mxu0 %v5466
    %6695 = vmatpush1.bf16.msra.mxu0 %v5465
    %6696 = vmatprep.subr.bf16.mxu0 %v5474
    %6697 = vmatpush1.bf16.msra.mxu0 %v5473
    %6698 = vmatprep.subr.bf16.mxu0 %v5482
    %6699 = vmatpush1.bf16.msra.mxu0 %v5481
    %6700 = vmatprep.subr.bf16.mxu0 %v5490
    %6701 = vmatpush1.bf16.msra.mxu0 %v5489
    %6702 = vmatprep.subr.bf16.mxu0 %v5498
    %6703 = vmatpush1.bf16.msra.mxu0 %v5497
    %6704 = vmatprep.subr.bf16.mxu0 %v5506
    %6705 = vmatpush1.bf16.msra.mxu0 %v5505
    %6706 = vmatprep.subr.bf16.mxu0 %v5514
    %6707 = vmatpush1.bf16.msra.mxu0 %v5513
    %6708 = vmatprep.subr.bf16.mxu0 %v5522
    %6709 = vmatpush1.bf16.msra.mxu0 %v5521
    %6710 = vmatprep.subr.bf16.mxu0 %v5530
    %6711 = vmatpush1.bf16.msra.mxu0 %v5529
    %6712 = vmatprep.subr.bf16.mxu0 %v5538
    %6713 = vmatpush1.bf16.msra.mxu0 %v5537
    %6714 = vmatprep.subr.bf16.mxu0 %v5546
    %6715 = vmatpush1.bf16.msra.mxu0 %v5545
    %6716 = vmatprep.subr.bf16.mxu0 %v5554
    %6717 = vmatpush1.bf16.msra.mxu0 %v5553
    %6718 = vmatprep.subr.bf16.mxu0 %v5562
    %6719 = vmatpush1.bf16.msra.mxu0 %v5561
    %6720 = vmatprep.subr.bf16.mxu0 %v5570
    %6721 = vmatpush1.bf16.msra.mxu0 %v5569
    %6722 = vmatprep.mubr.bf16.mxu0 %v4284
    %6723 = vmatmul.mubr.bf16.gmra.mrb[0].mxu0 %v4283
    %v6724 = vpop.f32.mrb[0].mxu0
    %v6725 = vadd.f32 %v6684, %v6724
    %v6726 = vpop.f32.mrb[0].mxu0
    %v6727 = vadd.f32 %v6686, %v6726
    %v6728 = vpop.f32.mrb[0].mxu0
    %v6729 = vpop.f32.mrb[0].mxu0
    %6730 = vdwg.mxu0
    %6731 = vmatprep.subr.bf16.mxu0 %v5578
    %6732 = vmatpush1.bf16.msra.mxu0 %v5577
    %6733 = vmatprep.subr.bf16.mxu0 %v5586
    %6734 = vmatpush1.bf16.msra.mxu0 %v5585
    %6735 = vmatprep.subr.bf16.mxu0 %v5594
    %6736 = vmatpush1.bf16.msra.mxu0 %v5593
    %6737 = vmatprep.subr.bf16.mxu0 %v5602
    %6738 = vmatpush1.bf16.msra.mxu0 %v5601
    %6739 = vmatprep.subr.bf16.mxu0 %v5610
    %6740 = vmatpush1.bf16.msra.mxu0 %v5609
    %6741 = vmatprep.subr.bf16.mxu0 %v5618
    %6742 = vmatpush1.bf16.msra.mxu0 %v5617
    %6743 = vmatprep.subr.bf16.mxu0 %v5626
    %6744 = vmatpush1.bf16.msra.mxu0 %v5625
    %6745 = vmatprep.subr.bf16.mxu0 %v5634
    %6746 = vmatpush1.bf16.msra.mxu0 %v5633
    %6747 = vmatprep.subr.bf16.mxu0 %v5642
    %6748 = vmatpush1.bf16.msra.mxu0 %v5641
    %6749 = vmatprep.subr.bf16.mxu0 %v5650
    %6750 = vmatpush1.bf16.msra.mxu0 %v5649
    %6751 = vmatprep.subr.bf16.mxu0 %v5658
    %6752 = vmatpush1.bf16.msra.mxu0 %v5657
    %6753 = vmatprep.subr.bf16.mxu0 %v5666
    %6754 = vmatpush1.bf16.msra.mxu0 %v5665
    %6755 = vmatprep.subr.bf16.mxu0 %v5674
    %6756 = vmatpush1.bf16.msra.mxu0 %v5673
    %6757 = vmatprep.subr.bf16.mxu0 %v5682
    %6758 = vmatpush1.bf16.msra.mxu0 %v5681
    %6759 = vmatprep.subr.bf16.mxu0 %v5690
    %6760 = vmatpush1.bf16.msra.mxu0 %v5689
    %6761 = vmatprep.subr.bf16.mxu0 %v5698
    %6762 = vmatpush1.bf16.msra.mxu0 %v5697
    %6763 = vmatprep.mubr.bf16.mxu0 %v4286
    %6764 = vmatmul.mubr.bf16.gmra.mrb[0].mxu0 %v4285
    %v6765 = vpop.f32.mrb[0].mxu0
    %v6766 = vadd.f32 %v6725, %v6765
    %v6767 = vpop.f32.mrb[0].mxu0
    %v6768 = vadd.f32 %v6727, %v6767
    %v6769 = vpop.f32.mrb[0].mxu0
    %v6770 = vpop.f32.mrb[0].mxu0
    %6771 = vdwg.mxu0
    %6772 = vmatprep.subr.bf16.mxu0 %v5706
    %6773 = vmatpush1.bf16.msra.mxu0 %v5705
    %6774 = vmatprep.subr.bf16.mxu0 %v5714
    %6775 = vmatpush1.bf16.msra.mxu0 %v5713
    %6776 = vmatprep.subr.bf16.mxu0 %v5722
    %6777 = vmatpush1.bf16.msra.mxu0 %v5721
    %6778 = vmatprep.subr.bf16.mxu0 %v5730
    %6779 = vmatpush1.bf16.msra.mxu0 %v5729
    %6780 = vmatprep.subr.bf16.mxu0 %v5738
    %6781 = vmatpush1.bf16.msra.mxu0 %v5737
    %6782 = vmatprep.subr.bf16.mxu0 %v5746
    %6783 = vmatpush1.bf16.msra.mxu0 %v5745
    %6784 = vmatprep.subr.bf16.mxu0 %v5754
    %6785 = vmatpush1.bf16.msra.mxu0 %v5753
    %6786 = vmatprep.subr.bf16.mxu0 %v5762
    %6787 = vmatpush1.bf16.msra.mxu0 %v5761
    %6788 = vmatprep.subr.bf16.mxu0 %v5770
    %6789 = vmatpush1.bf16.msra.mxu0 %v5769
    %6790 = vmatprep.subr.bf16.mxu0 %v5778
    %6791 = vmatpush1.bf16.msra.mxu0 %v5777
    %6792 = vmatprep.subr.bf16.mxu0 %v5786
    %6793 = vmatpush1.bf16.msra.mxu0 %v5785
    %6794 = vmatprep.subr.bf16.mxu0 %v5794
    %6795 = vmatpush1.bf16.msra.mxu0 %v5793
    %6796 = vmatprep.subr.bf16.mxu0 %v5802
    %6797 = vmatpush1.bf16.msra.mxu0 %v5801
    %6798 = vmatprep.subr.bf16.mxu0 %v5810
    %6799 = vmatpush1.bf16.msra.mxu0 %v5809
    %6800 = vmatprep.subr.bf16.mxu0 %v5818
    %6801 = vmatpush1.bf16.msra.mxu0 %v5817
    %6802 = vmatprep.subr.bf16.mxu0 %v5826
    %6803 = vmatpush1.bf16.msra.mxu0 %v5825
    %6804 = vmatprep.mubr.bf16.mxu0 %v4288
    %6805 = vmatmul.mubr.bf16.gmra.mrb[0].mxu0 %v4287
    %v6806 = vpop.f32.mrb[0].mxu0
    %v6807 = vadd.f32 %v6766, %v6806
    %v6808 = vpop.f32.mrb[0].mxu0
    %v6809 = vadd.f32 %v6768, %v6808
    %v6810 = vpop.f32.mrb[0].mxu0
    %v6811 = vpop.f32.mrb[0].mxu0
    %6812 = vdwg.mxu0
    %6813 = vmatprep.subr.bf16.mxu0 %v4812
    %6814 = vmatpush1.bf16.msra.mxu0 %v4811
    %6815 = vmatprep.subr.bf16.mxu0 %v4820
    %6816 = vmatpush1.bf16.msra.mxu0 %v4819
    %6817 = vmatprep.subr.bf16.mxu0 %v4828
    %6818 = vmatpush1.bf16.msra.mxu0 %v4827
    %6819 = vmatprep.subr.bf16.mxu0 %v4836
    %6820 = vmatpush1.bf16.msra.mxu0 %v4835
    %6821 = vmatprep.subr.bf16.mxu0 %v4844
    %6822 = vmatpush1.bf16.msra.mxu0 %v4843
    %6823 = vmatprep.subr.bf16.mxu0 %v4852
    %6824 = vmatpush1.bf16.msra.mxu0 %v4851
    %6825 = vmatprep.subr.bf16.mxu0 %v4860
    %6826 = vmatpush1.bf16.msra.mxu0 %v4859
    %6827 = vmatprep.subr.bf16.mxu0 %v4868
    %6828 = vmatpush1.bf16.msra.mxu0 %v4867
    %6829 = vmatprep.subr.bf16.mxu0 %v4876
    %6830 = vmatpush1.bf16.msra.mxu0 %v4875
    %6831 = vmatprep.subr.bf16.mxu0 %v4884
    %6832 = vmatpush1.bf16.msra.mxu0 %v4883
    %6833 = vmatprep.subr.bf16.mxu0 %v4892
    %6834 = vmatpush1.bf16.msra.mxu0 %v4891
    %6835 = vmatprep.subr.bf16.mxu0 %v4900
    %6836 = vmatpush1.bf16.msra.mxu0 %v4899
    %6837 = vmatprep.subr.bf16.mxu0 %v4908
    %6838 = vmatpush1.bf16.msra.mxu0 %v4907
    %6839 = vmatprep.subr.bf16.mxu0 %v4916
    %6840 = vmatpush1.bf16.msra.mxu0 %v4915
    %6841 = vmatprep.subr.bf16.mxu0 %v4924
    %6842 = vmatpush1.bf16.msra.mxu0 %v4923
    %6843 = vmatprep.subr.bf16.mxu0 %v4932
    %6844 = vmatpush1.bf16.msra.mxu0 %v4931
    %6845 = vmatprep.mubr.bf16.mxu0 %v4274
    %6846 = vmatmul.mubr.bf16.gmra.mrb[0].mxu0 %v4273
    %v6847 = vpop.f32.mrb[0].mxu0
    %v6848 = vadd.f32 0.0, %v6847
    %v6849 = vpop.f32.mrb[0].mxu0
    %v6850 = vadd.f32 0.0, %v6849
    %v6851 = vpop.f32.mrb[0].mxu0
    %v6852 = vpop.f32.mrb[0].mxu0
    %6853 = vdwg.mxu0
    %6854 = vmatprep.subr.bf16.mxu0 %v4940
    %6855 = vmatpush1.bf16.msra.mxu0 %v4939
    %6856 = vmatprep.subr.bf16.mxu0 %v4948
    %6857 = vmatpush1.bf16.msra.mxu0 %v4947
    %6858 = vmatprep.subr.bf16.mxu0 %v4956
    %6859 = vmatpush1.bf16.msra.mxu0 %v4955
    %6860 = vmatprep.subr.bf16.mxu0 %v4964
    %6861 = vmatpush1.bf16.msra.mxu0 %v4963
    %6862 = vmatprep.subr.bf16.mxu0 %v4972
    %6863 = vmatpush1.bf16.msra.mxu0 %v4971
    %6864 = vmatprep.subr.bf16.mxu0 %v4980
    %6865 = vmatpush1.bf16.msra.mxu0 %v4979
    %6866 = vmatprep.subr.bf16.mxu0 %v4988
    %6867 = vmatpush1.bf16.msra.mxu0 %v4987
    %6868 = vmatprep.subr.bf16.mxu0 %v4996
    %6869 = vmatpush1.bf16.msra.mxu0 %v4995
    %6870 = vmatprep.subr.bf16.mxu0 %v5004
    %6871 = vmatpush1.bf16.msra.mxu0 %v5003
    %6872 = vmatprep.subr.bf16.mxu0 %v5012
    %6873 = vmatpush1.bf16.msra.mxu0 %v5011
    %6874 = vmatprep.subr.bf16.mxu0 %v5020
    %6875 = vmatpush1.bf16.msra.mxu0 %v5019
    %6876 = vmatprep.subr.bf16.mxu0 %v5028
    %6877 = vmatpush1.bf16.msra.mxu0 %v5027
    %6878 = vmatprep.subr.bf16.mxu0 %v5036
    %6879 = vmatpush1.bf16.msra.mxu0 %v5035
    %6880 = vmatprep.subr.bf16.mxu0 %v5044
    %6881 = vmatpush1.bf16.msra.mxu0 %v5043
    %6882 = vmatprep.subr.bf16.mxu0 %v5052
    %6883 = vmatpush1.bf16.msra.mxu0 %v5051
    %6884 = vmatprep.subr.bf16.mxu0 %v5060
    %6885 = vmatpush1.bf16.msra.mxu0 %v5059
    %6886 = vmatprep.mubr.bf16.mxu0 %v4276
    %6887 = vmatmul.mubr.bf16.gmra.mrb[0].mxu0 %v4275
    %v6888 = vpop.f32.mrb[0].mxu0
    %v6889 = vadd.f32 %v6848, %v6888
    %v6890 = vpop.f32.mrb[0].mxu0
    %v6891 = vadd.f32 %v6850, %v6890
    %v6892 = vpop.f32.mrb[0].mxu0
    %v6893 = vpop.f32.mrb[0].mxu0
    %6894 = vdwg.mxu0
    %6895 = vmatprep.subr.bf16.mxu0 %v5068
    %6896 = vmatpush1.bf16.msra.mxu0 %v5067
    %6897 = vmatprep.subr.bf16.mxu0 %v5076
    %6898 = vmatpush1.bf16.msra.mxu0 %v5075
    %6899 = vmatprep.subr.bf16.mxu0 %v5084
    %6900 = vmatpush1.bf16.msra.mxu0 %v5083
    %6901 = vmatprep.subr.bf16.mxu0 %v5092
    %6902 = vmatpush1.bf16.msra.mxu0 %v5091
    %6903 = vmatprep.subr.bf16.mxu0 %v5100
    %6904 = vmatpush1.bf16.msra.mxu0 %v5099
    %6905 = vmatprep.subr.bf16.mxu0 %v5108
    %6906 = vmatpush1.bf16.msra.mxu0 %v5107
    %6907 = vmatprep.subr.bf16.mxu0 %v5116
    %6908 = vmatpush1.bf16.msra.mxu0 %v5115
    %6909 = vmatprep.subr.bf16.mxu0 %v5124
    %6910 = vmatpush1.bf16.msra.mxu0 %v5123
    %6911 = vmatprep.subr.bf16.mxu0 %v5132
    %6912 = vmatpush1.bf16.msra.mxu0 %v5131
    %6913 = vmatprep.subr.bf16.mxu0 %v5140
    %6914 = vmatpush1.bf16.msra.mxu0 %v5139
    %6915 = vmatprep.subr.bf16.mxu0 %v5148
    %6916 = vmatpush1.bf16.msra.mxu0 %v5147
    %6917 = vmatprep.subr.bf16.mxu0 %v5156
    %6918 = vmatpush1.bf16.msra.mxu0 %v5155
    %6919 = vmatprep.subr.bf16.mxu0 %v5164
    %6920 = vmatpush1.bf16.msra.mxu0 %v5163
    %6921 = vmatprep.subr.bf16.mxu0 %v5172
    %6922 = vmatpush1.bf16.msra.mxu0 %v5171
    %6923 = vmatprep.subr.bf16.mxu0 %v5180
    %6924 = vmatpush1.bf16.msra.mxu0 %v5179
    %6925 = vmatprep.subr.bf16.mxu0 %v5188
    %6926 = vmatpush1.bf16.msra.mxu0 %v5187
    %6927 = vmatprep.mubr.bf16.mxu0 %v4278
    %6928 = vmatmul.mubr.bf16.gmra.mrb[0].mxu0 %v4277
    %v6929 = vpop.f32.mrb[0].mxu0
    %v6930 = vadd.f32 %v6889, %v6929
    %v6931 = vpop.f32.mrb[0].mxu0
    %v6932 = vadd.f32 %v6891, %v6931
    %v6933 = vpop.f32.mrb[0].mxu0
    %v6934 = vpop.f32.mrb[0].mxu0
    %6935 = vdwg.mxu0
    %6936 = vmatprep.subr.bf16.mxu0 %v5196
    %6937 = vmatpush1.bf16.msra.mxu0 %v5195
    %6938 = vmatprep.subr.bf16.mxu0 %v5204
    %6939 = vmatpush1.bf16.msra.mxu0 %v5203
    %6940 = vmatprep.subr.bf16.mxu0 %v5212
    %6941 = vmatpush1.bf16.msra.mxu0 %v5211
    %6942 = vmatprep.subr.bf16.mxu0 %v5220
    %6943 = vmatpush1.bf16.msra.mxu0 %v5219
    %6944 = vmatprep.subr.bf16.mxu0 %v5228
    %6945 = vmatpush1.bf16.msra.mxu0 %v5227
    %6946 = vmatprep.subr.bf16.mxu0 %v5236
    %6947 = vmatpush1.bf16.msra.mxu0 %v5235
    %6948 = vmatprep.subr.bf16.mxu0 %v5244
    %6949 = vmatpush1.bf16.msra.mxu0 %v5243
    %6950 = vmatprep.subr.bf16.mxu0 %v5252
    %6951 = vmatpush1.bf16.msra.mxu0 %v5251
    %6952 = vmatprep.subr.bf16.mxu0 %v5260
    %6953 = vmatpush1.bf16.msra.mxu0 %v5259
    %6954 = vmatprep.subr.bf16.mxu0 %v5268
    %6955 = vmatpush1.bf16.msra.mxu0 %v5267
    %6956 = vmatprep.subr.bf16.mxu0 %v5276
    %6957 = vmatpush1.bf16.msra.mxu0 %v5275
    %6958 = vmatprep.subr.bf16.mxu0 %v5284
    %6959 = vmatpush1.bf16.msra.mxu0 %v5283
    %6960 = vmatprep.subr.bf16.mxu0 %v5292
    %6961 = vmatpush1.bf16.msra.mxu0 %v5291
    %6962 = vmatprep.subr.bf16.mxu0 %v5300
    %6963 = vmatpush1.bf16.msra.mxu0 %v5299
    %6964 = vmatprep.subr.bf16.mxu0 %v5308
    %6965 = vmatpush1.bf16.msra.mxu0 %v5307
    %6966 = vmatprep.subr.bf16.mxu0 %v5316
    %6967 = vmatpush1.bf16.msra.mxu0 %v5315
    %6968 = vmatprep.mubr.bf16.mxu0 %v4280
    %6969 = vmatmul.mubr.bf16.gmra.mrb[0].mxu0 %v4279
    %v6970 = vpop.f32.mrb[0].mxu0
    %v6971 = vadd.f32 %v6930, %v6970
    %v6972 = vpop.f32.mrb[0].mxu0
    %v6973 = vadd.f32 %v6932, %v6972
    %v6974 = vpop.f32.mrb[0].mxu0
    %v6975 = vpop.f32.mrb[0].mxu0
    %6976 = vdwg.mxu0
    %6977 = vmatprep.subr.bf16.mxu0 %v5324
    %6978 = vmatpush1.bf16.msra.mxu0 %v5323
    %6979 = vmatprep.subr.bf16.mxu0 %v5332
    %6980 = vmatpush1.bf16.msra.mxu0 %v5331
    %6981 = vmatprep.subr.bf16.mxu0 %v5340
    %6982 = vmatpush1.bf16.msra.mxu0 %v5339
    %6983 = vmatprep.subr.bf16.mxu0 %v5348
    %6984 = vmatpush1.bf16.msra.mxu0 %v5347
    %6985 = vmatprep.subr.bf16.mxu0 %v5356
    %6986 = vmatpush1.bf16.msra.mxu0 %v5355
    %6987 = vmatprep.subr.bf16.mxu0 %v5364
    %6988 = vmatpush1.bf16.msra.mxu0 %v5363
    %6989 = vmatprep.subr.bf16.mxu0 %v5372
    %6990 = vmatpush1.bf16.msra.mxu0 %v5371
    %6991 = vmatprep.subr.bf16.mxu0 %v5380
    %6992 = vmatpush1.bf16.msra.mxu0 %v5379
    %6993 = vmatprep.subr.bf16.mxu0 %v5388
    %6994 = vmatpush1.bf16.msra.mxu0 %v5387
    %6995 = vmatprep.subr.bf16.mxu0 %v5396
    %6996 = vmatpush1.bf16.msra.mxu0 %v5395
    %6997 = vmatprep.subr.bf16.mxu0 %v5404
    %6998 = vmatpush1.bf16.msra.mxu0 %v5403
    %6999 = vmatprep.subr.bf16.mxu0 %v5412
    %7000 = vmatpush1.bf16.msra.mxu0 %v5411
    %7001 = vmatprep.subr.bf16.mxu0 %v5420
    %7002 = vmatpush1.bf16.msra.mxu0 %v5419
    %7003 = vmatprep.subr.bf16.mxu0 %v5428
    %7004 = vmatpush1.bf16.msra.mxu0 %v5427
    %7005 = vmatprep.subr.bf16.mxu0 %v5436
    %7006 = vmatpush1.bf16.msra.mxu0 %v5435
    %7007 = vmatprep.subr.bf16.mxu0 %v5444
    %7008 = vmatpush1.bf16.msra.mxu0 %v5443
    %7009 = vmatprep.mubr.bf16.mxu0 %v4282
    %7010 = vmatmul.mubr.bf16.gmra.mrb[0].mxu0 %v4281
    %v7011 = vpop.f32.mrb[0].mxu0
    %v7012 = vadd.f32 %v6971, %v7011
    %v7013 = vpop.f32.mrb[0].mxu0
    %v7014 = vadd.f32 %v6973, %v7013
    %v7015 = vpop.f32.mrb[0].mxu0
    %v7016 = vpop.f32.mrb[0].mxu0
    %7017 = vdwg.mxu0
    %7018 = vmatprep.subr.bf16.mxu0 %v5452
    %7019 = vmatpush1.bf16.msra.mxu0 %v5451
    %7020 = vmatprep.subr.bf16.mxu0 %v5460
    %7021 = vmatpush1.bf16.msra.mxu0 %v5459
    %7022 = vmatprep.subr.bf16.mxu0 %v5468
    %7023 = vmatpush1.bf16.msra.mxu0 %v5467
    %7024 = vmatprep.subr.bf16.mxu0 %v5476
    %7025 = vmatpush1.bf16.msra.mxu0 %v5475
    %7026 = vmatprep.subr.bf16.mxu0 %v5484
    %7027 = vmatpush1.bf16.msra.mxu0 %v5483
    %7028 = vmatprep.subr.bf16.mxu0 %v5492
    %7029 = vmatpush1.bf16.msra.mxu0 %v5491
    %7030 = vmatprep.subr.bf16.mxu0 %v5500
    %7031 = vmatpush1.bf16.msra.mxu0 %v5499
    %7032 = vmatprep.subr.bf16.mxu0 %v5508
    %7033 = vmatpush1.bf16.msra.mxu0 %v5507
    %7034 = vmatprep.subr.bf16.mxu0 %v5516
    %7035 = vmatpush1.bf16.msra.mxu0 %v5515
    %7036 = vmatprep.subr.bf16.mxu0 %v5524
    %7037 = vmatpush1.bf16.msra.mxu0 %v5523
    %7038 = vmatprep.subr.bf16.mxu0 %v5532
    %7039 = vmatpush1.bf16.msra.mxu0 %v5531
    %7040 = vmatprep.subr.bf16.mxu0 %v5540
    %7041 = vmatpush1.bf16.msra.mxu0 %v5539
    %7042 = vmatprep.subr.bf16.mxu0 %v5548
    %7043 = vmatpush1.bf16.msra.mxu0 %v5547
    %7044 = vmatprep.subr.bf16.mxu0 %v5556
    %7045 = vmatpush1.bf16.msra.mxu0 %v5555
    %7046 = vmatprep.subr.bf16.mxu0 %v5564
    %7047 = vmatpush1.bf16.msra.mxu0 %v5563
    %7048 = vmatprep.subr.bf16.mxu0 %v5572
    %7049 = vmatpush1.bf16.msra.mxu0 %v5571
    %7050 = vmatprep.mubr.bf16.mxu0 %v4284
    %7051 = vmatmul.mubr.bf16.gmra.mrb[0].mxu0 %v4283
    %v7052 = vpop.f32.mrb[0].mxu0
    %v7053 = vadd.f32 %v7012, %v7052
    %v7054 = vpop.f32.mrb[0].mxu0
    %v7055 = vadd.f32 %v7014, %v7054
    %v7056 = vpop.f32.mrb[0].mxu0
    %v7057 = vpop.f32.mrb[0].mxu0
    %7058 = vdwg.mxu0
    %7059 = vmatprep.subr.bf16.mxu0 %v5580
    %7060 = vmatpush1.bf16.msra.mxu0 %v5579
    %7061 = vmatprep.subr.bf16.mxu0 %v5588
    %7062 = vmatpush1.bf16.msra.mxu0 %v5587
    %7063 = vmatprep.subr.bf16.mxu0 %v5596
    %7064 = vmatpush1.bf16.msra.mxu0 %v5595
    %7065 = vmatprep.subr.bf16.mxu0 %v5604
    %7066 = vmatpush1.bf16.msra.mxu0 %v5603
    %7067 = vmatprep.subr.bf16.mxu0 %v5612
    %7068 = vmatpush1.bf16.msra.mxu0 %v5611
    %7069 = vmatprep.subr.bf16.mxu0 %v5620
    %7070 = vmatpush1.bf16.msra.mxu0 %v5619
    %7071 = vmatprep.subr.bf16.mxu0 %v5628
    %7072 = vmatpush1.bf16.msra.mxu0 %v5627
    %7073 = vmatprep.subr.bf16.mxu0 %v5636
    %7074 = vmatpush1.bf16.msra.mxu0 %v5635
    %7075 = vmatprep.subr.bf16.mxu0 %v5644
    %7076 = vmatpush1.bf16.msra.mxu0 %v5643
    %7077 = vmatprep.subr.bf16.mxu0 %v5652
    %7078 = vmatpush1.bf16.msra.mxu0 %v5651
    %7079 = vmatprep.subr.bf16.mxu0 %v5660
    %7080 = vmatpush1.bf16.msra.mxu0 %v5659
    %7081 = vmatprep.subr.bf16.mxu0 %v5668
    %7082 = vmatpush1.bf16.msra.mxu0 %v5667
    %7083 = vmatprep.subr.bf16.mxu0 %v5676
    %7084 = vmatpush1.bf16.msra.mxu0 %v5675
    %7085 = vmatprep.subr.bf16.mxu0 %v5684
    %7086 = vmatpush1.bf16.msra.mxu0 %v5683
    %7087 = vmatprep.subr.bf16.mxu0 %v5692
    %7088 = vmatpush1.bf16.msra.mxu0 %v5691
    %7089 = vmatprep.subr.bf16.mxu0 %v5700
    %7090 = vmatpush1.bf16.msra.mxu0 %v5699
    %7091 = vmatprep.mubr.bf16.mxu0 %v4286
    %7092 = vmatmul.mubr.bf16.gmra.mrb[0].mxu0 %v4285
    %v7093 = vpop.f32.mrb[0].mxu0
    %v7094 = vadd.f32 %v7053, %v7093
    %v7095 = vpop.f32.mrb[0].mxu0
    %v7096 = vadd.f32 %v7055, %v7095
    %v7097 = vpop.f32.mrb[0].mxu0
    %v7098 = vpop.f32.mrb[0].mxu0
    %7099 = vdwg.mxu0
    %7100 = vmatprep.subr.bf16.mxu0 %v5708
    %7101 = vmatpush1.bf16.msra.mxu0 %v5707
    %7102 = vmatprep.subr.bf16.mxu0 %v5716
    %7103 = vmatpush1.bf16.msra.mxu0 %v5715
    %7104 = vmatprep.subr.bf16.mxu0 %v5724
    %7105 = vmatpush1.bf16.msra.mxu0 %v5723
    %7106 = vmatprep.subr.bf16.mxu0 %v5732
    %7107 = vmatpush1.bf16.msra.mxu0 %v5731
    %7108 = vmatprep.subr.bf16.mxu0 %v5740
    %7109 = vmatpush1.bf16.msra.mxu0 %v5739
    %7110 = vmatprep.subr.bf16.mxu0 %v5748
    %7111 = vmatpush1.bf16.msra.mxu0 %v5747
    %7112 = vmatprep.subr.bf16.mxu0 %v5756
    %7113 = vmatpush1.bf16.msra.mxu0 %v5755
    %7114 = vmatprep.subr.bf16.mxu0 %v5764
    %7115 = vmatpush1.bf16.msra.mxu0 %v5763
    %7116 = vmatprep.subr.bf16.mxu0 %v5772
    %7117 = vmatpush1.bf16.msra.mxu0 %v5771
    %7118 = vmatprep.subr.bf16.mxu0 %v5780
    %7119 = vmatpush1.bf16.msra.mxu0 %v5779
    %7120 = vmatprep.subr.bf16.mxu0 %v5788
    %7121 = vmatpush1.bf16.msra.mxu0 %v5787
    %7122 = vmatprep.subr.bf16.mxu0 %v5796
    %7123 = vmatpush1.bf16.msra.mxu0 %v5795
    %7124 = vmatprep.subr.bf16.mxu0 %v5804
    %7125 = vmatpush1.bf16.msra.mxu0 %v5803
    %7126 = vmatprep.subr.bf16.mxu0 %v5812
    %7127 = vmatpush1.bf16.msra.mxu0 %v5811
    %7128 = vmatprep.subr.bf16.mxu0 %v5820
    %7129 = vmatpush1.bf16.msra.mxu0 %v5819
    %7130 = vmatprep.subr.bf16.mxu0 %v5828
    %7131 = vmatpush1.bf16.msra.mxu0 %v5827
    %7132 = vmatprep.mubr.bf16.mxu0 %v4288
    %7133 = vmatmul.mubr.bf16.gmra.mrb[0].mxu0 %v4287
    %v7134 = vpop.f32.mrb[0].mxu0
    %v7135 = vadd.f32 %v7094, %v7134
    %v7136 = vpop.f32.mrb[0].mxu0
    %v7137 = vadd.f32 %v7096, %v7136
    %v7138 = vpop.f32.mrb[0].mxu0
    %v7139 = vpop.f32.mrb[0].mxu0
    %7140 = vdwg.mxu0
    %v7141 = vld [vmem:[#allocation22] sm:$0xff]
    %v7143 = vlaneseq
    %v7144 = vshrl.u32 %v7143, 7
    %v7145 = vsub.s32 0, %v7144
    %v7146 = vrot.slane %v7141, %v7145
    %v7147 = vlaneseq
    %v7148 = vshrl.u32 %v7147, 7
    %v7149 = vsub.s32 1, %v7148
    %v7150 = vrot.slane %v7141, %v7149
    %v7151 = vlaneseq
    %v7152 = vshrl.u32 %v7151, 7
    %v7153 = vsub.s32 2, %v7152
    %v7154 = vrot.slane %v7141, %v7153
    %v7155 = vlaneseq
    %v7156 = vshrl.u32 %v7155, 7
    %v7157 = vsub.s32 3, %v7156
    %v7158 = vrot.slane %v7141, %v7157
    %v7159 = vlaneseq
    %v7160 = vshrl.u32 %v7159, 7
    %v7161 = vsub.s32 4, %v7160
    %v7162 = vrot.slane %v7141, %v7161
    %v7163 = vlaneseq
    %v7164 = vshrl.u32 %v7163, 7
    %v7165 = vsub.s32 5, %v7164
    %v7166 = vrot.slane %v7141, %v7165
    %v7167 = vlaneseq
    %v7168 = vshrl.u32 %v7167, 7
    %v7169 = vsub.s32 6, %v7168
    %v7170 = vrot.slane %v7141, %v7169
    %v7171 = vlaneseq
    %v7172 = vshrl.u32 %v7171, 7
    %v7173 = vsub.s32 7, %v7172
    %v7174 = vrot.slane %v7141, %v7173
    %v7183 = vmul.f32 %v6151, %v7146
    %v7184 = vmul.f32 %v6153, %v7150
    %v7185 = vmul.f32 %v6479, %v7154
    %v7186 = vmul.f32 %v6481, %v7158
    %v7187 = vmul.f32 %v6807, %v7162
    %v7188 = vmul.f32 %v6809, %v7166
    %v7189 = vmul.f32 %v7135, %v7170
    %v7190 = vmul.f32 %v7137, %v7174
    %v7191 = vld [vmem:[#allocation16] sm:$0xff]
    %v7193 = vlaneseq
    %v7194 = vshrl.u32 %v7193, 7
    %v7195 = vsub.s32 0, %v7194
    %v7196 = vrot.slane %v7191, %v7195
    %v7197 = vlaneseq
    %v7198 = vshrl.u32 %v7197, 7
    %v7199 = vsub.s32 1, %v7198
    %v7200 = vrot.slane %v7191, %v7199
    %v7201 = vlaneseq
    %v7202 = vshrl.u32 %v7201, 7
    %v7203 = vsub.s32 2, %v7202
    %v7204 = vrot.slane %v7191, %v7203
    %v7205 = vlaneseq
    %v7206 = vshrl.u32 %v7205, 7
    %v7207 = vsub.s32 3, %v7206
    %v7208 = vrot.slane %v7191, %v7207
    %v7209 = vlaneseq
    %v7210 = vshrl.u32 %v7209, 7
    %v7211 = vsub.s32 4, %v7210
    %v7212 = vrot.slane %v7191, %v7211
    %v7213 = vlaneseq
    %v7214 = vshrl.u32 %v7213, 7
    %v7215 = vsub.s32 5, %v7214
    %v7216 = vrot.slane %v7191, %v7215
    %v7217 = vlaneseq
    %v7218 = vshrl.u32 %v7217, 7
    %v7219 = vsub.s32 6, %v7218
    %v7220 = vrot.slane %v7191, %v7219
    %v7221 = vlaneseq
    %v7222 = vshrl.u32 %v7221, 7
    %v7223 = vsub.s32 7, %v7222
    %v7224 = vrot.slane %v7191, %v7223
    %v7233 = vadd.f32 %v7183, %v7196
    %v7234 = vadd.f32 %v7184, %v7200
    %v7235 = vadd.f32 %v7185, %v7204
    %v7236 = vadd.f32 %v7186, %v7208
    %v7237 = vadd.f32 %v7187, %v7212
    %v7238 = vadd.f32 %v7188, %v7216
    %v7239 = vadd.f32 %v7189, %v7220
    %v7240 = vadd.f32 %v7190, %v7224
    %v7241 = vmax.f32 %v7233, 0.0
    %v7242 = vmax.f32 %v7234, 0.0
    %v7243 = vmax.f32 %v7235, 0.0
    %v7244 = vmax.f32 %v7236, 0.0
    %v7245 = vmax.f32 %v7237, 0.0
    %v7246 = vmax.f32 %v7238, 0.0
    %v7247 = vmax.f32 %v7239, 0.0
    %v7248 = vmax.f32 %v7240, 0.0
    %v7249 = vpack.c.bf16 %v7241, %v7241
    %v7250 = vpack.c.bf16 %v7242, %v7242
    %v7251 = vpack.c.bf16 %v7243, %v7243
    %v7252 = vpack.c.bf16 %v7244, %v7244
    %v7253 = vpack.c.bf16 %v7245, %v7245
    %v7254 = vpack.c.bf16 %v7246, %v7246
    %v7255 = vpack.c.bf16 %v7247, %v7247
    %v7256 = vpack.c.bf16 %v7248, %v7248
    %s7257 = smul.u32 4, 2
    %s7258 = smul.u32 %s7257, 8
    %s7259 = sshll.u32 %s7258, 4
    %7260 = dma.done %s214, %s7259
    %v7261 = vld [vmem:[#allocation6] sm:$0xff]
    %v7262 = vld [vmem:[#allocation6 + $0x8] sm:$0xff]
    %v7263 = vld [vmem:[#allocation6 + $0x10] sm:$0xff]
    %v7264 = vld [vmem:[#allocation6 + $0x18] sm:$0xff]
    %v7265 = vld [vmem:[#allocation6 + $0x20] sm:$0xff]
    %v7266 = vld [vmem:[#allocation6 + $0x28] sm:$0xff]
    %v7267 = vld [vmem:[#allocation6 + $0x30] sm:$0xff]
    %v7268 = vld [vmem:[#allocation6 + $0x38] sm:$0xff]
    %v7269 = vld [vmem:[#allocation17] sm:$0x1]
    %v7271 = vlaneseq
    %v7272 = vshrl.u32 %v7271, 7
    %v7273 = vsub.s32 0, %v7272
    %v7274 = vrot.slane %v7269, %v7273
    %7276 = vmatprep.subr.bf16.mxu0 %v7262
    %7277 = vmatpush1.bf16.xpose.msra.mxu0 %v7261
    %7278 = vmatprep.subr.bf16.mxu0 0
    %7279 = vmatpush1.bf16.xpose.msra.mxu0 0
    %7280 = vmatprep.subr.bf16.mxu0 0
    %7281 = vmatpush1.bf16.xpose.msra.mxu0 0
    %7282 = vmatprep.subr.bf16.mxu0 0
    %7283 = vmatpush1.bf16.xpose.msra.mxu0 0
    %7284 = vmatprep.subr.bf16.mxu0 0
    %7285 = vmatpush1.bf16.xpose.msra.mxu0 0
    %7286 = vmatprep.subr.bf16.mxu0 0
    %7287 = vmatpush1.bf16.xpose.msra.mxu0 0
    %7288 = vmatprep.subr.bf16.mxu0 0
    %7289 = vmatpush1.bf16.xpose.msra.mxu0 0
    %7290 = vmatprep.subr.bf16.mxu0 0
    %7291 = vmatpush1.bf16.xpose.msra.mxu0 0
    %7292 = vmatprep.subr.bf16.mxu0 0
    %7293 = vmatpush1.bf16.xpose.msra.mxu0 0
    %7294 = vmatprep.subr.bf16.mxu0 0
    %7295 = vmatpush1.bf16.xpose.msra.mxu0 0
    %7296 = vmatprep.subr.bf16.mxu0 0
    %7297 = vmatpush1.bf16.xpose.msra.mxu0 0
    %7298 = vmatprep.subr.bf16.mxu0 0
    %7299 = vmatpush1.bf16.xpose.msra.mxu0 0
    %7300 = vmatprep.subr.bf16.mxu0 0
    %7301 = vmatpush1.bf16.xpose.msra.mxu0 0
    %7302 = vmatprep.subr.bf16.mxu0 0
    %7303 = vmatpush1.bf16.xpose.msra.mxu0 0
    %7304 = vmatprep.subr.bf16.mxu0 0
    %7305 = vmatpush1.bf16.xpose.msra.mxu0 0
    %7306 = vmatprep.subr.bf16.mxu0 0
    %7307 = vmatpush1.bf16.xpose.msra.mxu0 0
    %7308 = vmatprep.mubr.bf16.mxu0 %v7250
    %7309 = vmatmul.mubr.bf16.gmra.mrb[0].mxu0 %v7249
    %v7310 = vpop.f32.mrb[0].mxu0
    %v7311 = vadd.f32 %v7274, %v7310
    %v7312 = vpop.f32.mrb[0].mxu0
    %v7313 = vpop.f32.mrb[0].mxu0
    %v7314 = vpop.f32.mrb[0].mxu0
    %7315 = vdwg.mxu0
    %7316 = vmatprep.subr.bf16.mxu0 %v7264
    %7317 = vmatpush1.bf16.xpose.msra.mxu0 %v7263
    %7318 = vmatprep.subr.bf16.mxu0 0
    %7319 = vmatpush1.bf16.xpose.msra.mxu0 0
    %7320 = vmatprep.subr.bf16.mxu0 0
    %7321 = vmatpush1.bf16.xpose.msra.mxu0 0
    %7322 = vmatprep.subr.bf16.mxu0 0
    %7323 = vmatpush1.bf16.xpose.msra.mxu0 0
    %7324 = vmatprep.subr.bf16.mxu0 0
    %7325 = vmatpush1.bf16.xpose.msra.mxu0 0
    %7326 = vmatprep.subr.bf16.mxu0 0
    %7327 = vmatpush1.bf16.xpose.msra.mxu0 0
    %7328 = vmatprep.subr.bf16.mxu0 0
    %7329 = vmatpush1.bf16.xpose.msra.mxu0 0
    %7330 = vmatprep.subr.bf16.mxu0 0
    %7331 = vmatpush1.bf16.xpose.msra.mxu0 0
    %7332 = vmatprep.subr.bf16.mxu0 0
    %7333 = vmatpush1.bf16.xpose.msra.mxu0 0
    %7334 = vmatprep.subr.bf16.mxu0 0
    %7335 = vmatpush1.bf16.xpose.msra.mxu0 0
    %7336 = vmatprep.subr.bf16.mxu0 0
    %7337 = vmatpush1.bf16.xpose.msra.mxu0 0
    %7338 = vmatprep.subr.bf16.mxu0 0
    %7339 = vmatpush1.bf16.xpose.msra.mxu0 0
    %7340 = vmatprep.subr.bf16.mxu0 0
    %7341 = vmatpush1.bf16.xpose.msra.mxu0 0
    %7342 = vmatprep.subr.bf16.mxu0 0
    %7343 = vmatpush1.bf16.xpose.msra.mxu0 0
    %7344 = vmatprep.subr.bf16.mxu0 0
    %7345 = vmatpush1.bf16.xpose.msra.mxu0 0
    %7346 = vmatprep.subr.bf16.mxu0 0
    %7347 = vmatpush1.bf16.xpose.msra.mxu0 0
    %7348 = vmatprep.mubr.bf16.mxu0 %v7252
    %7349 = vmatmul.mubr.bf16.gmra.mrb[0].mxu0 %v7251
    %v7350 = vpop.f32.mrb[0].mxu0
    %v7351 = vadd.f32 %v7311, %v7350
    %v7352 = vpop.f32.mrb[0].mxu0
    %v7353 = vpop.f32.mrb[0].mxu0
    %v7354 = vpop.f32.mrb[0].mxu0
    %7355 = vdwg.mxu0
    %7356 = vmatprep.subr.bf16.mxu0 %v7266
    %7357 = vmatpush1.bf16.xpose.msra.mxu0 %v7265
    %7358 = vmatprep.subr.bf16.mxu0 0
    %7359 = vmatpush1.bf16.xpose.msra.mxu0 0
    %7360 = vmatprep.subr.bf16.mxu0 0
    %7361 = vmatpush1.bf16.xpose.msra.mxu0 0
    %7362 = vmatprep.subr.bf16.mxu0 0
    %7363 = vmatpush1.bf16.xpose.msra.mxu0 0
    %7364 = vmatprep.subr.bf16.mxu0 0
    %7365 = vmatpush1.bf16.xpose.msra.mxu0 0
    %7366 = vmatprep.subr.bf16.mxu0 0
    %7367 = vmatpush1.bf16.xpose.msra.mxu0 0
    %7368 = vmatprep.subr.bf16.mxu0 0
    %7369 = vmatpush1.bf16.xpose.msra.mxu0 0
    %7370 = vmatprep.subr.bf16.mxu0 0
    %7371 = vmatpush1.bf16.xpose.msra.mxu0 0
    %7372 = vmatprep.subr.bf16.mxu0 0
    %7373 = vmatpush1.bf16.xpose.msra.mxu0 0
    %7374 = vmatprep.subr.bf16.mxu0 0
    %7375 = vmatpush1.bf16.xpose.msra.mxu0 0
    %7376 = vmatprep.subr.bf16.mxu0 0
    %7377 = vmatpush1.bf16.xpose.msra.mxu0 0
    %7378 = vmatprep.subr.bf16.mxu0 0
    %7379 = vmatpush1.bf16.xpose.msra.mxu0 0
    %7380 = vmatprep.subr.bf16.mxu0 0
    %7381 = vmatpush1.bf16.xpose.msra.mxu0 0
    %7382 = vmatprep.subr.bf16.mxu0 0
    %7383 = vmatpush1.bf16.xpose.msra.mxu0 0
    %7384 = vmatprep.subr.bf16.mxu0 0
    %7385 = vmatpush1.bf16.xpose.msra.mxu0 0
    %7386 = vmatprep.subr.bf16.mxu0 0
    %7387 = vmatpush1.bf16.xpose.msra.mxu0 0
    %7388 = vmatprep.mubr.bf16.mxu0 %v7254
    %7389 = vmatmul.mubr.bf16.gmra.mrb[0].mxu0 %v7253
    %v7390 = vpop.f32.mrb[0].mxu0
    %v7391 = vadd.f32 %v7351, %v7390
    %v7392 = vpop.f32.mrb[0].mxu0
    %v7393 = vpop.f32.mrb[0].mxu0
    %v7394 = vpop.f32.mrb[0].mxu0
    %7395 = vdwg.mxu0
    %7396 = vmatprep.subr.bf16.mxu0 %v7268
    %7397 = vmatpush1.bf16.xpose.msra.mxu0 %v7267
    %7398 = vmatprep.subr.bf16.mxu0 0
    %7399 = vmatpush1.bf16.xpose.msra.mxu0 0
    %7400 = vmatprep.subr.bf16.mxu0 0
    %7401 = vmatpush1.bf16.xpose.msra.mxu0 0
    %7402 = vmatprep.subr.bf16.mxu0 0
    %7403 = vmatpush1.bf16.xpose.msra.mxu0 0
    %7404 = vmatprep.subr.bf16.mxu0 0
    %7405 = vmatpush1.bf16.xpose.msra.mxu0 0
    %7406 = vmatprep.subr.bf16.mxu0 0
    %7407 = vmatpush1.bf16.xpose.msra.mxu0 0
    %7408 = vmatprep.subr.bf16.mxu0 0
    %7409 = vmatpush1.bf16.xpose.msra.mxu0 0
    %7410 = vmatprep.subr.bf16.mxu0 0
    %7411 = vmatpush1.bf16.xpose.msra.mxu0 0
    %7412 = vmatprep.subr.bf16.mxu0 0
    %7413 = vmatpush1.bf16.xpose.msra.mxu0 0
    %7414 = vmatprep.subr.bf16.mxu0 0
    %7415 = vmatpush1.bf16.xpose.msra.mxu0 0
    %7416 = vmatprep.subr.bf16.mxu0 0
    %7417 = vmatpush1.bf16.xpose.msra.mxu0 0
    %7418 = vmatprep.subr.bf16.mxu0 0
    %7419 = vmatpush1.bf16.xpose.msra.mxu0 0
    %7420 = vmatprep.subr.bf16.mxu0 0
    %7421 = vmatpush1.bf16.xpose.msra.mxu0 0
    %7422 = vmatprep.subr.bf16.mxu0 0
    %7423 = vmatpush1.bf16.xpose.msra.mxu0 0
    %7424 = vmatprep.subr.bf16.mxu0 0
    %7425 = vmatpush1.bf16.xpose.msra.mxu0 0
    %7426 = vmatprep.subr.bf16.mxu0 0
    %7427 = vmatpush1.bf16.xpose.msra.mxu0 0
    %7428 = vmatprep.mubr.bf16.mxu0 %v7256
    %7429 = vmatmul.mubr.bf16.gmra.mrb[0].mxu0 %v7255
    %v7430 = vpop.f32.mrb[0].mxu0
    %v7431 = vadd.f32 %v7391, %v7430
    %v7432 = vpop.f32.mrb[0].mxu0
    %v7433 = vpop.f32.mrb[0].mxu0
    %v7434 = vpop.f32.mrb[0].mxu0
    %7435 = vdwg.mxu0
    %vm7436 = vcmask 130048
    %7437 = vst.msk [vmem:[#allocation23] sm:$0xff] %vm7436, %v7431
    // Predicated region
    $region86: #{fused_mlp_forward.1} parent=1 // pred_check
      _
    $region87: #{fused_mlp_forward.1} parent=1 // pred_check_branch
      %7439 = sbr.rel (0) target = $region89
    $region88: #{fused_mlp_forward.1} parent=1 // pred_region
      %s7441 = ssub.s32 128, 128
      %7442 = vsyncadd [#allocation10], %s7441
      %s7444 = sshll.u32 [#allocation23], 4
      %s7445 = int_to_ptr.vmem [resolvable:$true] %s7444
      %7447 = dma.vmem_to_hbm [thread:$0]  %s7445, 128, %s14, [#allocation10]
    $region89: #{fused_mlp_forward.1} parent=1 // pred_fallthru
      _
    // Predicated region
    $region90: #{fused_mlp_forward.1} parent=1 // pred_check
      _
    $region91: #{fused_mlp_forward.1} parent=1 // pred_check_branch
      %7449 = sbr.rel (0) target = $region93
    $region92: #{fused_mlp_forward.1} parent=1 // pred_region
      %7450 = dma.done [#allocation10], 128
    $region93: #{fused_mlp_forward.1} parent=1 // pred_fallthru
      _
    %7451 = vsyncpa [#allocation9], 1
    %7452 = vsyncpa [#allocation12], 1
    %7453 = vsyncpa [#allocation15], 1
    %7454 = vsyncpa [#allocation18], 1
    %7455 = vsyncpa [#allocation21], 1
    %7456 = vsyncpa [#allocation10], 1
  %7457 = vsyncmov [#allocation7]
  %s7458 = vpop.sfrf %7457
  %p7459 = scmp.eq.s32.totalorder %s7458, 0
  %p7460 = pneg %p7459
  %7462 = shalt.err (%p7460)
  %s7463 = scalar_lea.sflag [#allocation7], 1
  %7464 = vsyncmov %s7463
  %s7465 = vpop.sfrf %7464
  %p7466 = scmp.eq.s32.totalorder %s7465, 0
  %p7467 = pneg %p7466
  %7469 = shalt.err (%p7467)
  %s7470 = scalar_lea.sflag [#allocation7], 2
  %7471 = vsyncmov %s7470
  %s7472 = vpop.sfrf %7471
  %p7473 = scmp.eq.s32.totalorder %s7472, 0
  %p7474 = pneg %p7473
  %7476 = shalt.err (%p7474)
  %s7477 = scalar_lea.sflag [#allocation7], 3
  %7478 = vsyncmov %s7477
  %s7479 = vpop.sfrf %7478
  %p7480 = scmp.eq.s32.totalorder %s7479, 0
  %p7481 = pneg %p7480
  %7483 = shalt.err (%p7481)
  %s7484 = scalar_lea.sflag [#allocation7], 4
  %7485 = vsyncmov %s7484
  %s7486 = vpop.sfrf %7485
  %p7487 = scmp.eq.s32.totalorder %s7486, 0
  %p7488 = pneg %p7487
  %7490 = shalt.err (%p7488)

</llo_original>
